<compile_context>
chip_gen: v6e
topology: v6e:2x2x1
jax: 0.10.0
libtpu: 0.0.40
codegen_flags: <defaults>
</compile_context>

<pallas_src>
import functools

import jax
import jax.numpy as jnp
from jax.experimental import pallas as pl
from jax.experimental.pallas import tpu as pltpu

LANES = 128                       # channel padding -> lane-dense stores
_VMEM_SPEC = pl.BlockSpec(memory_space=pltpu.MemorySpace.VMEM)


# ---------------------------------------------------------------------------
# Kernel A: conv1 + ReLU + BN1(batch stats) + ReLU + MaxPool1d(4)
# ---------------------------------------------------------------------------

def _conv1_bn_pool_kernel(patch_ref, w_ref, b_ref, g_ref, be_ref, o_ref,
                          zc_ref, sum_ref, ssq_ref,
                          *, l_out, bn_count, eps, t_tiles, cache_z):
    """Grid = (2 passes, batch, length tiles).

    patch_ref : (1, r, Kf) bf16     im2col tile (built lane-dense in wrapper)
    w_ref     : (Kf, 128) bf16      conv1 weight as matmul matrix
    b/g/be    : (1, 128) f32        conv bias / BN gamma / BN beta
    o_ref     : (1, tp, 128) bf16   pooled output tile
    zc_ref    : (slots*r, 128) f32  persistent pre-norm activation cache
    sum/ssq   : (1, 128) f32        global per-channel sum / sum-of-squares
    """
    p = pl.program_id(0)              # 0: stats pass, 1: normalize+pool pass
    b = pl.program_id(1)              # batch element
    t = pl.program_id(2)              # length tile
    tp = o_ref.shape[1]               # pooled rows per tile
    r = 4 * tp                        # conv-output rows per tile
    slot = (b * t_tiles + t) if cache_z else 0
    base = pl.multiple_of(slot * r, r)

    def compute_z():
        z = jnp.dot(patch_ref[0], w_ref[...], preferred_element_type=jnp.float32)
        return jnp.maximum(z + b_ref[...], 0.0)          # relu(conv1(x) + bias)

    @pl.when(p == 0)
    def _stats_pass():
        @pl.when((b == 0) & (t == 0))
        def _init():
            sum_ref[...] = jnp.zeros_like(sum_ref)
            ssq_ref[...] = jnp.zeros_like(ssq_ref)

        z = compute_z()
        if cache_z:                                      # cache pre-norm conv
            zc_ref[pl.ds(base, r), :] = z
        rows = t * r + jax.lax.broadcasted_iota(jnp.int32, (r, 1), 0)
        zm = jnp.where(rows < l_out, z, 0.0)             # mask length padding
        sum_ref[...] += jnp.sum(zm, axis=0, keepdims=True)
        ssq_ref[...] += jnp.sum(zm * zm, axis=0, keepdims=True)

    @pl.when(p == 1)
    def _norm_pool_pass():
        if not cache_z:                                  # VMEM-pressure fallback
            zc_ref[pl.ds(base, r), :] = compute_z()
        inv_cnt = 1.0 / float(bn_count)
        mean = sum_ref[...] * inv_cnt
        var = ssq_ref[...] * inv_cnt - mean * mean       # biased (training) var
        scale = jax.lax.rsqrt(var + eps) * g_ref[...]
        # relu(BN(z)) then MaxPool1d(4) via 4 stride-4 VMEM loads of the cache.
        pooled = None
        for q in range(4):
            zq = zc_ref[pl.ds(base + q, tp, 4), :]
            yq = jnp.maximum((zq - mean) * scale + be_ref[...], 0.0)
            pooled = yq if pooled is None else jnp.maximum(pooled, yq)
        o_ref[0] = pooled.astype(o_ref.dtype)


def conv1_bn_relu_pool(x_nlc, kp, *, kernel_size, stride, tp=256, eps=1e-5):
    """x_nlc: (N, L, Cin) f32 -> (pooled (N, seg, 128) bf16, valid length lp)."""
    n, length, cin = x_nlc.shape
    assert length > kernel_size
    l_out = (length - kernel_size) // stride + 1
    lp = l_out // 4
    assert lp >= 1
    r = 4 * tp
    t_tiles = pl.cdiv(l_out, r)
    lpad = r * t_tiles
    kf_raw = kernel_size * cin
    kf = pl.cdiv(kf_raw, LANES) * LANES
    assert kp["w1m"].shape == (kf, LANES)

    # im2col in the XLA wrapper: pure layout plumbing, lane-dense bf16 slab.
    if kernel_size % stride == 0:
        k_taps = kernel_size // stride
        lt = (length // stride) * stride
        xr = x_nlc[:, :lt, :].reshape(n, lt // stride, stride * cin)  # polyphase
        patches = jnp.concatenate([xr[:, j:j + l_out, :] for j in range(k_taps)],
                                  axis=-1)                # (n, l_out, K*Cin)
    else:
        # TODO(synk): gather path when kernel_size % stride != 0 (not M5's case)
        idx = (jnp.arange(l_out)[:, None] * stride + jnp.arange(kernel_size)[None, :])
        patches = x_nlc[:, idx, :].reshape(n, l_out, kf_raw)
    patches = jnp.pad(patches, ((0, 0), (0, lpad - l_out), (0, kf - kf_raw)))
    patches = patches.astype(jnp.bfloat16)

    # Cache the pre-norm activations for pass 1 unless it would strain VMEM
    # (v7x only has 64 MiB/TC); otherwise fall back to recompute.
    zc_bytes = n * t_tiles * r * LANES * 4
    cache_z = zc_bytes <= (10 << 20)
    zc_rows = (n * t_tiles if cache_z else 1) * r

    if cache_z:
        # Pass 1 never touches the patches: pin its block index so the second
        # input sweep collapses to a single block fetch.
        patch_map = lambda p, b, t: (b * (1 - p), t * (1 - p), 0)
    else:
        patch_map = lambda p, b, t: (b, t, 0)

    vmem_need = (2 * r * kf * 2            # patch blocks (bf16, double-buffered)
                 + zc_rows * LANES * 4     # z cache
                 + 2 * tp * LANES * 2      # output blocks (bf16)
                 + kf * LANES * 2          # weight
                 + (4 << 20))              # body temporaries / headroom
    vmem_limit = int(min(max(vmem_need, 16 << 20), 48 << 20))

    kernel = functools.partial(_conv1_bn_pool_kernel, l_out=l_out,
                               bn_count=n * l_out, eps=eps,
                               t_tiles=t_tiles, cache_z=cache_z)
    out = pl.pallas_call(
        kernel,
        out_shape=jax.ShapeDtypeStruct((n, t_tiles * tp, LANES), jnp.bfloat16),
        grid_spec=pltpu.PrefetchScalarGridSpec(
            num_scalar_prefetch=0,
            grid=(2, n, t_tiles),
            in_specs=[
                pl.BlockSpec((1, r, kf), patch_map),
                pl.BlockSpec((kf, LANES), lambda p, b, t: (0, 0)),
                pl.BlockSpec((1, LANES), lambda p, b, t: (0, 0)),
                pl.BlockSpec((1, LANES), lambda p, b, t: (0, 0)),
                pl.BlockSpec((1, LANES), lambda p, b, t: (0, 0)),
            ],
            # Pass 0 never writes the output: keep its block index pinned so no
            # stale block is ever streamed back to HBM.
            out_specs=pl.BlockSpec((1, tp, LANES), lambda p, b, t: (b * p, t * p, 0)),
            scratch_shapes=[
                pltpu.VMEM((zc_rows, LANES), jnp.float32),   # z cache
                pltpu.VMEM((1, LANES), jnp.float32),         # sum
                pltpu.VMEM((1, LANES), jnp.float32),         # sum of squares
            ],
        ),
        # BN stats accumulate across batch and tiles -> sequential axes.
        compiler_params=pltpu.CompilerParams(
            dimension_semantics=("arbitrary", "arbitrary", "arbitrary"),
            vmem_limit_bytes=vmem_limit),
    )(patches, kp["w1m"], kp["b1"], kp["g1"], kp["be1"])
    return out, lp


# ---------------------------------------------------------------------------
# Kernel B: conv2..4 (+BN+ReLU+MaxPool4) + global avg-pool + Linear + sigmoid
# ---------------------------------------------------------------------------

def _tail_kernel(y_ref, w2_ref, p2_ref, w3_ref, p3_ref, w4_ref, p4_ref,
                 wfc_ref, bfc_ref, o_ref, pool_ref, *, n, seg, l1, eps):
    """y_ref: (n*seg, 128) bf16 flat activation; rows [b*seg, b*seg+l1) valid."""
    c = y_ref.shape[1]

    def shift_up(a, k):
        # result[i] = a[i + k]; the (garbage) tail rows are zero-filled.
        pad = jnp.zeros((k, c), a.dtype)
        return jnp.concatenate([a[k:], pad], axis=0)

    def stage(y, v_in, p_in, w_ref, prm_ref):
        """y: (n*p_in, c) flat rows, v_in valid rows per segment of stride p_in."""
        m_rows = y.shape[0]
        lc = v_in - 2                                    # valid conv (K=3) length
        lp = lc // 4
        yb = y.astype(jnp.bfloat16)
        # conv as 3 tall MXU matmuls over the flattened rows, shift-added.
        z = jnp.dot(yb, w_ref[0], preferred_element_type=jnp.float32)
        z = z + shift_up(jnp.dot(yb, w_ref[1], preferred_element_type=jnp.float32), 1)
        z = z + shift_up(jnp.dot(yb, w_ref[2], preferred_element_type=jnp.float32), 2)
        z = z + prm_ref[0:1, :]                          # + conv bias
        # BatchNorm1d training-mode stats over the valid (batch, length) rows.
        rows = jax.lax.broadcasted_iota(jnp.int32, (m_rows, 1), 0)
        valid = (rows % p_in) < lc
        zm = jnp.where(valid, z, 0.0)
        inv_cnt = 1.0 / float(n * lc)
        mean = jnp.sum(zm, axis=0, keepdims=True) * inv_cnt
        var = jnp.sum(zm * zm, axis=0, keepdims=True) * inv_cnt - mean * mean
        scale = jax.lax.rsqrt(var + eps) * prm_ref[1:2, :]
        a = jnp.maximum((z - mean) * scale + prm_ref[2:3, :], 0.0)
        # MaxPool1d(4) via VMEM scratch + 4 stride-4 loads (segment-aligned
        # because p_in is a multiple of 4).
        pool_ref[0:m_rows, :] = a
        m_out = m_rows // 4
        pooled = None
        for q in range(4):
            aq = pool_ref[pl.ds(q, m_out, 4), :]
            pooled = aq if pooled is None else jnp.maximum(pooled, aq)
        return pooled, lp, p_in // 4

    act = y_ref[...]
    v, p = l1, seg
    act, v, p = stage(act, v, p, w2_ref, p2_ref)
    act, v, p = stage(act, v, p, w3_ref, p3_ref)
    act, v, p = stage(act, v, p, w4_ref, p4_ref)

    # Global average pool (per segment) + Linear + sigmoid.
    rows = jax.lax.broadcasted_iota(jnp.int32, (act.shape[0], 1), 0)
    actm = jnp.where((rows % p) < v, act, 0.0)
    wfc = wfc_ref[...]
    bfc = bfc_ref[...]
    outs = []
    for bb in range(n):                                  # n is small & static
        m = jnp.sum(actm[bb * p:(bb + 1) * p, :], axis=0, keepdims=True) / float(v)
        outs.append(jnp.dot(m, wfc, preferred_element_type=jnp.float32) + bfc)
    logit = jnp.concatenate(outs, axis=0)
    o_ref[...] = 1.0 / (1.0 + jnp.exp(-logit))           # sigmoid in f32


def tail_stages(y1_flat, kp, *, n, seg, l1, eps=1e-5):
    assert seg % 64 == 0, "need stride-4 pooling alignment through 3 stages"
    # Validate the length chain (same floor rules as the PyTorch module).
    v = l1
    for _ in range(3):
        lc = v - 2
        assert lc >= 1 and lc // 4 >= 1, "input too short for the M5 stages"
        v = lc // 4
    n_out = kp["wfc"].shape[1]
    # TODO(synk): tile kernel B over batch for very large N (full-VMEM here).
    return pl.pallas_call(
        functools.partial(_tail_kernel, n=n, seg=seg, l1=l1, eps=eps),
        out_shape=jax.ShapeDtypeStruct((n, n_out), jnp.float32),
        in_specs=[_VMEM_SPEC] * 9,
        out_specs=_VMEM_SPEC,
        scratch_shapes=[pltpu.VMEM((n * seg, LANES), jnp.float32)],
    )(y1_flat, kp["w2m"], kp["p2"], kp["w3m"], kp["p3"], kp["w4m"], kp["p4"],
      kp["wfc"], kp["bfc"])


# ---------------------------------------------------------------------------
# Full forward pass (NetAurHPD_M5)
# ---------------------------------------------------------------------------

def net_aur_hpd_m5_forward(x_ncl, kp, *, stride, kernel_size=80, tp=256, eps=1e-5):
    """x_ncl: (N, n_input, L) PyTorch NCL layout.  Returns (N, 1, n_output)."""
    x = jnp.transpose(x_ncl, (0, 2, 1)).astype(jnp.float32)         # -> NLC
    y1, l1 = conv1_bn_relu_pool(x, kp, kernel_size=kernel_size,
                                stride=stride, tp=tp, eps=eps)
    n, seg, c = y1.shape
    y1_flat = y1.reshape(n * seg, c)          # free metadata reshape in HBM
    out = tail_stages(y1_flat, kp, n=n, seg=seg, l1=l1, eps=eps)
    return out.reshape(n, 1, out.shape[1])


# ---------------------------------------------------------------------------
# Parameters
# ---------------------------------------------------------------------------

def init_params(key, n_input, n_output, n_channel):
    """Random parameters in the PyTorch layout (Conv1d weight: (Cout, Cin, K))."""
    ks = jax.random.split(key, 16)
    c2 = 2 * n_channel

    def conv_w(k, co, ci, ksz):
        return 0.05 * jax.random.normal(k, (co, ci, ksz), jnp.float32)

    def vec(k, c, scale=0.05):
        return scale * jax.random.normal(k, (c,), jnp.float32)

    params = {
        "w1": conv_w(ks[0], n_channel, n_input, 80), "b1": vec(ks[1], n_channel),
        "g1": 1.0 + vec(ks[2], n_channel, 0.1), "be1": vec(ks[3], n_channel, 0.1),
        "w2": conv_w(ks[4], c2, n_channel, 3), "b2": vec(ks[5], c2),
        "g2": 1.0 + vec(ks[6], c2, 0.1), "be2": vec(ks[7], c2, 0.1),
        "w3": conv_w(ks[8], c2, c2, 3), "b3": vec(ks[9], c2),
        "g3": 1.0 + vec(ks[10], c2, 0.1), "be3": vec(ks[11], c2, 0.1),
        "w4": conv_w(ks[12], c2, c2, 3), "b4": vec(ks[13], c2),
        "g4": 1.0 + vec(ks[14], c2, 0.1), "be4": vec(ks[15], c2, 0.1),
    }
    kf1, kf2 = jax.random.split(jax.random.fold_in(key, 123))
    params["w_fc"] = 0.05 * jax.random.normal(kf1, (c2, n_output), jnp.float32)
    params["b_fc"] = 0.05 * jax.random.normal(kf2, (n_output,), jnp.float32)
    return params


def _pad_vec(v):
    return jnp.pad(v.astype(jnp.float32), (0, LANES - v.shape[0])).reshape(1, LANES)


def prepare_params(p):
    """One-time weight packing: channels zero-padded to 128 lanes, conv weights
    as bf16 matmul matrices, per-stage bias/gamma/beta packed into one array."""
    kp = {}
    cout1, cin, k1 = p["w1"].shape
    assert cout1 <= LANES and 2 * cout1 <= LANES
    kcin = cin * k1
    kf = pl.cdiv(kcin, LANES) * LANES
    w1m = jnp.transpose(p["w1"], (2, 1, 0)).reshape(kcin, cout1)     # (K*Cin, Cout)
    kp["w1m"] = jnp.pad(w1m, ((0, kf - kcin), (0, LANES - cout1))).astype(jnp.bfloat16)
    kp["b1"] = _pad_vec(p["b1"])
    kp["g1"] = _pad_vec(p["g1"])
    kp["be1"] = _pad_vec(p["be1"])
    for i in (2, 3, 4):
        w = p[f"w{i}"]                                   # (Cout, Cin, 3)
        cout, cin_i, _ = w.shape
        m = jnp.transpose(w, (2, 1, 0))                  # (3, Cin, Cout)
        m = jnp.pad(m, ((0, 0), (0, LANES - cin_i), (0, LANES - cout)))
        kp[f"w{i}m"] = m.astype(jnp.bfloat16)
        kp[f"p{i}"] = jnp.concatenate(
            [_pad_vec(p[f"b{i}"]), _pad_vec(p[f"g{i}"]), _pad_vec(p[f"be{i}"])],
            axis=0)                                      # (3, 128) bias/gamma/beta
    cfc = p["w_fc"].shape[0]
    kp["wfc"] = jnp.pad(p["w_fc"].astype(jnp.float32), ((0, LANES - cfc), (0, 0)))
    kp["bfc"] = p["b_fc"].astype(jnp.float32).reshape(1, -1)
    return kp


# ---------------------------------------------------------------------------
# Pure-JAX reference (mirrors the PyTorch forward, f32)
# ---------------------------------------------------------------------------

def reference_forward(x_ncl, p, *, stride, eps=1e-5):
    x = x_ncl.astype(jnp.float32)                        # (N, Cin, L)

    def conv1d(x, w, b, s=1):
        y = jax.lax.conv_general_dilated(
            x, w, (s,), "VALID", dimension_numbers=("NCH", "OIH", "NCH"))
        return y + b[None, :, None]

    def bn(x, g, be):
        mean = jnp.mean(x, axis=(0, 2), keepdims=True)
        var = jnp.mean((x - mean) ** 2, axis=(0, 2), keepdims=True)
        return (x - mean) * jax.lax.rsqrt(var + eps) * g[None, :, None] + be[None, :, None]

    def pool4(x):
        l = (x.shape[2] // 4) * 4
        return jnp.max(x[:, :, :l].reshape(x.shape[0], x.shape[1], l // 4, 4), axis=3)

    y = conv1d(x, p["w1"], p["b1"], stride)
    y = jax.nn.relu(y)                                   # extra ReLU before BN (per module)
    y = pool4(jax.nn.relu(bn(y, p["g1"], p["be1"])))
    for i in (2, 3, 4):
        y = conv1d(y, p[f"w{i}"], p[f"b{i}"])
        y = pool4(jax.nn.relu(bn(y, p[f"g{i}"], p[f"be{i}"])))
    m = jnp.mean(y, axis=2)                              # global average pool
    logit = m @ p["w_fc"] + p["b_fc"]
    return jax.nn.sigmoid(logit).reshape(x.shape[0], 1, -1)


if __name__ == "__main__":
    # Hyperparameters consistent with the module; length long enough that every
    # pooled stage stays non-empty: 2048 -> 493 -> 123 -> 30 -> 7 -> 1.
    N_INPUT, N_OUTPUT, STRIDE, N_CHANNEL = 1, 1, 4, 32
    BATCH, LENGTH = 2, 2048

    key = jax.random.PRNGKey(0)
    k_x, k_p = jax.random.split(key)
    x = jax.random.normal(k_x, (BATCH, N_INPUT, LENGTH), jnp.float32)   # NCL
    params = init_params(k_p, N_INPUT, N_OUTPUT, N_CHANNEL)
    kparams = prepare_params(params)           # packed once, not per forward

    fwd = jax.jit(functools.partial(net_aur_hpd_m5_forward, stride=STRIDE))
    out = jax.block_until_ready(fwd(x, kparams))
    assert out.shape == (BATCH, 1, N_OUTPUT), out.shape
    assert bool(jnp.all(jnp.isfinite(out)))
    assert bool(jnp.all((out >= 0.0) & (out <= 1.0)))

    ref = jax.block_until_ready(
        jax.jit(functools.partial(reference_forward, stride=STRIDE))(x, params))
    err = float(jnp.max(jnp.abs(out - ref)))
    assert err < 5e-2, f"max |pallas - reference| = {err}"
    print("KERNEL_OK")
</pallas_src>

<mosaic_0001>
module attributes {stable_mosaic.version = 11 : i64} {
  func.func @_conv1_bn_pool_kernel(%arg0: i32, %arg1: i32, %arg2: i32, %arg3: memref<1x1024x128xbf16, #tpu.memory_space<vmem>>, %arg4: memref<128x128xbf16, #tpu.memory_space<vmem>>, %arg5: memref<1x128xf32, #tpu.memory_space<vmem>>, %arg6: memref<1x128xf32, #tpu.memory_space<vmem>>, %arg7: memref<1x128xf32, #tpu.memory_space<vmem>>, %arg8: memref<1x256x128xbf16, #tpu.memory_space<vmem>>, %arg9: memref<2048x128xf32, #tpu.memory_space<vmem>>, %arg10: memref<1x128xf32, #tpu.memory_space<vmem>>, %arg11: memref<1x128xf32, #tpu.memory_space<vmem>>) attributes {dimension_semantics = [#tpu.dimension_semantics<arbitrary>, #tpu.dimension_semantics<arbitrary>, #tpu.dimension_semantics<arbitrary>], iteration_bounds = array<i64: 2, 2, 1>, scalar_prefetch = 0 : i64, scratch_operands = 3 : i64, tpu.core_type = #tpu.core_type<tc>, window_params = [{transform_indices = @transform_0, window_bounds = array<i64: 1, 1024, 128>}, {pipeline_mode = #tpu.pipeline_mode<synchronous>, transform_indices = @transform_1, window_bounds = array<i64: 128, 128>}, {pipeline_mode = #tpu.pipeline_mode<synchronous>, transform_indices = @transform_2, window_bounds = array<i64: 1, 128>}, {pipeline_mode = #tpu.pipeline_mode<synchronous>, transform_indices = @transform_3, window_bounds = array<i64: 1, 128>}, {pipeline_mode = #tpu.pipeline_mode<synchronous>, transform_indices = @transform_4, window_bounds = array<i64: 1, 128>}, {transform_indices = @transform_5, window_bounds = array<i64: 1, 256, 128>}]} {
    %c1_i32 = arith.constant 1 : i32
    %0 = arith.muli %arg1, %c1_i32 : i32
    %1 = arith.addi %0, %arg2 : i32
    %c1024_i32 = arith.constant 1024 : i32
    %2 = arith.muli %1, %c1024_i32 : i32
    %3 = tpu.assume_multiple %2, 1024 : i32
    %c0_i32 = arith.constant 0 : i32
    %4 = arith.cmpi eq, %arg0, %c0_i32 : i32
    %5 = arith.extui %4 : i1 to i32
    %c0_i32_0 = arith.constant 0 : i32
    %6 = arith.cmpi ne, %5, %c0_i32_0 : i32
    scf.if %6 {
      %c0_i32_3 = arith.constant 0 : i32
      %10 = arith.cmpi eq, %arg1, %c0_i32_3 : i32
      %c0_i32_4 = arith.constant 0 : i32
      %11 = arith.cmpi eq, %arg2, %c0_i32_4 : i32
      %12 = arith.andi %10, %11 : i1
      %13 = arith.extui %12 : i1 to i32
      %c0_i32_5 = arith.constant 0 : i32
      %14 = arith.cmpi ne, %13, %c0_i32_5 : i32
      scf.if %14 {
        %cst_26 = arith.constant 0.000000e+00 : f32
        %47 = vector.broadcast %cst_26 : f32 to vector<1x128xf32>
        %c0_27 = arith.constant 0 : index
        %c0_28 = arith.constant 0 : index
        %48 = vector.load %arg10[%c0_27, %c0_28] : memref<1x128xf32, #tpu.memory_space<vmem>>, vector<1x128xf32>
        tpu.vector_store %arg10[%c0_27, %c0_28], %47 {strides = array<i32>} : memref<1x128xf32, #tpu.memory_space<vmem>>, vector<1x128xf32>,
        %cst_29 = arith.constant 0.000000e+00 : f32
        %49 = vector.broadcast %cst_29 : f32 to vector<1x128xf32>
        %c0_30 = arith.constant 0 : index
        %c0_31 = arith.constant 0 : index
        %50 = vector.load %arg11[%c0_30, %c0_31] : memref<1x128xf32, #tpu.memory_space<vmem>>, vector<1x128xf32>
        tpu.vector_store %arg11[%c0_30, %c0_31], %49 {strides = array<i32>} : memref<1x128xf32, #tpu.memory_space<vmem>>, vector<1x128xf32>,
      } else {
      }
      %c0 = arith.constant 0 : index
      %c0_6 = arith.constant 0 : index
      %c0_7 = arith.constant 0 : index
      %15 = vector.load %arg3[%c0, %c0_6, %c0_7] : memref<1x1024x128xbf16, #tpu.memory_space<vmem>>, vector<1x1024x128xbf16>
      %16 = vector.shape_cast %15 : vector<1x1024x128xbf16> to vector<1024x128xbf16>
      %c0_8 = arith.constant 0 : index
      %c0_9 = arith.constant 0 : index
      %17 = vector.load %arg4[%c0_8, %c0_9] : memref<128x128xbf16, #tpu.memory_space<vmem>>, vector<128x128xbf16>
      %cst = arith.constant dense<0.000000e+00> : vector<1024x128xf32>
      %18 = tpu.matmul %16, %17, %cst {dimension_numbers = #tpu.dot_dimension_numbers<[1], [0], [0], [1], [0, 0, 1, 1], [], []>} : vector<1024x128xbf16>, vector<128x128xbf16>, vector<1024x128xf32> -> vector<1024x128xf32>
      %c0_10 = arith.constant 0 : index
      %c0_11 = arith.constant 0 : index
      %19 = vector.load %arg5[%c0_10, %c0_11] : memref<1x128xf32, #tpu.memory_space<vmem>>, vector<1x128xf32>
      %20 = vector.broadcast %19 : vector<1x128xf32> to vector<1024x128xf32>
      %21 = arith.addf %18, %20 : vector<1024x128xf32>
      %cst_12 = arith.constant 0.000000e+00 : f32
      %22 = vector.broadcast %cst_12 : f32 to vector<1024x128xf32>
      %23 = arith.maximumf %21, %22 : vector<1024x128xf32>
      %24 = arith.index_cast %3 : i32 to index
      %c0_13 = arith.constant 0 : index
      %25 = vector.load %arg9[%24, %c0_13] : memref<2048x128xf32, #tpu.memory_space<vmem>>, vector<1024x128xf32>
      tpu.vector_store %arg9[%24, %c0_13], %23 {strides = array<i32>} : memref<2048x128xf32, #tpu.memory_space<vmem>>, vector<1024x128xf32>,
      %c1024_i32_14 = arith.constant 1024 : i32
      %26 = arith.muli %arg2, %c1024_i32_14 : i32
      %27 = tpu.iota {dimensions = array<i32: 0>} : vector<1024x1xi32>
      %28 = vector.broadcast %26 : i32 to vector<1024x1xi32>
      %29 = arith.addi %28, %27 : vector<1024x1xi32>
      %c493_i32 = arith.constant 493 : i32
      %30 = vector.broadcast %c493_i32 : i32 to vector<1024x1xi32>
      %31 = arith.cmpi slt, %29, %30 : vector<1024x1xi32>
      %cst_15 = arith.constant 0.000000e+00 : f32
      %32 = vector.shape_cast %31 : vector<1024x1xi1> to vector<1024x1xi1>
      %33 = vector.broadcast %32 : vector<1024x1xi1> to vector<1024x128xi1>
      %34 = vector.broadcast %cst_15 : f32 to vector<1024x128xf32>
      %35 = arith.select %33, %23, %34 : vector<1024x128xi1>, vector<1024x128xf32>
      %c0_16 = arith.constant 0 : index
      %c0_17 = arith.constant 0 : index
      %36 = vector.load %arg10[%c0_16, %c0_17] : memref<1x128xf32, #tpu.memory_space<vmem>>, vector<1x128xf32>
      %cst_18 = arith.constant dense<0.000000e+00> : vector<128xf32>
      %37 = vector.multi_reduction <add>, %35, %cst_18 [0] : vector<1024x128xf32> to vector<128xf32>
      %38 = vector.shape_cast %37 : vector<128xf32> to vector<1x128xf32>
      %39 = arith.addf %36, %38 : vector<1x128xf32>
      %c0_19 = arith.constant 0 : index
      %c0_20 = arith.constant 0 : index
      %40 = vector.load %arg10[%c0_19, %c0_20] : memref<1x128xf32, #tpu.memory_space<vmem>>, vector<1x128xf32>
      tpu.vector_store %arg10[%c0_19, %c0_20], %39 {strides = array<i32>} : memref<1x128xf32, #tpu.memory_space<vmem>>, vector<1x128xf32>,
      %c0_21 = arith.constant 0 : index
      %c0_22 = arith.constant 0 : index
      %41 = vector.load %arg11[%c0_21, %c0_22] : memref<1x128xf32, #tpu.memory_space<vmem>>, vector<1x128xf32>
      %42 = arith.mulf %35, %35 : vector<1024x128xf32>
      %cst_23 = arith.constant dense<0.000000e+00> : vector<128xf32>
      %43 = vector.multi_reduction <add>, %42, %cst_23 [0] : vector<1024x128xf32> to vector<128xf32>
      %44 = vector.shape_cast %43 : vector<128xf32> to vector<1x128xf32>
      %45 = arith.addf %41, %44 : vector<1x128xf32>
      %c0_24 = arith.constant 0 : index
      %c0_25 = arith.constant 0 : index
      %46 = vector.load %arg11[%c0_24, %c0_25] : memref<1x128xf32, #tpu.memory_space<vmem>>, vector<1x128xf32>
      tpu.vector_store %arg11[%c0_24, %c0_25], %45 {strides = array<i32>} : memref<1x128xf32, #tpu.memory_space<vmem>>, vector<1x128xf32>,
    } else {
    }
    %c1_i32_1 = arith.constant 1 : i32
    %7 = arith.cmpi eq, %arg0, %c1_i32_1 : i32
    %8 = arith.extui %7 : i1 to i32
    %c0_i32_2 = arith.constant 0 : i32
    %9 = arith.cmpi ne, %8, %c0_i32_2 : i32
    scf.if %9 {
      %c0 = arith.constant 0 : index
      %c0_3 = arith.constant 0 : index
      %10 = vector.load %arg10[%c0, %c0_3] : memref<1x128xf32, #tpu.memory_space<vmem>>, vector<1x128xf32>
      %cst = arith.constant 0.00101419876 : f32
      %11 = vector.broadcast %cst : f32 to vector<1x128xf32>
      %12 = arith.mulf %10, %11 : vector<1x128xf32>
      %c0_4 = arith.constant 0 : index
      %c0_5 = arith.constant 0 : index
      %13 = vector.load %arg11[%c0_4, %c0_5] : memref<1x128xf32, #tpu.memory_space<vmem>>, vector<1x128xf32>
      %cst_6 = arith.constant 0.00101419876 : f32
      %14 = vector.broadcast %cst_6 : f32 to vector<1x128xf32>
      %15 = arith.mulf %13, %14 : vector<1x128xf32>
      %16 = arith.mulf %12, %12 : vector<1x128xf32>
      %17 = arith.subf %15, %16 : vector<1x128xf32>
      %cst_7 = arith.constant 9.99999974E-6 : f32
      %18 = vector.broadcast %cst_7 : f32 to vector<1x128xf32>
      %19 = arith.addf %17, %18 : vector<1x128xf32>
      %20 = math.rsqrt %19 : vector<1x128xf32>
      %c0_8 = arith.constant 0 : index
      %c0_9 = arith.constant 0 : index
      %21 = vector.load %arg6[%c0_8, %c0_9] : memref<1x128xf32, #tpu.memory_space<vmem>>, vector<1x128xf32>
      %22 = arith.mulf %20, %21 : vector<1x128xf32>
      %c0_i32_10 = arith.constant 0 : i32
      %23 = arith.addi %3, %c0_i32_10 : i32
      %24 = arith.index_cast %23 : i32 to index
      %c0_11 = arith.constant 0 : index
      %25 = tpu.strided_load %arg9[%24, %c0_11] {strides = array<i32: 4, 1>} : memref<2048x128xf32, #tpu.memory_space<vmem>>, vector<256x128xf32>
      %26 = vector.broadcast %12 : vector<1x128xf32> to vector<256x128xf32>
      %27 = arith.subf %25, %26 : vector<256x128xf32>
      %28 = vector.broadcast %22 : vector<1x128xf32> to vector<256x128xf32>
      %29 = arith.mulf %27, %28 : vector<256x128xf32>
      %c0_12 = arith.constant 0 : index
      %c0_13 = arith.constant 0 : index
      %30 = vector.load %arg7[%c0_12, %c0_13] : memref<1x128xf32, #tpu.memory_space<vmem>>, vector<1x128xf32>
      %31 = vector.broadcast %30 : vector<1x128xf32> to vector<256x128xf32>
      %32 = arith.addf %29, %31 : vector<256x128xf32>
      %cst_14 = arith.constant 0.000000e+00 : f32
      %33 = vector.broadcast %cst_14 : f32 to vector<256x128xf32>
      %34 = arith.maximumf %32, %33 : vector<256x128xf32>
      %c1_i32_15 = arith.constant 1 : i32
      %35 = arith.addi %3, %c1_i32_15 : i32
      %36 = arith.index_cast %35 : i32 to index
      %c0_16 = arith.constant 0 : index
      %37 = tpu.strided_load %arg9[%36, %c0_16] {strides = array<i32: 4, 1>} : memref<2048x128xf32, #tpu.memory_space<vmem>>, vector<256x128xf32>
      %38 = vector.broadcast %12 : vector<1x128xf32> to vector<256x128xf32>
      %39 = arith.subf %37, %38 : vector<256x128xf32>
      %40 = vector.broadcast %22 : vector<1x128xf32> to vector<256x128xf32>
      %41 = arith.mulf %39, %40 : vector<256x128xf32>
      %c0_17 = arith.constant 0 : index
      %c0_18 = arith.constant 0 : index
      %42 = vector.load %arg7[%c0_17, %c0_18] : memref<1x128xf32, #tpu.memory_space<vmem>>, vector<1x128xf32>
      %43 = vector.broadcast %42 : vector<1x128xf32> to vector<256x128xf32>
      %44 = arith.addf %41, %43 : vector<256x128xf32>
      %cst_19 = arith.constant 0.000000e+00 : f32
      %45 = vector.broadcast %cst_19 : f32 to vector<256x128xf32>
      %46 = arith.maximumf %44, %45 : vector<256x128xf32>
      %47 = arith.maximumf %34, %46 : vector<256x128xf32>
      %c2_i32 = arith.constant 2 : i32
      %48 = arith.addi %3, %c2_i32 : i32
      %49 = arith.index_cast %48 : i32 to index
      %c0_20 = arith.constant 0 : index
      %50 = tpu.strided_load %arg9[%49, %c0_20] {strides = array<i32: 4, 1>} : memref<2048x128xf32, #tpu.memory_space<vmem>>, vector<256x128xf32>
      %51 = vector.broadcast %12 : vector<1x128xf32> to vector<256x128xf32>
      %52 = arith.subf %50, %51 : vector<256x128xf32>
      %53 = vector.broadcast %22 : vector<1x128xf32> to vector<256x128xf32>
      %54 = arith.mulf %52, %53 : vector<256x128xf32>
      %c0_21 = arith.constant 0 : index
      %c0_22 = arith.constant 0 : index
      %55 = vector.load %arg7[%c0_21, %c0_22] : memref<1x128xf32, #tpu.memory_space<vmem>>, vector<1x128xf32>
      %56 = vector.broadcast %55 : vector<1x128xf32> to vector<256x128xf32>
      %57 = arith.addf %54, %56 : vector<256x128xf32>
      %cst_23 = arith.constant 0.000000e+00 : f32
      %58 = vector.broadcast %cst_23 : f32 to vector<256x128xf32>
      %59 = arith.maximumf %57, %58 : vector<256x128xf32>
      %60 = arith.maximumf %47, %59 : vector<256x128xf32>
      %c3_i32 = arith.constant 3 : i32
      %61 = arith.addi %3, %c3_i32 : i32
      %62 = arith.index_cast %61 : i32 to index
      %c0_24 = arith.constant 0 : index
      %63 = tpu.strided_load %arg9[%62, %c0_24] {strides = array<i32: 4, 1>} : memref<2048x128xf32, #tpu.memory_space<vmem>>, vector<256x128xf32>
      %64 = vector.broadcast %12 : vector<1x128xf32> to vector<256x128xf32>
      %65 = arith.subf %63, %64 : vector<256x128xf32>
      %66 = vector.broadcast %22 : vector<1x128xf32> to vector<256x128xf32>
      %67 = arith.mulf %65, %66 : vector<256x128xf32>
      %c0_25 = arith.constant 0 : index
      %c0_26 = arith.constant 0 : index
      %68 = vector.load %arg7[%c0_25, %c0_26] : memref<1x128xf32, #tpu.memory_space<vmem>>, vector<1x128xf32>
      %69 = vector.broadcast %68 : vector<1x128xf32> to vector<256x128xf32>
      %70 = arith.addf %67, %69 : vector<256x128xf32>
      %cst_27 = arith.constant 0.000000e+00 : f32
      %71 = vector.broadcast %cst_27 : f32 to vector<256x128xf32>
      %72 = arith.maximumf %70, %71 : vector<256x128xf32>
      %73 = arith.maximumf %60, %72 : vector<256x128xf32>
      %74 = arith.truncf %73 : vector<256x128xf32> to vector<256x128xbf16>
      %c0_28 = arith.constant 0 : index
      %c0_29 = arith.constant 0 : index
      %c0_30 = arith.constant 0 : index
      %75 = vector.load %arg8[%c0_28, %c0_29, %c0_30] : memref<1x256x128xbf16, #tpu.memory_space<vmem>>, vector<1x256x128xbf16>
      %76 = vector.shape_cast %75 : vector<1x256x128xbf16> to vector<256x128xbf16>
      %77 = vector.shape_cast %74 : vector<256x128xbf16> to vector<1x256x128xbf16>
      tpu.vector_store %arg8[%c0_28, %c0_29, %c0_30], %77 {strides = array<i32>} : memref<1x256x128xbf16, #tpu.memory_space<vmem>>, vector<1x256x128xbf16>,
    } else {
    }
    return
  }
  func.func @transform_0(%arg0: i32, %arg1: i32, %arg2: i32) -> (i32, i32, i32) {
    %c1_i32 = arith.constant 1 : i32
    %0 = arith.subi %c1_i32, %arg0 : i32
    %1 = arith.muli %arg1, %0 : i32
    %c1_i32_0 = arith.constant 1 : i32
    %2 = arith.subi %c1_i32_0, %arg0 : i32
    %3 = arith.muli %arg2, %2 : i32
    %c0_i32 = arith.constant 0 : i32
    %c0_i32_1 = arith.constant 0 : i32
    return %1, %3, %c0_i32 : i32, i32, i32
  }
  func.func @transform_1(%arg0: i32, %arg1: i32, %arg2: i32) -> (i32, i32) {
    %c0_i32 = arith.constant 0 : i32
    %c0_i32_0 = arith.constant 0 : i32
    %c0_i32_1 = arith.constant 0 : i32
    return %c0_i32, %c0_i32_0 : i32, i32
  }
  func.func @transform_2(%arg0: i32, %arg1: i32, %arg2: i32) -> (i32, i32) {
    %c0_i32 = arith.constant 0 : i32
    %c0_i32_0 = arith.constant 0 : i32
    %c0_i32_1 = arith.constant 0 : i32
    return %c0_i32, %c0_i32_0 : i32, i32
  }
  func.func @transform_3(%arg0: i32, %arg1: i32, %arg2: i32) -> (i32, i32) {
    %c0_i32 = arith.constant 0 : i32
    %c0_i32_0 = arith.constant 0 : i32
    %c0_i32_1 = arith.constant 0 : i32
    return %c0_i32, %c0_i32_0 : i32, i32
  }
  func.func @transform_4(%arg0: i32, %arg1: i32, %arg2: i32) -> (i32, i32) {
    %c0_i32 = arith.constant 0 : i32
    %c0_i32_0 = arith.constant 0 : i32
    %c0_i32_1 = arith.constant 0 : i32
    return %c0_i32, %c0_i32_0 : i32, i32
  }
  func.func @transform_5(%arg0: i32, %arg1: i32, %arg2: i32) -> (i32, i32, i32) {
    %0 = arith.muli %arg1, %arg0 : i32
    %1 = arith.muli %arg2, %arg0 : i32
    %c0_i32 = arith.constant 0 : i32
    %c0_i32_0 = arith.constant 0 : i32
    return %0, %1, %c0_i32 : i32, i32, i32
  }
}

module attributes {stable_mosaic.version = 11 : i64} {
  func.func @_tail_kernel(%arg0: memref<512x128xbf16, #tpu.memory_space<vmem>>, %arg1: memref<3x128x128xbf16, #tpu.memory_space<vmem>>, %arg2: memref<3x128xf32, #tpu.memory_space<vmem>>, %arg3: memref<3x128x128xbf16, #tpu.memory_space<vmem>>, %arg4: memref<3x128xf32, #tpu.memory_space<vmem>>, %arg5: memref<3x128x128xbf16, #tpu.memory_space<vmem>>, %arg6: memref<3x128xf32, #tpu.memory_space<vmem>>, %arg7: memref<128x1xf32, #tpu.memory_space<vmem>>, %arg8: memref<1x1xf32, #tpu.memory_space<vmem>>, %arg9: memref<2x1xf32, #tpu.memory_space<vmem>>, %arg10: memref<512x128xf32, #tpu.memory_space<vmem>>) attributes {dimension_semantics = [], scalar_prefetch = 0 : i64, scratch_operands = 1 : i64, tpu.core_type = #tpu.core_type<tc>} {
    %c0 = arith.constant 0 : index
    %c0_0 = arith.constant 0 : index
    %0 = vector.load %arg0[%c0, %c0_0] : memref<512x128xbf16, #tpu.memory_space<vmem>>, vector<512x128xbf16>
    %c0_1 = arith.constant 0 : index
    %c0_2 = arith.constant 0 : index
    %c0_3 = arith.constant 0 : index
    %1 = vector.load %arg1[%c0_1, %c0_2, %c0_3] : memref<3x128x128xbf16, #tpu.memory_space<vmem>>, vector<1x128x128xbf16>
    %2 = vector.shape_cast %1 : vector<1x128x128xbf16> to vector<128x128xbf16>
    %cst = arith.constant dense<0.000000e+00> : vector<512x128xf32>
    %3 = tpu.matmul %0, %2, %cst {dimension_numbers = #tpu.dot_dimension_numbers<[1], [0], [0], [1], [0, 0, 1, 1], [], []>} : vector<512x128xbf16>, vector<128x128xbf16>, vector<512x128xf32> -> vector<512x128xf32>
    %c1 = arith.constant 1 : index
    %c0_4 = arith.constant 0 : index
    %c0_5 = arith.constant 0 : index
    %4 = vector.load %arg1[%c1, %c0_4, %c0_5] : memref<3x128x128xbf16, #tpu.memory_space<vmem>>, vector<1x128x128xbf16>
    %5 = vector.shape_cast %4 : vector<1x128x128xbf16> to vector<128x128xbf16>
    %cst_6 = arith.constant dense<0.000000e+00> : vector<512x128xf32>
    %6 = tpu.matmul %0, %5, %cst_6 {dimension_numbers = #tpu.dot_dimension_numbers<[1], [0], [0], [1], [0, 0, 1, 1], [], []>} : vector<512x128xbf16>, vector<128x128xbf16>, vector<512x128xf32> -> vector<512x128xf32>
    %cst_7 = arith.constant 0.000000e+00 : f32
    %7 = vector.broadcast %cst_7 : f32 to vector<1x128xf32>
    %8 = vector.extract_strided_slice %6 {offsets = [1, 0], sizes = [511, 128], strides = [1, 1]} : vector<512x128xf32> to vector<511x128xf32>
    %9 = tpu.concatenate %8, %7 in 0 : vector<511x128xf32>, vector<1x128xf32> -> vector<512x128xf32>
    %10 = arith.addf %3, %9 : vector<512x128xf32>
    %c2 = arith.constant 2 : index
    %c0_8 = arith.constant 0 : index
    %c0_9 = arith.constant 0 : index
    %11 = vector.load %arg1[%c2, %c0_8, %c0_9] : memref<3x128x128xbf16, #tpu.memory_space<vmem>>, vector<1x128x128xbf16>
    %12 = vector.shape_cast %11 : vector<1x128x128xbf16> to vector<128x128xbf16>
    %cst_10 = arith.constant dense<0.000000e+00> : vector<512x128xf32>
    %13 = tpu.matmul %0, %12, %cst_10 {dimension_numbers = #tpu.dot_dimension_numbers<[1], [0], [0], [1], [0, 0, 1, 1], [], []>} : vector<512x128xbf16>, vector<128x128xbf16>, vector<512x128xf32> -> vector<512x128xf32>
    %cst_11 = arith.constant 0.000000e+00 : f32
    %14 = vector.broadcast %cst_11 : f32 to vector<2x128xf32>
    %15 = vector.extract_strided_slice %13 {offsets = [2, 0], sizes = [510, 128], strides = [1, 1]} : vector<512x128xf32> to vector<510x128xf32>
    %16 = tpu.concatenate %15, %14 in 0 : vector<510x128xf32>, vector<2x128xf32> -> vector<512x128xf32>
    %17 = arith.addf %10, %16 : vector<512x128xf32>
    %c0_12 = arith.constant 0 : index
    %c0_13 = arith.constant 0 : index
    %18 = vector.load %arg2[%c0_12, %c0_13] : memref<3x128xf32, #tpu.memory_space<vmem>>, vector<1x128xf32>
    %19 = vector.broadcast %18 : vector<1x128xf32> to vector<512x128xf32>
    %20 = arith.addf %17, %19 : vector<512x128xf32>
    %21 = tpu.iota {dimensions = array<i32: 0>} : vector<512x1xi32>
    %c256_i32 = arith.constant 256 : i32
    %c0_i32 = arith.constant 0 : i32
    %22 = arith.cmpi eq, %c256_i32, %c0_i32 : i32
    %c1_i32 = arith.constant 1 : i32
    %23 = arith.select %22, %c1_i32, %c256_i32 : i32
    %24 = vector.broadcast %23 : i32 to vector<512x1xi32>
    %25 = arith.remsi %21, %24 : vector<512x1xi32>
    %c0_i32_14 = arith.constant 0 : i32
    %26 = vector.broadcast %c0_i32_14 : i32 to vector<512x1xi32>
    %27 = arith.cmpi ne, %25, %26 : vector<512x1xi32>
    %c0_i32_15 = arith.constant 0 : i32
    %28 = vector.broadcast %c0_i32_15 : i32 to vector<512x1xi32>
    %29 = arith.cmpi slt, %25, %28 : vector<512x1xi32>
    %c0_i32_16 = arith.constant 0 : i32
    %30 = arith.cmpi slt, %23, %c0_i32_16 : i32
    %31 = vector.broadcast %30 : i1 to vector<512x1xi1>
    %32 = vector.broadcast %31 : vector<512x1xi1> to vector<512x1xi1>
    %33 = arith.xori %29, %32 : vector<512x1xi1>
    %34 = arith.andi %33, %27 : vector<512x1xi1>
    %35 = vector.broadcast %23 : i32 to vector<512x1xi32>
    %36 = arith.addi %25, %35 : vector<512x1xi32>
    %37 = arith.select %34, %36, %25 : vector<512x1xi1>, vector<512x1xi32>
    %c121_i32 = arith.constant 121 : i32
    %38 = vector.broadcast %c121_i32 : i32 to vector<512x1xi32>
    %39 = arith.cmpi slt, %37, %38 : vector<512x1xi32>
    %cst_17 = arith.constant 0.000000e+00 : f32
    %40 = vector.shape_cast %39 : vector<512x1xi1> to vector<512x1xi1>
    %41 = vector.broadcast %40 : vector<512x1xi1> to vector<512x128xi1>
    %42 = vector.broadcast %cst_17 : f32 to vector<512x128xf32>
    %43 = arith.select %41, %20, %42 : vector<512x128xi1>, vector<512x128xf32>
    %cst_18 = arith.constant dense<0.000000e+00> : vector<128xf32>
    %44 = vector.multi_reduction <add>, %43, %cst_18 [0] : vector<512x128xf32> to vector<128xf32>
    %45 = vector.shape_cast %44 : vector<128xf32> to vector<1x128xf32>
    %cst_19 = arith.constant 0.00413223123 : f32
    %46 = vector.broadcast %cst_19 : f32 to vector<1x128xf32>
    %47 = arith.mulf %45, %46 : vector<1x128xf32>
    %48 = arith.mulf %43, %43 : vector<512x128xf32>
    %cst_20 = arith.constant dense<0.000000e+00> : vector<128xf32>
    %49 = vector.multi_reduction <add>, %48, %cst_20 [0] : vector<512x128xf32> to vector<128xf32>
    %50 = vector.shape_cast %49 : vector<128xf32> to vector<1x128xf32>
    %cst_21 = arith.constant 0.00413223123 : f32
    %51 = vector.broadcast %cst_21 : f32 to vector<1x128xf32>
    %52 = arith.mulf %50, %51 : vector<1x128xf32>
    %53 = arith.mulf %47, %47 : vector<1x128xf32>
    %54 = arith.subf %52, %53 : vector<1x128xf32>
    %cst_22 = arith.constant 9.99999974E-6 : f32
    %55 = vector.broadcast %cst_22 : f32 to vector<1x128xf32>
    %56 = arith.addf %54, %55 : vector<1x128xf32>
    %57 = math.rsqrt %56 : vector<1x128xf32>
    %c1_23 = arith.constant 1 : index
    %c0_24 = arith.constant 0 : index
    %58 = vector.load %arg2[%c1_23, %c0_24] : memref<3x128xf32, #tpu.memory_space<vmem>>, vector<1x128xf32>
    %59 = arith.mulf %57, %58 : vector<1x128xf32>
    %60 = vector.broadcast %47 : vector<1x128xf32> to vector<512x128xf32>
    %61 = arith.subf %20, %60 : vector<512x128xf32>
    %62 = vector.broadcast %59 : vector<1x128xf32> to vector<512x128xf32>
    %63 = arith.mulf %61, %62 : vector<512x128xf32>
    %c2_25 = arith.constant 2 : index
    %c0_26 = arith.constant 0 : index
    %64 = vector.load %arg2[%c2_25, %c0_26] : memref<3x128xf32, #tpu.memory_space<vmem>>, vector<1x128xf32>
    %65 = vector.broadcast %64 : vector<1x128xf32> to vector<512x128xf32>
    %66 = arith.addf %63, %65 : vector<512x128xf32>
    %cst_27 = arith.constant 0.000000e+00 : f32
    %67 = vector.broadcast %cst_27 : f32 to vector<512x128xf32>
    %68 = arith.maximumf %66, %67 : vector<512x128xf32>
    %c0_28 = arith.constant 0 : index
    %c0_29 = arith.constant 0 : index
    %69 = vector.load %arg10[%c0_28, %c0_29] : memref<512x128xf32, #tpu.memory_space<vmem>>, vector<512x128xf32>
    tpu.vector_store %arg10[%c0_28, %c0_29], %68 {strides = array<i32>} : memref<512x128xf32, #tpu.memory_space<vmem>>, vector<512x128xf32>,
    %c0_30 = arith.constant 0 : index
    %c0_31 = arith.constant 0 : index
    %70 = tpu.strided_load %arg10[%c0_30, %c0_31] {strides = array<i32: 4, 1>} : memref<512x128xf32, #tpu.memory_space<vmem>>, vector<128x128xf32>
    %c1_32 = arith.constant 1 : index
    %c0_33 = arith.constant 0 : index
    %71 = tpu.strided_load %arg10[%c1_32, %c0_33] {strides = array<i32: 4, 1>} : memref<512x128xf32, #tpu.memory_space<vmem>>, vector<128x128xf32>
    %72 = arith.maximumf %70, %71 : vector<128x128xf32>
    %c2_34 = arith.constant 2 : index
    %c0_35 = arith.constant 0 : index
    %73 = tpu.strided_load %arg10[%c2_34, %c0_35] {strides = array<i32: 4, 1>} : memref<512x128xf32, #tpu.memory_space<vmem>>, vector<128x128xf32>
    %74 = arith.maximumf %72, %73 : vector<128x128xf32>
    %c3 = arith.constant 3 : index
    %c0_36 = arith.constant 0 : index
    %75 = tpu.strided_load %arg10[%c3, %c0_36] {strides = array<i32: 4, 1>} : memref<512x128xf32, #tpu.memory_space<vmem>>, vector<128x128xf32>
    %76 = arith.maximumf %74, %75 : vector<128x128xf32>
    %77 = arith.truncf %76 : vector<128x128xf32> to vector<128x128xbf16>
    %c0_37 = arith.constant 0 : index
    %c0_38 = arith.constant 0 : index
    %c0_39 = arith.constant 0 : index
    %78 = vector.load %arg3[%c0_37, %c0_38, %c0_39] : memref<3x128x128xbf16, #tpu.memory_space<vmem>>, vector<1x128x128xbf16>
    %79 = vector.shape_cast %78 : vector<1x128x128xbf16> to vector<128x128xbf16>
    %cst_40 = arith.constant dense<0.000000e+00> : vector<128x128xf32>
    %80 = tpu.matmul %77, %79, %cst_40 {dimension_numbers = #tpu.dot_dimension_numbers<[1], [0], [0], [1], [0, 0, 1, 1], [], []>} : vector<128x128xbf16>, vector<128x128xbf16>, vector<128x128xf32> -> vector<128x128xf32>
    %c1_41 = arith.constant 1 : index
    %c0_42 = arith.constant 0 : index
    %c0_43 = arith.constant 0 : index
    %81 = vector.load %arg3[%c1_41, %c0_42, %c0_43] : memref<3x128x128xbf16, #tpu.memory_space<vmem>>, vector<1x128x128xbf16>
    %82 = vector.shape_cast %81 : vector<1x128x128xbf16> to vector<128x128xbf16>
    %cst_44 = arith.constant dense<0.000000e+00> : vector<128x128xf32>
    %83 = tpu.matmul %77, %82, %cst_44 {dimension_numbers = #tpu.dot_dimension_numbers<[1], [0], [0], [1], [0, 0, 1, 1], [], []>} : vector<128x128xbf16>, vector<128x128xbf16>, vector<128x128xf32> -> vector<128x128xf32>
    %cst_45 = arith.constant 0.000000e+00 : f32
    %84 = vector.broadcast %cst_45 : f32 to vector<1x128xf32>
    %85 = vector.extract_strided_slice %83 {offsets = [1, 0], sizes = [127, 128], strides = [1, 1]} : vector<128x128xf32> to vector<127x128xf32>
    %86 = tpu.concatenate %85, %84 in 0 : vector<127x128xf32>, vector<1x128xf32> -> vector<128x128xf32>
    %87 = arith.addf %80, %86 : vector<128x128xf32>
    %c2_46 = arith.constant 2 : index
    %c0_47 = arith.constant 0 : index
    %c0_48 = arith.constant 0 : index
    %88 = vector.load %arg3[%c2_46, %c0_47, %c0_48] : memref<3x128x128xbf16, #tpu.memory_space<vmem>>, vector<1x128x128xbf16>
    %89 = vector.shape_cast %88 : vector<1x128x128xbf16> to vector<128x128xbf16>
    %cst_49 = arith.constant dense<0.000000e+00> : vector<128x128xf32>
    %90 = tpu.matmul %77, %89, %cst_49 {dimension_numbers = #tpu.dot_dimension_numbers<[1], [0], [0], [1], [0, 0, 1, 1], [], []>} : vector<128x128xbf16>, vector<128x128xbf16>, vector<128x128xf32> -> vector<128x128xf32>
    %cst_50 = arith.constant 0.000000e+00 : f32
    %91 = vector.broadcast %cst_50 : f32 to vector<2x128xf32>
    %92 = vector.extract_strided_slice %90 {offsets = [2, 0], sizes = [126, 128], strides = [1, 1]} : vector<128x128xf32> to vector<126x128xf32>
    %93 = tpu.concatenate %92, %91 in 0 : vector<126x128xf32>, vector<2x128xf32> -> vector<128x128xf32>
    %94 = arith.addf %87, %93 : vector<128x128xf32>
    %c0_51 = arith.constant 0 : index
    %c0_52 = arith.constant 0 : index
    %95 = vector.load %arg4[%c0_51, %c0_52] : memref<3x128xf32, #tpu.memory_space<vmem>>, vector<1x128xf32>
    %96 = vector.broadcast %95 : vector<1x128xf32> to vector<128x128xf32>
    %97 = arith.addf %94, %96 : vector<128x128xf32>
    %98 = tpu.iota {dimensions = array<i32: 0>} : vector<128x1xi32>
    %c64_i32 = arith.constant 64 : i32
    %c0_i32_53 = arith.constant 0 : i32
    %99 = arith.cmpi eq, %c64_i32, %c0_i32_53 : i32
    %c1_i32_54 = arith.constant 1 : i32
    %100 = arith.select %99, %c1_i32_54, %c64_i32 : i32
    %101 = vector.broadcast %100 : i32 to vector<128x1xi32>
    %102 = arith.remsi %98, %101 : vector<128x1xi32>
    %c0_i32_55 = arith.constant 0 : i32
    %103 = vector.broadcast %c0_i32_55 : i32 to vector<128x1xi32>
    %104 = arith.cmpi ne, %102, %103 : vector<128x1xi32>
    %c0_i32_56 = arith.constant 0 : i32
    %105 = vector.broadcast %c0_i32_56 : i32 to vector<128x1xi32>
    %106 = arith.cmpi slt, %102, %105 : vector<128x1xi32>
    %c0_i32_57 = arith.constant 0 : i32
    %107 = arith.cmpi slt, %100, %c0_i32_57 : i32
    %108 = vector.broadcast %107 : i1 to vector<128x1xi1>
    %109 = vector.broadcast %108 : vector<128x1xi1> to vector<128x1xi1>
    %110 = arith.xori %106, %109 : vector<128x1xi1>
    %111 = arith.andi %110, %104 : vector<128x1xi1>
    %112 = vector.broadcast %100 : i32 to vector<128x1xi32>
    %113 = arith.addi %102, %112 : vector<128x1xi32>
    %114 = arith.select %111, %113, %102 : vector<128x1xi1>, vector<128x1xi32>
    %c28_i32 = arith.constant 28 : i32
    %115 = vector.broadcast %c28_i32 : i32 to vector<128x1xi32>
    %116 = arith.cmpi slt, %114, %115 : vector<128x1xi32>
    %cst_58 = arith.constant 0.000000e+00 : f32
    %117 = vector.shape_cast %116 : vector<128x1xi1> to vector<128x1xi1>
    %118 = vector.broadcast %117 : vector<128x1xi1> to vector<128x128xi1>
    %119 = vector.broadcast %cst_58 : f32 to vector<128x128xf32>
    %120 = arith.select %118, %97, %119 : vector<128x128xi1>, vector<128x128xf32>
    %cst_59 = arith.constant dense<0.000000e+00> : vector<128xf32>
    %121 = vector.multi_reduction <add>, %120, %cst_59 [0] : vector<128x128xf32> to vector<128xf32>
    %122 = vector.shape_cast %121 : vector<128xf32> to vector<1x128xf32>
    %cst_60 = arith.constant 0.0178571437 : f32
    %123 = vector.broadcast %cst_60 : f32 to vector<1x128xf32>
    %124 = arith.mulf %122, %123 : vector<1x128xf32>
    %125 = arith.mulf %120, %120 : vector<128x128xf32>
    %cst_61 = arith.constant dense<0.000000e+00> : vector<128xf32>
    %126 = vector.multi_reduction <add>, %125, %cst_61 [0] : vector<128x128xf32> to vector<128xf32>
    %127 = vector.shape_cast %126 : vector<128xf32> to vector<1x128xf32>
    %cst_62 = arith.constant 0.0178571437 : f32
    %128 = vector.broadcast %cst_62 : f32 to vector<1x128xf32>
    %129 = arith.mulf %127, %128 : vector<1x128xf32>
    %130 = arith.mulf %124, %124 : vector<1x128xf32>
    %131 = arith.subf %129, %130 : vector<1x128xf32>
    %cst_63 = arith.constant 9.99999974E-6 : f32
    %132 = vector.broadcast %cst_63 : f32 to vector<1x128xf32>
    %133 = arith.addf %131, %132 : vector<1x128xf32>
    %134 = math.rsqrt %133 : vector<1x128xf32>
    %c1_64 = arith.constant 1 : index
    %c0_65 = arith.constant 0 : index
    %135 = vector.load %arg4[%c1_64, %c0_65] : memref<3x128xf32, #tpu.memory_space<vmem>>, vector<1x128xf32>
    %136 = arith.mulf %134, %135 : vector<1x128xf32>
    %137 = vector.broadcast %124 : vector<1x128xf32> to vector<128x128xf32>
    %138 = arith.subf %97, %137 : vector<128x128xf32>
    %139 = vector.broadcast %136 : vector<1x128xf32> to vector<128x128xf32>
    %140 = arith.mulf %138, %139 : vector<128x128xf32>
    %c2_66 = arith.constant 2 : index
    %c0_67 = arith.constant 0 : index
    %141 = vector.load %arg4[%c2_66, %c0_67] : memref<3x128xf32, #tpu.memory_space<vmem>>, vector<1x128xf32>
    %142 = vector.broadcast %141 : vector<1x128xf32> to vector<128x128xf32>
    %143 = arith.addf %140, %142 : vector<128x128xf32>
    %cst_68 = arith.constant 0.000000e+00 : f32
    %144 = vector.broadcast %cst_68 : f32 to vector<128x128xf32>
    %145 = arith.maximumf %143, %144 : vector<128x128xf32>
    %c0_69 = arith.constant 0 : index
    %c0_70 = arith.constant 0 : index
    %146 = vector.load %arg10[%c0_69, %c0_70] : memref<512x128xf32, #tpu.memory_space<vmem>>, vector<128x128xf32>
    tpu.vector_store %arg10[%c0_69, %c0_70], %145 {strides = array<i32>} : memref<512x128xf32, #tpu.memory_space<vmem>>, vector<128x128xf32>,
    %c0_71 = arith.constant 0 : index
    %c0_72 = arith.constant 0 : index
    %147 = tpu.strided_load %arg10[%c0_71, %c0_72] {strides = array<i32: 4, 1>} : memref<512x128xf32, #tpu.memory_space<vmem>>, vector<32x128xf32>
    %c1_73 = arith.constant 1 : index
    %c0_74 = arith.constant 0 : index
    %148 = tpu.strided_load %arg10[%c1_73, %c0_74] {strides = array<i32: 4, 1>} : memref<512x128xf32, #tpu.memory_space<vmem>>, vector<32x128xf32>
    %149 = arith.maximumf %147, %148 : vector<32x128xf32>
    %c2_75 = arith.constant 2 : index
    %c0_76 = arith.constant 0 : index
    %150 = tpu.strided_load %arg10[%c2_75, %c0_76] {strides = array<i32: 4, 1>} : memref<512x128xf32, #tpu.memory_space<vmem>>, vector<32x128xf32>
    %151 = arith.maximumf %149, %150 : vector<32x128xf32>
    %c3_77 = arith.constant 3 : index
    %c0_78 = arith.constant 0 : index
    %152 = tpu.strided_load %arg10[%c3_77, %c0_78] {strides = array<i32: 4, 1>} : memref<512x128xf32, #tpu.memory_space<vmem>>, vector<32x128xf32>
    %153 = arith.maximumf %151, %152 : vector<32x128xf32>
    %154 = arith.truncf %153 : vector<32x128xf32> to vector<32x128xbf16>
    %c0_79 = arith.constant 0 : index
    %c0_80 = arith.constant 0 : index
    %c0_81 = arith.constant 0 : index
    %155 = vector.load %arg5[%c0_79, %c0_80, %c0_81] : memref<3x128x128xbf16, #tpu.memory_space<vmem>>, vector<1x128x128xbf16>
    %156 = vector.shape_cast %155 : vector<1x128x128xbf16> to vector<128x128xbf16>
    %cst_82 = arith.constant dense<0.000000e+00> : vector<32x128xf32>
    %157 = tpu.matmul %154, %156, %cst_82 {dimension_numbers = #tpu.dot_dimension_numbers<[1], [0], [0], [1], [0, 0, 1, 1], [], []>} : vector<32x128xbf16>, vector<128x128xbf16>, vector<32x128xf32> -> vector<32x128xf32>
    %c1_83 = arith.constant 1 : index
    %c0_84 = arith.constant 0 : index
    %c0_85 = arith.constant 0 : index
    %158 = vector.load %arg5[%c1_83, %c0_84, %c0_85] : memref<3x128x128xbf16, #tpu.memory_space<vmem>>, vector<1x128x128xbf16>
    %159 = vector.shape_cast %158 : vector<1x128x128xbf16> to vector<128x128xbf16>
    %cst_86 = arith.constant dense<0.000000e+00> : vector<32x128xf32>
    %160 = tpu.matmul %154, %159, %cst_86 {dimension_numbers = #tpu.dot_dimension_numbers<[1], [0], [0], [1], [0, 0, 1, 1], [], []>} : vector<32x128xbf16>, vector<128x128xbf16>, vector<32x128xf32> -> vector<32x128xf32>
    %cst_87 = arith.constant 0.000000e+00 : f32
    %161 = vector.broadcast %cst_87 : f32 to vector<1x128xf32>
    %162 = vector.extract_strided_slice %160 {offsets = [1, 0], sizes = [31, 128], strides = [1, 1]} : vector<32x128xf32> to vector<31x128xf32>
    %163 = tpu.concatenate %162, %161 in 0 : vector<31x128xf32>, vector<1x128xf32> -> vector<32x128xf32>
    %164 = arith.addf %157, %163 : vector<32x128xf32>
    %c2_88 = arith.constant 2 : index
    %c0_89 = arith.constant 0 : index
    %c0_90 = arith.constant 0 : index
    %165 = vector.load %arg5[%c2_88, %c0_89, %c0_90] : memref<3x128x128xbf16, #tpu.memory_space<vmem>>, vector<1x128x128xbf16>
    %166 = vector.shape_cast %165 : vector<1x128x128xbf16> to vector<128x128xbf16>
    %cst_91 = arith.constant dense<0.000000e+00> : vector<32x128xf32>
    %167 = tpu.matmul %154, %166, %cst_91 {dimension_numbers = #tpu.dot_dimension_numbers<[1], [0], [0], [1], [0, 0, 1, 1], [], []>} : vector<32x128xbf16>, vector<128x128xbf16>, vector<32x128xf32> -> vector<32x128xf32>
    %cst_92 = arith.constant 0.000000e+00 : f32
    %168 = vector.broadcast %cst_92 : f32 to vector<2x128xf32>
    %169 = vector.extract_strided_slice %167 {offsets = [2, 0], sizes = [30, 128], strides = [1, 1]} : vector<32x128xf32> to vector<30x128xf32>
    %170 = tpu.concatenate %169, %168 in 0 : vector<30x128xf32>, vector<2x128xf32> -> vector<32x128xf32>
    %171 = arith.addf %164, %170 : vector<32x128xf32>
    %c0_93 = arith.constant 0 : index
    %c0_94 = arith.constant 0 : index
    %172 = vector.load %arg6[%c0_93, %c0_94] : memref<3x128xf32, #tpu.memory_space<vmem>>, vector<1x128xf32>
    %173 = vector.broadcast %172 : vector<1x128xf32> to vector<32x128xf32>
    %174 = arith.addf %171, %173 : vector<32x128xf32>
    %175 = tpu.iota {dimensions = array<i32: 0>} : vector<32x1xi32>
    %c16_i32 = arith.constant 16 : i32
    %c0_i32_95 = arith.constant 0 : i32
    %176 = arith.cmpi eq, %c16_i32, %c0_i32_95 : i32
    %c1_i32_96 = arith.constant 1 : i32
    %177 = arith.select %176, %c1_i32_96, %c16_i32 : i32
    %178 = vector.broadcast %177 : i32 to vector<32x1xi32>
    %179 = arith.remsi %175, %178 : vector<32x1xi32>
    %c0_i32_97 = arith.constant 0 : i32
    %180 = vector.broadcast %c0_i32_97 : i32 to vector<32x1xi32>
    %181 = arith.cmpi ne, %179, %180 : vector<32x1xi32>
    %c0_i32_98 = arith.constant 0 : i32
    %182 = vector.broadcast %c0_i32_98 : i32 to vector<32x1xi32>
    %183 = arith.cmpi slt, %179, %182 : vector<32x1xi32>
    %c0_i32_99 = arith.constant 0 : i32
    %184 = arith.cmpi slt, %177, %c0_i32_99 : i32
    %185 = vector.broadcast %184 : i1 to vector<32x1xi1>
    %186 = vector.broadcast %185 : vector<32x1xi1> to vector<32x1xi1>
    %187 = arith.xori %183, %186 : vector<32x1xi1>
    %188 = arith.andi %187, %181 : vector<32x1xi1>
    %189 = vector.broadcast %177 : i32 to vector<32x1xi32>
    %190 = arith.addi %179, %189 : vector<32x1xi32>
    %191 = arith.select %188, %190, %179 : vector<32x1xi1>, vector<32x1xi32>
    %c5_i32 = arith.constant 5 : i32
    %192 = vector.broadcast %c5_i32 : i32 to vector<32x1xi32>
    %193 = arith.cmpi slt, %191, %192 : vector<32x1xi32>
    %cst_100 = arith.constant 0.000000e+00 : f32
    %194 = vector.shape_cast %193 : vector<32x1xi1> to vector<32x1xi1>
    %195 = vector.broadcast %194 : vector<32x1xi1> to vector<32x128xi1>
    %196 = vector.broadcast %cst_100 : f32 to vector<32x128xf32>
    %197 = arith.select %195, %174, %196 : vector<32x128xi1>, vector<32x128xf32>
    %cst_101 = arith.constant dense<0.000000e+00> : vector<128xf32>
    %198 = vector.multi_reduction <add>, %197, %cst_101 [0] : vector<32x128xf32> to vector<128xf32>
    %199 = vector.shape_cast %198 : vector<128xf32> to vector<1x128xf32>
    %cst_102 = arith.constant 1.000000e-01 : f32
    %200 = vector.broadcast %cst_102 : f32 to vector<1x128xf32>
    %201 = arith.mulf %199, %200 : vector<1x128xf32>
    %202 = arith.mulf %197, %197 : vector<32x128xf32>
    %cst_103 = arith.constant dense<0.000000e+00> : vector<128xf32>
    %203 = vector.multi_reduction <add>, %202, %cst_103 [0] : vector<32x128xf32> to vector<128xf32>
    %204 = vector.shape_cast %203 : vector<128xf32> to vector<1x128xf32>
    %cst_104 = arith.constant 1.000000e-01 : f32
    %205 = vector.broadcast %cst_104 : f32 to vector<1x128xf32>
    %206 = arith.mulf %204, %205 : vector<1x128xf32>
    %207 = arith.mulf %201, %201 : vector<1x128xf32>
    %208 = arith.subf %206, %207 : vector<1x128xf32>
    %cst_105 = arith.constant 9.99999974E-6 : f32
    %209 = vector.broadcast %cst_105 : f32 to vector<1x128xf32>
    %210 = arith.addf %208, %209 : vector<1x128xf32>
    %211 = math.rsqrt %210 : vector<1x128xf32>
    %c1_106 = arith.constant 1 : index
    %c0_107 = arith.constant 0 : index
    %212 = vector.load %arg6[%c1_106, %c0_107] : memref<3x128xf32, #tpu.memory_space<vmem>>, vector<1x128xf32>
    %213 = arith.mulf %211, %212 : vector<1x128xf32>
    %214 = vector.broadcast %201 : vector<1x128xf32> to vector<32x128xf32>
    %215 = arith.subf %174, %214 : vector<32x128xf32>
    %216 = vector.broadcast %213 : vector<1x128xf32> to vector<32x128xf32>
    %217 = arith.mulf %215, %216 : vector<32x128xf32>
    %c2_108 = arith.constant 2 : index
    %c0_109 = arith.constant 0 : index
    %218 = vector.load %arg6[%c2_108, %c0_109] : memref<3x128xf32, #tpu.memory_space<vmem>>, vector<1x128xf32>
    %219 = vector.broadcast %218 : vector<1x128xf32> to vector<32x128xf32>
    %220 = arith.addf %217, %219 : vector<32x128xf32>
    %cst_110 = arith.constant 0.000000e+00 : f32
    %221 = vector.broadcast %cst_110 : f32 to vector<32x128xf32>
    %222 = arith.maximumf %220, %221 : vector<32x128xf32>
    %c0_111 = arith.constant 0 : index
    %c0_112 = arith.constant 0 : index
    %223 = vector.load %arg10[%c0_111, %c0_112] : memref<512x128xf32, #tpu.memory_space<vmem>>, vector<32x128xf32>
    tpu.vector_store %arg10[%c0_111, %c0_112], %222 {strides = array<i32>} : memref<512x128xf32, #tpu.memory_space<vmem>>, vector<32x128xf32>,
    %c0_113 = arith.constant 0 : index
    %c0_114 = arith.constant 0 : index
    %224 = tpu.strided_load %arg10[%c0_113, %c0_114] {strides = array<i32: 4, 1>} : memref<512x128xf32, #tpu.memory_space<vmem>>, vector<8x128xf32>
    %c1_115 = arith.constant 1 : index
    %c0_116 = arith.constant 0 : index
    %225 = tpu.strided_load %arg10[%c1_115, %c0_116] {strides = array<i32: 4, 1>} : memref<512x128xf32, #tpu.memory_space<vmem>>, vector<8x128xf32>
    %226 = arith.maximumf %224, %225 : vector<8x128xf32>
    %c2_117 = arith.constant 2 : index
    %c0_118 = arith.constant 0 : index
    %227 = tpu.strided_load %arg10[%c2_117, %c0_118] {strides = array<i32: 4, 1>} : memref<512x128xf32, #tpu.memory_space<vmem>>, vector<8x128xf32>
    %228 = arith.maximumf %226, %227 : vector<8x128xf32>
    %c3_119 = arith.constant 3 : index
    %c0_120 = arith.constant 0 : index
    %229 = tpu.strided_load %arg10[%c3_119, %c0_120] {strides = array<i32: 4, 1>} : memref<512x128xf32, #tpu.memory_space<vmem>>, vector<8x128xf32>
    %230 = arith.maximumf %228, %229 : vector<8x128xf32>
    %231 = tpu.iota {dimensions = array<i32: 0>} : vector<8x1xi32>
    %c4_i32 = arith.constant 4 : i32
    %c0_i32_121 = arith.constant 0 : i32
    %232 = arith.cmpi eq, %c4_i32, %c0_i32_121 : i32
    %c1_i32_122 = arith.constant 1 : i32
    %233 = arith.select %232, %c1_i32_122, %c4_i32 : i32
    %234 = vector.broadcast %233 : i32 to vector<8x1xi32>
    %235 = arith.remsi %231, %234 : vector<8x1xi32>
    %c0_i32_123 = arith.constant 0 : i32
    %236 = vector.broadcast %c0_i32_123 : i32 to vector<8x1xi32>
    %237 = arith.cmpi ne, %235, %236 : vector<8x1xi32>
    %c0_i32_124 = arith.constant 0 : i32
    %238 = vector.broadcast %c0_i32_124 : i32 to vector<8x1xi32>
    %239 = arith.cmpi slt, %235, %238 : vector<8x1xi32>
    %c0_i32_125 = arith.constant 0 : i32
    %240 = arith.cmpi slt, %233, %c0_i32_125 : i32
    %241 = vector.broadcast %240 : i1 to vector<8x1xi1>
    %242 = vector.broadcast %241 : vector<8x1xi1> to vector<8x1xi1>
    %243 = arith.xori %239, %242 : vector<8x1xi1>
    %244 = arith.andi %243, %237 : vector<8x1xi1>
    %245 = vector.broadcast %233 : i32 to vector<8x1xi32>
    %246 = arith.addi %235, %245 : vector<8x1xi32>
    %247 = arith.select %244, %246, %235 : vector<8x1xi1>, vector<8x1xi32>
    %c1_i32_126 = arith.constant 1 : i32
    %248 = vector.broadcast %c1_i32_126 : i32 to vector<8x1xi32>
    %249 = arith.cmpi slt, %247, %248 : vector<8x1xi32>
    %cst_127 = arith.constant 0.000000e+00 : f32
    %250 = vector.shape_cast %249 : vector<8x1xi1> to vector<8x1xi1>
    %251 = vector.broadcast %250 : vector<8x1xi1> to vector<8x128xi1>
    %252 = vector.broadcast %cst_127 : f32 to vector<8x128xf32>
    %253 = arith.select %251, %230, %252 : vector<8x128xi1>, vector<8x128xf32>
    %c0_128 = arith.constant 0 : index
    %c0_129 = arith.constant 0 : index
    %254 = vector.load %arg7[%c0_128, %c0_129] : memref<128x1xf32, #tpu.memory_space<vmem>>, vector<128x1xf32>
    %c0_130 = arith.constant 0 : index
    %c0_131 = arith.constant 0 : index
    %255 = vector.load %arg8[%c0_130, %c0_131] : memref<1x1xf32, #tpu.memory_space<vmem>>, vector<1x1xf32>
    %256 = vector.extract_strided_slice %253 {offsets = [0, 0], sizes = [4, 128], strides = [1, 1]} : vector<8x128xf32> to vector<4x128xf32>
    %cst_132 = arith.constant dense<0.000000e+00> : vector<128xf32>
    %257 = vector.multi_reduction <add>, %256, %cst_132 [0] : vector<4x128xf32> to vector<128xf32>
    %258 = vector.shape_cast %257 : vector<128xf32> to vector<1x128xf32>
    %cst_133 = arith.constant 1.000000e+00 : f32
    %259 = vector.broadcast %cst_133 : f32 to vector<1x128xf32>
    %260 = arith.divf %258, %259 : vector<1x128xf32>
    %cst_134 = arith.constant dense<0.000000e+00> : vector<1x1xf32>
    %261 = tpu.matmul %260, %254, %cst_134 {dimension_numbers = #tpu.dot_dimension_numbers<[1], [0], [0], [1], [0, 0, 1, 1], [], []>} : vector<1x128xf32>, vector<128x1xf32>, vector<1x1xf32> -> vector<1x1xf32>
    %262 = arith.addf %261, %255 : vector<1x1xf32>
    %263 = vector.extract_strided_slice %253 {offsets = [4, 0], sizes = [4, 128], strides = [1, 1]} : vector<8x128xf32> to vector<4x128xf32>
    %cst_135 = arith.constant dense<0.000000e+00> : vector<128xf32>
    %264 = vector.multi_reduction <add>, %263, %cst_135 [0] : vector<4x128xf32> to vector<128xf32>
    %265 = vector.shape_cast %264 : vector<128xf32> to vector<1x128xf32>
    %cst_136 = arith.constant 1.000000e+00 : f32
    %266 = vector.broadcast %cst_136 : f32 to vector<1x128xf32>
    %267 = arith.divf %265, %266 : vector<1x128xf32>
    %cst_137 = arith.constant dense<0.000000e+00> : vector<1x1xf32>
    %268 = tpu.matmul %267, %254, %cst_137 {dimension_numbers = #tpu.dot_dimension_numbers<[1], [0], [0], [1], [0, 0, 1, 1], [], []>} : vector<1x128xf32>, vector<128x1xf32>, vector<1x1xf32> -> vector<1x1xf32>
    %269 = arith.addf %268, %255 : vector<1x1xf32>
    %270 = tpu.concatenate %262, %269 in 0 : vector<1x1xf32>, vector<1x1xf32> -> vector<2x1xf32>
    %cst_138 = arith.constant 0.000000e+00 : f32
    %271 = vector.broadcast %cst_138 : f32 to vector<2x1xf32>
    %272 = arith.subf %271, %270 : vector<2x1xf32>
    %273 = math.exp %272 : vector<2x1xf32>
    %cst_139 = arith.constant 1.000000e+00 : f32
    %274 = vector.broadcast %cst_139 : f32 to vector<2x1xf32>
    %275 = arith.addf %274, %273 : vector<2x1xf32>
    %cst_140 = arith.constant 1.000000e+00 : f32
    %276 = vector.broadcast %cst_140 : f32 to vector<2x1xf32>
    %277 = arith.divf %276, %275 : vector<2x1xf32>
    %c0_141 = arith.constant 0 : index
    %c0_142 = arith.constant 0 : index
    %278 = vector.load %arg9[%c0_141, %c0_142] : memref<2x1xf32, #tpu.memory_space<vmem>>, vector<2x1xf32>
    tpu.vector_store %arg9[%c0_141, %c0_142], %277 {strides = array<i32>} : memref<2x1xf32, #tpu.memory_space<vmem>>, vector<2x1xf32>,
    return
  }
}

</mosaic_0001>

<llo_original>
// kernel: net_aur_hpd_m5_forward.2
$region0: #{net_aur_hpd_m5_forward.2}
  #allocation0 [shape = 'u32[]', space=smem, size = 0x4, offset = 0x4, fixed_abs, tag = 'smem constant byte address 0x4 - core index']
  #allocation1 [shape = 'u32[144,128]{1,0:T(1,128)}', space=vmem, size = 0x12000, scoped, tag = 'internal scratch']
  #allocation2 [shape = 'f32[2048,128]{1,0:T(8,128)}', space=vmem, size = 0x100000, scoped, tag = 'scratch operand']
  #allocation3 [shape = 'f32[1,128]{1,0:T(1,128)}', space=vmem, size = 0x200, scoped, tag = 'scratch operand']
  #allocation4 [shape = 'f32[1,128]{1,0:T(1,128)}', space=vmem, size = 0x200, scoped, tag = 'scratch operand']
  %s0 = inlined_call_operand.vmem [shape: bf16[2,1024,128], index: 0, kind: input, shape index: {}]
  %s1 = inlined_call_operand.vmem [shape: bf16[128,128], index: 1, kind: input, shape index: {}]
  %s2 = inlined_call_operand.vmem [shape: f32[1,128], index: 2, kind: input, shape index: {}]
  %s3 = inlined_call_operand.vmem [shape: f32[1,128], index: 3, kind: input, shape index: {}]
  %s4 = inlined_call_operand.vmem [shape: f32[1,128], index: 4, kind: input, shape index: {}]
  %s5 = inlined_call_operand.vmem [shape: bf16[2,256,128], index: 5, kind: output, shape index: {}]
  %s6 = sld [smem:[#allocation0]]
  $region65: #{net_aur_hpd_m5_forward.2} parent=0
    _
  %s8 = ssub.s32 1, %s6
  %s9 = scalar_select 0, %s8, %s6
  loop: start=0, step=1, limit=6
  $region2: #{net_aur_hpd_m5_forward.2} parent=0 // loop_pre_header
    _
  $region3: #{net_aur_hpd_m5_forward.2} parent=0 // loop_header
    %s11 = sphi 0, %s15
    %p12 = scmp.ge.s32.totalorder %s11, 6
    %s18 = sphi 0, %s37
    %s19 = sphi 0, %s33
    %s20 = sphi 0, %s29
    %s21 = sphi 0, %s18
    %s22 = sphi 0, %s19
    %s23 = sphi 0, %s20
    %s24 = sphi 0, %s21
    %s25 = sphi 0, %s22
    %s26 = sphi 0, %s23
    %s48 = sphi 0, %s50
    %s51 = sphi 0, %s48
    %s52 = sphi 0, %s51
    %s68 = sphi 0, %s52
    %s72 = sphi 0, %s72
    %s74 = sphi 0, %s72
    %s75 = sphi 0, %s74
    %s89 = sphi 0, %s75
    %s93 = sphi 0, %s93
    %s95 = sphi 0, %s93
    %s96 = sphi 0, %s95
    %s110 = sphi 0, %s96
    %s114 = sphi 0, %s114
    %s116 = sphi 0, %s114
    %s117 = sphi 0, %s116
    %s131 = sphi 0, %s117
    %s135 = sphi 0, %s135
    %s137 = sphi 0, %s135
    %s138 = sphi 0, %s137
    %s152 = sphi 0, %s138
    %s164 = sphi 0, %s166
    %s167 = sphi 0, %s164
    %s168 = sphi 0, %s167
    %s184 = sphi 0, %s168
  $region4: #{net_aur_hpd_m5_forward.2} parent=0 // loop_header_branch
    %14 = sbr.rel (%p12) target = $region8
  $region5: #{net_aur_hpd_m5_forward.2} parent=0 // loop_body
    %s16 = ssub.s32 %s11, 1
    %s17 = ssub.s32 %s11, 2
    %s27 = sadd.s32 1, %s20
    %p28 = scmp.ge.s32.totalorder %s27, 1
    %s29 = scalar_select %p28, 0, %s27
    %s30 = sadd.s32 1, %s19
    %s31 = scalar_select %p28, %s30, %s19
    %p32 = scmp.ge.s32.totalorder %s31, 2
    %s33 = scalar_select %p32, 0, %s31
    %s34 = sadd.s32 1, %s18
    %s35 = scalar_select %p32, %s34, %s18
    %p36 = scmp.ge.s32.totalorder %s35, 2
    %s37 = scalar_select %p36, 0, %s35
    %s38 = ssub.s32 1, %s18
    %s39 = smul.u32 %s19, %s38
    %s40 = smul.u32 %s20, %s38
    %s41 = ssub.s32 1, %s37
    %s42 = smul.u32 %s33, %s41
    %s43 = smul.u32 %s29, %s41
    %s44 = ssub.s32 %s39, %s42
    %s45 = ssub.s32 %s40, %s43
    %s46 = sor.u32 %s44, %s45
    %p47 = scmp.eq.s32.totalorder %s46, 0
    %s49 = sadd.s32 %s48, 1
    %s50 = scalar_select %p47, %s48, %s49
    %p53 = pneg %p47
    %p54 = scmp.eq.s32.totalorder %s11, 3
    %p55 = por %p53, %p54
    %p56 = scmp.ne.s32.totalorder %s48, %s51
    %p57 = scmp.eq.s32.totalorder %s11, 0
    %p58 = por %p56, %p57
    %p59 = scmp.ne.s32.totalorder %s48, %s51
    %p60 = scmp.eq.s32.totalorder %s16, 3
    %p61 = por %p59, %p60
    %p62 = scmp.ne.s32.totalorder %s51, %s52
    %p63 = scmp.eq.s32.totalorder %s16, 0
    %p64 = por %p62, %p63
    %p65 = scmp.ne.s32.totalorder %s51, %s52
    %p66 = scmp.eq.s32.totalorder %s17, 3
    %p67 = por %p65, %p66
    %p69 = scmp.ne.s32.totalorder %s52, %s68
    %p70 = scmp.eq.s32.totalorder %s17, 0
    %p71 = por %p69, %p70
    %s73 = sadd.s32 %s72, 1
    %p76 = scmp.eq.s32.totalorder %s11, 3
    %p77 = scmp.ne.s32.totalorder %s72, %s74
    %p78 = scmp.eq.s32.totalorder %s11, 0
    %p79 = por %p77, %p78
    %p80 = scmp.ne.s32.totalorder %s72, %s74
    %p81 = scmp.eq.s32.totalorder %s16, 3
    %p82 = por %p80, %p81
    %p83 = scmp.ne.s32.totalorder %s74, %s75
    %p84 = scmp.eq.s32.totalorder %s16, 0
    %p85 = por %p83, %p84
    %p86 = scmp.ne.s32.totalorder %s74, %s75
    %p87 = scmp.eq.s32.totalorder %s17, 3
    %p88 = por %p86, %p87
    %p90 = scmp.ne.s32.totalorder %s75, %s89
    %p91 = scmp.eq.s32.totalorder %s17, 0
    %p92 = por %p90, %p91
    %s94 = sadd.s32 %s93, 1
    %p97 = scmp.eq.s32.totalorder %s11, 3
    %p98 = scmp.ne.s32.totalorder %s93, %s95
    %p99 = scmp.eq.s32.totalorder %s11, 0
    %p100 = por %p98, %p99
    %p101 = scmp.ne.s32.totalorder %s93, %s95
    %p102 = scmp.eq.s32.totalorder %s16, 3
    %p103 = por %p101, %p102
    %p104 = scmp.ne.s32.totalorder %s95, %s96
    %p105 = scmp.eq.s32.totalorder %s16, 0
    %p106 = por %p104, %p105
    %p107 = scmp.ne.s32.totalorder %s95, %s96
    %p108 = scmp.eq.s32.totalorder %s17, 3
    %p109 = por %p107, %p108
    %p111 = scmp.ne.s32.totalorder %s96, %s110
    %p112 = scmp.eq.s32.totalorder %s17, 0
    %p113 = por %p111, %p112
    %s115 = sadd.s32 %s114, 1
    %p118 = scmp.eq.s32.totalorder %s11, 3
    %p119 = scmp.ne.s32.totalorder %s114, %s116
    %p120 = scmp.eq.s32.totalorder %s11, 0
    %p121 = por %p119, %p120
    %p122 = scmp.ne.s32.totalorder %s114, %s116
    %p123 = scmp.eq.s32.totalorder %s16, 3
    %p124 = por %p122, %p123
    %p125 = scmp.ne.s32.totalorder %s116, %s117
    %p126 = scmp.eq.s32.totalorder %s16, 0
    %p127 = por %p125, %p126
    %p128 = scmp.ne.s32.totalorder %s116, %s117
    %p129 = scmp.eq.s32.totalorder %s17, 3
    %p130 = por %p128, %p129
    %p132 = scmp.ne.s32.totalorder %s117, %s131
    %p133 = scmp.eq.s32.totalorder %s17, 0
    %p134 = por %p132, %p133
    %s136 = sadd.s32 %s135, 1
    %p139 = scmp.eq.s32.totalorder %s11, 3
    %p140 = scmp.ne.s32.totalorder %s135, %s137
    %p141 = scmp.eq.s32.totalorder %s11, 0
    %p142 = por %p140, %p141
    %p143 = scmp.ne.s32.totalorder %s135, %s137
    %p144 = scmp.eq.s32.totalorder %s16, 3
    %p145 = por %p143, %p144
    %p146 = scmp.ne.s32.totalorder %s137, %s138
    %p147 = scmp.eq.s32.totalorder %s16, 0
    %p148 = por %p146, %p147
    %p149 = scmp.ne.s32.totalorder %s137, %s138
    %p150 = scmp.eq.s32.totalorder %s17, 3
    %p151 = por %p149, %p150
    %p153 = scmp.ne.s32.totalorder %s138, %s152
    %p154 = scmp.eq.s32.totalorder %s17, 0
    %p155 = por %p153, %p154
    %s156 = smul.u32 %s19, %s18
    %s157 = smul.u32 %s20, %s18
    %s158 = smul.u32 %s33, %s37
    %s159 = smul.u32 %s29, %s37
    %s160 = ssub.s32 %s156, %s158
    %s161 = ssub.s32 %s157, %s159
    %s162 = sor.u32 %s160, %s161
    %p163 = scmp.eq.s32.totalorder %s162, 0
    %s165 = sadd.s32 %s164, 1
    %s166 = scalar_select %p163, %s164, %s165
    %p169 = pneg %p163
    %p170 = scmp.eq.s32.totalorder %s11, 3
    %p171 = por %p169, %p170
    %p172 = scmp.ne.s32.totalorder %s164, %s167
    %p173 = scmp.eq.s32.totalorder %s11, 0
    %p174 = por %p172, %p173
    %p175 = scmp.ne.s32.totalorder %s164, %s167
    %p176 = scmp.eq.s32.totalorder %s16, 3
    %p177 = por %p175, %p176
    %p178 = scmp.ne.s32.totalorder %s167, %s168
    %p179 = scmp.eq.s32.totalorder %s16, 0
    %p180 = por %p178, %p179
    %p181 = scmp.ne.s32.totalorder %s167, %s168
    %p182 = scmp.eq.s32.totalorder %s17, 3
    %p183 = por %p181, %p182
    %p185 = scmp.ne.s32.totalorder %s168, %s184
    %p186 = scmp.eq.s32.totalorder %s17, 0
    %p187 = por %p185, %p186
    %p188 = scmp.le.s32.totalorder 1, %s11
    %p189 = scmp.lt.s32.totalorder %s11, 5
    %p190 = pnand %p188, %p189
    %p191 = pneg %p190
    // Predicated region
    $region9: #{net_aur_hpd_m5_forward.2} parent=5 // pred_check
      _
    $region10: #{net_aur_hpd_m5_forward.2} parent=5 // pred_check_branch
      %193 = sbr.rel (%p190) target = $region12
    $region11: #{net_aur_hpd_m5_forward.2} parent=5 // pred_region
      %s194 = ssub.s32 %s11, 1
      // Predicated region
      $region13: #{net_aur_hpd_m5_forward.2} parent=11 // pred_check
        %p195 = pneg %p85
      $region14: #{net_aur_hpd_m5_forward.2} parent=11 // pred_check_branch
        %197 = sbr.rel (%p195) target = $region16
      $region15: #{net_aur_hpd_m5_forward.2} parent=11 // pred_region
        _
      $region16: #{net_aur_hpd_m5_forward.2} parent=11 // pred_fallthru
        _
      // Predicated region
      $region17: #{net_aur_hpd_m5_forward.2} parent=11 // pred_check
        %p198 = pneg %p106
      $region18: #{net_aur_hpd_m5_forward.2} parent=11 // pred_check_branch
        %200 = sbr.rel (%p198) target = $region20
      $region19: #{net_aur_hpd_m5_forward.2} parent=11 // pred_region
        _
      $region20: #{net_aur_hpd_m5_forward.2} parent=11 // pred_fallthru
        _
      // Predicated region
      $region21: #{net_aur_hpd_m5_forward.2} parent=11 // pred_check
        %p201 = pneg %p127
      $region22: #{net_aur_hpd_m5_forward.2} parent=11 // pred_check_branch
        %203 = sbr.rel (%p201) target = $region24
      $region23: #{net_aur_hpd_m5_forward.2} parent=11 // pred_region
        _
      $region24: #{net_aur_hpd_m5_forward.2} parent=11 // pred_fallthru
        _
      // Predicated region
      $region25: #{net_aur_hpd_m5_forward.2} parent=11 // pred_check
        %p204 = pneg %p148
      $region26: #{net_aur_hpd_m5_forward.2} parent=11 // pred_check_branch
        %206 = sbr.rel (%p204) target = $region28
      $region27: #{net_aur_hpd_m5_forward.2} parent=11 // pred_region
        _
      $region28: #{net_aur_hpd_m5_forward.2} parent=11 // pred_fallthru
        _
    $region12: #{net_aur_hpd_m5_forward.2} parent=5 // pred_fallthru
      _
    %p207 = scmp.lt.s32.totalorder %s11, 4
    // Predicated region
    $region29: #{net_aur_hpd_m5_forward.2} parent=5 // pred_check
      %p208 = pneg %p207
    $region30: #{net_aur_hpd_m5_forward.2} parent=5 // pred_check_branch
      %210 = sbr.rel (%p208) target = $region32
    $region31: #{net_aur_hpd_m5_forward.2} parent=5 // pred_region
      // Predicated region
      $region33: #{net_aur_hpd_m5_forward.2} parent=31 // pred_check
        %p211 = pneg %p58
      $region34: #{net_aur_hpd_m5_forward.2} parent=31 // pred_check_branch
        %213 = sbr.rel (%p211) target = $region36
      $region35: #{net_aur_hpd_m5_forward.2} parent=31 // pred_region
        %s214 = ssub.s32 1, %s18
        %s215 = smul.u32 %s19, %s214
        %s216 = smul.u32 %s20, %s214
        %s217 = smul.u32 128, %s216
        %p218 = scmp.lt.s32.totalorder %s215, 1
        %s219 = scalar_select %p218, %s215, 1
        %p220 = scmp.lt.s32.totalorder %s217, 127
        %s221 = scalar_select %p220, %s217, 127
        %s222 = smul.addr %s219, 128
        %s223 = sadd.s32 %s221, %s222
        %s224 = smul.addr %s223, 4
        %s225 = scalar_lea.vmem %s0, %s224
        %s226 = ssub.s32 1, %s18
        %s227 = smul.u32 %s19, %s226
        %s228 = smul.u32 %s20, %s226
        %s229 = smul.u32 128, %s228
      $region36: #{net_aur_hpd_m5_forward.2} parent=31 // pred_fallthru
        _
    $region32: #{net_aur_hpd_m5_forward.2} parent=5 // pred_fallthru
      _
    %p230 = scmp.le.s32.totalorder 1, %s11
    %p231 = scmp.lt.s32.totalorder %s11, 5
    %p232 = pnand %p230, %p231
    %p233 = pneg %p232
    // Predicated region
    $region37: #{net_aur_hpd_m5_forward.2} parent=5 // pred_check
      _
    $region38: #{net_aur_hpd_m5_forward.2} parent=5 // pred_check_branch
      %235 = sbr.rel (%p232) target = $region40
    $region39: #{net_aur_hpd_m5_forward.2} parent=5 // pred_region
      %s236 = ssub.s32 %s11, 1
      %s237 = ssub.s32 1, %s21
      %s238 = smul.u32 %s22, %s237
      %s239 = smul.u32 %s23, %s237
      %s240 = smul.u32 128, %s239
      %p241 = scmp.lt.s32.totalorder %s238, 1
      %s242 = scalar_select %p241, %s238, 1
      %p243 = scmp.lt.s32.totalorder %s240, 127
      %s244 = scalar_select %p243, %s240, 127
      %s245 = smul.addr %s242, 128
      %s246 = sadd.s32 %s244, %s245
      %s247 = smul.addr %s246, 4
      %s248 = scalar_lea.vmem %s0, %s247
      %p249 = pneg %p64
      %p250 = pneg %p61
      %p251 = pneg %p85
      %p252 = pneg %p82
      %p253 = pneg %p106
      %p254 = pneg %p103
      %p255 = pneg %p127
      %p256 = pneg %p124
      %p257 = pneg %p148
      %p258 = pneg %p145
      %p259 = pneg %p180
      %p260 = pneg %p177
      %s261 = smul.u32 %s22, %s21
      %s262 = smul.u32 %s23, %s21
      %s263 = smul.u32 32, %s262
      %p264 = scmp.lt.s32.totalorder %s261, 1
      %s265 = scalar_select %p264, %s261, 1
      %p266 = scmp.lt.s32.totalorder %s263, 31
      %s267 = scalar_select %p266, %s263, 31
      %s268 = smul.addr %s265, 32
      %s269 = sadd.s32 %s267, %s268
      %s270 = smul.addr %s269, 4
      %s271 = scalar_lea.vmem %s5, %s270
      %s272 = ssub.s32 1, %s21
      %s273 = smul.u32 %s22, %s272
      %s274 = smul.u32 %s23, %s272
      %s275 = smul.u32 128, %s274
      %p276 = scmp.lt.s32.totalorder %s273, 1
      %s277 = scalar_select %p276, %s273, 1
      %p278 = scmp.lt.s32.totalorder %s275, 127
      %s279 = scalar_select %p278, %s275, 127
      %s280 = smul.addr %s277, 128
      %s281 = sadd.s32 %s279, %s280
      %s282 = smul.addr %s281, 4
      %s283 = scalar_lea.vmem %s0, %s282
      %s284 = ssub.s32 1, %s21
      %s285 = smul.u32 %s22, %s284
      %s286 = smul.u32 %s23, %s284
      %s287 = smul.u32 128, %s286
      %s288 = smul.u32 %s22, %s21
      %s289 = smul.u32 %s23, %s21
      %s290 = smul.u32 32, %s289
      %p291 = scmp.lt.s32.totalorder %s288, 1
      %s292 = scalar_select %p291, %s288, 1
      %p293 = scmp.lt.s32.totalorder %s290, 31
      %s294 = scalar_select %p293, %s290, 31
      %s295 = smul.addr %s292, 32
      %s296 = sadd.s32 %s294, %s295
      %s297 = smul.addr %s296, 4
      %s298 = scalar_lea.vmem %s5, %s297
      %s299 = smul.u32 %s22, %s21
      %s300 = smul.u32 %s23, %s21
      %s301 = smul.u32 32, %s300
      %s303 = sadd.s32 %s22, %s23
      %s304 = smul.u32 %s303, 1024
      %p305 = scmp.eq.s32.totalorder %s21, 0
      // Predicated region
      $region41: #{net_aur_hpd_m5_forward.2} parent=39 // pred_check
        %p306 = pneg %p305
      $region42: #{net_aur_hpd_m5_forward.2} parent=39 // pred_check_branch
        %308 = sbr.rel (%p306) target = $region44
      $region43: #{net_aur_hpd_m5_forward.2} parent=39 // pred_region
        %p309 = scmp.eq.s32.totalorder %s22, 0
        %p310 = scmp.eq.s32.totalorder %s23, 0
        %p311 = pnand %p309, %p310
        %p312 = pneg %p311
        // Predicated region
        $region45: #{net_aur_hpd_m5_forward.2} parent=43 // pred_check
          _
        $region46: #{net_aur_hpd_m5_forward.2} parent=43 // pred_check_branch
          %314 = sbr.rel (%p311) target = $region48
        $region47: #{net_aur_hpd_m5_forward.2} parent=43 // pred_region
          %315 = vst [vmem:[#allocation3] sm:$0x1] 0.0
          %316 = vst [vmem:[#allocation4] sm:$0x1] 0.0
        $region48: #{net_aur_hpd_m5_forward.2} parent=43 // pred_fallthru
          _
        %v317 = vld [vmem:[%s283] sm:$0xf]
        %v318 = vld [vmem:[%s283 + $0x4] sm:$0xf]
        %v319 = vld [vmem:[%s283 + $0x8] sm:$0xf]
        %v320 = vld [vmem:[%s283 + $0xc] sm:$0xf]
        %v321 = vld [vmem:[%s283 + $0x10] sm:$0xf]
        %v322 = vld [vmem:[%s283 + $0x14] sm:$0xf]
        %v323 = vld [vmem:[%s283 + $0x18] sm:$0xf]
        %v324 = vld [vmem:[%s283 + $0x1c] sm:$0xf]
        %v325 = vld [vmem:[%s283 + $0x20] sm:$0xf]
        %v326 = vld [vmem:[%s283 + $0x24] sm:$0xf]
        %v327 = vld [vmem:[%s283 + $0x28] sm:$0xf]
        %v328 = vld [vmem:[%s283 + $0x2c] sm:$0xf]
        %v329 = vld [vmem:[%s283 + $0x30] sm:$0xf]
        %v330 = vld [vmem:[%s283 + $0x34] sm:$0xf]
        %v331 = vld [vmem:[%s283 + $0x38] sm:$0xf]
        %v332 = vld [vmem:[%s283 + $0x3c] sm:$0xf]
        %v333 = vld [vmem:[%s283 + $0x40] sm:$0xf]
        %v334 = vld [vmem:[%s283 + $0x44] sm:$0xf]
        %v335 = vld [vmem:[%s283 + $0x48] sm:$0xf]
        %v336 = vld [vmem:[%s283 + $0x4c] sm:$0xf]
        %v337 = vld [vmem:[%s283 + $0x50] sm:$0xf]
        %v338 = vld [vmem:[%s283 + $0x54] sm:$0xf]
        %v339 = vld [vmem:[%s283 + $0x58] sm:$0xf]
        %v340 = vld [vmem:[%s283 + $0x5c] sm:$0xf]
        %v341 = vld [vmem:[%s283 + $0x60] sm:$0xf]
        %v342 = vld [vmem:[%s283 + $0x64] sm:$0xf]
        %v343 = vld [vmem:[%s283 + $0x68] sm:$0xf]
        %v344 = vld [vmem:[%s283 + $0x6c] sm:$0xf]
        %v345 = vld [vmem:[%s283 + $0x70] sm:$0xf]
        %v346 = vld [vmem:[%s283 + $0x74] sm:$0xf]
        %v347 = vld [vmem:[%s283 + $0x78] sm:$0xf]
        %v348 = vld [vmem:[%s283 + $0x7c] sm:$0xf]
        %v349 = vld [vmem:[%s283 + $0x80] sm:$0xf]
        %v350 = vld [vmem:[%s283 + $0x84] sm:$0xf]
        %v351 = vld [vmem:[%s283 + $0x88] sm:$0xf]
        %v352 = vld [vmem:[%s283 + $0x8c] sm:$0xf]
        %v353 = vld [vmem:[%s283 + $0x90] sm:$0xf]
        %v354 = vld [vmem:[%s283 + $0x94] sm:$0xf]
        %v355 = vld [vmem:[%s283 + $0x98] sm:$0xf]
        %v356 = vld [vmem:[%s283 + $0x9c] sm:$0xf]
        %v357 = vld [vmem:[%s283 + $0xa0] sm:$0xf]
        %v358 = vld [vmem:[%s283 + $0xa4] sm:$0xf]
        %v359 = vld [vmem:[%s283 + $0xa8] sm:$0xf]
        %v360 = vld [vmem:[%s283 + $0xac] sm:$0xf]
        %v361 = vld [vmem:[%s283 + $0xb0] sm:$0xf]
        %v362 = vld [vmem:[%s283 + $0xb4] sm:$0xf]
        %v363 = vld [vmem:[%s283 + $0xb8] sm:$0xf]
        %v364 = vld [vmem:[%s283 + $0xbc] sm:$0xf]
        %v365 = vld [vmem:[%s283 + $0xc0] sm:$0xf]
        %v366 = vld [vmem:[%s283 + $0xc4] sm:$0xf]
        %v367 = vld [vmem:[%s283 + $0xc8] sm:$0xf]
        %v368 = vld [vmem:[%s283 + $0xcc] sm:$0xf]
        %v369 = vld [vmem:[%s283 + $0xd0] sm:$0xf]
        %v370 = vld [vmem:[%s283 + $0xd4] sm:$0xf]
        %v371 = vld [vmem:[%s283 + $0xd8] sm:$0xf]
        %v372 = vld [vmem:[%s283 + $0xdc] sm:$0xf]
        %v373 = vld [vmem:[%s283 + $0xe0] sm:$0xf]
        %v374 = vld [vmem:[%s283 + $0xe4] sm:$0xf]
        %v375 = vld [vmem:[%s283 + $0xe8] sm:$0xf]
        %v376 = vld [vmem:[%s283 + $0xec] sm:$0xf]
        %v377 = vld [vmem:[%s283 + $0xf0] sm:$0xf]
        %v378 = vld [vmem:[%s283 + $0xf4] sm:$0xf]
        %v379 = vld [vmem:[%s283 + $0xf8] sm:$0xf]
        %v380 = vld [vmem:[%s283 + $0xfc] sm:$0xf]
        %v381 = vld [vmem:[%s283 + $0x100] sm:$0xf]
        %v382 = vld [vmem:[%s283 + $0x104] sm:$0xf]
        %v383 = vld [vmem:[%s283 + $0x108] sm:$0xf]
        %v384 = vld [vmem:[%s283 + $0x10c] sm:$0xf]
        %v385 = vld [vmem:[%s283 + $0x110] sm:$0xf]
        %v386 = vld [vmem:[%s283 + $0x114] sm:$0xf]
        %v387 = vld [vmem:[%s283 + $0x118] sm:$0xf]
        %v388 = vld [vmem:[%s283 + $0x11c] sm:$0xf]
        %v389 = vld [vmem:[%s283 + $0x120] sm:$0xf]
        %v390 = vld [vmem:[%s283 + $0x124] sm:$0xf]
        %v391 = vld [vmem:[%s283 + $0x128] sm:$0xf]
        %v392 = vld [vmem:[%s283 + $0x12c] sm:$0xf]
        %v393 = vld [vmem:[%s283 + $0x130] sm:$0xf]
        %v394 = vld [vmem:[%s283 + $0x134] sm:$0xf]
        %v395 = vld [vmem:[%s283 + $0x138] sm:$0xf]
        %v396 = vld [vmem:[%s283 + $0x13c] sm:$0xf]
        %v397 = vld [vmem:[%s283 + $0x140] sm:$0xf]
        %v398 = vld [vmem:[%s283 + $0x144] sm:$0xf]
        %v399 = vld [vmem:[%s283 + $0x148] sm:$0xf]
        %v400 = vld [vmem:[%s283 + $0x14c] sm:$0xf]
        %v401 = vld [vmem:[%s283 + $0x150] sm:$0xf]
        %v402 = vld [vmem:[%s283 + $0x154] sm:$0xf]
        %v403 = vld [vmem:[%s283 + $0x158] sm:$0xf]
        %v404 = vld [vmem:[%s283 + $0x15c] sm:$0xf]
        %v405 = vld [vmem:[%s283 + $0x160] sm:$0xf]
        %v406 = vld [vmem:[%s283 + $0x164] sm:$0xf]
        %v407 = vld [vmem:[%s283 + $0x168] sm:$0xf]
        %v408 = vld [vmem:[%s283 + $0x16c] sm:$0xf]
        %v409 = vld [vmem:[%s283 + $0x170] sm:$0xf]
        %v410 = vld [vmem:[%s283 + $0x174] sm:$0xf]
        %v411 = vld [vmem:[%s283 + $0x178] sm:$0xf]
        %v412 = vld [vmem:[%s283 + $0x17c] sm:$0xf]
        %v413 = vld [vmem:[%s283 + $0x180] sm:$0xf]
        %v414 = vld [vmem:[%s283 + $0x184] sm:$0xf]
        %v415 = vld [vmem:[%s283 + $0x188] sm:$0xf]
        %v416 = vld [vmem:[%s283 + $0x18c] sm:$0xf]
        %v417 = vld [vmem:[%s283 + $0x190] sm:$0xf]
        %v418 = vld [vmem:[%s283 + $0x194] sm:$0xf]
        %v419 = vld [vmem:[%s283 + $0x198] sm:$0xf]
        %v420 = vld [vmem:[%s283 + $0x19c] sm:$0xf]
        %v421 = vld [vmem:[%s283 + $0x1a0] sm:$0xf]
        %v422 = vld [vmem:[%s283 + $0x1a4] sm:$0xf]
        %v423 = vld [vmem:[%s283 + $0x1a8] sm:$0xf]
        %v424 = vld [vmem:[%s283 + $0x1ac] sm:$0xf]
        %v425 = vld [vmem:[%s283 + $0x1b0] sm:$0xf]
        %v426 = vld [vmem:[%s283 + $0x1b4] sm:$0xf]
        %v427 = vld [vmem:[%s283 + $0x1b8] sm:$0xf]
        %v428 = vld [vmem:[%s283 + $0x1bc] sm:$0xf]
        %v429 = vld [vmem:[%s283 + $0x1c0] sm:$0xf]
        %v430 = vld [vmem:[%s283 + $0x1c4] sm:$0xf]
        %v431 = vld [vmem:[%s283 + $0x1c8] sm:$0xf]
        %v432 = vld [vmem:[%s283 + $0x1cc] sm:$0xf]
        %v433 = vld [vmem:[%s283 + $0x1d0] sm:$0xf]
        %v434 = vld [vmem:[%s283 + $0x1d4] sm:$0xf]
        %v435 = vld [vmem:[%s283 + $0x1d8] sm:$0xf]
        %v436 = vld [vmem:[%s283 + $0x1dc] sm:$0xf]
        %v437 = vld [vmem:[%s283 + $0x1e0] sm:$0xf]
        %v438 = vld [vmem:[%s283 + $0x1e4] sm:$0xf]
        %v439 = vld [vmem:[%s283 + $0x1e8] sm:$0xf]
        %v440 = vld [vmem:[%s283 + $0x1ec] sm:$0xf]
        %v441 = vld [vmem:[%s283 + $0x1f0] sm:$0xf]
        %v442 = vld [vmem:[%s283 + $0x1f4] sm:$0xf]
        %v443 = vld [vmem:[%s283 + $0x1f8] sm:$0xf]
        %v444 = vld [vmem:[%s283 + $0x1fc] sm:$0xf]
        %v445 = vld [vmem:[%s1] sm:$0xf]
        %v446 = vld [vmem:[%s1 + $0x4] sm:$0xf]
        %v447 = vld [vmem:[%s1 + $0x8] sm:$0xf]
        %v448 = vld [vmem:[%s1 + $0xc] sm:$0xf]
        %v449 = vld [vmem:[%s1 + $0x10] sm:$0xf]
        %v450 = vld [vmem:[%s1 + $0x14] sm:$0xf]
        %v451 = vld [vmem:[%s1 + $0x18] sm:$0xf]
        %v452 = vld [vmem:[%s1 + $0x1c] sm:$0xf]
        %v453 = vld [vmem:[%s1 + $0x20] sm:$0xf]
        %v454 = vld [vmem:[%s1 + $0x24] sm:$0xf]
        %v455 = vld [vmem:[%s1 + $0x28] sm:$0xf]
        %v456 = vld [vmem:[%s1 + $0x2c] sm:$0xf]
        %v457 = vld [vmem:[%s1 + $0x30] sm:$0xf]
        %v458 = vld [vmem:[%s1 + $0x34] sm:$0xf]
        %v459 = vld [vmem:[%s1 + $0x38] sm:$0xf]
        %v460 = vld [vmem:[%s1 + $0x3c] sm:$0xf]
        %v461 = vld [vmem:[%s2] sm:$0x1]
        %v463 = vlaneseq
        %v464 = vshrl.u32 %v463, 7
        %v465 = vsub.s32 0, %v464
        %v466 = vrot.slane %v461, %v465
        %v596 = vunpack.c.l.b16 %v317
        %v597 = vunpack.c.l.b16 %v318
        %v598 = vunpack.c.l.b16 %v319
        %v599 = vunpack.c.l.b16 %v320
        %v600 = vunpack.c.l.b16 %v321
        %v601 = vunpack.c.l.b16 %v322
        %v602 = vunpack.c.l.b16 %v323
        %v603 = vunpack.c.l.b16 %v324
        %v604 = vunpack.c.l.b16 %v325
        %v605 = vunpack.c.l.b16 %v326
        %v606 = vunpack.c.l.b16 %v327
        %v607 = vunpack.c.l.b16 %v328
        %v608 = vunpack.c.l.b16 %v329
        %v609 = vunpack.c.l.b16 %v330
        %v610 = vunpack.c.l.b16 %v331
        %v611 = vunpack.c.l.b16 %v332
        %v612 = vunpack.c.l.b16 %v333
        %v613 = vunpack.c.l.b16 %v334
        %v614 = vunpack.c.l.b16 %v335
        %v615 = vunpack.c.l.b16 %v336
        %v616 = vunpack.c.l.b16 %v337
        %v617 = vunpack.c.l.b16 %v338
        %v618 = vunpack.c.l.b16 %v339
        %v619 = vunpack.c.l.b16 %v340
        %v620 = vunpack.c.l.b16 %v341
        %v621 = vunpack.c.l.b16 %v342
        %v622 = vunpack.c.l.b16 %v343
        %v623 = vunpack.c.l.b16 %v344
        %v624 = vunpack.c.l.b16 %v345
        %v625 = vunpack.c.l.b16 %v346
        %v626 = vunpack.c.l.b16 %v347
        %v627 = vunpack.c.l.b16 %v348
        %v628 = vunpack.c.l.b16 %v349
        %v629 = vunpack.c.l.b16 %v350
        %v630 = vunpack.c.l.b16 %v351
        %v631 = vunpack.c.l.b16 %v352
        %v632 = vunpack.c.l.b16 %v353
        %v633 = vunpack.c.l.b16 %v354
        %v634 = vunpack.c.l.b16 %v355
        %v635 = vunpack.c.l.b16 %v356
        %v636 = vunpack.c.l.b16 %v357
        %v637 = vunpack.c.l.b16 %v358
        %v638 = vunpack.c.l.b16 %v359
        %v639 = vunpack.c.l.b16 %v360
        %v640 = vunpack.c.l.b16 %v361
        %v641 = vunpack.c.l.b16 %v362
        %v642 = vunpack.c.l.b16 %v363
        %v643 = vunpack.c.l.b16 %v364
        %v644 = vunpack.c.l.b16 %v365
        %v645 = vunpack.c.l.b16 %v366
        %v646 = vunpack.c.l.b16 %v367
        %v647 = vunpack.c.l.b16 %v368
        %v648 = vunpack.c.l.b16 %v369
        %v649 = vunpack.c.l.b16 %v370
        %v650 = vunpack.c.l.b16 %v371
        %v651 = vunpack.c.l.b16 %v372
        %v652 = vunpack.c.l.b16 %v373
        %v653 = vunpack.c.l.b16 %v374
        %v654 = vunpack.c.l.b16 %v375
        %v655 = vunpack.c.l.b16 %v376
        %v656 = vunpack.c.l.b16 %v377
        %v657 = vunpack.c.l.b16 %v378
        %v658 = vunpack.c.l.b16 %v379
        %v659 = vunpack.c.l.b16 %v380
        %v660 = vunpack.c.l.b16 %v381
        %v661 = vunpack.c.l.b16 %v382
        %v662 = vunpack.c.l.b16 %v383
        %v663 = vunpack.c.l.b16 %v384
        %v664 = vunpack.c.l.b16 %v385
        %v665 = vunpack.c.l.b16 %v386
        %v666 = vunpack.c.l.b16 %v387
        %v667 = vunpack.c.l.b16 %v388
        %v668 = vunpack.c.l.b16 %v389
        %v669 = vunpack.c.l.b16 %v390
        %v670 = vunpack.c.l.b16 %v391
        %v671 = vunpack.c.l.b16 %v392
        %v672 = vunpack.c.l.b16 %v393
        %v673 = vunpack.c.l.b16 %v394
        %v674 = vunpack.c.l.b16 %v395
        %v675 = vunpack.c.l.b16 %v396
        %v676 = vunpack.c.l.b16 %v397
        %v677 = vunpack.c.l.b16 %v398
        %v678 = vunpack.c.l.b16 %v399
        %v679 = vunpack.c.l.b16 %v400
        %v680 = vunpack.c.l.b16 %v401
        %v681 = vunpack.c.l.b16 %v402
        %v682 = vunpack.c.l.b16 %v403
        %v683 = vunpack.c.l.b16 %v404
        %v684 = vunpack.c.l.b16 %v405
        %v685 = vunpack.c.l.b16 %v406
        %v686 = vunpack.c.l.b16 %v407
        %v687 = vunpack.c.l.b16 %v408
        %v688 = vunpack.c.l.b16 %v409
        %v689 = vunpack.c.l.b16 %v410
        %v690 = vunpack.c.l.b16 %v411
        %v691 = vunpack.c.l.b16 %v412
        %v692 = vunpack.c.l.b16 %v413
        %v693 = vunpack.c.l.b16 %v414
        %v694 = vunpack.c.l.b16 %v415
        %v695 = vunpack.c.l.b16 %v416
        %v696 = vunpack.c.l.b16 %v417
        %v697 = vunpack.c.l.b16 %v418
        %v698 = vunpack.c.l.b16 %v419
        %v699 = vunpack.c.l.b16 %v420
        %v700 = vunpack.c.l.b16 %v421
        %v701 = vunpack.c.l.b16 %v422
        %v702 = vunpack.c.l.b16 %v423
        %v703 = vunpack.c.l.b16 %v424
        %v704 = vunpack.c.l.b16 %v425
        %v705 = vunpack.c.l.b16 %v426
        %v706 = vunpack.c.l.b16 %v427
        %v707 = vunpack.c.l.b16 %v428
        %v708 = vunpack.c.l.b16 %v429
        %v709 = vunpack.c.l.b16 %v430
        %v710 = vunpack.c.l.b16 %v431
        %v711 = vunpack.c.l.b16 %v432
        %v712 = vunpack.c.l.b16 %v433
        %v713 = vunpack.c.l.b16 %v434
        %v714 = vunpack.c.l.b16 %v435
        %v715 = vunpack.c.l.b16 %v436
        %v716 = vunpack.c.l.b16 %v437
        %v717 = vunpack.c.l.b16 %v438
        %v718 = vunpack.c.l.b16 %v439
        %v719 = vunpack.c.l.b16 %v440
        %v720 = vunpack.c.l.b16 %v441
        %v721 = vunpack.c.l.b16 %v442
        %v722 = vunpack.c.l.b16 %v443
        %v723 = vunpack.c.l.b16 %v444
        %v724 = vpack.c.b16 %v597, %v596
        %v725 = vpack.c.b16 %v599, %v598
        %v726 = vpack.c.b16 %v601, %v600
        %v727 = vpack.c.b16 %v603, %v602
        %v728 = vpack.c.b16 %v605, %v604
        %v729 = vpack.c.b16 %v607, %v606
        %v730 = vpack.c.b16 %v609, %v608
        %v731 = vpack.c.b16 %v611, %v610
        %v732 = vpack.c.b16 %v613, %v612
        %v733 = vpack.c.b16 %v615, %v614
        %v734 = vpack.c.b16 %v617, %v616
        %v735 = vpack.c.b16 %v619, %v618
        %v736 = vpack.c.b16 %v621, %v620
        %v737 = vpack.c.b16 %v623, %v622
        %v738 = vpack.c.b16 %v625, %v624
        %v739 = vpack.c.b16 %v627, %v626
        %v740 = vpack.c.b16 %v629, %v628
        %v741 = vpack.c.b16 %v631, %v630
        %v742 = vpack.c.b16 %v633, %v632
        %v743 = vpack.c.b16 %v635, %v634
        %v744 = vpack.c.b16 %v637, %v636
        %v745 = vpack.c.b16 %v639, %v638
        %v746 = vpack.c.b16 %v641, %v640
        %v747 = vpack.c.b16 %v643, %v642
        %v748 = vpack.c.b16 %v645, %v644
        %v749 = vpack.c.b16 %v647, %v646
        %v750 = vpack.c.b16 %v649, %v648
        %v751 = vpack.c.b16 %v651, %v650
        %v752 = vpack.c.b16 %v653, %v652
        %v753 = vpack.c.b16 %v655, %v654
        %v754 = vpack.c.b16 %v657, %v656
        %v755 = vpack.c.b16 %v659, %v658
        %v756 = vpack.c.b16 %v661, %v660
        %v757 = vpack.c.b16 %v663, %v662
        %v758 = vpack.c.b16 %v665, %v664
        %v759 = vpack.c.b16 %v667, %v666
        %v760 = vpack.c.b16 %v669, %v668
        %v761 = vpack.c.b16 %v671, %v670
        %v762 = vpack.c.b16 %v673, %v672
        %v763 = vpack.c.b16 %v675, %v674
        %v764 = vpack.c.b16 %v677, %v676
        %v765 = vpack.c.b16 %v679, %v678
        %v766 = vpack.c.b16 %v681, %v680
        %v767 = vpack.c.b16 %v683, %v682
        %v768 = vpack.c.b16 %v685, %v684
        %v769 = vpack.c.b16 %v687, %v686
        %v770 = vpack.c.b16 %v689, %v688
        %v771 = vpack.c.b16 %v691, %v690
        %v772 = vpack.c.b16 %v693, %v692
        %v773 = vpack.c.b16 %v695, %v694
        %v774 = vpack.c.b16 %v697, %v696
        %v775 = vpack.c.b16 %v699, %v698
        %v776 = vpack.c.b16 %v701, %v700
        %v777 = vpack.c.b16 %v703, %v702
        %v778 = vpack.c.b16 %v705, %v704
        %v779 = vpack.c.b16 %v707, %v706
        %v780 = vpack.c.b16 %v709, %v708
        %v781 = vpack.c.b16 %v711, %v710
        %v782 = vpack.c.b16 %v713, %v712
        %v783 = vpack.c.b16 %v715, %v714
        %v784 = vpack.c.b16 %v717, %v716
        %v785 = vpack.c.b16 %v719, %v718
        %v786 = vpack.c.b16 %v721, %v720
        %v787 = vpack.c.b16 %v723, %v722
        %v868 = vunpack.c.l.b16 %v445
        %v869 = vunpack.c.l.b16 %v446
        %v870 = vunpack.c.l.b16 %v447
        %v871 = vunpack.c.l.b16 %v448
        %v872 = vunpack.c.l.b16 %v449
        %v873 = vunpack.c.l.b16 %v450
        %v874 = vunpack.c.l.b16 %v451
        %v875 = vunpack.c.l.b16 %v452
        %v876 = vunpack.c.l.b16 %v453
        %v877 = vunpack.c.l.b16 %v454
        %v878 = vunpack.c.l.b16 %v455
        %v879 = vunpack.c.l.b16 %v456
        %v880 = vunpack.c.l.b16 %v457
        %v881 = vunpack.c.l.b16 %v458
        %v882 = vunpack.c.l.b16 %v459
        %v883 = vunpack.c.l.b16 %v460
        %v884 = vpack.c.b16 %v869, %v868
        %v885 = vpack.c.b16 %v871, %v870
        %v886 = vpack.c.b16 %v873, %v872
        %v887 = vpack.c.b16 %v875, %v874
        %v888 = vpack.c.b16 %v877, %v876
        %v889 = vpack.c.b16 %v879, %v878
        %v890 = vpack.c.b16 %v881, %v880
        %v891 = vpack.c.b16 %v883, %v882
        %900 = vmatprep.subr.bf16.mxu0 0
        %901 = vmatpush1.bf16.msra.mxu0 %v891
        %902 = vmatprep.subr.bf16.mxu0 0
        %903 = vmatpush1.bf16.msra.mxu0 %v890
        %904 = vmatprep.subr.bf16.mxu0 0
        %905 = vmatpush1.bf16.msra.mxu0 %v889
        %906 = vmatprep.subr.bf16.mxu0 0
        %907 = vmatpush1.bf16.msra.mxu0 %v888
        %908 = vmatprep.subr.bf16.mxu0 0
        %909 = vmatpush1.bf16.msra.mxu0 %v887
        %910 = vmatprep.subr.bf16.mxu0 0
        %911 = vmatpush1.bf16.msra.mxu0 %v886
        %912 = vmatprep.subr.bf16.mxu0 0
        %913 = vmatpush1.bf16.msra.mxu0 %v885
        %914 = vmatprep.subr.bf16.mxu0 0
        %915 = vmatpush1.bf16.msra.mxu0 %v884
        %916 = vmatprep.subr.bf16.mxu0 0
        %917 = vmatpush2.bf16.msra.mxu0 0
        %918 = vmatprep.subr.bf16.mxu0 0
        %919 = vmatpush2.bf16.msra.mxu0 0
        %920 = vmatprep.subr.bf16.mxu0 0
        %921 = vmatpush2.bf16.msra.mxu0 0
        %922 = vmatprep.subr.bf16.mxu0 0
        %923 = vmatpush2.bf16.msra.mxu0 0
        %924 = vmatprep.subr.bf16.mxu0 0
        %925 = vmatpush2.bf16.msra.mxu0 0
        %926 = vmatprep.subr.bf16.mxu0 0
        %927 = vmatpush2.bf16.msra.mxu0 0
        %928 = vmatprep.subr.bf16.mxu0 0
        %929 = vmatpush2.bf16.msra.mxu0 0
        %930 = vmatprep.subr.bf16.mxu0 0
        %931 = vmatpush2.bf16.msra.mxu0 0
        %932 = vmatprep.mubr.bf16.mxu0 0
        %933 = vmatmul.mubr.bf16.gmra.mxu0 %v724
        %v934 = vpop.f32.mrf.mxu0
        %v935 = vadd.f32 %v466, %v934
        %v936 = vpop.f32.mrf.mxu0
        %v937 = vpop.f32.mrf.mxu0
        %v938 = vadd.f32 %v466, %v937
        %v939 = vpop.f32.mrf.mxu0
        %940 = vmatprep.mubr.bf16.mxu0 0
        %941 = vmatmul.mubr.bf16.gmra.mxu0 %v725
        %v942 = vpop.f32.mrf.mxu0
        %v943 = vadd.f32 %v466, %v942
        %v944 = vpop.f32.mrf.mxu0
        %v945 = vpop.f32.mrf.mxu0
        %v946 = vadd.f32 %v466, %v945
        %v947 = vpop.f32.mrf.mxu0
        %948 = vmatprep.mubr.bf16.mxu0 0
        %949 = vmatmul.mubr.bf16.gmra.mxu0 %v726
        %v950 = vpop.f32.mrf.mxu0
        %v951 = vadd.f32 %v466, %v950
        %v952 = vpop.f32.mrf.mxu0
        %v953 = vpop.f32.mrf.mxu0
        %v954 = vadd.f32 %v466, %v953
        %v955 = vpop.f32.mrf.mxu0
        %956 = vmatprep.mubr.bf16.mxu0 0
        %957 = vmatmul.mubr.bf16.gmra.mxu0 %v727
        %v958 = vpop.f32.mrf.mxu0
        %v959 = vadd.f32 %v466, %v958
        %v960 = vpop.f32.mrf.mxu0
        %v961 = vpop.f32.mrf.mxu0
        %v962 = vadd.f32 %v466, %v961
        %v963 = vpop.f32.mrf.mxu0
        %964 = vmatprep.mubr.bf16.mxu0 0
        %965 = vmatmul.mubr.bf16.gmra.mxu0 %v728
        %v966 = vpop.f32.mrf.mxu0
        %v967 = vadd.f32 %v466, %v966
        %v968 = vpop.f32.mrf.mxu0
        %v969 = vpop.f32.mrf.mxu0
        %v970 = vadd.f32 %v466, %v969
        %v971 = vpop.f32.mrf.mxu0
        %972 = vmatprep.mubr.bf16.mxu0 0
        %973 = vmatmul.mubr.bf16.gmra.mxu0 %v729
        %v974 = vpop.f32.mrf.mxu0
        %v975 = vadd.f32 %v466, %v974
        %v976 = vpop.f32.mrf.mxu0
        %v977 = vpop.f32.mrf.mxu0
        %v978 = vadd.f32 %v466, %v977
        %v979 = vpop.f32.mrf.mxu0
        %980 = vmatprep.mubr.bf16.mxu0 0
        %981 = vmatmul.mubr.bf16.gmra.mxu0 %v730
        %v982 = vpop.f32.mrf.mxu0
        %v983 = vadd.f32 %v466, %v982
        %v984 = vpop.f32.mrf.mxu0
        %v985 = vpop.f32.mrf.mxu0
        %v986 = vadd.f32 %v466, %v985
        %v987 = vpop.f32.mrf.mxu0
        %988 = vmatprep.mubr.bf16.mxu0 0
        %989 = vmatmul.mubr.bf16.gmra.mxu0 %v731
        %v990 = vpop.f32.mrf.mxu0
        %v991 = vadd.f32 %v466, %v990
        %v992 = vpop.f32.mrf.mxu0
        %v993 = vpop.f32.mrf.mxu0
        %v994 = vadd.f32 %v466, %v993
        %v995 = vpop.f32.mrf.mxu0
        %996 = vmatprep.mubr.bf16.mxu0 0
        %997 = vmatmul.mubr.bf16.gmra.mxu0 %v732
        %v998 = vpop.f32.mrf.mxu0
        %v999 = vadd.f32 %v466, %v998
        %v1000 = vpop.f32.mrf.mxu0
        %v1001 = vpop.f32.mrf.mxu0
        %v1002 = vadd.f32 %v466, %v1001
        %v1003 = vpop.f32.mrf.mxu0
        %1004 = vmatprep.mubr.bf16.mxu0 0
        %1005 = vmatmul.mubr.bf16.gmra.mxu0 %v733
        %v1006 = vpop.f32.mrf.mxu0
        %v1007 = vadd.f32 %v466, %v1006
        %v1008 = vpop.f32.mrf.mxu0
        %v1009 = vpop.f32.mrf.mxu0
        %v1010 = vadd.f32 %v466, %v1009
        %v1011 = vpop.f32.mrf.mxu0
        %1012 = vmatprep.mubr.bf16.mxu0 0
        %1013 = vmatmul.mubr.bf16.gmra.mxu0 %v734
        %v1014 = vpop.f32.mrf.mxu0
        %v1015 = vadd.f32 %v466, %v1014
        %v1016 = vpop.f32.mrf.mxu0
        %v1017 = vpop.f32.mrf.mxu0
        %v1018 = vadd.f32 %v466, %v1017
        %v1019 = vpop.f32.mrf.mxu0
        %1020 = vmatprep.mubr.bf16.mxu0 0
        %1021 = vmatmul.mubr.bf16.gmra.mxu0 %v735
        %v1022 = vpop.f32.mrf.mxu0
        %v1023 = vadd.f32 %v466, %v1022
        %v1024 = vpop.f32.mrf.mxu0
        %v1025 = vpop.f32.mrf.mxu0
        %v1026 = vadd.f32 %v466, %v1025
        %v1027 = vpop.f32.mrf.mxu0
        %1028 = vmatprep.mubr.bf16.mxu0 0
        %1029 = vmatmul.mubr.bf16.gmra.mxu0 %v736
        %v1030 = vpop.f32.mrf.mxu0
        %v1031 = vadd.f32 %v466, %v1030
        %v1032 = vpop.f32.mrf.mxu0
        %v1033 = vpop.f32.mrf.mxu0
        %v1034 = vadd.f32 %v466, %v1033
        %v1035 = vpop.f32.mrf.mxu0
        %1036 = vmatprep.mubr.bf16.mxu0 0
        %1037 = vmatmul.mubr.bf16.gmra.mxu0 %v737
        %v1038 = vpop.f32.mrf.mxu0
        %v1039 = vadd.f32 %v466, %v1038
        %v1040 = vpop.f32.mrf.mxu0
        %v1041 = vpop.f32.mrf.mxu0
        %v1042 = vadd.f32 %v466, %v1041
        %v1043 = vpop.f32.mrf.mxu0
        %1044 = vmatprep.mubr.bf16.mxu0 0
        %1045 = vmatmul.mubr.bf16.gmra.mxu0 %v738
        %v1046 = vpop.f32.mrf.mxu0
        %v1047 = vadd.f32 %v466, %v1046
        %v1048 = vpop.f32.mrf.mxu0
        %v1049 = vpop.f32.mrf.mxu0
        %v1050 = vadd.f32 %v466, %v1049
        %v1051 = vpop.f32.mrf.mxu0
        %1052 = vmatprep.mubr.bf16.mxu0 0
        %1053 = vmatmul.mubr.bf16.gmra.mxu0 %v739
        %v1054 = vpop.f32.mrf.mxu0
        %v1055 = vadd.f32 %v466, %v1054
        %v1056 = vpop.f32.mrf.mxu0
        %v1057 = vpop.f32.mrf.mxu0
        %v1058 = vadd.f32 %v466, %v1057
        %v1059 = vpop.f32.mrf.mxu0
        %1060 = vmatprep.mubr.bf16.mxu0 0
        %1061 = vmatmul.mubr.bf16.gmra.mxu0 %v740
        %v1062 = vpop.f32.mrf.mxu0
        %v1063 = vadd.f32 %v466, %v1062
        %v1064 = vpop.f32.mrf.mxu0
        %v1065 = vpop.f32.mrf.mxu0
        %v1066 = vadd.f32 %v466, %v1065
        %v1067 = vpop.f32.mrf.mxu0
        %1068 = vmatprep.mubr.bf16.mxu0 0
        %1069 = vmatmul.mubr.bf16.gmra.mxu0 %v741
        %v1070 = vpop.f32.mrf.mxu0
        %v1071 = vadd.f32 %v466, %v1070
        %v1072 = vpop.f32.mrf.mxu0
        %v1073 = vpop.f32.mrf.mxu0
        %v1074 = vadd.f32 %v466, %v1073
        %v1075 = vpop.f32.mrf.mxu0
        %1076 = vmatprep.mubr.bf16.mxu0 0
        %1077 = vmatmul.mubr.bf16.gmra.mxu0 %v742
        %v1078 = vpop.f32.mrf.mxu0
        %v1079 = vadd.f32 %v466, %v1078
        %v1080 = vpop.f32.mrf.mxu0
        %v1081 = vpop.f32.mrf.mxu0
        %v1082 = vadd.f32 %v466, %v1081
        %v1083 = vpop.f32.mrf.mxu0
        %1084 = vmatprep.mubr.bf16.mxu0 0
        %1085 = vmatmul.mubr.bf16.gmra.mxu0 %v743
        %v1086 = vpop.f32.mrf.mxu0
        %v1087 = vadd.f32 %v466, %v1086
        %v1088 = vpop.f32.mrf.mxu0
        %v1089 = vpop.f32.mrf.mxu0
        %v1090 = vadd.f32 %v466, %v1089
        %v1091 = vpop.f32.mrf.mxu0
        %1092 = vmatprep.mubr.bf16.mxu0 0
        %1093 = vmatmul.mubr.bf16.gmra.mxu0 %v744
        %v1094 = vpop.f32.mrf.mxu0
        %v1095 = vadd.f32 %v466, %v1094
        %v1096 = vpop.f32.mrf.mxu0
        %v1097 = vpop.f32.mrf.mxu0
        %v1098 = vadd.f32 %v466, %v1097
        %v1099 = vpop.f32.mrf.mxu0
        %1100 = vmatprep.mubr.bf16.mxu0 0
        %1101 = vmatmul.mubr.bf16.gmra.mxu0 %v745
        %v1102 = vpop.f32.mrf.mxu0
        %v1103 = vadd.f32 %v466, %v1102
        %v1104 = vpop.f32.mrf.mxu0
        %v1105 = vpop.f32.mrf.mxu0
        %v1106 = vadd.f32 %v466, %v1105
        %v1107 = vpop.f32.mrf.mxu0
        %1108 = vmatprep.mubr.bf16.mxu0 0
        %1109 = vmatmul.mubr.bf16.gmra.mxu0 %v746
        %v1110 = vpop.f32.mrf.mxu0
        %v1111 = vadd.f32 %v466, %v1110
        %v1112 = vpop.f32.mrf.mxu0
        %v1113 = vpop.f32.mrf.mxu0
        %v1114 = vadd.f32 %v466, %v1113
        %v1115 = vpop.f32.mrf.mxu0
        %1116 = vmatprep.mubr.bf16.mxu0 0
        %1117 = vmatmul.mubr.bf16.gmra.mxu0 %v747
        %v1118 = vpop.f32.mrf.mxu0
        %v1119 = vadd.f32 %v466, %v1118
        %v1120 = vpop.f32.mrf.mxu0
        %v1121 = vpop.f32.mrf.mxu0
        %v1122 = vadd.f32 %v466, %v1121
        %v1123 = vpop.f32.mrf.mxu0
        %1124 = vmatprep.mubr.bf16.mxu0 0
        %1125 = vmatmul.mubr.bf16.gmra.mxu0 %v748
        %v1126 = vpop.f32.mrf.mxu0
        %v1127 = vadd.f32 %v466, %v1126
        %v1128 = vpop.f32.mrf.mxu0
        %v1129 = vpop.f32.mrf.mxu0
        %v1130 = vadd.f32 %v466, %v1129
        %v1131 = vpop.f32.mrf.mxu0
        %1132 = vmatprep.mubr.bf16.mxu0 0
        %1133 = vmatmul.mubr.bf16.gmra.mxu0 %v749
        %v1134 = vpop.f32.mrf.mxu0
        %v1135 = vadd.f32 %v466, %v1134
        %v1136 = vpop.f32.mrf.mxu0
        %v1137 = vpop.f32.mrf.mxu0
        %v1138 = vadd.f32 %v466, %v1137
        %v1139 = vpop.f32.mrf.mxu0
        %1140 = vmatprep.mubr.bf16.mxu0 0
        %1141 = vmatmul.mubr.bf16.gmra.mxu0 %v750
        %v1142 = vpop.f32.mrf.mxu0
        %v1143 = vadd.f32 %v466, %v1142
        %v1144 = vpop.f32.mrf.mxu0
        %v1145 = vpop.f32.mrf.mxu0
        %v1146 = vadd.f32 %v466, %v1145
        %v1147 = vpop.f32.mrf.mxu0
        %1148 = vmatprep.mubr.bf16.mxu0 0
        %1149 = vmatmul.mubr.bf16.gmra.mxu0 %v751
        %v1150 = vpop.f32.mrf.mxu0
        %v1151 = vadd.f32 %v466, %v1150
        %v1152 = vpop.f32.mrf.mxu0
        %v1153 = vpop.f32.mrf.mxu0
        %v1154 = vadd.f32 %v466, %v1153
        %v1155 = vpop.f32.mrf.mxu0
        %1156 = vmatprep.mubr.bf16.mxu0 0
        %1157 = vmatmul.mubr.bf16.gmra.mxu0 %v752
        %v1158 = vpop.f32.mrf.mxu0
        %v1159 = vadd.f32 %v466, %v1158
        %v1160 = vpop.f32.mrf.mxu0
        %v1161 = vpop.f32.mrf.mxu0
        %v1162 = vadd.f32 %v466, %v1161
        %v1163 = vpop.f32.mrf.mxu0
        %1164 = vmatprep.mubr.bf16.mxu0 0
        %1165 = vmatmul.mubr.bf16.gmra.mxu0 %v753
        %v1166 = vpop.f32.mrf.mxu0
        %v1167 = vadd.f32 %v466, %v1166
        %v1168 = vpop.f32.mrf.mxu0
        %v1169 = vpop.f32.mrf.mxu0
        %v1170 = vadd.f32 %v466, %v1169
        %v1171 = vpop.f32.mrf.mxu0
        %1172 = vmatprep.mubr.bf16.mxu0 0
        %1173 = vmatmul.mubr.bf16.gmra.mxu0 %v754
        %v1174 = vpop.f32.mrf.mxu0
        %v1175 = vadd.f32 %v466, %v1174
        %v1176 = vpop.f32.mrf.mxu0
        %v1177 = vpop.f32.mrf.mxu0
        %v1178 = vadd.f32 %v466, %v1177
        %v1179 = vpop.f32.mrf.mxu0
        %1180 = vmatprep.mubr.bf16.mxu0 0
        %1181 = vmatmul.mubr.bf16.gmra.mxu0 %v755
        %v1182 = vpop.f32.mrf.mxu0
        %v1183 = vadd.f32 %v466, %v1182
        %v1184 = vpop.f32.mrf.mxu0
        %v1185 = vpop.f32.mrf.mxu0
        %v1186 = vadd.f32 %v466, %v1185
        %v1187 = vpop.f32.mrf.mxu0
        %1188 = vmatprep.mubr.bf16.mxu0 0
        %1189 = vmatmul.mubr.bf16.gmra.mxu0 %v756
        %v1190 = vpop.f32.mrf.mxu0
        %v1191 = vadd.f32 %v466, %v1190
        %v1192 = vpop.f32.mrf.mxu0
        %v1193 = vpop.f32.mrf.mxu0
        %v1194 = vadd.f32 %v466, %v1193
        %v1195 = vpop.f32.mrf.mxu0
        %1196 = vmatprep.mubr.bf16.mxu0 0
        %1197 = vmatmul.mubr.bf16.gmra.mxu0 %v757
        %v1198 = vpop.f32.mrf.mxu0
        %v1199 = vadd.f32 %v466, %v1198
        %v1200 = vpop.f32.mrf.mxu0
        %v1201 = vpop.f32.mrf.mxu0
        %v1202 = vadd.f32 %v466, %v1201
        %v1203 = vpop.f32.mrf.mxu0
        %1204 = vmatprep.mubr.bf16.mxu0 0
        %1205 = vmatmul.mubr.bf16.gmra.mxu0 %v758
        %v1206 = vpop.f32.mrf.mxu0
        %v1207 = vadd.f32 %v466, %v1206
        %v1208 = vpop.f32.mrf.mxu0
        %v1209 = vpop.f32.mrf.mxu0
        %v1210 = vadd.f32 %v466, %v1209
        %v1211 = vpop.f32.mrf.mxu0
        %1212 = vmatprep.mubr.bf16.mxu0 0
        %1213 = vmatmul.mubr.bf16.gmra.mxu0 %v759
        %v1214 = vpop.f32.mrf.mxu0
        %v1215 = vadd.f32 %v466, %v1214
        %v1216 = vpop.f32.mrf.mxu0
        %v1217 = vpop.f32.mrf.mxu0
        %v1218 = vadd.f32 %v466, %v1217
        %v1219 = vpop.f32.mrf.mxu0
        %1220 = vmatprep.mubr.bf16.mxu0 0
        %1221 = vmatmul.mubr.bf16.gmra.mxu0 %v760
        %v1222 = vpop.f32.mrf.mxu0
        %v1223 = vadd.f32 %v466, %v1222
        %v1224 = vpop.f32.mrf.mxu0
        %v1225 = vpop.f32.mrf.mxu0
        %v1226 = vadd.f32 %v466, %v1225
        %v1227 = vpop.f32.mrf.mxu0
        %1228 = vmatprep.mubr.bf16.mxu0 0
        %1229 = vmatmul.mubr.bf16.gmra.mxu0 %v761
        %v1230 = vpop.f32.mrf.mxu0
        %v1231 = vadd.f32 %v466, %v1230
        %v1232 = vpop.f32.mrf.mxu0
        %v1233 = vpop.f32.mrf.mxu0
        %v1234 = vadd.f32 %v466, %v1233
        %v1235 = vpop.f32.mrf.mxu0
        %1236 = vmatprep.mubr.bf16.mxu0 0
        %1237 = vmatmul.mubr.bf16.gmra.mxu0 %v762
        %v1238 = vpop.f32.mrf.mxu0
        %v1239 = vadd.f32 %v466, %v1238
        %v1240 = vpop.f32.mrf.mxu0
        %v1241 = vpop.f32.mrf.mxu0
        %v1242 = vadd.f32 %v466, %v1241
        %v1243 = vpop.f32.mrf.mxu0
        %1244 = vmatprep.mubr.bf16.mxu0 0
        %1245 = vmatmul.mubr.bf16.gmra.mxu0 %v763
        %v1246 = vpop.f32.mrf.mxu0
        %v1247 = vadd.f32 %v466, %v1246
        %v1248 = vpop.f32.mrf.mxu0
        %v1249 = vpop.f32.mrf.mxu0
        %v1250 = vadd.f32 %v466, %v1249
        %v1251 = vpop.f32.mrf.mxu0
        %1252 = vmatprep.mubr.bf16.mxu0 0
        %1253 = vmatmul.mubr.bf16.gmra.mxu0 %v764
        %v1254 = vpop.f32.mrf.mxu0
        %v1255 = vadd.f32 %v466, %v1254
        %v1256 = vpop.f32.mrf.mxu0
        %v1257 = vpop.f32.mrf.mxu0
        %v1258 = vadd.f32 %v466, %v1257
        %v1259 = vpop.f32.mrf.mxu0
        %1260 = vmatprep.mubr.bf16.mxu0 0
        %1261 = vmatmul.mubr.bf16.gmra.mxu0 %v765
        %v1262 = vpop.f32.mrf.mxu0
        %v1263 = vadd.f32 %v466, %v1262
        %v1264 = vpop.f32.mrf.mxu0
        %v1265 = vpop.f32.mrf.mxu0
        %v1266 = vadd.f32 %v466, %v1265
        %v1267 = vpop.f32.mrf.mxu0
        %1268 = vmatprep.mubr.bf16.mxu0 0
        %1269 = vmatmul.mubr.bf16.gmra.mxu0 %v766
        %v1270 = vpop.f32.mrf.mxu0
        %v1271 = vadd.f32 %v466, %v1270
        %v1272 = vpop.f32.mrf.mxu0
        %v1273 = vpop.f32.mrf.mxu0
        %v1274 = vadd.f32 %v466, %v1273
        %v1275 = vpop.f32.mrf.mxu0
        %1276 = vmatprep.mubr.bf16.mxu0 0
        %1277 = vmatmul.mubr.bf16.gmra.mxu0 %v767
        %v1278 = vpop.f32.mrf.mxu0
        %v1279 = vadd.f32 %v466, %v1278
        %v1280 = vpop.f32.mrf.mxu0
        %v1281 = vpop.f32.mrf.mxu0
        %v1282 = vadd.f32 %v466, %v1281
        %v1283 = vpop.f32.mrf.mxu0
        %1284 = vmatprep.mubr.bf16.mxu0 0
        %1285 = vmatmul.mubr.bf16.gmra.mxu0 %v768
        %v1286 = vpop.f32.mrf.mxu0
        %v1287 = vadd.f32 %v466, %v1286
        %v1288 = vpop.f32.mrf.mxu0
        %v1289 = vpop.f32.mrf.mxu0
        %v1290 = vadd.f32 %v466, %v1289
        %v1291 = vpop.f32.mrf.mxu0
        %1292 = vmatprep.mubr.bf16.mxu0 0
        %1293 = vmatmul.mubr.bf16.gmra.mxu0 %v769
        %v1294 = vpop.f32.mrf.mxu0
        %v1295 = vadd.f32 %v466, %v1294
        %v1296 = vpop.f32.mrf.mxu0
        %v1297 = vpop.f32.mrf.mxu0
        %v1298 = vadd.f32 %v466, %v1297
        %v1299 = vpop.f32.mrf.mxu0
        %1300 = vmatprep.mubr.bf16.mxu0 0
        %1301 = vmatmul.mubr.bf16.gmra.mxu0 %v770
        %v1302 = vpop.f32.mrf.mxu0
        %v1303 = vadd.f32 %v466, %v1302
        %v1304 = vpop.f32.mrf.mxu0
        %v1305 = vpop.f32.mrf.mxu0
        %v1306 = vadd.f32 %v466, %v1305
        %v1307 = vpop.f32.mrf.mxu0
        %1308 = vmatprep.mubr.bf16.mxu0 0
        %1309 = vmatmul.mubr.bf16.gmra.mxu0 %v771
        %v1310 = vpop.f32.mrf.mxu0
        %v1311 = vadd.f32 %v466, %v1310
        %v1312 = vpop.f32.mrf.mxu0
        %v1313 = vpop.f32.mrf.mxu0
        %v1314 = vadd.f32 %v466, %v1313
        %v1315 = vpop.f32.mrf.mxu0
        %1316 = vmatprep.mubr.bf16.mxu0 0
        %1317 = vmatmul.mubr.bf16.gmra.mxu0 %v772
        %v1318 = vpop.f32.mrf.mxu0
        %v1319 = vadd.f32 %v466, %v1318
        %v1320 = vpop.f32.mrf.mxu0
        %v1321 = vpop.f32.mrf.mxu0
        %v1322 = vadd.f32 %v466, %v1321
        %v1323 = vpop.f32.mrf.mxu0
        %1324 = vmatprep.mubr.bf16.mxu0 0
        %1325 = vmatmul.mubr.bf16.gmra.mxu0 %v773
        %v1326 = vpop.f32.mrf.mxu0
        %v1327 = vadd.f32 %v466, %v1326
        %v1328 = vpop.f32.mrf.mxu0
        %v1329 = vpop.f32.mrf.mxu0
        %v1330 = vadd.f32 %v466, %v1329
        %v1331 = vpop.f32.mrf.mxu0
        %1332 = vmatprep.mubr.bf16.mxu0 0
        %1333 = vmatmul.mubr.bf16.gmra.mxu0 %v774
        %v1334 = vpop.f32.mrf.mxu0
        %v1335 = vadd.f32 %v466, %v1334
        %v1336 = vpop.f32.mrf.mxu0
        %v1337 = vpop.f32.mrf.mxu0
        %v1338 = vadd.f32 %v466, %v1337
        %v1339 = vpop.f32.mrf.mxu0
        %1340 = vmatprep.mubr.bf16.mxu0 0
        %1341 = vmatmul.mubr.bf16.gmra.mxu0 %v775
        %v1342 = vpop.f32.mrf.mxu0
        %v1343 = vadd.f32 %v466, %v1342
        %v1344 = vpop.f32.mrf.mxu0
        %v1345 = vpop.f32.mrf.mxu0
        %v1346 = vadd.f32 %v466, %v1345
        %v1347 = vpop.f32.mrf.mxu0
        %1348 = vmatprep.mubr.bf16.mxu0 0
        %1349 = vmatmul.mubr.bf16.gmra.mxu0 %v776
        %v1350 = vpop.f32.mrf.mxu0
        %v1351 = vadd.f32 %v466, %v1350
        %v1352 = vpop.f32.mrf.mxu0
        %v1353 = vpop.f32.mrf.mxu0
        %v1354 = vadd.f32 %v466, %v1353
        %v1355 = vpop.f32.mrf.mxu0
        %1356 = vmatprep.mubr.bf16.mxu0 0
        %1357 = vmatmul.mubr.bf16.gmra.mxu0 %v777
        %v1358 = vpop.f32.mrf.mxu0
        %v1359 = vadd.f32 %v466, %v1358
        %v1360 = vpop.f32.mrf.mxu0
        %v1361 = vpop.f32.mrf.mxu0
        %v1362 = vadd.f32 %v466, %v1361
        %v1363 = vpop.f32.mrf.mxu0
        %1364 = vmatprep.mubr.bf16.mxu0 0
        %1365 = vmatmul.mubr.bf16.gmra.mxu0 %v778
        %v1366 = vpop.f32.mrf.mxu0
        %v1367 = vadd.f32 %v466, %v1366
        %v1368 = vpop.f32.mrf.mxu0
        %v1369 = vpop.f32.mrf.mxu0
        %v1370 = vadd.f32 %v466, %v1369
        %v1371 = vpop.f32.mrf.mxu0
        %1372 = vmatprep.mubr.bf16.mxu0 0
        %1373 = vmatmul.mubr.bf16.gmra.mxu0 %v779
        %v1374 = vpop.f32.mrf.mxu0
        %v1375 = vadd.f32 %v466, %v1374
        %v1376 = vpop.f32.mrf.mxu0
        %v1377 = vpop.f32.mrf.mxu0
        %v1378 = vadd.f32 %v466, %v1377
        %v1379 = vpop.f32.mrf.mxu0
        %1380 = vmatprep.mubr.bf16.mxu0 0
        %1381 = vmatmul.mubr.bf16.gmra.mxu0 %v780
        %v1382 = vpop.f32.mrf.mxu0
        %v1383 = vadd.f32 %v466, %v1382
        %v1384 = vpop.f32.mrf.mxu0
        %v1385 = vpop.f32.mrf.mxu0
        %v1386 = vadd.f32 %v466, %v1385
        %v1387 = vpop.f32.mrf.mxu0
        %1388 = vmatprep.mubr.bf16.mxu0 0
        %1389 = vmatmul.mubr.bf16.gmra.mxu0 %v781
        %v1390 = vpop.f32.mrf.mxu0
        %v1391 = vadd.f32 %v466, %v1390
        %v1392 = vpop.f32.mrf.mxu0
        %v1393 = vpop.f32.mrf.mxu0
        %v1394 = vadd.f32 %v466, %v1393
        %v1395 = vpop.f32.mrf.mxu0
        %1396 = vmatprep.mubr.bf16.mxu0 0
        %1397 = vmatmul.mubr.bf16.gmra.mxu0 %v782
        %v1398 = vpop.f32.mrf.mxu0
        %v1399 = vadd.f32 %v466, %v1398
        %v1400 = vpop.f32.mrf.mxu0
        %v1401 = vpop.f32.mrf.mxu0
        %v1402 = vadd.f32 %v466, %v1401
        %v1403 = vpop.f32.mrf.mxu0
        %1404 = vmatprep.mubr.bf16.mxu0 0
        %1405 = vmatmul.mubr.bf16.gmra.mxu0 %v783
        %v1406 = vpop.f32.mrf.mxu0
        %v1407 = vadd.f32 %v466, %v1406
        %v1408 = vpop.f32.mrf.mxu0
        %v1409 = vpop.f32.mrf.mxu0
        %v1410 = vadd.f32 %v466, %v1409
        %v1411 = vpop.f32.mrf.mxu0
        %1412 = vmatprep.mubr.bf16.mxu0 0
        %1413 = vmatmul.mubr.bf16.gmra.mxu0 %v784
        %v1414 = vpop.f32.mrf.mxu0
        %v1415 = vadd.f32 %v466, %v1414
        %v1416 = vpop.f32.mrf.mxu0
        %v1417 = vpop.f32.mrf.mxu0
        %v1418 = vadd.f32 %v466, %v1417
        %v1419 = vpop.f32.mrf.mxu0
        %1420 = vmatprep.mubr.bf16.mxu0 0
        %1421 = vmatmul.mubr.bf16.gmra.mxu0 %v785
        %v1422 = vpop.f32.mrf.mxu0
        %v1423 = vadd.f32 %v466, %v1422
        %v1424 = vpop.f32.mrf.mxu0
        %v1425 = vpop.f32.mrf.mxu0
        %v1426 = vadd.f32 %v466, %v1425
        %v1427 = vpop.f32.mrf.mxu0
        %1428 = vmatprep.mubr.bf16.mxu0 0
        %1429 = vmatmul.mubr.bf16.gmra.mxu0 %v786
        %v1430 = vpop.f32.mrf.mxu0
        %v1431 = vadd.f32 %v466, %v1430
        %v1432 = vpop.f32.mrf.mxu0
        %v1433 = vpop.f32.mrf.mxu0
        %v1434 = vadd.f32 %v466, %v1433
        %v1435 = vpop.f32.mrf.mxu0
        %1436 = vmatprep.mubr.bf16.mxu0 0
        %1437 = vmatmul.mubr.bf16.gmra.mxu0 %v787
        %v1438 = vpop.f32.mrf.mxu0
        %v1439 = vadd.f32 %v466, %v1438
        %v1440 = vpop.f32.mrf.mxu0
        %v1441 = vpop.f32.mrf.mxu0
        %v1442 = vadd.f32 %v466, %v1441
        %v1443 = vpop.f32.mrf.mxu0
        %1444 = vdwg.mxu0
        %v1445 = vmax.f32 %v935, 0.0
        %v1446 = vmax.f32 %v938, 0.0
        %v1447 = vmax.f32 %v943, 0.0
        %v1448 = vmax.f32 %v946, 0.0
        %v1449 = vmax.f32 %v951, 0.0
        %v1450 = vmax.f32 %v954, 0.0
        %v1451 = vmax.f32 %v959, 0.0
        %v1452 = vmax.f32 %v962, 0.0
        %v1453 = vmax.f32 %v967, 0.0
        %v1454 = vmax.f32 %v970, 0.0
        %v1455 = vmax.f32 %v975, 0.0
        %v1456 = vmax.f32 %v978, 0.0
        %v1457 = vmax.f32 %v983, 0.0
        %v1458 = vmax.f32 %v986, 0.0
        %v1459 = vmax.f32 %v991, 0.0
        %v1460 = vmax.f32 %v994, 0.0
        %v1461 = vmax.f32 %v999, 0.0
        %v1462 = vmax.f32 %v1002, 0.0
        %v1463 = vmax.f32 %v1007, 0.0
        %v1464 = vmax.f32 %v1010, 0.0
        %v1465 = vmax.f32 %v1015, 0.0
        %v1466 = vmax.f32 %v1018, 0.0
        %v1467 = vmax.f32 %v1023, 0.0
        %v1468 = vmax.f32 %v1026, 0.0
        %v1469 = vmax.f32 %v1031, 0.0
        %v1470 = vmax.f32 %v1034, 0.0
        %v1471 = vmax.f32 %v1039, 0.0
        %v1472 = vmax.f32 %v1042, 0.0
        %v1473 = vmax.f32 %v1047, 0.0
        %v1474 = vmax.f32 %v1050, 0.0
        %v1475 = vmax.f32 %v1055, 0.0
        %v1476 = vmax.f32 %v1058, 0.0
        %v1477 = vmax.f32 %v1063, 0.0
        %v1478 = vmax.f32 %v1066, 0.0
        %v1479 = vmax.f32 %v1071, 0.0
        %v1480 = vmax.f32 %v1074, 0.0
        %v1481 = vmax.f32 %v1079, 0.0
        %v1482 = vmax.f32 %v1082, 0.0
        %v1483 = vmax.f32 %v1087, 0.0
        %v1484 = vmax.f32 %v1090, 0.0
        %v1485 = vmax.f32 %v1095, 0.0
        %v1486 = vmax.f32 %v1098, 0.0
        %v1487 = vmax.f32 %v1103, 0.0
        %v1488 = vmax.f32 %v1106, 0.0
        %v1489 = vmax.f32 %v1111, 0.0
        %v1490 = vmax.f32 %v1114, 0.0
        %v1491 = vmax.f32 %v1119, 0.0
        %v1492 = vmax.f32 %v1122, 0.0
        %v1493 = vmax.f32 %v1127, 0.0
        %v1494 = vmax.f32 %v1130, 0.0
        %v1495 = vmax.f32 %v1135, 0.0
        %v1496 = vmax.f32 %v1138, 0.0
        %v1497 = vmax.f32 %v1143, 0.0
        %v1498 = vmax.f32 %v1146, 0.0
        %v1499 = vmax.f32 %v1151, 0.0
        %v1500 = vmax.f32 %v1154, 0.0
        %v1501 = vmax.f32 %v1159, 0.0
        %v1502 = vmax.f32 %v1162, 0.0
        %v1503 = vmax.f32 %v1167, 0.0
        %v1504 = vmax.f32 %v1170, 0.0
        %v1505 = vmax.f32 %v1175, 0.0
        %v1506 = vmax.f32 %v1178, 0.0
        %v1507 = vmax.f32 %v1183, 0.0
        %v1508 = vmax.f32 %v1186, 0.0
        %v1509 = vmax.f32 %v1191, 0.0
        %v1510 = vmax.f32 %v1194, 0.0
        %v1511 = vmax.f32 %v1199, 0.0
        %v1512 = vmax.f32 %v1202, 0.0
        %v1513 = vmax.f32 %v1207, 0.0
        %v1514 = vmax.f32 %v1210, 0.0
        %v1515 = vmax.f32 %v1215, 0.0
        %v1516 = vmax.f32 %v1218, 0.0
        %v1517 = vmax.f32 %v1223, 0.0
        %v1518 = vmax.f32 %v1226, 0.0
        %v1519 = vmax.f32 %v1231, 0.0
        %v1520 = vmax.f32 %v1234, 0.0
        %v1521 = vmax.f32 %v1239, 0.0
        %v1522 = vmax.f32 %v1242, 0.0
        %v1523 = vmax.f32 %v1247, 0.0
        %v1524 = vmax.f32 %v1250, 0.0
        %v1525 = vmax.f32 %v1255, 0.0
        %v1526 = vmax.f32 %v1258, 0.0
        %v1527 = vmax.f32 %v1263, 0.0
        %v1528 = vmax.f32 %v1266, 0.0
        %v1529 = vmax.f32 %v1271, 0.0
        %v1530 = vmax.f32 %v1274, 0.0
        %v1531 = vmax.f32 %v1279, 0.0
        %v1532 = vmax.f32 %v1282, 0.0
        %v1533 = vmax.f32 %v1287, 0.0
        %v1534 = vmax.f32 %v1290, 0.0
        %v1535 = vmax.f32 %v1295, 0.0
        %v1536 = vmax.f32 %v1298, 0.0
        %v1537 = vmax.f32 %v1303, 0.0
        %v1538 = vmax.f32 %v1306, 0.0
        %v1539 = vmax.f32 %v1311, 0.0
        %v1540 = vmax.f32 %v1314, 0.0
        %v1541 = vmax.f32 %v1319, 0.0
        %v1542 = vmax.f32 %v1322, 0.0
        %v1543 = vmax.f32 %v1327, 0.0
        %v1544 = vmax.f32 %v1330, 0.0
        %v1545 = vmax.f32 %v1335, 0.0
        %v1546 = vmax.f32 %v1338, 0.0
        %v1547 = vmax.f32 %v1343, 0.0
        %v1548 = vmax.f32 %v1346, 0.0
        %v1549 = vmax.f32 %v1351, 0.0
        %v1550 = vmax.f32 %v1354, 0.0
        %v1551 = vmax.f32 %v1359, 0.0
        %v1552 = vmax.f32 %v1362, 0.0
        %v1553 = vmax.f32 %v1367, 0.0
        %v1554 = vmax.f32 %v1370, 0.0
        %v1555 = vmax.f32 %v1375, 0.0
        %v1556 = vmax.f32 %v1378, 0.0
        %v1557 = vmax.f32 %v1383, 0.0
        %v1558 = vmax.f32 %v1386, 0.0
        %v1559 = vmax.f32 %v1391, 0.0
        %v1560 = vmax.f32 %v1394, 0.0
        %v1561 = vmax.f32 %v1399, 0.0
        %v1562 = vmax.f32 %v1402, 0.0
        %v1563 = vmax.f32 %v1407, 0.0
        %v1564 = vmax.f32 %v1410, 0.0
        %v1565 = vmax.f32 %v1415, 0.0
        %v1566 = vmax.f32 %v1418, 0.0
        %v1567 = vmax.f32 %v1423, 0.0
        %v1568 = vmax.f32 %v1426, 0.0
        %v1569 = vmax.f32 %v1431, 0.0
        %v1570 = vmax.f32 %v1434, 0.0
        %v1571 = vmax.f32 %v1439, 0.0
        %v1572 = vmax.f32 %v1442, 0.0
        %s1573 = scalar_lea.vmem [#allocation2], %s304
        %1574 = vst [vmem:[%s1573] sm:$0xff] %v1445
        %1575 = vst [vmem:[%s1573 + $0x8] sm:$0xff] %v1446
        %1576 = vst [vmem:[%s1573 + $0x10] sm:$0xff] %v1447
        %1577 = vst [vmem:[%s1573 + $0x18] sm:$0xff] %v1448
        %1578 = vst [vmem:[%s1573 + $0x20] sm:$0xff] %v1449
        %1579 = vst [vmem:[%s1573 + $0x28] sm:$0xff] %v1450
        %1580 = vst [vmem:[%s1573 + $0x30] sm:$0xff] %v1451
        %1581 = vst [vmem:[%s1573 + $0x38] sm:$0xff] %v1452
        %1582 = vst [vmem:[%s1573 + $0x40] sm:$0xff] %v1453
        %1583 = vst [vmem:[%s1573 + $0x48] sm:$0xff] %v1454
        %1584 = vst [vmem:[%s1573 + $0x50] sm:$0xff] %v1455
        %1585 = vst [vmem:[%s1573 + $0x58] sm:$0xff] %v1456
        %1586 = vst [vmem:[%s1573 + $0x60] sm:$0xff] %v1457
        %1587 = vst [vmem:[%s1573 + $0x68] sm:$0xff] %v1458
        %1588 = vst [vmem:[%s1573 + $0x70] sm:$0xff] %v1459
        %1589 = vst [vmem:[%s1573 + $0x78] sm:$0xff] %v1460
        %1590 = vst [vmem:[%s1573 + $0x80] sm:$0xff] %v1461
        %1591 = vst [vmem:[%s1573 + $0x88] sm:$0xff] %v1462
        %1592 = vst [vmem:[%s1573 + $0x90] sm:$0xff] %v1463
        %1593 = vst [vmem:[%s1573 + $0x98] sm:$0xff] %v1464
        %1594 = vst [vmem:[%s1573 + $0xa0] sm:$0xff] %v1465
        %1595 = vst [vmem:[%s1573 + $0xa8] sm:$0xff] %v1466
        %1596 = vst [vmem:[%s1573 + $0xb0] sm:$0xff] %v1467
        %1597 = vst [vmem:[%s1573 + $0xb8] sm:$0xff] %v1468
        %1598 = vst [vmem:[%s1573 + $0xc0] sm:$0xff] %v1469
        %1599 = vst [vmem:[%s1573 + $0xc8] sm:$0xff] %v1470
        %1600 = vst [vmem:[%s1573 + $0xd0] sm:$0xff] %v1471
        %1601 = vst [vmem:[%s1573 + $0xd8] sm:$0xff] %v1472
        %1602 = vst [vmem:[%s1573 + $0xe0] sm:$0xff] %v1473
        %1603 = vst [vmem:[%s1573 + $0xe8] sm:$0xff] %v1474
        %1604 = vst [vmem:[%s1573 + $0xf0] sm:$0xff] %v1475
        %1605 = vst [vmem:[%s1573 + $0xf8] sm:$0xff] %v1476
        %1606 = vst [vmem:[%s1573 + $0x100] sm:$0xff] %v1477
        %1607 = vst [vmem:[%s1573 + $0x108] sm:$0xff] %v1478
        %1608 = vst [vmem:[%s1573 + $0x110] sm:$0xff] %v1479
        %1609 = vst [vmem:[%s1573 + $0x118] sm:$0xff] %v1480
        %1610 = vst [vmem:[%s1573 + $0x120] sm:$0xff] %v1481
        %1611 = vst [vmem:[%s1573 + $0x128] sm:$0xff] %v1482
        %1612 = vst [vmem:[%s1573 + $0x130] sm:$0xff] %v1483
        %1613 = vst [vmem:[%s1573 + $0x138] sm:$0xff] %v1484
        %1614 = vst [vmem:[%s1573 + $0x140] sm:$0xff] %v1485
        %1615 = vst [vmem:[%s1573 + $0x148] sm:$0xff] %v1486
        %1616 = vst [vmem:[%s1573 + $0x150] sm:$0xff] %v1487
        %1617 = vst [vmem:[%s1573 + $0x158] sm:$0xff] %v1488
        %1618 = vst [vmem:[%s1573 + $0x160] sm:$0xff] %v1489
        %1619 = vst [vmem:[%s1573 + $0x168] sm:$0xff] %v1490
        %1620 = vst [vmem:[%s1573 + $0x170] sm:$0xff] %v1491
        %1621 = vst [vmem:[%s1573 + $0x178] sm:$0xff] %v1492
        %1622 = vst [vmem:[%s1573 + $0x180] sm:$0xff] %v1493
        %1623 = vst [vmem:[%s1573 + $0x188] sm:$0xff] %v1494
        %1624 = vst [vmem:[%s1573 + $0x190] sm:$0xff] %v1495
        %1625 = vst [vmem:[%s1573 + $0x198] sm:$0xff] %v1496
        %1626 = vst [vmem:[%s1573 + $0x1a0] sm:$0xff] %v1497
        %1627 = vst [vmem:[%s1573 + $0x1a8] sm:$0xff] %v1498
        %1628 = vst [vmem:[%s1573 + $0x1b0] sm:$0xff] %v1499
        %1629 = vst [vmem:[%s1573 + $0x1b8] sm:$0xff] %v1500
        %1630 = vst [vmem:[%s1573 + $0x1c0] sm:$0xff] %v1501
        %1631 = vst [vmem:[%s1573 + $0x1c8] sm:$0xff] %v1502
        %1632 = vst [vmem:[%s1573 + $0x1d0] sm:$0xff] %v1503
        %1633 = vst [vmem:[%s1573 + $0x1d8] sm:$0xff] %v1504
        %1634 = vst [vmem:[%s1573 + $0x1e0] sm:$0xff] %v1505
        %1635 = vst [vmem:[%s1573 + $0x1e8] sm:$0xff] %v1506
        %1636 = vst [vmem:[%s1573 + $0x1f0] sm:$0xff] %v1507
        %1637 = vst [vmem:[%s1573 + $0x1f8] sm:$0xff] %v1508
        %1638 = vst [vmem:[%s1573 + $0x200] sm:$0xff] %v1509
        %1639 = vst [vmem:[%s1573 + $0x208] sm:$0xff] %v1510
        %1640 = vst [vmem:[%s1573 + $0x210] sm:$0xff] %v1511
        %1641 = vst [vmem:[%s1573 + $0x218] sm:$0xff] %v1512
        %1642 = vst [vmem:[%s1573 + $0x220] sm:$0xff] %v1513
        %1643 = vst [vmem:[%s1573 + $0x228] sm:$0xff] %v1514
        %1644 = vst [vmem:[%s1573 + $0x230] sm:$0xff] %v1515
        %1645 = vst [vmem:[%s1573 + $0x238] sm:$0xff] %v1516
        %1646 = vst [vmem:[%s1573 + $0x240] sm:$0xff] %v1517
        %1647 = vst [vmem:[%s1573 + $0x248] sm:$0xff] %v1518
        %1648 = vst [vmem:[%s1573 + $0x250] sm:$0xff] %v1519
        %1649 = vst [vmem:[%s1573 + $0x258] sm:$0xff] %v1520
        %1650 = vst [vmem:[%s1573 + $0x260] sm:$0xff] %v1521
        %1651 = vst [vmem:[%s1573 + $0x268] sm:$0xff] %v1522
        %1652 = vst [vmem:[%s1573 + $0x270] sm:$0xff] %v1523
        %1653 = vst [vmem:[%s1573 + $0x278] sm:$0xff] %v1524
        %1654 = vst [vmem:[%s1573 + $0x280] sm:$0xff] %v1525
        %1655 = vst [vmem:[%s1573 + $0x288] sm:$0xff] %v1526
        %1656 = vst [vmem:[%s1573 + $0x290] sm:$0xff] %v1527
        %1657 = vst [vmem:[%s1573 + $0x298] sm:$0xff] %v1528
        %1658 = vst [vmem:[%s1573 + $0x2a0] sm:$0xff] %v1529
        %1659 = vst [vmem:[%s1573 + $0x2a8] sm:$0xff] %v1530
        %1660 = vst [vmem:[%s1573 + $0x2b0] sm:$0xff] %v1531
        %1661 = vst [vmem:[%s1573 + $0x2b8] sm:$0xff] %v1532
        %1662 = vst [vmem:[%s1573 + $0x2c0] sm:$0xff] %v1533
        %1663 = vst [vmem:[%s1573 + $0x2c8] sm:$0xff] %v1534
        %1664 = vst [vmem:[%s1573 + $0x2d0] sm:$0xff] %v1535
        %1665 = vst [vmem:[%s1573 + $0x2d8] sm:$0xff] %v1536
        %1666 = vst [vmem:[%s1573 + $0x2e0] sm:$0xff] %v1537
        %1667 = vst [vmem:[%s1573 + $0x2e8] sm:$0xff] %v1538
        %1668 = vst [vmem:[%s1573 + $0x2f0] sm:$0xff] %v1539
        %1669 = vst [vmem:[%s1573 + $0x2f8] sm:$0xff] %v1540
        %1670 = vst [vmem:[%s1573 + $0x300] sm:$0xff] %v1541
        %1671 = vst [vmem:[%s1573 + $0x308] sm:$0xff] %v1542
        %1672 = vst [vmem:[%s1573 + $0x310] sm:$0xff] %v1543
        %1673 = vst [vmem:[%s1573 + $0x318] sm:$0xff] %v1544
        %1674 = vst [vmem:[%s1573 + $0x320] sm:$0xff] %v1545
        %1675 = vst [vmem:[%s1573 + $0x328] sm:$0xff] %v1546
        %1676 = vst [vmem:[%s1573 + $0x330] sm:$0xff] %v1547
        %1677 = vst [vmem:[%s1573 + $0x338] sm:$0xff] %v1548
        %1678 = vst [vmem:[%s1573 + $0x340] sm:$0xff] %v1549
        %1679 = vst [vmem:[%s1573 + $0x348] sm:$0xff] %v1550
        %1680 = vst [vmem:[%s1573 + $0x350] sm:$0xff] %v1551
        %1681 = vst [vmem:[%s1573 + $0x358] sm:$0xff] %v1552
        %1682 = vst [vmem:[%s1573 + $0x360] sm:$0xff] %v1553
        %1683 = vst [vmem:[%s1573 + $0x368] sm:$0xff] %v1554
        %1684 = vst [vmem:[%s1573 + $0x370] sm:$0xff] %v1555
        %1685 = vst [vmem:[%s1573 + $0x378] sm:$0xff] %v1556
        %1686 = vst [vmem:[%s1573 + $0x380] sm:$0xff] %v1557
        %1687 = vst [vmem:[%s1573 + $0x388] sm:$0xff] %v1558
        %1688 = vst [vmem:[%s1573 + $0x390] sm:$0xff] %v1559
        %1689 = vst [vmem:[%s1573 + $0x398] sm:$0xff] %v1560
        %1690 = vst [vmem:[%s1573 + $0x3a0] sm:$0xff] %v1561
        %1691 = vst [vmem:[%s1573 + $0x3a8] sm:$0xff] %v1562
        %1692 = vst [vmem:[%s1573 + $0x3b0] sm:$0xff] %v1563
        %1693 = vst [vmem:[%s1573 + $0x3b8] sm:$0xff] %v1564
        %1694 = vst [vmem:[%s1573 + $0x3c0] sm:$0xff] %v1565
        %1695 = vst [vmem:[%s1573 + $0x3c8] sm:$0xff] %v1566
        %1696 = vst [vmem:[%s1573 + $0x3d0] sm:$0xff] %v1567
        %1697 = vst [vmem:[%s1573 + $0x3d8] sm:$0xff] %v1568
        %1698 = vst [vmem:[%s1573 + $0x3e0] sm:$0xff] %v1569
        %1699 = vst [vmem:[%s1573 + $0x3e8] sm:$0xff] %v1570
        %1700 = vst [vmem:[%s1573 + $0x3f0] sm:$0xff] %v1571
        %1701 = vst [vmem:[%s1573 + $0x3f8] sm:$0xff] %v1572
        %s1702 = smul.u32 %s23, 1024
        %v1703 = vlaneseq
        %v1704 = vshrl.u32 %v1703, 7
        %v1705 = vadd.s32 %v1704, 8
        %v1706 = vadd.s32 %v1704, 16
        %v1707 = vadd.s32 %v1704, 24
        %v1708 = vadd.s32 %v1704, 32
        %v1709 = vadd.s32 %v1704, 40
        %v1710 = vadd.s32 %v1704, 48
        %v1711 = vadd.s32 %v1704, 56
        %v1712 = vadd.s32 %v1704, 64
        %v1713 = vadd.s32 %v1704, 72
        %v1714 = vadd.s32 %v1704, 80
        %v1715 = vadd.s32 %v1704, 88
        %v1716 = vadd.s32 %v1704, 96
        %v1717 = vadd.s32 %v1704, 104
        %v1718 = vadd.s32 %v1704, 112
        %v1719 = vadd.s32 %v1704, 120
        %v1720 = vadd.s32 %v1704, 128
        %v1721 = vadd.s32 %v1704, 136
        %v1722 = vadd.s32 %v1704, 144
        %v1723 = vadd.s32 %v1704, 152
        %v1724 = vadd.s32 %v1704, 160
        %v1725 = vadd.s32 %v1704, 168
        %v1726 = vadd.s32 %v1704, 176
        %v1727 = vadd.s32 %v1704, 184
        %v1728 = vadd.s32 %v1704, 192
        %v1729 = vadd.s32 %v1704, 200
        %v1730 = vadd.s32 %v1704, 208
        %v1731 = vadd.s32 %v1704, 216
        %v1732 = vadd.s32 %v1704, 224
        %v1733 = vadd.s32 %v1704, 232
        %v1734 = vadd.s32 %v1704, 240
        %v1735 = vadd.s32 %v1704, 248
        %v1736 = vadd.s32 %v1704, 256
        %v1737 = vadd.s32 %v1704, 264
        %v1738 = vadd.s32 %v1704, 272
        %v1739 = vadd.s32 %v1704, 280
        %v1740 = vadd.s32 %v1704, 288
        %v1741 = vadd.s32 %v1704, 296
        %v1742 = vadd.s32 %v1704, 304
        %v1743 = vadd.s32 %v1704, 312
        %v1744 = vadd.s32 %v1704, 320
        %v1745 = vadd.s32 %v1704, 328
        %v1746 = vadd.s32 %v1704, 336
        %v1747 = vadd.s32 %v1704, 344
        %v1748 = vadd.s32 %v1704, 352
        %v1749 = vadd.s32 %v1704, 360
        %v1750 = vadd.s32 %v1704, 368
        %v1751 = vadd.s32 %v1704, 376
        %v1752 = vadd.s32 %v1704, 384
        %v1753 = vadd.s32 %v1704, 392
        %v1754 = vadd.s32 %v1704, 400
        %v1755 = vadd.s32 %v1704, 408
        %v1756 = vadd.s32 %v1704, 416
        %v1757 = vadd.s32 %v1704, 424
        %v1758 = vadd.s32 %v1704, 432
        %v1759 = vadd.s32 %v1704, 440
        %v1760 = vadd.s32 %v1704, 448
        %v1761 = vadd.s32 %v1704, 456
        %v1762 = vadd.s32 %v1704, 464
        %v1763 = vadd.s32 %v1704, 472
        %v1764 = vadd.s32 %v1704, 480
        %v1765 = vadd.s32 %v1704, 488
        %v1766 = vadd.s32 %v1704, 496
        %v1767 = vadd.s32 %v1704, 504
        %v1768 = vadd.s32 %v1704, 512
        %v1769 = vadd.s32 %v1704, 520
        %v1770 = vadd.s32 %v1704, 528
        %v1771 = vadd.s32 %v1704, 536
        %v1772 = vadd.s32 %v1704, 544
        %v1773 = vadd.s32 %v1704, 552
        %v1774 = vadd.s32 %v1704, 560
        %v1775 = vadd.s32 %v1704, 568
        %v1776 = vadd.s32 %v1704, 576
        %v1777 = vadd.s32 %v1704, 584
        %v1778 = vadd.s32 %v1704, 592
        %v1779 = vadd.s32 %v1704, 600
        %v1780 = vadd.s32 %v1704, 608
        %v1781 = vadd.s32 %v1704, 616
        %v1782 = vadd.s32 %v1704, 624
        %v1783 = vadd.s32 %v1704, 632
        %v1784 = vadd.s32 %v1704, 640
        %v1785 = vadd.s32 %v1704, 648
        %v1786 = vadd.s32 %v1704, 656
        %v1787 = vadd.s32 %v1704, 664
        %v1788 = vadd.s32 %v1704, 672
        %v1789 = vadd.s32 %v1704, 680
        %v1790 = vadd.s32 %v1704, 688
        %v1791 = vadd.s32 %v1704, 696
        %v1792 = vadd.s32 %v1704, 704
        %v1793 = vadd.s32 %v1704, 712
        %v1794 = vadd.s32 %v1704, 720
        %v1795 = vadd.s32 %v1704, 728
        %v1796 = vadd.s32 %v1704, 736
        %v1797 = vadd.s32 %v1704, 744
        %v1798 = vadd.s32 %v1704, 752
        %v1799 = vadd.s32 %v1704, 760
        %v1800 = vadd.s32 %v1704, 768
        %v1801 = vadd.s32 %v1704, 776
        %v1802 = vadd.s32 %v1704, 784
        %v1803 = vadd.s32 %v1704, 792
        %v1804 = vadd.s32 %v1704, 800
        %v1805 = vadd.s32 %v1704, 808
        %v1806 = vadd.s32 %v1704, 816
        %v1807 = vadd.s32 %v1704, 824
        %v1808 = vadd.s32 %v1704, 832
        %v1809 = vadd.s32 %v1704, 840
        %v1810 = vadd.s32 %v1704, 848
        %v1811 = vadd.s32 %v1704, 856
        %v1812 = vadd.s32 %v1704, 864
        %v1813 = vadd.s32 %v1704, 872
        %v1814 = vadd.s32 %v1704, 880
        %v1815 = vadd.s32 %v1704, 888
        %v1816 = vadd.s32 %v1704, 896
        %v1817 = vadd.s32 %v1704, 904
        %v1818 = vadd.s32 %v1704, 912
        %v1819 = vadd.s32 %v1704, 920
        %v1820 = vadd.s32 %v1704, 928
        %v1821 = vadd.s32 %v1704, 936
        %v1822 = vadd.s32 %v1704, 944
        %v1823 = vadd.s32 %v1704, 952
        %v1824 = vadd.s32 %v1704, 960
        %v1825 = vadd.s32 %v1704, 968
        %v1826 = vadd.s32 %v1704, 976
        %v1827 = vadd.s32 %v1704, 984
        %v1828 = vadd.s32 %v1704, 992
        %v1829 = vadd.s32 %v1704, 1000
        %v1830 = vadd.s32 %v1704, 1008
        %v1831 = vadd.s32 %v1704, 1016
        %v1832 = vstv %s1702
        %v1833 = vadd.s32 %v1832, %v1704
        %v1834 = vadd.s32 %v1832, %v1705
        %v1835 = vadd.s32 %v1832, %v1706
        %v1836 = vadd.s32 %v1832, %v1707
        %v1837 = vadd.s32 %v1832, %v1708
        %v1838 = vadd.s32 %v1832, %v1709
        %v1839 = vadd.s32 %v1832, %v1710
        %v1840 = vadd.s32 %v1832, %v1711
        %v1841 = vadd.s32 %v1832, %v1712
        %v1842 = vadd.s32 %v1832, %v1713
        %v1843 = vadd.s32 %v1832, %v1714
        %v1844 = vadd.s32 %v1832, %v1715
        %v1845 = vadd.s32 %v1832, %v1716
        %v1846 = vadd.s32 %v1832, %v1717
        %v1847 = vadd.s32 %v1832, %v1718
        %v1848 = vadd.s32 %v1832, %v1719
        %v1849 = vadd.s32 %v1832, %v1720
        %v1850 = vadd.s32 %v1832, %v1721
        %v1851 = vadd.s32 %v1832, %v1722
        %v1852 = vadd.s32 %v1832, %v1723
        %v1853 = vadd.s32 %v1832, %v1724
        %v1854 = vadd.s32 %v1832, %v1725
        %v1855 = vadd.s32 %v1832, %v1726
        %v1856 = vadd.s32 %v1832, %v1727
        %v1857 = vadd.s32 %v1832, %v1728
        %v1858 = vadd.s32 %v1832, %v1729
        %v1859 = vadd.s32 %v1832, %v1730
        %v1860 = vadd.s32 %v1832, %v1731
        %v1861 = vadd.s32 %v1832, %v1732
        %v1862 = vadd.s32 %v1832, %v1733
        %v1863 = vadd.s32 %v1832, %v1734
        %v1864 = vadd.s32 %v1832, %v1735
        %v1865 = vadd.s32 %v1832, %v1736
        %v1866 = vadd.s32 %v1832, %v1737
        %v1867 = vadd.s32 %v1832, %v1738
        %v1868 = vadd.s32 %v1832, %v1739
        %v1869 = vadd.s32 %v1832, %v1740
        %v1870 = vadd.s32 %v1832, %v1741
        %v1871 = vadd.s32 %v1832, %v1742
        %v1872 = vadd.s32 %v1832, %v1743
        %v1873 = vadd.s32 %v1832, %v1744
        %v1874 = vadd.s32 %v1832, %v1745
        %v1875 = vadd.s32 %v1832, %v1746
        %v1876 = vadd.s32 %v1832, %v1747
        %v1877 = vadd.s32 %v1832, %v1748
        %v1878 = vadd.s32 %v1832, %v1749
        %v1879 = vadd.s32 %v1832, %v1750
        %v1880 = vadd.s32 %v1832, %v1751
        %v1881 = vadd.s32 %v1832, %v1752
        %v1882 = vadd.s32 %v1832, %v1753
        %v1883 = vadd.s32 %v1832, %v1754
        %v1884 = vadd.s32 %v1832, %v1755
        %v1885 = vadd.s32 %v1832, %v1756
        %v1886 = vadd.s32 %v1832, %v1757
        %v1887 = vadd.s32 %v1832, %v1758
        %v1888 = vadd.s32 %v1832, %v1759
        %v1889 = vadd.s32 %v1832, %v1760
        %v1890 = vadd.s32 %v1832, %v1761
        %v1891 = vadd.s32 %v1832, %v1762
        %v1892 = vadd.s32 %v1832, %v1763
        %v1893 = vadd.s32 %v1832, %v1764
        %v1894 = vadd.s32 %v1832, %v1765
        %v1895 = vadd.s32 %v1832, %v1766
        %v1896 = vadd.s32 %v1832, %v1767
        %v1897 = vadd.s32 %v1832, %v1768
        %v1898 = vadd.s32 %v1832, %v1769
        %v1899 = vadd.s32 %v1832, %v1770
        %v1900 = vadd.s32 %v1832, %v1771
        %v1901 = vadd.s32 %v1832, %v1772
        %v1902 = vadd.s32 %v1832, %v1773
        %v1903 = vadd.s32 %v1832, %v1774
        %v1904 = vadd.s32 %v1832, %v1775
        %v1905 = vadd.s32 %v1832, %v1776
        %v1906 = vadd.s32 %v1832, %v1777
        %v1907 = vadd.s32 %v1832, %v1778
        %v1908 = vadd.s32 %v1832, %v1779
        %v1909 = vadd.s32 %v1832, %v1780
        %v1910 = vadd.s32 %v1832, %v1781
        %v1911 = vadd.s32 %v1832, %v1782
        %v1912 = vadd.s32 %v1832, %v1783
        %v1913 = vadd.s32 %v1832, %v1784
        %v1914 = vadd.s32 %v1832, %v1785
        %v1915 = vadd.s32 %v1832, %v1786
        %v1916 = vadd.s32 %v1832, %v1787
        %v1917 = vadd.s32 %v1832, %v1788
        %v1918 = vadd.s32 %v1832, %v1789
        %v1919 = vadd.s32 %v1832, %v1790
        %v1920 = vadd.s32 %v1832, %v1791
        %v1921 = vadd.s32 %v1832, %v1792
        %v1922 = vadd.s32 %v1832, %v1793
        %v1923 = vadd.s32 %v1832, %v1794
        %v1924 = vadd.s32 %v1832, %v1795
        %v1925 = vadd.s32 %v1832, %v1796
        %v1926 = vadd.s32 %v1832, %v1797
        %v1927 = vadd.s32 %v1832, %v1798
        %v1928 = vadd.s32 %v1832, %v1799
        %v1929 = vadd.s32 %v1832, %v1800
        %v1930 = vadd.s32 %v1832, %v1801
        %v1931 = vadd.s32 %v1832, %v1802
        %v1932 = vadd.s32 %v1832, %v1803
        %v1933 = vadd.s32 %v1832, %v1804
        %v1934 = vadd.s32 %v1832, %v1805
        %v1935 = vadd.s32 %v1832, %v1806
        %v1936 = vadd.s32 %v1832, %v1807
        %v1937 = vadd.s32 %v1832, %v1808
        %v1938 = vadd.s32 %v1832, %v1809
        %v1939 = vadd.s32 %v1832, %v1810
        %v1940 = vadd.s32 %v1832, %v1811
        %v1941 = vadd.s32 %v1832, %v1812
        %v1942 = vadd.s32 %v1832, %v1813
        %v1943 = vadd.s32 %v1832, %v1814
        %v1944 = vadd.s32 %v1832, %v1815
        %v1945 = vadd.s32 %v1832, %v1816
        %v1946 = vadd.s32 %v1832, %v1817
        %v1947 = vadd.s32 %v1832, %v1818
        %v1948 = vadd.s32 %v1832, %v1819
        %v1949 = vadd.s32 %v1832, %v1820
        %v1950 = vadd.s32 %v1832, %v1821
        %v1951 = vadd.s32 %v1832, %v1822
        %v1952 = vadd.s32 %v1832, %v1823
        %v1953 = vadd.s32 %v1832, %v1824
        %v1954 = vadd.s32 %v1832, %v1825
        %v1955 = vadd.s32 %v1832, %v1826
        %v1956 = vadd.s32 %v1832, %v1827
        %v1957 = vadd.s32 %v1832, %v1828
        %v1958 = vadd.s32 %v1832, %v1829
        %v1959 = vadd.s32 %v1832, %v1830
        %v1960 = vadd.s32 %v1832, %v1831
        %vm1961 = vcmp.lt.s32.totalorder %v1833, 493
        %vm1962 = vcmp.lt.s32.totalorder %v1834, 493
        %vm1963 = vcmp.lt.s32.totalorder %v1835, 493
        %vm1964 = vcmp.lt.s32.totalorder %v1836, 493
        %vm1965 = vcmp.lt.s32.totalorder %v1837, 493
        %vm1966 = vcmp.lt.s32.totalorder %v1838, 493
        %vm1967 = vcmp.lt.s32.totalorder %v1839, 493
        %vm1968 = vcmp.lt.s32.totalorder %v1840, 493
        %vm1969 = vcmp.lt.s32.totalorder %v1841, 493
        %vm1970 = vcmp.lt.s32.totalorder %v1842, 493
        %vm1971 = vcmp.lt.s32.totalorder %v1843, 493
        %vm1972 = vcmp.lt.s32.totalorder %v1844, 493
        %vm1973 = vcmp.lt.s32.totalorder %v1845, 493
        %vm1974 = vcmp.lt.s32.totalorder %v1846, 493
        %vm1975 = vcmp.lt.s32.totalorder %v1847, 493
        %vm1976 = vcmp.lt.s32.totalorder %v1848, 493
        %vm1977 = vcmp.lt.s32.totalorder %v1849, 493
        %vm1978 = vcmp.lt.s32.totalorder %v1850, 493
        %vm1979 = vcmp.lt.s32.totalorder %v1851, 493
        %vm1980 = vcmp.lt.s32.totalorder %v1852, 493
        %vm1981 = vcmp.lt.s32.totalorder %v1853, 493
        %vm1982 = vcmp.lt.s32.totalorder %v1854, 493
        %vm1983 = vcmp.lt.s32.totalorder %v1855, 493
        %vm1984 = vcmp.lt.s32.totalorder %v1856, 493
        %vm1985 = vcmp.lt.s32.totalorder %v1857, 493
        %vm1986 = vcmp.lt.s32.totalorder %v1858, 493
        %vm1987 = vcmp.lt.s32.totalorder %v1859, 493
        %vm1988 = vcmp.lt.s32.totalorder %v1860, 493
        %vm1989 = vcmp.lt.s32.totalorder %v1861, 493
        %vm1990 = vcmp.lt.s32.totalorder %v1862, 493
        %vm1991 = vcmp.lt.s32.totalorder %v1863, 493
        %vm1992 = vcmp.lt.s32.totalorder %v1864, 493
        %vm1993 = vcmp.lt.s32.totalorder %v1865, 493
        %vm1994 = vcmp.lt.s32.totalorder %v1866, 493
        %vm1995 = vcmp.lt.s32.totalorder %v1867, 493
        %vm1996 = vcmp.lt.s32.totalorder %v1868, 493
        %vm1997 = vcmp.lt.s32.totalorder %v1869, 493
        %vm1998 = vcmp.lt.s32.totalorder %v1870, 493
        %vm1999 = vcmp.lt.s32.totalorder %v1871, 493
        %vm2000 = vcmp.lt.s32.totalorder %v1872, 493
        %vm2001 = vcmp.lt.s32.totalorder %v1873, 493
        %vm2002 = vcmp.lt.s32.totalorder %v1874, 493
        %vm2003 = vcmp.lt.s32.totalorder %v1875, 493
        %vm2004 = vcmp.lt.s32.totalorder %v1876, 493
        %vm2005 = vcmp.lt.s32.totalorder %v1877, 493
        %vm2006 = vcmp.lt.s32.totalorder %v1878, 493
        %vm2007 = vcmp.lt.s32.totalorder %v1879, 493
        %vm2008 = vcmp.lt.s32.totalorder %v1880, 493
        %vm2009 = vcmp.lt.s32.totalorder %v1881, 493
        %vm2010 = vcmp.lt.s32.totalorder %v1882, 493
        %vm2011 = vcmp.lt.s32.totalorder %v1883, 493
        %vm2012 = vcmp.lt.s32.totalorder %v1884, 493
        %vm2013 = vcmp.lt.s32.totalorder %v1885, 493
        %vm2014 = vcmp.lt.s32.totalorder %v1886, 493
        %vm2015 = vcmp.lt.s32.totalorder %v1887, 493
        %vm2016 = vcmp.lt.s32.totalorder %v1888, 493
        %vm2017 = vcmp.lt.s32.totalorder %v1889, 493
        %vm2018 = vcmp.lt.s32.totalorder %v1890, 493
        %vm2019 = vcmp.lt.s32.totalorder %v1891, 493
        %vm2020 = vcmp.lt.s32.totalorder %v1892, 493
        %vm2021 = vcmp.lt.s32.totalorder %v1893, 493
        %vm2022 = vcmp.lt.s32.totalorder %v1894, 493
        %vm2023 = vcmp.lt.s32.totalorder %v1895, 493
        %vm2024 = vcmp.lt.s32.totalorder %v1896, 493
        %vm2025 = vcmp.lt.s32.totalorder %v1897, 493
        %vm2026 = vcmp.lt.s32.totalorder %v1898, 493
        %vm2027 = vcmp.lt.s32.totalorder %v1899, 493
        %vm2028 = vcmp.lt.s32.totalorder %v1900, 493
        %vm2029 = vcmp.lt.s32.totalorder %v1901, 493
        %vm2030 = vcmp.lt.s32.totalorder %v1902, 493
        %vm2031 = vcmp.lt.s32.totalorder %v1903, 493
        %vm2032 = vcmp.lt.s32.totalorder %v1904, 493
        %vm2033 = vcmp.lt.s32.totalorder %v1905, 493
        %vm2034 = vcmp.lt.s32.totalorder %v1906, 493
        %vm2035 = vcmp.lt.s32.totalorder %v1907, 493
        %vm2036 = vcmp.lt.s32.totalorder %v1908, 493
        %vm2037 = vcmp.lt.s32.totalorder %v1909, 493
        %vm2038 = vcmp.lt.s32.totalorder %v1910, 493
        %vm2039 = vcmp.lt.s32.totalorder %v1911, 493
        %vm2040 = vcmp.lt.s32.totalorder %v1912, 493
        %vm2041 = vcmp.lt.s32.totalorder %v1913, 493
        %vm2042 = vcmp.lt.s32.totalorder %v1914, 493
        %vm2043 = vcmp.lt.s32.totalorder %v1915, 493
        %vm2044 = vcmp.lt.s32.totalorder %v1916, 493
        %vm2045 = vcmp.lt.s32.totalorder %v1917, 493
        %vm2046 = vcmp.lt.s32.totalorder %v1918, 493
        %vm2047 = vcmp.lt.s32.totalorder %v1919, 493
        %vm2048 = vcmp.lt.s32.totalorder %v1920, 493
        %vm2049 = vcmp.lt.s32.totalorder %v1921, 493
        %vm2050 = vcmp.lt.s32.totalorder %v1922, 493
        %vm2051 = vcmp.lt.s32.totalorder %v1923, 493
        %vm2052 = vcmp.lt.s32.totalorder %v1924, 493
        %vm2053 = vcmp.lt.s32.totalorder %v1925, 493
        %vm2054 = vcmp.lt.s32.totalorder %v1926, 493
        %vm2055 = vcmp.lt.s32.totalorder %v1927, 493
        %vm2056 = vcmp.lt.s32.totalorder %v1928, 493
        %vm2057 = vcmp.lt.s32.totalorder %v1929, 493
        %vm2058 = vcmp.lt.s32.totalorder %v1930, 493
        %vm2059 = vcmp.lt.s32.totalorder %v1931, 493
        %vm2060 = vcmp.lt.s32.totalorder %v1932, 493
        %vm2061 = vcmp.lt.s32.totalorder %v1933, 493
        %vm2062 = vcmp.lt.s32.totalorder %v1934, 493
        %vm2063 = vcmp.lt.s32.totalorder %v1935, 493
        %vm2064 = vcmp.lt.s32.totalorder %v1936, 493
        %vm2065 = vcmp.lt.s32.totalorder %v1937, 493
        %vm2066 = vcmp.lt.s32.totalorder %v1938, 493
        %vm2067 = vcmp.lt.s32.totalorder %v1939, 493
        %vm2068 = vcmp.lt.s32.totalorder %v1940, 493
        %vm2069 = vcmp.lt.s32.totalorder %v1941, 493
        %vm2070 = vcmp.lt.s32.totalorder %v1942, 493
        %vm2071 = vcmp.lt.s32.totalorder %v1943, 493
        %vm2072 = vcmp.lt.s32.totalorder %v1944, 493
        %vm2073 = vcmp.lt.s32.totalorder %v1945, 493
        %vm2074 = vcmp.lt.s32.totalorder %v1946, 493
        %vm2075 = vcmp.lt.s32.totalorder %v1947, 493
        %vm2076 = vcmp.lt.s32.totalorder %v1948, 493
        %vm2077 = vcmp.lt.s32.totalorder %v1949, 493
        %vm2078 = vcmp.lt.s32.totalorder %v1950, 493
        %vm2079 = vcmp.lt.s32.totalorder %v1951, 493
        %vm2080 = vcmp.lt.s32.totalorder %v1952, 493
        %vm2081 = vcmp.lt.s32.totalorder %v1953, 493
        %vm2082 = vcmp.lt.s32.totalorder %v1954, 493
        %vm2083 = vcmp.lt.s32.totalorder %v1955, 493
        %vm2084 = vcmp.lt.s32.totalorder %v1956, 493
        %vm2085 = vcmp.lt.s32.totalorder %v1957, 493
        %vm2086 = vcmp.lt.s32.totalorder %v1958, 493
        %vm2087 = vcmp.lt.s32.totalorder %v1959, 493
        %vm2088 = vcmp.lt.s32.totalorder %v1960, 493
        %v2089 = vsel %vm1961, 1, 0
        %v2090 = vsel %vm1962, 1, 0
        %v2091 = vsel %vm1963, 1, 0
        %v2092 = vsel %vm1964, 1, 0
        %v2093 = vsel %vm1965, 1, 0
        %v2094 = vsel %vm1966, 1, 0
        %v2095 = vsel %vm1967, 1, 0
        %v2096 = vsel %vm1968, 1, 0
        %v2097 = vsel %vm1969, 1, 0
        %v2098 = vsel %vm1970, 1, 0
        %v2099 = vsel %vm1971, 1, 0
        %v2100 = vsel %vm1972, 1, 0
        %v2101 = vsel %vm1973, 1, 0
        %v2102 = vsel %vm1974, 1, 0
        %v2103 = vsel %vm1975, 1, 0
        %v2104 = vsel %vm1976, 1, 0
        %v2105 = vsel %vm1977, 1, 0
        %v2106 = vsel %vm1978, 1, 0
        %v2107 = vsel %vm1979, 1, 0
        %v2108 = vsel %vm1980, 1, 0
        %v2109 = vsel %vm1981, 1, 0
        %v2110 = vsel %vm1982, 1, 0
        %v2111 = vsel %vm1983, 1, 0
        %v2112 = vsel %vm1984, 1, 0
        %v2113 = vsel %vm1985, 1, 0
        %v2114 = vsel %vm1986, 1, 0
        %v2115 = vsel %vm1987, 1, 0
        %v2116 = vsel %vm1988, 1, 0
        %v2117 = vsel %vm1989, 1, 0
        %v2118 = vsel %vm1990, 1, 0
        %v2119 = vsel %vm1991, 1, 0
        %v2120 = vsel %vm1992, 1, 0
        %v2121 = vsel %vm1993, 1, 0
        %v2122 = vsel %vm1994, 1, 0
        %v2123 = vsel %vm1995, 1, 0
        %v2124 = vsel %vm1996, 1, 0
        %v2125 = vsel %vm1997, 1, 0
        %v2126 = vsel %vm1998, 1, 0
        %v2127 = vsel %vm1999, 1, 0
        %v2128 = vsel %vm2000, 1, 0
        %v2129 = vsel %vm2001, 1, 0
        %v2130 = vsel %vm2002, 1, 0
        %v2131 = vsel %vm2003, 1, 0
        %v2132 = vsel %vm2004, 1, 0
        %v2133 = vsel %vm2005, 1, 0
        %v2134 = vsel %vm2006, 1, 0
        %v2135 = vsel %vm2007, 1, 0
        %v2136 = vsel %vm2008, 1, 0
        %v2137 = vsel %vm2009, 1, 0
        %v2138 = vsel %vm2010, 1, 0
        %v2139 = vsel %vm2011, 1, 0
        %v2140 = vsel %vm2012, 1, 0
        %v2141 = vsel %vm2013, 1, 0
        %v2142 = vsel %vm2014, 1, 0
        %v2143 = vsel %vm2015, 1, 0
        %v2144 = vsel %vm2016, 1, 0
        %v2145 = vsel %vm2017, 1, 0
        %v2146 = vsel %vm2018, 1, 0
        %v2147 = vsel %vm2019, 1, 0
        %v2148 = vsel %vm2020, 1, 0
        %v2149 = vsel %vm2021, 1, 0
        %v2150 = vsel %vm2022, 1, 0
        %v2151 = vsel %vm2023, 1, 0
        %v2152 = vsel %vm2024, 1, 0
        %v2153 = vsel %vm2025, 1, 0
        %v2154 = vsel %vm2026, 1, 0
        %v2155 = vsel %vm2027, 1, 0
        %v2156 = vsel %vm2028, 1, 0
        %v2157 = vsel %vm2029, 1, 0
        %v2158 = vsel %vm2030, 1, 0
        %v2159 = vsel %vm2031, 1, 0
        %v2160 = vsel %vm2032, 1, 0
        %v2161 = vsel %vm2033, 1, 0
        %v2162 = vsel %vm2034, 1, 0
        %v2163 = vsel %vm2035, 1, 0
        %v2164 = vsel %vm2036, 1, 0
        %v2165 = vsel %vm2037, 1, 0
        %v2166 = vsel %vm2038, 1, 0
        %v2167 = vsel %vm2039, 1, 0
        %v2168 = vsel %vm2040, 1, 0
        %v2169 = vsel %vm2041, 1, 0
        %v2170 = vsel %vm2042, 1, 0
        %v2171 = vsel %vm2043, 1, 0
        %v2172 = vsel %vm2044, 1, 0
        %v2173 = vsel %vm2045, 1, 0
        %v2174 = vsel %vm2046, 1, 0
        %v2175 = vsel %vm2047, 1, 0
        %v2176 = vsel %vm2048, 1, 0
        %v2177 = vsel %vm2049, 1, 0
        %v2178 = vsel %vm2050, 1, 0
        %v2179 = vsel %vm2051, 1, 0
        %v2180 = vsel %vm2052, 1, 0
        %v2181 = vsel %vm2053, 1, 0
        %v2182 = vsel %vm2054, 1, 0
        %v2183 = vsel %vm2055, 1, 0
        %v2184 = vsel %vm2056, 1, 0
        %v2185 = vsel %vm2057, 1, 0
        %v2186 = vsel %vm2058, 1, 0
        %v2187 = vsel %vm2059, 1, 0
        %v2188 = vsel %vm2060, 1, 0
        %v2189 = vsel %vm2061, 1, 0
        %v2190 = vsel %vm2062, 1, 0
        %v2191 = vsel %vm2063, 1, 0
        %v2192 = vsel %vm2064, 1, 0
        %v2193 = vsel %vm2065, 1, 0
        %v2194 = vsel %vm2066, 1, 0
        %v2195 = vsel %vm2067, 1, 0
        %v2196 = vsel %vm2068, 1, 0
        %v2197 = vsel %vm2069, 1, 0
        %v2198 = vsel %vm2070, 1, 0
        %v2199 = vsel %vm2071, 1, 0
        %v2200 = vsel %vm2072, 1, 0
        %v2201 = vsel %vm2073, 1, 0
        %v2202 = vsel %vm2074, 1, 0
        %v2203 = vsel %vm2075, 1, 0
        %v2204 = vsel %vm2076, 1, 0
        %v2205 = vsel %vm2077, 1, 0
        %v2206 = vsel %vm2078, 1, 0
        %v2207 = vsel %vm2079, 1, 0
        %v2208 = vsel %vm2080, 1, 0
        %v2209 = vsel %vm2081, 1, 0
        %v2210 = vsel %vm2082, 1, 0
        %v2211 = vsel %vm2083, 1, 0
        %v2212 = vsel %vm2084, 1, 0
        %v2213 = vsel %vm2085, 1, 0
        %v2214 = vsel %vm2086, 1, 0
        %v2215 = vsel %vm2087, 1, 0
        %v2216 = vsel %vm2088, 1, 0
        %vm2217 = vcmp.eq.s32.totalorder %v2089, 1
        %vm2218 = vcmp.eq.s32.totalorder %v2090, 1
        %vm2219 = vcmp.eq.s32.totalorder %v2091, 1
        %vm2220 = vcmp.eq.s32.totalorder %v2092, 1
        %vm2221 = vcmp.eq.s32.totalorder %v2093, 1
        %vm2222 = vcmp.eq.s32.totalorder %v2094, 1
        %vm2223 = vcmp.eq.s32.totalorder %v2095, 1
        %vm2224 = vcmp.eq.s32.totalorder %v2096, 1
        %vm2225 = vcmp.eq.s32.totalorder %v2097, 1
        %vm2226 = vcmp.eq.s32.totalorder %v2098, 1
        %vm2227 = vcmp.eq.s32.totalorder %v2099, 1
        %vm2228 = vcmp.eq.s32.totalorder %v2100, 1
        %vm2229 = vcmp.eq.s32.totalorder %v2101, 1
        %vm2230 = vcmp.eq.s32.totalorder %v2102, 1
        %vm2231 = vcmp.eq.s32.totalorder %v2103, 1
        %vm2232 = vcmp.eq.s32.totalorder %v2104, 1
        %vm2233 = vcmp.eq.s32.totalorder %v2105, 1
        %vm2234 = vcmp.eq.s32.totalorder %v2106, 1
        %vm2235 = vcmp.eq.s32.totalorder %v2107, 1
        %vm2236 = vcmp.eq.s32.totalorder %v2108, 1
        %vm2237 = vcmp.eq.s32.totalorder %v2109, 1
        %vm2238 = vcmp.eq.s32.totalorder %v2110, 1
        %vm2239 = vcmp.eq.s32.totalorder %v2111, 1
        %vm2240 = vcmp.eq.s32.totalorder %v2112, 1
        %vm2241 = vcmp.eq.s32.totalorder %v2113, 1
        %vm2242 = vcmp.eq.s32.totalorder %v2114, 1
        %vm2243 = vcmp.eq.s32.totalorder %v2115, 1
        %vm2244 = vcmp.eq.s32.totalorder %v2116, 1
        %vm2245 = vcmp.eq.s32.totalorder %v2117, 1
        %vm2246 = vcmp.eq.s32.totalorder %v2118, 1
        %vm2247 = vcmp.eq.s32.totalorder %v2119, 1
        %vm2248 = vcmp.eq.s32.totalorder %v2120, 1
        %vm2249 = vcmp.eq.s32.totalorder %v2121, 1
        %vm2250 = vcmp.eq.s32.totalorder %v2122, 1
        %vm2251 = vcmp.eq.s32.totalorder %v2123, 1
        %vm2252 = vcmp.eq.s32.totalorder %v2124, 1
        %vm2253 = vcmp.eq.s32.totalorder %v2125, 1
        %vm2254 = vcmp.eq.s32.totalorder %v2126, 1
        %vm2255 = vcmp.eq.s32.totalorder %v2127, 1
        %vm2256 = vcmp.eq.s32.totalorder %v2128, 1
        %vm2257 = vcmp.eq.s32.totalorder %v2129, 1
        %vm2258 = vcmp.eq.s32.totalorder %v2130, 1
        %vm2259 = vcmp.eq.s32.totalorder %v2131, 1
        %vm2260 = vcmp.eq.s32.totalorder %v2132, 1
        %vm2261 = vcmp.eq.s32.totalorder %v2133, 1
        %vm2262 = vcmp.eq.s32.totalorder %v2134, 1
        %vm2263 = vcmp.eq.s32.totalorder %v2135, 1
        %vm2264 = vcmp.eq.s32.totalorder %v2136, 1
        %vm2265 = vcmp.eq.s32.totalorder %v2137, 1
        %vm2266 = vcmp.eq.s32.totalorder %v2138, 1
        %vm2267 = vcmp.eq.s32.totalorder %v2139, 1
        %vm2268 = vcmp.eq.s32.totalorder %v2140, 1
        %vm2269 = vcmp.eq.s32.totalorder %v2141, 1
        %vm2270 = vcmp.eq.s32.totalorder %v2142, 1
        %vm2271 = vcmp.eq.s32.totalorder %v2143, 1
        %vm2272 = vcmp.eq.s32.totalorder %v2144, 1
        %vm2273 = vcmp.eq.s32.totalorder %v2145, 1
        %vm2274 = vcmp.eq.s32.totalorder %v2146, 1
        %vm2275 = vcmp.eq.s32.totalorder %v2147, 1
        %vm2276 = vcmp.eq.s32.totalorder %v2148, 1
        %vm2277 = vcmp.eq.s32.totalorder %v2149, 1
        %vm2278 = vcmp.eq.s32.totalorder %v2150, 1
        %vm2279 = vcmp.eq.s32.totalorder %v2151, 1
        %vm2280 = vcmp.eq.s32.totalorder %v2152, 1
        %vm2281 = vcmp.eq.s32.totalorder %v2153, 1
        %vm2282 = vcmp.eq.s32.totalorder %v2154, 1
        %vm2283 = vcmp.eq.s32.totalorder %v2155, 1
        %vm2284 = vcmp.eq.s32.totalorder %v2156, 1
        %vm2285 = vcmp.eq.s32.totalorder %v2157, 1
        %vm2286 = vcmp.eq.s32.totalorder %v2158, 1
        %vm2287 = vcmp.eq.s32.totalorder %v2159, 1
        %vm2288 = vcmp.eq.s32.totalorder %v2160, 1
        %vm2289 = vcmp.eq.s32.totalorder %v2161, 1
        %vm2290 = vcmp.eq.s32.totalorder %v2162, 1
        %vm2291 = vcmp.eq.s32.totalorder %v2163, 1
        %vm2292 = vcmp.eq.s32.totalorder %v2164, 1
        %vm2293 = vcmp.eq.s32.totalorder %v2165, 1
        %vm2294 = vcmp.eq.s32.totalorder %v2166, 1
        %vm2295 = vcmp.eq.s32.totalorder %v2167, 1
        %vm2296 = vcmp.eq.s32.totalorder %v2168, 1
        %vm2297 = vcmp.eq.s32.totalorder %v2169, 1
        %vm2298 = vcmp.eq.s32.totalorder %v2170, 1
        %vm2299 = vcmp.eq.s32.totalorder %v2171, 1
        %vm2300 = vcmp.eq.s32.totalorder %v2172, 1
        %vm2301 = vcmp.eq.s32.totalorder %v2173, 1
        %vm2302 = vcmp.eq.s32.totalorder %v2174, 1
        %vm2303 = vcmp.eq.s32.totalorder %v2175, 1
        %vm2304 = vcmp.eq.s32.totalorder %v2176, 1
        %vm2305 = vcmp.eq.s32.totalorder %v2177, 1
        %vm2306 = vcmp.eq.s32.totalorder %v2178, 1
        %vm2307 = vcmp.eq.s32.totalorder %v2179, 1
        %vm2308 = vcmp.eq.s32.totalorder %v2180, 1
        %vm2309 = vcmp.eq.s32.totalorder %v2181, 1
        %vm2310 = vcmp.eq.s32.totalorder %v2182, 1
        %vm2311 = vcmp.eq.s32.totalorder %v2183, 1
        %vm2312 = vcmp.eq.s32.totalorder %v2184, 1
        %vm2313 = vcmp.eq.s32.totalorder %v2185, 1
        %vm2314 = vcmp.eq.s32.totalorder %v2186, 1
        %vm2315 = vcmp.eq.s32.totalorder %v2187, 1
        %vm2316 = vcmp.eq.s32.totalorder %v2188, 1
        %vm2317 = vcmp.eq.s32.totalorder %v2189, 1
        %vm2318 = vcmp.eq.s32.totalorder %v2190, 1
        %vm2319 = vcmp.eq.s32.totalorder %v2191, 1
        %vm2320 = vcmp.eq.s32.totalorder %v2192, 1
        %vm2321 = vcmp.eq.s32.totalorder %v2193, 1
        %vm2322 = vcmp.eq.s32.totalorder %v2194, 1
        %vm2323 = vcmp.eq.s32.totalorder %v2195, 1
        %vm2324 = vcmp.eq.s32.totalorder %v2196, 1
        %vm2325 = vcmp.eq.s32.totalorder %v2197, 1
        %vm2326 = vcmp.eq.s32.totalorder %v2198, 1
        %vm2327 = vcmp.eq.s32.totalorder %v2199, 1
        %vm2328 = vcmp.eq.s32.totalorder %v2200, 1
        %vm2329 = vcmp.eq.s32.totalorder %v2201, 1
        %vm2330 = vcmp.eq.s32.totalorder %v2202, 1
        %vm2331 = vcmp.eq.s32.totalorder %v2203, 1
        %vm2332 = vcmp.eq.s32.totalorder %v2204, 1
        %vm2333 = vcmp.eq.s32.totalorder %v2205, 1
        %vm2334 = vcmp.eq.s32.totalorder %v2206, 1
        %vm2335 = vcmp.eq.s32.totalorder %v2207, 1
        %vm2336 = vcmp.eq.s32.totalorder %v2208, 1
        %vm2337 = vcmp.eq.s32.totalorder %v2209, 1
        %vm2338 = vcmp.eq.s32.totalorder %v2210, 1
        %vm2339 = vcmp.eq.s32.totalorder %v2211, 1
        %vm2340 = vcmp.eq.s32.totalorder %v2212, 1
        %vm2341 = vcmp.eq.s32.totalorder %v2213, 1
        %vm2342 = vcmp.eq.s32.totalorder %v2214, 1
        %vm2343 = vcmp.eq.s32.totalorder %v2215, 1
        %vm2344 = vcmp.eq.s32.totalorder %v2216, 1
        %v2345 = vsel %vm2217, %v1445, 0.0
        %v2346 = vsel %vm2218, %v1446, 0.0
        %v2347 = vsel %vm2219, %v1447, 0.0
        %v2348 = vsel %vm2220, %v1448, 0.0
        %v2349 = vsel %vm2221, %v1449, 0.0
        %v2350 = vsel %vm2222, %v1450, 0.0
        %v2351 = vsel %vm2223, %v1451, 0.0
        %v2352 = vsel %vm2224, %v1452, 0.0
        %v2353 = vsel %vm2225, %v1453, 0.0
        %v2354 = vsel %vm2226, %v1454, 0.0
        %v2355 = vsel %vm2227, %v1455, 0.0
        %v2356 = vsel %vm2228, %v1456, 0.0
        %v2357 = vsel %vm2229, %v1457, 0.0
        %v2358 = vsel %vm2230, %v1458, 0.0
        %v2359 = vsel %vm2231, %v1459, 0.0
        %v2360 = vsel %vm2232, %v1460, 0.0
        %v2361 = vsel %vm2233, %v1461, 0.0
        %v2362 = vsel %vm2234, %v1462, 0.0
        %v2363 = vsel %vm2235, %v1463, 0.0
        %v2364 = vsel %vm2236, %v1464, 0.0
        %v2365 = vsel %vm2237, %v1465, 0.0
        %v2366 = vsel %vm2238, %v1466, 0.0
        %v2367 = vsel %vm2239, %v1467, 0.0
        %v2368 = vsel %vm2240, %v1468, 0.0
        %v2369 = vsel %vm2241, %v1469, 0.0
        %v2370 = vsel %vm2242, %v1470, 0.0
        %v2371 = vsel %vm2243, %v1471, 0.0
        %v2372 = vsel %vm2244, %v1472, 0.0
        %v2373 = vsel %vm2245, %v1473, 0.0
        %v2374 = vsel %vm2246, %v1474, 0.0
        %v2375 = vsel %vm2247, %v1475, 0.0
        %v2376 = vsel %vm2248, %v1476, 0.0
        %v2377 = vsel %vm2249, %v1477, 0.0
        %v2378 = vsel %vm2250, %v1478, 0.0
        %v2379 = vsel %vm2251, %v1479, 0.0
        %v2380 = vsel %vm2252, %v1480, 0.0
        %v2381 = vsel %vm2253, %v1481, 0.0
        %v2382 = vsel %vm2254, %v1482, 0.0
        %v2383 = vsel %vm2255, %v1483, 0.0
        %v2384 = vsel %vm2256, %v1484, 0.0
        %v2385 = vsel %vm2257, %v1485, 0.0
        %v2386 = vsel %vm2258, %v1486, 0.0
        %v2387 = vsel %vm2259, %v1487, 0.0
        %v2388 = vsel %vm2260, %v1488, 0.0
        %v2389 = vsel %vm2261, %v1489, 0.0
        %v2390 = vsel %vm2262, %v1490, 0.0
        %v2391 = vsel %vm2263, %v1491, 0.0
        %v2392 = vsel %vm2264, %v1492, 0.0
        %v2393 = vsel %vm2265, %v1493, 0.0
        %v2394 = vsel %vm2266, %v1494, 0.0
        %v2395 = vsel %vm2267, %v1495, 0.0
        %v2396 = vsel %vm2268, %v1496, 0.0
        %v2397 = vsel %vm2269, %v1497, 0.0
        %v2398 = vsel %vm2270, %v1498, 0.0
        %v2399 = vsel %vm2271, %v1499, 0.0
        %v2400 = vsel %vm2272, %v1500, 0.0
        %v2401 = vsel %vm2273, %v1501, 0.0
        %v2402 = vsel %vm2274, %v1502, 0.0
        %v2403 = vsel %vm2275, %v1503, 0.0
        %v2404 = vsel %vm2276, %v1504, 0.0
        %v2405 = vsel %vm2277, %v1505, 0.0
        %v2406 = vsel %vm2278, %v1506, 0.0
        %v2407 = vsel %vm2279, %v1507, 0.0
        %v2408 = vsel %vm2280, %v1508, 0.0
        %v2409 = vsel %vm2281, %v1509, 0.0
        %v2410 = vsel %vm2282, %v1510, 0.0
        %v2411 = vsel %vm2283, %v1511, 0.0
        %v2412 = vsel %vm2284, %v1512, 0.0
        %v2413 = vsel %vm2285, %v1513, 0.0
        %v2414 = vsel %vm2286, %v1514, 0.0
        %v2415 = vsel %vm2287, %v1515, 0.0
        %v2416 = vsel %vm2288, %v1516, 0.0
        %v2417 = vsel %vm2289, %v1517, 0.0
        %v2418 = vsel %vm2290, %v1518, 0.0
        %v2419 = vsel %vm2291, %v1519, 0.0
        %v2420 = vsel %vm2292, %v1520, 0.0
        %v2421 = vsel %vm2293, %v1521, 0.0
        %v2422 = vsel %vm2294, %v1522, 0.0
        %v2423 = vsel %vm2295, %v1523, 0.0
        %v2424 = vsel %vm2296, %v1524, 0.0
        %v2425 = vsel %vm2297, %v1525, 0.0
        %v2426 = vsel %vm2298, %v1526, 0.0
        %v2427 = vsel %vm2299, %v1527, 0.0
        %v2428 = vsel %vm2300, %v1528, 0.0
        %v2429 = vsel %vm2301, %v1529, 0.0
        %v2430 = vsel %vm2302, %v1530, 0.0
        %v2431 = vsel %vm2303, %v1531, 0.0
        %v2432 = vsel %vm2304, %v1532, 0.0
        %v2433 = vsel %vm2305, %v1533, 0.0
        %v2434 = vsel %vm2306, %v1534, 0.0
        %v2435 = vsel %vm2307, %v1535, 0.0
        %v2436 = vsel %vm2308, %v1536, 0.0
        %v2437 = vsel %vm2309, %v1537, 0.0
        %v2438 = vsel %vm2310, %v1538, 0.0
        %v2439 = vsel %vm2311, %v1539, 0.0
        %v2440 = vsel %vm2312, %v1540, 0.0
        %v2441 = vsel %vm2313, %v1541, 0.0
        %v2442 = vsel %vm2314, %v1542, 0.0
        %v2443 = vsel %vm2315, %v1543, 0.0
        %v2444 = vsel %vm2316, %v1544, 0.0
        %v2445 = vsel %vm2317, %v1545, 0.0
        %v2446 = vsel %vm2318, %v1546, 0.0
        %v2447 = vsel %vm2319, %v1547, 0.0
        %v2448 = vsel %vm2320, %v1548, 0.0
        %v2449 = vsel %vm2321, %v1549, 0.0
        %v2450 = vsel %vm2322, %v1550, 0.0
        %v2451 = vsel %vm2323, %v1551, 0.0
        %v2452 = vsel %vm2324, %v1552, 0.0
        %v2453 = vsel %vm2325, %v1553, 0.0
        %v2454 = vsel %vm2326, %v1554, 0.0
        %v2455 = vsel %vm2327, %v1555, 0.0
        %v2456 = vsel %vm2328, %v1556, 0.0
        %v2457 = vsel %vm2329, %v1557, 0.0
        %v2458 = vsel %vm2330, %v1558, 0.0
        %v2459 = vsel %vm2331, %v1559, 0.0
        %v2460 = vsel %vm2332, %v1560, 0.0
        %v2461 = vsel %vm2333, %v1561, 0.0
        %v2462 = vsel %vm2334, %v1562, 0.0
        %v2463 = vsel %vm2335, %v1563, 0.0
        %v2464 = vsel %vm2336, %v1564, 0.0
        %v2465 = vsel %vm2337, %v1565, 0.0
        %v2466 = vsel %vm2338, %v1566, 0.0
        %v2467 = vsel %vm2339, %v1567, 0.0
        %v2468 = vsel %vm2340, %v1568, 0.0
        %v2469 = vsel %vm2341, %v1569, 0.0
        %v2470 = vsel %vm2342, %v1570, 0.0
        %v2471 = vsel %vm2343, %v1571, 0.0
        %v2472 = vsel %vm2344, %v1572, 0.0
        %v2473 = vld [vmem:[#allocation3] sm:$0x1]
        %v2474 = vadd.f32 %v2345, %v2346
        %v2475 = vadd.f32 %v2474, %v2347
        %v2476 = vadd.f32 %v2475, %v2348
        %v2477 = vadd.f32 %v2476, %v2349
        %v2478 = vadd.f32 %v2477, %v2350
        %v2479 = vadd.f32 %v2478, %v2351
        %v2480 = vadd.f32 %v2479, %v2352
        %v2481 = vadd.f32 %v2480, %v2353
        %v2482 = vadd.f32 %v2481, %v2354
        %v2483 = vadd.f32 %v2482, %v2355
        %v2484 = vadd.f32 %v2483, %v2356
        %v2485 = vadd.f32 %v2484, %v2357
        %v2486 = vadd.f32 %v2485, %v2358
        %v2487 = vadd.f32 %v2486, %v2359
        %v2488 = vadd.f32 %v2487, %v2360
        %v2489 = vadd.f32 %v2488, %v2361
        %v2490 = vadd.f32 %v2489, %v2362
        %v2491 = vadd.f32 %v2490, %v2363
        %v2492 = vadd.f32 %v2491, %v2364
        %v2493 = vadd.f32 %v2492, %v2365
        %v2494 = vadd.f32 %v2493, %v2366
        %v2495 = vadd.f32 %v2494, %v2367
        %v2496 = vadd.f32 %v2495, %v2368
        %v2497 = vadd.f32 %v2496, %v2369
        %v2498 = vadd.f32 %v2497, %v2370
        %v2499 = vadd.f32 %v2498, %v2371
        %v2500 = vadd.f32 %v2499, %v2372
        %v2501 = vadd.f32 %v2500, %v2373
        %v2502 = vadd.f32 %v2501, %v2374
        %v2503 = vadd.f32 %v2502, %v2375
        %v2504 = vadd.f32 %v2503, %v2376
        %v2505 = vadd.f32 %v2504, %v2377
        %v2506 = vadd.f32 %v2505, %v2378
        %v2507 = vadd.f32 %v2506, %v2379
        %v2508 = vadd.f32 %v2507, %v2380
        %v2509 = vadd.f32 %v2508, %v2381
        %v2510 = vadd.f32 %v2509, %v2382
        %v2511 = vadd.f32 %v2510, %v2383
        %v2512 = vadd.f32 %v2511, %v2384
        %v2513 = vadd.f32 %v2512, %v2385
        %v2514 = vadd.f32 %v2513, %v2386
        %v2515 = vadd.f32 %v2514, %v2387
        %v2516 = vadd.f32 %v2515, %v2388
        %v2517 = vadd.f32 %v2516, %v2389
        %v2518 = vadd.f32 %v2517, %v2390
        %v2519 = vadd.f32 %v2518, %v2391
        %v2520 = vadd.f32 %v2519, %v2392
        %v2521 = vadd.f32 %v2520, %v2393
        %v2522 = vadd.f32 %v2521, %v2394
        %v2523 = vadd.f32 %v2522, %v2395
        %v2524 = vadd.f32 %v2523, %v2396
        %v2525 = vadd.f32 %v2524, %v2397
        %v2526 = vadd.f32 %v2525, %v2398
        %v2527 = vadd.f32 %v2526, %v2399
        %v2528 = vadd.f32 %v2527, %v2400
        %v2529 = vadd.f32 %v2528, %v2401
        %v2530 = vadd.f32 %v2529, %v2402
        %v2531 = vadd.f32 %v2530, %v2403
        %v2532 = vadd.f32 %v2531, %v2404
        %v2533 = vadd.f32 %v2532, %v2405
        %v2534 = vadd.f32 %v2533, %v2406
        %v2535 = vadd.f32 %v2534, %v2407
        %v2536 = vadd.f32 %v2535, %v2408
        %v2537 = vadd.f32 %v2536, %v2409
        %v2538 = vadd.f32 %v2537, %v2410
        %v2539 = vadd.f32 %v2538, %v2411
        %v2540 = vadd.f32 %v2539, %v2412
        %v2541 = vadd.f32 %v2540, %v2413
        %v2542 = vadd.f32 %v2541, %v2414
        %v2543 = vadd.f32 %v2542, %v2415
        %v2544 = vadd.f32 %v2543, %v2416
        %v2545 = vadd.f32 %v2544, %v2417
        %v2546 = vadd.f32 %v2545, %v2418
        %v2547 = vadd.f32 %v2546, %v2419
        %v2548 = vadd.f32 %v2547, %v2420
        %v2549 = vadd.f32 %v2548, %v2421
        %v2550 = vadd.f32 %v2549, %v2422
        %v2551 = vadd.f32 %v2550, %v2423
        %v2552 = vadd.f32 %v2551, %v2424
        %v2553 = vadd.f32 %v2552, %v2425
        %v2554 = vadd.f32 %v2553, %v2426
        %v2555 = vadd.f32 %v2554, %v2427
        %v2556 = vadd.f32 %v2555, %v2428
        %v2557 = vadd.f32 %v2556, %v2429
        %v2558 = vadd.f32 %v2557, %v2430
        %v2559 = vadd.f32 %v2558, %v2431
        %v2560 = vadd.f32 %v2559, %v2432
        %v2561 = vadd.f32 %v2560, %v2433
        %v2562 = vadd.f32 %v2561, %v2434
        %v2563 = vadd.f32 %v2562, %v2435
        %v2564 = vadd.f32 %v2563, %v2436
        %v2565 = vadd.f32 %v2564, %v2437
        %v2566 = vadd.f32 %v2565, %v2438
        %v2567 = vadd.f32 %v2566, %v2439
        %v2568 = vadd.f32 %v2567, %v2440
        %v2569 = vadd.f32 %v2568, %v2441
        %v2570 = vadd.f32 %v2569, %v2442
        %v2571 = vadd.f32 %v2570, %v2443
        %v2572 = vadd.f32 %v2571, %v2444
        %v2573 = vadd.f32 %v2572, %v2445
        %v2574 = vadd.f32 %v2573, %v2446
        %v2575 = vadd.f32 %v2574, %v2447
        %v2576 = vadd.f32 %v2575, %v2448
        %v2577 = vadd.f32 %v2576, %v2449
        %v2578 = vadd.f32 %v2577, %v2450
        %v2579 = vadd.f32 %v2578, %v2451
        %v2580 = vadd.f32 %v2579, %v2452
        %v2581 = vadd.f32 %v2580, %v2453
        %v2582 = vadd.f32 %v2581, %v2454
        %v2583 = vadd.f32 %v2582, %v2455
        %v2584 = vadd.f32 %v2583, %v2456
        %v2585 = vadd.f32 %v2584, %v2457
        %v2586 = vadd.f32 %v2585, %v2458
        %v2587 = vadd.f32 %v2586, %v2459
        %v2588 = vadd.f32 %v2587, %v2460
        %v2589 = vadd.f32 %v2588, %v2461
        %v2590 = vadd.f32 %v2589, %v2462
        %v2591 = vadd.f32 %v2590, %v2463
        %v2592 = vadd.f32 %v2591, %v2464
        %v2593 = vadd.f32 %v2592, %v2465
        %v2594 = vadd.f32 %v2593, %v2466
        %v2595 = vadd.f32 %v2594, %v2467
        %v2596 = vadd.f32 %v2595, %v2468
        %v2597 = vadd.f32 %v2596, %v2469
        %v2598 = vadd.f32 %v2597, %v2470
        %v2599 = vadd.f32 %v2598, %v2471
        %v2600 = vadd.f32 %v2599, %v2472
        %v2601 = vrot.slane %v2600, 4
        %v2602 = vadd.f32 %v2600, %v2601
        %v2603 = vrot.slane %v2602, 2
        %v2604 = vadd.f32 %v2602, %v2603
        %v2605 = vrot.slane %v2604, 1
        %v2606 = vadd.f32 %v2604, %v2605
        %v2607 = vadd.f32 %v2473, %v2606
        %2608 = vst [vmem:[#allocation3] sm:$0x1] %v2607
        %v2609 = vld [vmem:[#allocation4] sm:$0x1]
        %v2610 = vmul.f32 %v2345, %v2345
        %v2611 = vmul.f32 %v2346, %v2346
        %v2612 = vmul.f32 %v2347, %v2347
        %v2613 = vmul.f32 %v2348, %v2348
        %v2614 = vmul.f32 %v2349, %v2349
        %v2615 = vmul.f32 %v2350, %v2350
        %v2616 = vmul.f32 %v2351, %v2351
        %v2617 = vmul.f32 %v2352, %v2352
        %v2618 = vmul.f32 %v2353, %v2353
        %v2619 = vmul.f32 %v2354, %v2354
        %v2620 = vmul.f32 %v2355, %v2355
        %v2621 = vmul.f32 %v2356, %v2356
        %v2622 = vmul.f32 %v2357, %v2357
        %v2623 = vmul.f32 %v2358, %v2358
        %v2624 = vmul.f32 %v2359, %v2359
        %v2625 = vmul.f32 %v2360, %v2360
        %v2626 = vmul.f32 %v2361, %v2361
        %v2627 = vmul.f32 %v2362, %v2362
        %v2628 = vmul.f32 %v2363, %v2363
        %v2629 = vmul.f32 %v2364, %v2364
        %v2630 = vmul.f32 %v2365, %v2365
        %v2631 = vmul.f32 %v2366, %v2366
        %v2632 = vmul.f32 %v2367, %v2367
        %v2633 = vmul.f32 %v2368, %v2368
        %v2634 = vmul.f32 %v2369, %v2369
        %v2635 = vmul.f32 %v2370, %v2370
        %v2636 = vmul.f32 %v2371, %v2371
        %v2637 = vmul.f32 %v2372, %v2372
        %v2638 = vmul.f32 %v2373, %v2373
        %v2639 = vmul.f32 %v2374, %v2374
        %v2640 = vmul.f32 %v2375, %v2375
        %v2641 = vmul.f32 %v2376, %v2376
        %v2642 = vmul.f32 %v2377, %v2377
        %v2643 = vmul.f32 %v2378, %v2378
        %v2644 = vmul.f32 %v2379, %v2379
        %v2645 = vmul.f32 %v2380, %v2380
        %v2646 = vmul.f32 %v2381, %v2381
        %v2647 = vmul.f32 %v2382, %v2382
        %v2648 = vmul.f32 %v2383, %v2383
        %v2649 = vmul.f32 %v2384, %v2384
        %v2650 = vmul.f32 %v2385, %v2385
        %v2651 = vmul.f32 %v2386, %v2386
        %v2652 = vmul.f32 %v2387, %v2387
        %v2653 = vmul.f32 %v2388, %v2388
        %v2654 = vmul.f32 %v2389, %v2389
        %v2655 = vmul.f32 %v2390, %v2390
        %v2656 = vmul.f32 %v2391, %v2391
        %v2657 = vmul.f32 %v2392, %v2392
        %v2658 = vmul.f32 %v2393, %v2393
        %v2659 = vmul.f32 %v2394, %v2394
        %v2660 = vmul.f32 %v2395, %v2395
        %v2661 = vmul.f32 %v2396, %v2396
        %v2662 = vmul.f32 %v2397, %v2397
        %v2663 = vmul.f32 %v2398, %v2398
        %v2664 = vmul.f32 %v2399, %v2399
        %v2665 = vmul.f32 %v2400, %v2400
        %v2666 = vmul.f32 %v2401, %v2401
        %v2667 = vmul.f32 %v2402, %v2402
        %v2668 = vmul.f32 %v2403, %v2403
        %v2669 = vmul.f32 %v2404, %v2404
        %v2670 = vmul.f32 %v2405, %v2405
        %v2671 = vmul.f32 %v2406, %v2406
        %v2672 = vmul.f32 %v2407, %v2407
        %v2673 = vmul.f32 %v2408, %v2408
        %v2674 = vmul.f32 %v2409, %v2409
        %v2675 = vmul.f32 %v2410, %v2410
        %v2676 = vmul.f32 %v2411, %v2411
        %v2677 = vmul.f32 %v2412, %v2412
        %v2678 = vmul.f32 %v2413, %v2413
        %v2679 = vmul.f32 %v2414, %v2414
        %v2680 = vmul.f32 %v2415, %v2415
        %v2681 = vmul.f32 %v2416, %v2416
        %v2682 = vmul.f32 %v2417, %v2417
        %v2683 = vmul.f32 %v2418, %v2418
        %v2684 = vmul.f32 %v2419, %v2419
        %v2685 = vmul.f32 %v2420, %v2420
        %v2686 = vmul.f32 %v2421, %v2421
        %v2687 = vmul.f32 %v2422, %v2422
        %v2688 = vmul.f32 %v2423, %v2423
        %v2689 = vmul.f32 %v2424, %v2424
        %v2690 = vmul.f32 %v2425, %v2425
        %v2691 = vmul.f32 %v2426, %v2426
        %v2692 = vmul.f32 %v2427, %v2427
        %v2693 = vmul.f32 %v2428, %v2428
        %v2694 = vmul.f32 %v2429, %v2429
        %v2695 = vmul.f32 %v2430, %v2430
        %v2696 = vmul.f32 %v2431, %v2431
        %v2697 = vmul.f32 %v2432, %v2432
        %v2698 = vmul.f32 %v2433, %v2433
        %v2699 = vmul.f32 %v2434, %v2434
        %v2700 = vmul.f32 %v2435, %v2435
        %v2701 = vmul.f32 %v2436, %v2436
        %v2702 = vmul.f32 %v2437, %v2437
        %v2703 = vmul.f32 %v2438, %v2438
        %v2704 = vmul.f32 %v2439, %v2439
        %v2705 = vmul.f32 %v2440, %v2440
        %v2706 = vmul.f32 %v2441, %v2441
        %v2707 = vmul.f32 %v2442, %v2442
        %v2708 = vmul.f32 %v2443, %v2443
        %v2709 = vmul.f32 %v2444, %v2444
        %v2710 = vmul.f32 %v2445, %v2445
        %v2711 = vmul.f32 %v2446, %v2446
        %v2712 = vmul.f32 %v2447, %v2447
        %v2713 = vmul.f32 %v2448, %v2448
        %v2714 = vmul.f32 %v2449, %v2449
        %v2715 = vmul.f32 %v2450, %v2450
        %v2716 = vmul.f32 %v2451, %v2451
        %v2717 = vmul.f32 %v2452, %v2452
        %v2718 = vmul.f32 %v2453, %v2453
        %v2719 = vmul.f32 %v2454, %v2454
        %v2720 = vmul.f32 %v2455, %v2455
        %v2721 = vmul.f32 %v2456, %v2456
        %v2722 = vmul.f32 %v2457, %v2457
        %v2723 = vmul.f32 %v2458, %v2458
        %v2724 = vmul.f32 %v2459, %v2459
        %v2725 = vmul.f32 %v2460, %v2460
        %v2726 = vmul.f32 %v2461, %v2461
        %v2727 = vmul.f32 %v2462, %v2462
        %v2728 = vmul.f32 %v2463, %v2463
        %v2729 = vmul.f32 %v2464, %v2464
        %v2730 = vmul.f32 %v2465, %v2465
        %v2731 = vmul.f32 %v2466, %v2466
        %v2732 = vmul.f32 %v2467, %v2467
        %v2733 = vmul.f32 %v2468, %v2468
        %v2734 = vmul.f32 %v2469, %v2469
        %v2735 = vmul.f32 %v2470, %v2470
        %v2736 = vmul.f32 %v2471, %v2471
        %v2737 = vmul.f32 %v2472, %v2472
        %v2738 = vadd.f32 %v2610, %v2611
        %v2739 = vadd.f32 %v2738, %v2612
        %v2740 = vadd.f32 %v2739, %v2613
        %v2741 = vadd.f32 %v2740, %v2614
        %v2742 = vadd.f32 %v2741, %v2615
        %v2743 = vadd.f32 %v2742, %v2616
        %v2744 = vadd.f32 %v2743, %v2617
        %v2745 = vadd.f32 %v2744, %v2618
        %v2746 = vadd.f32 %v2745, %v2619
        %v2747 = vadd.f32 %v2746, %v2620
        %v2748 = vadd.f32 %v2747, %v2621
        %v2749 = vadd.f32 %v2748, %v2622
        %v2750 = vadd.f32 %v2749, %v2623
        %v2751 = vadd.f32 %v2750, %v2624
        %v2752 = vadd.f32 %v2751, %v2625
        %v2753 = vadd.f32 %v2752, %v2626
        %v2754 = vadd.f32 %v2753, %v2627
        %v2755 = vadd.f32 %v2754, %v2628
        %v2756 = vadd.f32 %v2755, %v2629
        %v2757 = vadd.f32 %v2756, %v2630
        %v2758 = vadd.f32 %v2757, %v2631
        %v2759 = vadd.f32 %v2758, %v2632
        %v2760 = vadd.f32 %v2759, %v2633
        %v2761 = vadd.f32 %v2760, %v2634
        %v2762 = vadd.f32 %v2761, %v2635
        %v2763 = vadd.f32 %v2762, %v2636
        %v2764 = vadd.f32 %v2763, %v2637
        %v2765 = vadd.f32 %v2764, %v2638
        %v2766 = vadd.f32 %v2765, %v2639
        %v2767 = vadd.f32 %v2766, %v2640
        %v2768 = vadd.f32 %v2767, %v2641
        %v2769 = vadd.f32 %v2768, %v2642
        %v2770 = vadd.f32 %v2769, %v2643
        %v2771 = vadd.f32 %v2770, %v2644
        %v2772 = vadd.f32 %v2771, %v2645
        %v2773 = vadd.f32 %v2772, %v2646
        %v2774 = vadd.f32 %v2773, %v2647
        %v2775 = vadd.f32 %v2774, %v2648
        %v2776 = vadd.f32 %v2775, %v2649
        %v2777 = vadd.f32 %v2776, %v2650
        %v2778 = vadd.f32 %v2777, %v2651
        %v2779 = vadd.f32 %v2778, %v2652
        %v2780 = vadd.f32 %v2779, %v2653
        %v2781 = vadd.f32 %v2780, %v2654
        %v2782 = vadd.f32 %v2781, %v2655
        %v2783 = vadd.f32 %v2782, %v2656
        %v2784 = vadd.f32 %v2783, %v2657
        %v2785 = vadd.f32 %v2784, %v2658
        %v2786 = vadd.f32 %v2785, %v2659
        %v2787 = vadd.f32 %v2786, %v2660
        %v2788 = vadd.f32 %v2787, %v2661
        %v2789 = vadd.f32 %v2788, %v2662
        %v2790 = vadd.f32 %v2789, %v2663
        %v2791 = vadd.f32 %v2790, %v2664
        %v2792 = vadd.f32 %v2791, %v2665
        %v2793 = vadd.f32 %v2792, %v2666
        %v2794 = vadd.f32 %v2793, %v2667
        %v2795 = vadd.f32 %v2794, %v2668
        %v2796 = vadd.f32 %v2795, %v2669
        %v2797 = vadd.f32 %v2796, %v2670
        %v2798 = vadd.f32 %v2797, %v2671
        %v2799 = vadd.f32 %v2798, %v2672
        %v2800 = vadd.f32 %v2799, %v2673
        %v2801 = vadd.f32 %v2800, %v2674
        %v2802 = vadd.f32 %v2801, %v2675
        %v2803 = vadd.f32 %v2802, %v2676
        %v2804 = vadd.f32 %v2803, %v2677
        %v2805 = vadd.f32 %v2804, %v2678
        %v2806 = vadd.f32 %v2805, %v2679
        %v2807 = vadd.f32 %v2806, %v2680
        %v2808 = vadd.f32 %v2807, %v2681
        %v2809 = vadd.f32 %v2808, %v2682
        %v2810 = vadd.f32 %v2809, %v2683
        %v2811 = vadd.f32 %v2810, %v2684
        %v2812 = vadd.f32 %v2811, %v2685
        %v2813 = vadd.f32 %v2812, %v2686
        %v2814 = vadd.f32 %v2813, %v2687
        %v2815 = vadd.f32 %v2814, %v2688
        %v2816 = vadd.f32 %v2815, %v2689
        %v2817 = vadd.f32 %v2816, %v2690
        %v2818 = vadd.f32 %v2817, %v2691
        %v2819 = vadd.f32 %v2818, %v2692
        %v2820 = vadd.f32 %v2819, %v2693
        %v2821 = vadd.f32 %v2820, %v2694
        %v2822 = vadd.f32 %v2821, %v2695
        %v2823 = vadd.f32 %v2822, %v2696
        %v2824 = vadd.f32 %v2823, %v2697
        %v2825 = vadd.f32 %v2824, %v2698
        %v2826 = vadd.f32 %v2825, %v2699
        %v2827 = vadd.f32 %v2826, %v2700
        %v2828 = vadd.f32 %v2827, %v2701
        %v2829 = vadd.f32 %v2828, %v2702
        %v2830 = vadd.f32 %v2829, %v2703
        %v2831 = vadd.f32 %v2830, %v2704
        %v2832 = vadd.f32 %v2831, %v2705
        %v2833 = vadd.f32 %v2832, %v2706
        %v2834 = vadd.f32 %v2833, %v2707
        %v2835 = vadd.f32 %v2834, %v2708
        %v2836 = vadd.f32 %v2835, %v2709
        %v2837 = vadd.f32 %v2836, %v2710
        %v2838 = vadd.f32 %v2837, %v2711
        %v2839 = vadd.f32 %v2838, %v2712
        %v2840 = vadd.f32 %v2839, %v2713
        %v2841 = vadd.f32 %v2840, %v2714
        %v2842 = vadd.f32 %v2841, %v2715
        %v2843 = vadd.f32 %v2842, %v2716
        %v2844 = vadd.f32 %v2843, %v2717
        %v2845 = vadd.f32 %v2844, %v2718
        %v2846 = vadd.f32 %v2845, %v2719
        %v2847 = vadd.f32 %v2846, %v2720
        %v2848 = vadd.f32 %v2847, %v2721
        %v2849 = vadd.f32 %v2848, %v2722
        %v2850 = vadd.f32 %v2849, %v2723
        %v2851 = vadd.f32 %v2850, %v2724
        %v2852 = vadd.f32 %v2851, %v2725
        %v2853 = vadd.f32 %v2852, %v2726
        %v2854 = vadd.f32 %v2853, %v2727
        %v2855 = vadd.f32 %v2854, %v2728
        %v2856 = vadd.f32 %v2855, %v2729
        %v2857 = vadd.f32 %v2856, %v2730
        %v2858 = vadd.f32 %v2857, %v2731
        %v2859 = vadd.f32 %v2858, %v2732
        %v2860 = vadd.f32 %v2859, %v2733
        %v2861 = vadd.f32 %v2860, %v2734
        %v2862 = vadd.f32 %v2861, %v2735
        %v2863 = vadd.f32 %v2862, %v2736
        %v2864 = vadd.f32 %v2863, %v2737
        %v2865 = vrot.slane %v2864, 4
        %v2866 = vadd.f32 %v2864, %v2865
        %v2867 = vrot.slane %v2866, 2
        %v2868 = vadd.f32 %v2866, %v2867
        %v2869 = vrot.slane %v2868, 1
        %v2870 = vadd.f32 %v2868, %v2869
        %v2871 = vadd.f32 %v2609, %v2870
        %2872 = vst [vmem:[#allocation4] sm:$0x1] %v2871
      $region44: #{net_aur_hpd_m5_forward.2} parent=39 // pred_fallthru
        _
      %p2873 = scmp.eq.s32.totalorder %s21, 1
      // Predicated region
      $region49: #{net_aur_hpd_m5_forward.2} parent=39 // pred_check
        %p2874 = pneg %p2873
      $region50: #{net_aur_hpd_m5_forward.2} parent=39 // pred_check_branch
        %2876 = sbr.rel (%p2874) target = $region52
      $region51: #{net_aur_hpd_m5_forward.2} parent=39 // pred_region
        %v2877 = vld [vmem:[#allocation3] sm:$0x1]
        %v2878 = vmul.f32 %v2877, 0.0010141988
        %v2879 = vld [vmem:[#allocation4] sm:$0x1]
        %v2880 = vmul.f32 %v2879, 0.0010141988
        %v2881 = vmul.f32 %v2878, %v2878
        %v2882 = vsub.f32 %v2880, %v2881
        %v2883 = vadd.f32 %v2882, 1e-05
        %v2884 = vrsqrt.pop %v2883
        %v2885 = vld [vmem:[%s3] sm:$0x1]
        %v2886 = vmul.f32 %v2884, %v2885
        %s2887 = scalar_lea.vmem [#allocation2], %s304
        %v2888 = vld [vmem:[%s2887] ss:$4 sm:$0xff]
        %s2889 = scalar_lea.vmem %s2887, 32 [#allocation2]
        %v2890 = vld [vmem:[%s2889] ss:$4 sm:$0xff]
        %s2891 = scalar_lea.vmem %s2887, 64 [#allocation2]
        %v2892 = vld [vmem:[%s2891] ss:$4 sm:$0xff]
        %s2893 = scalar_lea.vmem %s2887, 96 [#allocation2]
        %v2894 = vld [vmem:[%s2893] ss:$4 sm:$0xff]
        %s2895 = scalar_lea.vmem %s2887, 128 [#allocation2]
        %v2896 = vld [vmem:[%s2895] ss:$4 sm:$0xff]
        %s2897 = scalar_lea.vmem %s2887, 160 [#allocation2]
        %v2898 = vld [vmem:[%s2897] ss:$4 sm:$0xff]
        %s2899 = scalar_lea.vmem %s2887, 192 [#allocation2]
        %v2900 = vld [vmem:[%s2899] ss:$4 sm:$0xff]
        %s2901 = scalar_lea.vmem %s2887, 224 [#allocation2]
        %v2902 = vld [vmem:[%s2901] ss:$4 sm:$0xff]
        %s2903 = scalar_lea.vmem %s2887, 256 [#allocation2]
        %v2904 = vld [vmem:[%s2903] ss:$4 sm:$0xff]
        %s2905 = scalar_lea.vmem %s2887, 288 [#allocation2]
        %v2906 = vld [vmem:[%s2905] ss:$4 sm:$0xff]
        %s2907 = scalar_lea.vmem %s2887, 320 [#allocation2]
        %v2908 = vld [vmem:[%s2907] ss:$4 sm:$0xff]
        %s2909 = scalar_lea.vmem %s2887, 352 [#allocation2]
        %v2910 = vld [vmem:[%s2909] ss:$4 sm:$0xff]
        %s2911 = scalar_lea.vmem %s2887, 384 [#allocation2]
        %v2912 = vld [vmem:[%s2911] ss:$4 sm:$0xff]
        %s2913 = scalar_lea.vmem %s2887, 416 [#allocation2]
        %v2914 = vld [vmem:[%s2913] ss:$4 sm:$0xff]
        %s2915 = scalar_lea.vmem %s2887, 448 [#allocation2]
        %v2916 = vld [vmem:[%s2915] ss:$4 sm:$0xff]
        %s2917 = scalar_lea.vmem %s2887, 480 [#allocation2]
        %v2918 = vld [vmem:[%s2917] ss:$4 sm:$0xff]
        %s2919 = scalar_lea.vmem %s2887, 512 [#allocation2]
        %v2920 = vld [vmem:[%s2919] ss:$4 sm:$0xff]
        %s2921 = scalar_lea.vmem %s2887, 544 [#allocation2]
        %v2922 = vld [vmem:[%s2921] ss:$4 sm:$0xff]
        %s2923 = scalar_lea.vmem %s2887, 576 [#allocation2]
        %v2924 = vld [vmem:[%s2923] ss:$4 sm:$0xff]
        %s2925 = scalar_lea.vmem %s2887, 608 [#allocation2]
        %v2926 = vld [vmem:[%s2925] ss:$4 sm:$0xff]
        %s2927 = scalar_lea.vmem %s2887, 640 [#allocation2]
        %v2928 = vld [vmem:[%s2927] ss:$4 sm:$0xff]
        %s2929 = scalar_lea.vmem %s2887, 672 [#allocation2]
        %v2930 = vld [vmem:[%s2929] ss:$4 sm:$0xff]
        %s2931 = scalar_lea.vmem %s2887, 704 [#allocation2]
        %v2932 = vld [vmem:[%s2931] ss:$4 sm:$0xff]
        %s2933 = scalar_lea.vmem %s2887, 736 [#allocation2]
        %v2934 = vld [vmem:[%s2933] ss:$4 sm:$0xff]
        %s2935 = scalar_lea.vmem %s2887, 768 [#allocation2]
        %v2936 = vld [vmem:[%s2935] ss:$4 sm:$0xff]
        %s2937 = scalar_lea.vmem %s2887, 800 [#allocation2]
        %v2938 = vld [vmem:[%s2937] ss:$4 sm:$0xff]
        %s2939 = scalar_lea.vmem %s2887, 832 [#allocation2]
        %v2940 = vld [vmem:[%s2939] ss:$4 sm:$0xff]
        %s2941 = scalar_lea.vmem %s2887, 864 [#allocation2]
        %v2942 = vld [vmem:[%s2941] ss:$4 sm:$0xff]
        %s2943 = scalar_lea.vmem %s2887, 896 [#allocation2]
        %v2944 = vld [vmem:[%s2943] ss:$4 sm:$0xff]
        %s2945 = scalar_lea.vmem %s2887, 928 [#allocation2]
        %v2946 = vld [vmem:[%s2945] ss:$4 sm:$0xff]
        %s2947 = scalar_lea.vmem %s2887, 960 [#allocation2]
        %v2948 = vld [vmem:[%s2947] ss:$4 sm:$0xff]
        %s2949 = scalar_lea.vmem %s2887, 992 [#allocation2]
        %v2950 = vld [vmem:[%s2949] ss:$4 sm:$0xff]
        %v2952 = vlaneseq
        %v2953 = vshrl.u32 %v2952, 7
        %v2954 = vsub.s32 0, %v2953
        %v2955 = vrot.slane %v2878, %v2954
        %v2957 = vsub.f32 %v2888, %v2955
        %v2958 = vsub.f32 %v2890, %v2955
        %v2959 = vsub.f32 %v2892, %v2955
        %v2960 = vsub.f32 %v2894, %v2955
        %v2961 = vsub.f32 %v2896, %v2955
        %v2962 = vsub.f32 %v2898, %v2955
        %v2963 = vsub.f32 %v2900, %v2955
        %v2964 = vsub.f32 %v2902, %v2955
        %v2965 = vsub.f32 %v2904, %v2955
        %v2966 = vsub.f32 %v2906, %v2955
        %v2967 = vsub.f32 %v2908, %v2955
        %v2968 = vsub.f32 %v2910, %v2955
        %v2969 = vsub.f32 %v2912, %v2955
        %v2970 = vsub.f32 %v2914, %v2955
        %v2971 = vsub.f32 %v2916, %v2955
        %v2972 = vsub.f32 %v2918, %v2955
        %v2973 = vsub.f32 %v2920, %v2955
        %v2974 = vsub.f32 %v2922, %v2955
        %v2975 = vsub.f32 %v2924, %v2955
        %v2976 = vsub.f32 %v2926, %v2955
        %v2977 = vsub.f32 %v2928, %v2955
        %v2978 = vsub.f32 %v2930, %v2955
        %v2979 = vsub.f32 %v2932, %v2955
        %v2980 = vsub.f32 %v2934, %v2955
        %v2981 = vsub.f32 %v2936, %v2955
        %v2982 = vsub.f32 %v2938, %v2955
        %v2983 = vsub.f32 %v2940, %v2955
        %v2984 = vsub.f32 %v2942, %v2955
        %v2985 = vsub.f32 %v2944, %v2955
        %v2986 = vsub.f32 %v2946, %v2955
        %v2987 = vsub.f32 %v2948, %v2955
        %v2988 = vsub.f32 %v2950, %v2955
        %v2990 = vlaneseq
        %v2991 = vshrl.u32 %v2990, 7
        %v2992 = vsub.s32 0, %v2991
        %v2993 = vrot.slane %v2886, %v2992
        %v2995 = vmul.f32 %v2957, %v2993
        %v2996 = vmul.f32 %v2958, %v2993
        %v2997 = vmul.f32 %v2959, %v2993
        %v2998 = vmul.f32 %v2960, %v2993
        %v2999 = vmul.f32 %v2961, %v2993
        %v3000 = vmul.f32 %v2962, %v2993
        %v3001 = vmul.f32 %v2963, %v2993
        %v3002 = vmul.f32 %v2964, %v2993
        %v3003 = vmul.f32 %v2965, %v2993
        %v3004 = vmul.f32 %v2966, %v2993
        %v3005 = vmul.f32 %v2967, %v2993
        %v3006 = vmul.f32 %v2968, %v2993
        %v3007 = vmul.f32 %v2969, %v2993
        %v3008 = vmul.f32 %v2970, %v2993
        %v3009 = vmul.f32 %v2971, %v2993
        %v3010 = vmul.f32 %v2972, %v2993
        %v3011 = vmul.f32 %v2973, %v2993
        %v3012 = vmul.f32 %v2974, %v2993
        %v3013 = vmul.f32 %v2975, %v2993
        %v3014 = vmul.f32 %v2976, %v2993
        %v3015 = vmul.f32 %v2977, %v2993
        %v3016 = vmul.f32 %v2978, %v2993
        %v3017 = vmul.f32 %v2979, %v2993
        %v3018 = vmul.f32 %v2980, %v2993
        %v3019 = vmul.f32 %v2981, %v2993
        %v3020 = vmul.f32 %v2982, %v2993
        %v3021 = vmul.f32 %v2983, %v2993
        %v3022 = vmul.f32 %v2984, %v2993
        %v3023 = vmul.f32 %v2985, %v2993
        %v3024 = vmul.f32 %v2986, %v2993
        %v3025 = vmul.f32 %v2987, %v2993
        %v3026 = vmul.f32 %v2988, %v2993
        %v3027 = vld [vmem:[%s4] sm:$0x1]
        %v3029 = vlaneseq
        %v3030 = vshrl.u32 %v3029, 7
        %v3031 = vsub.s32 0, %v3030
        %v3032 = vrot.slane %v3027, %v3031
        %v3034 = vadd.f32 %v2995, %v3032
        %v3035 = vadd.f32 %v2996, %v3032
        %v3036 = vadd.f32 %v2997, %v3032
        %v3037 = vadd.f32 %v2998, %v3032
        %v3038 = vadd.f32 %v2999, %v3032
        %v3039 = vadd.f32 %v3000, %v3032
        %v3040 = vadd.f32 %v3001, %v3032
        %v3041 = vadd.f32 %v3002, %v3032
        %v3042 = vadd.f32 %v3003, %v3032
        %v3043 = vadd.f32 %v3004, %v3032
        %v3044 = vadd.f32 %v3005, %v3032
        %v3045 = vadd.f32 %v3006, %v3032
        %v3046 = vadd.f32 %v3007, %v3032
        %v3047 = vadd.f32 %v3008, %v3032
        %v3048 = vadd.f32 %v3009, %v3032
        %v3049 = vadd.f32 %v3010, %v3032
        %v3050 = vadd.f32 %v3011, %v3032
        %v3051 = vadd.f32 %v3012, %v3032
        %v3052 = vadd.f32 %v3013, %v3032
        %v3053 = vadd.f32 %v3014, %v3032
        %v3054 = vadd.f32 %v3015, %v3032
        %v3055 = vadd.f32 %v3016, %v3032
        %v3056 = vadd.f32 %v3017, %v3032
        %v3057 = vadd.f32 %v3018, %v3032
        %v3058 = vadd.f32 %v3019, %v3032
        %v3059 = vadd.f32 %v3020, %v3032
        %v3060 = vadd.f32 %v3021, %v3032
        %v3061 = vadd.f32 %v3022, %v3032
        %v3062 = vadd.f32 %v3023, %v3032
        %v3063 = vadd.f32 %v3024, %v3032
        %v3064 = vadd.f32 %v3025, %v3032
        %v3065 = vadd.f32 %v3026, %v3032
        %v3066 = vmax.f32 %v3034, 0.0
        %v3067 = vmax.f32 %v3035, 0.0
        %v3068 = vmax.f32 %v3036, 0.0
        %v3069 = vmax.f32 %v3037, 0.0
        %v3070 = vmax.f32 %v3038, 0.0
        %v3071 = vmax.f32 %v3039, 0.0
        %v3072 = vmax.f32 %v3040, 0.0
        %v3073 = vmax.f32 %v3041, 0.0
        %v3074 = vmax.f32 %v3042, 0.0
        %v3075 = vmax.f32 %v3043, 0.0
        %v3076 = vmax.f32 %v3044, 0.0
        %v3077 = vmax.f32 %v3045, 0.0
        %v3078 = vmax.f32 %v3046, 0.0
        %v3079 = vmax.f32 %v3047, 0.0
        %v3080 = vmax.f32 %v3048, 0.0
        %v3081 = vmax.f32 %v3049, 0.0
        %v3082 = vmax.f32 %v3050, 0.0
        %v3083 = vmax.f32 %v3051, 0.0
        %v3084 = vmax.f32 %v3052, 0.0
        %v3085 = vmax.f32 %v3053, 0.0
        %v3086 = vmax.f32 %v3054, 0.0
        %v3087 = vmax.f32 %v3055, 0.0
        %v3088 = vmax.f32 %v3056, 0.0
        %v3089 = vmax.f32 %v3057, 0.0
        %v3090 = vmax.f32 %v3058, 0.0
        %v3091 = vmax.f32 %v3059, 0.0
        %v3092 = vmax.f32 %v3060, 0.0
        %v3093 = vmax.f32 %v3061, 0.0
        %v3094 = vmax.f32 %v3062, 0.0
        %v3095 = vmax.f32 %v3063, 0.0
        %v3096 = vmax.f32 %v3064, 0.0
        %v3097 = vmax.f32 %v3065, 0.0
        %s3098 = sadd.s32 %s304, 1
        %s3099 = scalar_lea.vmem [#allocation2], %s3098
        %v3100 = vld [vmem:[%s3099] ss:$4 sm:$0xff]
        %s3101 = scalar_lea.vmem %s3099, 32 [#allocation2]
        %v3102 = vld [vmem:[%s3101] ss:$4 sm:$0xff]
        %s3103 = scalar_lea.vmem %s3099, 64 [#allocation2]
        %v3104 = vld [vmem:[%s3103] ss:$4 sm:$0xff]
        %s3105 = scalar_lea.vmem %s3099, 96 [#allocation2]
        %v3106 = vld [vmem:[%s3105] ss:$4 sm:$0xff]
        %s3107 = scalar_lea.vmem %s3099, 128 [#allocation2]
        %v3108 = vld [vmem:[%s3107] ss:$4 sm:$0xff]
        %s3109 = scalar_lea.vmem %s3099, 160 [#allocation2]
        %v3110 = vld [vmem:[%s3109] ss:$4 sm:$0xff]
        %s3111 = scalar_lea.vmem %s3099, 192 [#allocation2]
        %v3112 = vld [vmem:[%s3111] ss:$4 sm:$0xff]
        %s3113 = scalar_lea.vmem %s3099, 224 [#allocation2]
        %v3114 = vld [vmem:[%s3113] ss:$4 sm:$0xff]
        %s3115 = scalar_lea.vmem %s3099, 256 [#allocation2]
        %v3116 = vld [vmem:[%s3115] ss:$4 sm:$0xff]
        %s3117 = scalar_lea.vmem %s3099, 288 [#allocation2]
        %v3118 = vld [vmem:[%s3117] ss:$4 sm:$0xff]
        %s3119 = scalar_lea.vmem %s3099, 320 [#allocation2]
        %v3120 = vld [vmem:[%s3119] ss:$4 sm:$0xff]
        %s3121 = scalar_lea.vmem %s3099, 352 [#allocation2]
        %v3122 = vld [vmem:[%s3121] ss:$4 sm:$0xff]
        %s3123 = scalar_lea.vmem %s3099, 384 [#allocation2]
        %v3124 = vld [vmem:[%s3123] ss:$4 sm:$0xff]
        %s3125 = scalar_lea.vmem %s3099, 416 [#allocation2]
        %v3126 = vld [vmem:[%s3125] ss:$4 sm:$0xff]
        %s3127 = scalar_lea.vmem %s3099, 448 [#allocation2]
        %v3128 = vld [vmem:[%s3127] ss:$4 sm:$0xff]
        %s3129 = scalar_lea.vmem %s3099, 480 [#allocation2]
        %v3130 = vld [vmem:[%s3129] ss:$4 sm:$0xff]
        %s3131 = scalar_lea.vmem %s3099, 512 [#allocation2]
        %v3132 = vld [vmem:[%s3131] ss:$4 sm:$0xff]
        %s3133 = scalar_lea.vmem %s3099, 544 [#allocation2]
        %v3134 = vld [vmem:[%s3133] ss:$4 sm:$0xff]
        %s3135 = scalar_lea.vmem %s3099, 576 [#allocation2]
        %v3136 = vld [vmem:[%s3135] ss:$4 sm:$0xff]
        %s3137 = scalar_lea.vmem %s3099, 608 [#allocation2]
        %v3138 = vld [vmem:[%s3137] ss:$4 sm:$0xff]
        %s3139 = scalar_lea.vmem %s3099, 640 [#allocation2]
        %v3140 = vld [vmem:[%s3139] ss:$4 sm:$0xff]
        %s3141 = scalar_lea.vmem %s3099, 672 [#allocation2]
        %v3142 = vld [vmem:[%s3141] ss:$4 sm:$0xff]
        %s3143 = scalar_lea.vmem %s3099, 704 [#allocation2]
        %v3144 = vld [vmem:[%s3143] ss:$4 sm:$0xff]
        %s3145 = scalar_lea.vmem %s3099, 736 [#allocation2]
        %v3146 = vld [vmem:[%s3145] ss:$4 sm:$0xff]
        %s3147 = scalar_lea.vmem %s3099, 768 [#allocation2]
        %v3148 = vld [vmem:[%s3147] ss:$4 sm:$0xff]
        %s3149 = scalar_lea.vmem %s3099, 800 [#allocation2]
        %v3150 = vld [vmem:[%s3149] ss:$4 sm:$0xff]
        %s3151 = scalar_lea.vmem %s3099, 832 [#allocation2]
        %v3152 = vld [vmem:[%s3151] ss:$4 sm:$0xff]
        %s3153 = scalar_lea.vmem %s3099, 864 [#allocation2]
        %v3154 = vld [vmem:[%s3153] ss:$4 sm:$0xff]
        %s3155 = scalar_lea.vmem %s3099, 896 [#allocation2]
        %v3156 = vld [vmem:[%s3155] ss:$4 sm:$0xff]
        %s3157 = scalar_lea.vmem %s3099, 928 [#allocation2]
        %v3158 = vld [vmem:[%s3157] ss:$4 sm:$0xff]
        %s3159 = scalar_lea.vmem %s3099, 960 [#allocation2]
        %v3160 = vld [vmem:[%s3159] ss:$4 sm:$0xff]
        %s3161 = scalar_lea.vmem %s3099, 992 [#allocation2]
        %v3162 = vld [vmem:[%s3161] ss:$4 sm:$0xff]
        %v3163 = vsub.f32 %v3100, %v2955
        %v3164 = vsub.f32 %v3102, %v2955
        %v3165 = vsub.f32 %v3104, %v2955
        %v3166 = vsub.f32 %v3106, %v2955
        %v3167 = vsub.f32 %v3108, %v2955
        %v3168 = vsub.f32 %v3110, %v2955
        %v3169 = vsub.f32 %v3112, %v2955
        %v3170 = vsub.f32 %v3114, %v2955
        %v3171 = vsub.f32 %v3116, %v2955
        %v3172 = vsub.f32 %v3118, %v2955
        %v3173 = vsub.f32 %v3120, %v2955
        %v3174 = vsub.f32 %v3122, %v2955
        %v3175 = vsub.f32 %v3124, %v2955
        %v3176 = vsub.f32 %v3126, %v2955
        %v3177 = vsub.f32 %v3128, %v2955
        %v3178 = vsub.f32 %v3130, %v2955
        %v3179 = vsub.f32 %v3132, %v2955
        %v3180 = vsub.f32 %v3134, %v2955
        %v3181 = vsub.f32 %v3136, %v2955
        %v3182 = vsub.f32 %v3138, %v2955
        %v3183 = vsub.f32 %v3140, %v2955
        %v3184 = vsub.f32 %v3142, %v2955
        %v3185 = vsub.f32 %v3144, %v2955
        %v3186 = vsub.f32 %v3146, %v2955
        %v3187 = vsub.f32 %v3148, %v2955
        %v3188 = vsub.f32 %v3150, %v2955
        %v3189 = vsub.f32 %v3152, %v2955
        %v3190 = vsub.f32 %v3154, %v2955
        %v3191 = vsub.f32 %v3156, %v2955
        %v3192 = vsub.f32 %v3158, %v2955
        %v3193 = vsub.f32 %v3160, %v2955
        %v3194 = vsub.f32 %v3162, %v2955
        %v3195 = vmul.f32 %v3163, %v2993
        %v3196 = vmul.f32 %v3164, %v2993
        %v3197 = vmul.f32 %v3165, %v2993
        %v3198 = vmul.f32 %v3166, %v2993
        %v3199 = vmul.f32 %v3167, %v2993
        %v3200 = vmul.f32 %v3168, %v2993
        %v3201 = vmul.f32 %v3169, %v2993
        %v3202 = vmul.f32 %v3170, %v2993
        %v3203 = vmul.f32 %v3171, %v2993
        %v3204 = vmul.f32 %v3172, %v2993
        %v3205 = vmul.f32 %v3173, %v2993
        %v3206 = vmul.f32 %v3174, %v2993
        %v3207 = vmul.f32 %v3175, %v2993
        %v3208 = vmul.f32 %v3176, %v2993
        %v3209 = vmul.f32 %v3177, %v2993
        %v3210 = vmul.f32 %v3178, %v2993
        %v3211 = vmul.f32 %v3179, %v2993
        %v3212 = vmul.f32 %v3180, %v2993
        %v3213 = vmul.f32 %v3181, %v2993
        %v3214 = vmul.f32 %v3182, %v2993
        %v3215 = vmul.f32 %v3183, %v2993
        %v3216 = vmul.f32 %v3184, %v2993
        %v3217 = vmul.f32 %v3185, %v2993
        %v3218 = vmul.f32 %v3186, %v2993
        %v3219 = vmul.f32 %v3187, %v2993
        %v3220 = vmul.f32 %v3188, %v2993
        %v3221 = vmul.f32 %v3189, %v2993
        %v3222 = vmul.f32 %v3190, %v2993
        %v3223 = vmul.f32 %v3191, %v2993
        %v3224 = vmul.f32 %v3192, %v2993
        %v3225 = vmul.f32 %v3193, %v2993
        %v3226 = vmul.f32 %v3194, %v2993
        %v3227 = vadd.f32 %v3195, %v3032
        %v3228 = vadd.f32 %v3196, %v3032
        %v3229 = vadd.f32 %v3197, %v3032
        %v3230 = vadd.f32 %v3198, %v3032
        %v3231 = vadd.f32 %v3199, %v3032
        %v3232 = vadd.f32 %v3200, %v3032
        %v3233 = vadd.f32 %v3201, %v3032
        %v3234 = vadd.f32 %v3202, %v3032
        %v3235 = vadd.f32 %v3203, %v3032
        %v3236 = vadd.f32 %v3204, %v3032
        %v3237 = vadd.f32 %v3205, %v3032
        %v3238 = vadd.f32 %v3206, %v3032
        %v3239 = vadd.f32 %v3207, %v3032
        %v3240 = vadd.f32 %v3208, %v3032
        %v3241 = vadd.f32 %v3209, %v3032
        %v3242 = vadd.f32 %v3210, %v3032
        %v3243 = vadd.f32 %v3211, %v3032
        %v3244 = vadd.f32 %v3212, %v3032
        %v3245 = vadd.f32 %v3213, %v3032
        %v3246 = vadd.f32 %v3214, %v3032
        %v3247 = vadd.f32 %v3215, %v3032
        %v3248 = vadd.f32 %v3216, %v3032
        %v3249 = vadd.f32 %v3217, %v3032
        %v3250 = vadd.f32 %v3218, %v3032
        %v3251 = vadd.f32 %v3219, %v3032
        %v3252 = vadd.f32 %v3220, %v3032
        %v3253 = vadd.f32 %v3221, %v3032
        %v3254 = vadd.f32 %v3222, %v3032
        %v3255 = vadd.f32 %v3223, %v3032
        %v3256 = vadd.f32 %v3224, %v3032
        %v3257 = vadd.f32 %v3225, %v3032
        %v3258 = vadd.f32 %v3226, %v3032
        %v3259 = vmax.f32 %v3227, 0.0
        %v3260 = vmax.f32 %v3228, 0.0
        %v3261 = vmax.f32 %v3229, 0.0
        %v3262 = vmax.f32 %v3230, 0.0
        %v3263 = vmax.f32 %v3231, 0.0
        %v3264 = vmax.f32 %v3232, 0.0
        %v3265 = vmax.f32 %v3233, 0.0
        %v3266 = vmax.f32 %v3234, 0.0
        %v3267 = vmax.f32 %v3235, 0.0
        %v3268 = vmax.f32 %v3236, 0.0
        %v3269 = vmax.f32 %v3237, 0.0
        %v3270 = vmax.f32 %v3238, 0.0
        %v3271 = vmax.f32 %v3239, 0.0
        %v3272 = vmax.f32 %v3240, 0.0
        %v3273 = vmax.f32 %v3241, 0.0
        %v3274 = vmax.f32 %v3242, 0.0
        %v3275 = vmax.f32 %v3243, 0.0
        %v3276 = vmax.f32 %v3244, 0.0
        %v3277 = vmax.f32 %v3245, 0.0
        %v3278 = vmax.f32 %v3246, 0.0
        %v3279 = vmax.f32 %v3247, 0.0
        %v3280 = vmax.f32 %v3248, 0.0
        %v3281 = vmax.f32 %v3249, 0.0
        %v3282 = vmax.f32 %v3250, 0.0
        %v3283 = vmax.f32 %v3251, 0.0
        %v3284 = vmax.f32 %v3252, 0.0
        %v3285 = vmax.f32 %v3253, 0.0
        %v3286 = vmax.f32 %v3254, 0.0
        %v3287 = vmax.f32 %v3255, 0.0
        %v3288 = vmax.f32 %v3256, 0.0
        %v3289 = vmax.f32 %v3257, 0.0
        %v3290 = vmax.f32 %v3258, 0.0
        %v3291 = vmax.f32 %v3066, %v3259
        %v3292 = vmax.f32 %v3067, %v3260
        %v3293 = vmax.f32 %v3068, %v3261
        %v3294 = vmax.f32 %v3069, %v3262
        %v3295 = vmax.f32 %v3070, %v3263
        %v3296 = vmax.f32 %v3071, %v3264
        %v3297 = vmax.f32 %v3072, %v3265
        %v3298 = vmax.f32 %v3073, %v3266
        %v3299 = vmax.f32 %v3074, %v3267
        %v3300 = vmax.f32 %v3075, %v3268
        %v3301 = vmax.f32 %v3076, %v3269
        %v3302 = vmax.f32 %v3077, %v3270
        %v3303 = vmax.f32 %v3078, %v3271
        %v3304 = vmax.f32 %v3079, %v3272
        %v3305 = vmax.f32 %v3080, %v3273
        %v3306 = vmax.f32 %v3081, %v3274
        %v3307 = vmax.f32 %v3082, %v3275
        %v3308 = vmax.f32 %v3083, %v3276
        %v3309 = vmax.f32 %v3084, %v3277
        %v3310 = vmax.f32 %v3085, %v3278
        %v3311 = vmax.f32 %v3086, %v3279
        %v3312 = vmax.f32 %v3087, %v3280
        %v3313 = vmax.f32 %v3088, %v3281
        %v3314 = vmax.f32 %v3089, %v3282
        %v3315 = vmax.f32 %v3090, %v3283
        %v3316 = vmax.f32 %v3091, %v3284
        %v3317 = vmax.f32 %v3092, %v3285
        %v3318 = vmax.f32 %v3093, %v3286
        %v3319 = vmax.f32 %v3094, %v3287
        %v3320 = vmax.f32 %v3095, %v3288
        %v3321 = vmax.f32 %v3096, %v3289
        %v3322 = vmax.f32 %v3097, %v3290
        %s3323 = sadd.s32 %s304, 2
        %s3324 = scalar_lea.vmem [#allocation2], %s3323
        %v3325 = vld [vmem:[%s3324] ss:$4 sm:$0xff]
        %s3326 = scalar_lea.vmem %s3324, 32 [#allocation2]
        %v3327 = vld [vmem:[%s3326] ss:$4 sm:$0xff]
        %s3328 = scalar_lea.vmem %s3324, 64 [#allocation2]
        %v3329 = vld [vmem:[%s3328] ss:$4 sm:$0xff]
        %s3330 = scalar_lea.vmem %s3324, 96 [#allocation2]
        %v3331 = vld [vmem:[%s3330] ss:$4 sm:$0xff]
        %s3332 = scalar_lea.vmem %s3324, 128 [#allocation2]
        %v3333 = vld [vmem:[%s3332] ss:$4 sm:$0xff]
        %s3334 = scalar_lea.vmem %s3324, 160 [#allocation2]
        %v3335 = vld [vmem:[%s3334] ss:$4 sm:$0xff]
        %s3336 = scalar_lea.vmem %s3324, 192 [#allocation2]
        %v3337 = vld [vmem:[%s3336] ss:$4 sm:$0xff]
        %s3338 = scalar_lea.vmem %s3324, 224 [#allocation2]
        %v3339 = vld [vmem:[%s3338] ss:$4 sm:$0xff]
        %s3340 = scalar_lea.vmem %s3324, 256 [#allocation2]
        %v3341 = vld [vmem:[%s3340] ss:$4 sm:$0xff]
        %s3342 = scalar_lea.vmem %s3324, 288 [#allocation2]
        %v3343 = vld [vmem:[%s3342] ss:$4 sm:$0xff]
        %s3344 = scalar_lea.vmem %s3324, 320 [#allocation2]
        %v3345 = vld [vmem:[%s3344] ss:$4 sm:$0xff]
        %s3346 = scalar_lea.vmem %s3324, 352 [#allocation2]
        %v3347 = vld [vmem:[%s3346] ss:$4 sm:$0xff]
        %s3348 = scalar_lea.vmem %s3324, 384 [#allocation2]
        %v3349 = vld [vmem:[%s3348] ss:$4 sm:$0xff]
        %s3350 = scalar_lea.vmem %s3324, 416 [#allocation2]
        %v3351 = vld [vmem:[%s3350] ss:$4 sm:$0xff]
        %s3352 = scalar_lea.vmem %s3324, 448 [#allocation2]
        %v3353 = vld [vmem:[%s3352] ss:$4 sm:$0xff]
        %s3354 = scalar_lea.vmem %s3324, 480 [#allocation2]
        %v3355 = vld [vmem:[%s3354] ss:$4 sm:$0xff]
        %s3356 = scalar_lea.vmem %s3324, 512 [#allocation2]
        %v3357 = vld [vmem:[%s3356] ss:$4 sm:$0xff]
        %s3358 = scalar_lea.vmem %s3324, 544 [#allocation2]
        %v3359 = vld [vmem:[%s3358] ss:$4 sm:$0xff]
        %s3360 = scalar_lea.vmem %s3324, 576 [#allocation2]
        %v3361 = vld [vmem:[%s3360] ss:$4 sm:$0xff]
        %s3362 = scalar_lea.vmem %s3324, 608 [#allocation2]
        %v3363 = vld [vmem:[%s3362] ss:$4 sm:$0xff]
        %s3364 = scalar_lea.vmem %s3324, 640 [#allocation2]
        %v3365 = vld [vmem:[%s3364] ss:$4 sm:$0xff]
        %s3366 = scalar_lea.vmem %s3324, 672 [#allocation2]
        %v3367 = vld [vmem:[%s3366] ss:$4 sm:$0xff]
        %s3368 = scalar_lea.vmem %s3324, 704 [#allocation2]
        %v3369 = vld [vmem:[%s3368] ss:$4 sm:$0xff]
        %s3370 = scalar_lea.vmem %s3324, 736 [#allocation2]
        %v3371 = vld [vmem:[%s3370] ss:$4 sm:$0xff]
        %s3372 = scalar_lea.vmem %s3324, 768 [#allocation2]
        %v3373 = vld [vmem:[%s3372] ss:$4 sm:$0xff]
        %s3374 = scalar_lea.vmem %s3324, 800 [#allocation2]
        %v3375 = vld [vmem:[%s3374] ss:$4 sm:$0xff]
        %s3376 = scalar_lea.vmem %s3324, 832 [#allocation2]
        %v3377 = vld [vmem:[%s3376] ss:$4 sm:$0xff]
        %s3378 = scalar_lea.vmem %s3324, 864 [#allocation2]
        %v3379 = vld [vmem:[%s3378] ss:$4 sm:$0xff]
        %s3380 = scalar_lea.vmem %s3324, 896 [#allocation2]
        %v3381 = vld [vmem:[%s3380] ss:$4 sm:$0xff]
        %s3382 = scalar_lea.vmem %s3324, 928 [#allocation2]
        %v3383 = vld [vmem:[%s3382] ss:$4 sm:$0xff]
        %s3384 = scalar_lea.vmem %s3324, 960 [#allocation2]
        %v3385 = vld [vmem:[%s3384] ss:$4 sm:$0xff]
        %s3386 = scalar_lea.vmem %s3324, 992 [#allocation2]
        %v3387 = vld [vmem:[%s3386] ss:$4 sm:$0xff]
        %v3388 = vsub.f32 %v3325, %v2955
        %v3389 = vsub.f32 %v3327, %v2955
        %v3390 = vsub.f32 %v3329, %v2955
        %v3391 = vsub.f32 %v3331, %v2955
        %v3392 = vsub.f32 %v3333, %v2955
        %v3393 = vsub.f32 %v3335, %v2955
        %v3394 = vsub.f32 %v3337, %v2955
        %v3395 = vsub.f32 %v3339, %v2955
        %v3396 = vsub.f32 %v3341, %v2955
        %v3397 = vsub.f32 %v3343, %v2955
        %v3398 = vsub.f32 %v3345, %v2955
        %v3399 = vsub.f32 %v3347, %v2955
        %v3400 = vsub.f32 %v3349, %v2955
        %v3401 = vsub.f32 %v3351, %v2955
        %v3402 = vsub.f32 %v3353, %v2955
        %v3403 = vsub.f32 %v3355, %v2955
        %v3404 = vsub.f32 %v3357, %v2955
        %v3405 = vsub.f32 %v3359, %v2955
        %v3406 = vsub.f32 %v3361, %v2955
        %v3407 = vsub.f32 %v3363, %v2955
        %v3408 = vsub.f32 %v3365, %v2955
        %v3409 = vsub.f32 %v3367, %v2955
        %v3410 = vsub.f32 %v3369, %v2955
        %v3411 = vsub.f32 %v3371, %v2955
        %v3412 = vsub.f32 %v3373, %v2955
        %v3413 = vsub.f32 %v3375, %v2955
        %v3414 = vsub.f32 %v3377, %v2955
        %v3415 = vsub.f32 %v3379, %v2955
        %v3416 = vsub.f32 %v3381, %v2955
        %v3417 = vsub.f32 %v3383, %v2955
        %v3418 = vsub.f32 %v3385, %v2955
        %v3419 = vsub.f32 %v3387, %v2955
        %v3420 = vmul.f32 %v3388, %v2993
        %v3421 = vmul.f32 %v3389, %v2993
        %v3422 = vmul.f32 %v3390, %v2993
        %v3423 = vmul.f32 %v3391, %v2993
        %v3424 = vmul.f32 %v3392, %v2993
        %v3425 = vmul.f32 %v3393, %v2993
        %v3426 = vmul.f32 %v3394, %v2993
        %v3427 = vmul.f32 %v3395, %v2993
        %v3428 = vmul.f32 %v3396, %v2993
        %v3429 = vmul.f32 %v3397, %v2993
        %v3430 = vmul.f32 %v3398, %v2993
        %v3431 = vmul.f32 %v3399, %v2993
        %v3432 = vmul.f32 %v3400, %v2993
        %v3433 = vmul.f32 %v3401, %v2993
        %v3434 = vmul.f32 %v3402, %v2993
        %v3435 = vmul.f32 %v3403, %v2993
        %v3436 = vmul.f32 %v3404, %v2993
        %v3437 = vmul.f32 %v3405, %v2993
        %v3438 = vmul.f32 %v3406, %v2993
        %v3439 = vmul.f32 %v3407, %v2993
        %v3440 = vmul.f32 %v3408, %v2993
        %v3441 = vmul.f32 %v3409, %v2993
        %v3442 = vmul.f32 %v3410, %v2993
        %v3443 = vmul.f32 %v3411, %v2993
        %v3444 = vmul.f32 %v3412, %v2993
        %v3445 = vmul.f32 %v3413, %v2993
        %v3446 = vmul.f32 %v3414, %v2993
        %v3447 = vmul.f32 %v3415, %v2993
        %v3448 = vmul.f32 %v3416, %v2993
        %v3449 = vmul.f32 %v3417, %v2993
        %v3450 = vmul.f32 %v3418, %v2993
        %v3451 = vmul.f32 %v3419, %v2993
        %v3452 = vadd.f32 %v3420, %v3032
        %v3453 = vadd.f32 %v3421, %v3032
        %v3454 = vadd.f32 %v3422, %v3032
        %v3455 = vadd.f32 %v3423, %v3032
        %v3456 = vadd.f32 %v3424, %v3032
        %v3457 = vadd.f32 %v3425, %v3032
        %v3458 = vadd.f32 %v3426, %v3032
        %v3459 = vadd.f32 %v3427, %v3032
        %v3460 = vadd.f32 %v3428, %v3032
        %v3461 = vadd.f32 %v3429, %v3032
        %v3462 = vadd.f32 %v3430, %v3032
        %v3463 = vadd.f32 %v3431, %v3032
        %v3464 = vadd.f32 %v3432, %v3032
        %v3465 = vadd.f32 %v3433, %v3032
        %v3466 = vadd.f32 %v3434, %v3032
        %v3467 = vadd.f32 %v3435, %v3032
        %v3468 = vadd.f32 %v3436, %v3032
        %v3469 = vadd.f32 %v3437, %v3032
        %v3470 = vadd.f32 %v3438, %v3032
        %v3471 = vadd.f32 %v3439, %v3032
        %v3472 = vadd.f32 %v3440, %v3032
        %v3473 = vadd.f32 %v3441, %v3032
        %v3474 = vadd.f32 %v3442, %v3032
        %v3475 = vadd.f32 %v3443, %v3032
        %v3476 = vadd.f32 %v3444, %v3032
        %v3477 = vadd.f32 %v3445, %v3032
        %v3478 = vadd.f32 %v3446, %v3032
        %v3479 = vadd.f32 %v3447, %v3032
        %v3480 = vadd.f32 %v3448, %v3032
        %v3481 = vadd.f32 %v3449, %v3032
        %v3482 = vadd.f32 %v3450, %v3032
        %v3483 = vadd.f32 %v3451, %v3032
        %v3484 = vmax.f32 %v3452, 0.0
        %v3485 = vmax.f32 %v3453, 0.0
        %v3486 = vmax.f32 %v3454, 0.0
        %v3487 = vmax.f32 %v3455, 0.0
        %v3488 = vmax.f32 %v3456, 0.0
        %v3489 = vmax.f32 %v3457, 0.0
        %v3490 = vmax.f32 %v3458, 0.0
        %v3491 = vmax.f32 %v3459, 0.0
        %v3492 = vmax.f32 %v3460, 0.0
        %v3493 = vmax.f32 %v3461, 0.0
        %v3494 = vmax.f32 %v3462, 0.0
        %v3495 = vmax.f32 %v3463, 0.0
        %v3496 = vmax.f32 %v3464, 0.0
        %v3497 = vmax.f32 %v3465, 0.0
        %v3498 = vmax.f32 %v3466, 0.0
        %v3499 = vmax.f32 %v3467, 0.0
        %v3500 = vmax.f32 %v3468, 0.0
        %v3501 = vmax.f32 %v3469, 0.0
        %v3502 = vmax.f32 %v3470, 0.0
        %v3503 = vmax.f32 %v3471, 0.0
        %v3504 = vmax.f32 %v3472, 0.0
        %v3505 = vmax.f32 %v3473, 0.0
        %v3506 = vmax.f32 %v3474, 0.0
        %v3507 = vmax.f32 %v3475, 0.0
        %v3508 = vmax.f32 %v3476, 0.0
        %v3509 = vmax.f32 %v3477, 0.0
        %v3510 = vmax.f32 %v3478, 0.0
        %v3511 = vmax.f32 %v3479, 0.0
        %v3512 = vmax.f32 %v3480, 0.0
        %v3513 = vmax.f32 %v3481, 0.0
        %v3514 = vmax.f32 %v3482, 0.0
        %v3515 = vmax.f32 %v3483, 0.0
        %v3516 = vmax.f32 %v3291, %v3484
        %v3517 = vmax.f32 %v3292, %v3485
        %v3518 = vmax.f32 %v3293, %v3486
        %v3519 = vmax.f32 %v3294, %v3487
        %v3520 = vmax.f32 %v3295, %v3488
        %v3521 = vmax.f32 %v3296, %v3489
        %v3522 = vmax.f32 %v3297, %v3490
        %v3523 = vmax.f32 %v3298, %v3491
        %v3524 = vmax.f32 %v3299, %v3492
        %v3525 = vmax.f32 %v3300, %v3493
        %v3526 = vmax.f32 %v3301, %v3494
        %v3527 = vmax.f32 %v3302, %v3495
        %v3528 = vmax.f32 %v3303, %v3496
        %v3529 = vmax.f32 %v3304, %v3497
        %v3530 = vmax.f32 %v3305, %v3498
        %v3531 = vmax.f32 %v3306, %v3499
        %v3532 = vmax.f32 %v3307, %v3500
        %v3533 = vmax.f32 %v3308, %v3501
        %v3534 = vmax.f32 %v3309, %v3502
        %v3535 = vmax.f32 %v3310, %v3503
        %v3536 = vmax.f32 %v3311, %v3504
        %v3537 = vmax.f32 %v3312, %v3505
        %v3538 = vmax.f32 %v3313, %v3506
        %v3539 = vmax.f32 %v3314, %v3507
        %v3540 = vmax.f32 %v3315, %v3508
        %v3541 = vmax.f32 %v3316, %v3509
        %v3542 = vmax.f32 %v3317, %v3510
        %v3543 = vmax.f32 %v3318, %v3511
        %v3544 = vmax.f32 %v3319, %v3512
        %v3545 = vmax.f32 %v3320, %v3513
        %v3546 = vmax.f32 %v3321, %v3514
        %v3547 = vmax.f32 %v3322, %v3515
        %s3548 = sadd.s32 %s304, 3
        %s3549 = scalar_lea.vmem [#allocation2], %s3548
        %v3550 = vld [vmem:[%s3549] ss:$4 sm:$0xff]
        %s3551 = scalar_lea.vmem %s3549, 32 [#allocation2]
        %v3552 = vld [vmem:[%s3551] ss:$4 sm:$0xff]
        %s3553 = scalar_lea.vmem %s3549, 64 [#allocation2]
        %v3554 = vld [vmem:[%s3553] ss:$4 sm:$0xff]
        %s3555 = scalar_lea.vmem %s3549, 96 [#allocation2]
        %v3556 = vld [vmem:[%s3555] ss:$4 sm:$0xff]
        %s3557 = scalar_lea.vmem %s3549, 128 [#allocation2]
        %v3558 = vld [vmem:[%s3557] ss:$4 sm:$0xff]
        %s3559 = scalar_lea.vmem %s3549, 160 [#allocation2]
        %v3560 = vld [vmem:[%s3559] ss:$4 sm:$0xff]
        %s3561 = scalar_lea.vmem %s3549, 192 [#allocation2]
        %v3562 = vld [vmem:[%s3561] ss:$4 sm:$0xff]
        %s3563 = scalar_lea.vmem %s3549, 224 [#allocation2]
        %v3564 = vld [vmem:[%s3563] ss:$4 sm:$0xff]
        %s3565 = scalar_lea.vmem %s3549, 256 [#allocation2]
        %v3566 = vld [vmem:[%s3565] ss:$4 sm:$0xff]
        %s3567 = scalar_lea.vmem %s3549, 288 [#allocation2]
        %v3568 = vld [vmem:[%s3567] ss:$4 sm:$0xff]
        %s3569 = scalar_lea.vmem %s3549, 320 [#allocation2]
        %v3570 = vld [vmem:[%s3569] ss:$4 sm:$0xff]
        %s3571 = scalar_lea.vmem %s3549, 352 [#allocation2]
        %v3572 = vld [vmem:[%s3571] ss:$4 sm:$0xff]
        %s3573 = scalar_lea.vmem %s3549, 384 [#allocation2]
        %v3574 = vld [vmem:[%s3573] ss:$4 sm:$0xff]
        %s3575 = scalar_lea.vmem %s3549, 416 [#allocation2]
        %v3576 = vld [vmem:[%s3575] ss:$4 sm:$0xff]
        %s3577 = scalar_lea.vmem %s3549, 448 [#allocation2]
        %v3578 = vld [vmem:[%s3577] ss:$4 sm:$0xff]
        %s3579 = scalar_lea.vmem %s3549, 480 [#allocation2]
        %v3580 = vld [vmem:[%s3579] ss:$4 sm:$0xff]
        %s3581 = scalar_lea.vmem %s3549, 512 [#allocation2]
        %v3582 = vld [vmem:[%s3581] ss:$4 sm:$0xff]
        %s3583 = scalar_lea.vmem %s3549, 544 [#allocation2]
        %v3584 = vld [vmem:[%s3583] ss:$4 sm:$0xff]
        %s3585 = scalar_lea.vmem %s3549, 576 [#allocation2]
        %v3586 = vld [vmem:[%s3585] ss:$4 sm:$0xff]
        %s3587 = scalar_lea.vmem %s3549, 608 [#allocation2]
        %v3588 = vld [vmem:[%s3587] ss:$4 sm:$0xff]
        %s3589 = scalar_lea.vmem %s3549, 640 [#allocation2]
        %v3590 = vld [vmem:[%s3589] ss:$4 sm:$0xff]
        %s3591 = scalar_lea.vmem %s3549, 672 [#allocation2]
        %v3592 = vld [vmem:[%s3591] ss:$4 sm:$0xff]
        %s3593 = scalar_lea.vmem %s3549, 704 [#allocation2]
        %v3594 = vld [vmem:[%s3593] ss:$4 sm:$0xff]
        %s3595 = scalar_lea.vmem %s3549, 736 [#allocation2]
        %v3596 = vld [vmem:[%s3595] ss:$4 sm:$0xff]
        %s3597 = scalar_lea.vmem %s3549, 768 [#allocation2]
        %v3598 = vld [vmem:[%s3597] ss:$4 sm:$0xff]
        %s3599 = scalar_lea.vmem %s3549, 800 [#allocation2]
        %v3600 = vld [vmem:[%s3599] ss:$4 sm:$0xff]
        %s3601 = scalar_lea.vmem %s3549, 832 [#allocation2]
        %v3602 = vld [vmem:[%s3601] ss:$4 sm:$0xff]
        %s3603 = scalar_lea.vmem %s3549, 864 [#allocation2]
        %v3604 = vld [vmem:[%s3603] ss:$4 sm:$0xff]
        %s3605 = scalar_lea.vmem %s3549, 896 [#allocation2]
        %v3606 = vld [vmem:[%s3605] ss:$4 sm:$0xff]
        %s3607 = scalar_lea.vmem %s3549, 928 [#allocation2]
        %v3608 = vld [vmem:[%s3607] ss:$4 sm:$0xff]
        %s3609 = scalar_lea.vmem %s3549, 960 [#allocation2]
        %v3610 = vld [vmem:[%s3609] ss:$4 sm:$0xff]
        %s3611 = scalar_lea.vmem %s3549, 992 [#allocation2]
        %v3612 = vld [vmem:[%s3611] ss:$4 sm:$0xff]
        %v3613 = vsub.f32 %v3550, %v2955
        %v3614 = vsub.f32 %v3552, %v2955
        %v3615 = vsub.f32 %v3554, %v2955
        %v3616 = vsub.f32 %v3556, %v2955
        %v3617 = vsub.f32 %v3558, %v2955
        %v3618 = vsub.f32 %v3560, %v2955
        %v3619 = vsub.f32 %v3562, %v2955
        %v3620 = vsub.f32 %v3564, %v2955
        %v3621 = vsub.f32 %v3566, %v2955
        %v3622 = vsub.f32 %v3568, %v2955
        %v3623 = vsub.f32 %v3570, %v2955
        %v3624 = vsub.f32 %v3572, %v2955
        %v3625 = vsub.f32 %v3574, %v2955
        %v3626 = vsub.f32 %v3576, %v2955
        %v3627 = vsub.f32 %v3578, %v2955
        %v3628 = vsub.f32 %v3580, %v2955
        %v3629 = vsub.f32 %v3582, %v2955
        %v3630 = vsub.f32 %v3584, %v2955
        %v3631 = vsub.f32 %v3586, %v2955
        %v3632 = vsub.f32 %v3588, %v2955
        %v3633 = vsub.f32 %v3590, %v2955
        %v3634 = vsub.f32 %v3592, %v2955
        %v3635 = vsub.f32 %v3594, %v2955
        %v3636 = vsub.f32 %v3596, %v2955
        %v3637 = vsub.f32 %v3598, %v2955
        %v3638 = vsub.f32 %v3600, %v2955
        %v3639 = vsub.f32 %v3602, %v2955
        %v3640 = vsub.f32 %v3604, %v2955
        %v3641 = vsub.f32 %v3606, %v2955
        %v3642 = vsub.f32 %v3608, %v2955
        %v3643 = vsub.f32 %v3610, %v2955
        %v3644 = vsub.f32 %v3612, %v2955
        %v3645 = vmul.f32 %v3613, %v2993
        %v3646 = vmul.f32 %v3614, %v2993
        %v3647 = vmul.f32 %v3615, %v2993
        %v3648 = vmul.f32 %v3616, %v2993
        %v3649 = vmul.f32 %v3617, %v2993
        %v3650 = vmul.f32 %v3618, %v2993
        %v3651 = vmul.f32 %v3619, %v2993
        %v3652 = vmul.f32 %v3620, %v2993
        %v3653 = vmul.f32 %v3621, %v2993
        %v3654 = vmul.f32 %v3622, %v2993
        %v3655 = vmul.f32 %v3623, %v2993
        %v3656 = vmul.f32 %v3624, %v2993
        %v3657 = vmul.f32 %v3625, %v2993
        %v3658 = vmul.f32 %v3626, %v2993
        %v3659 = vmul.f32 %v3627, %v2993
        %v3660 = vmul.f32 %v3628, %v2993
        %v3661 = vmul.f32 %v3629, %v2993
        %v3662 = vmul.f32 %v3630, %v2993
        %v3663 = vmul.f32 %v3631, %v2993
        %v3664 = vmul.f32 %v3632, %v2993
        %v3665 = vmul.f32 %v3633, %v2993
        %v3666 = vmul.f32 %v3634, %v2993
        %v3667 = vmul.f32 %v3635, %v2993
        %v3668 = vmul.f32 %v3636, %v2993
        %v3669 = vmul.f32 %v3637, %v2993
        %v3670 = vmul.f32 %v3638, %v2993
        %v3671 = vmul.f32 %v3639, %v2993
        %v3672 = vmul.f32 %v3640, %v2993
        %v3673 = vmul.f32 %v3641, %v2993
        %v3674 = vmul.f32 %v3642, %v2993
        %v3675 = vmul.f32 %v3643, %v2993
        %v3676 = vmul.f32 %v3644, %v2993
        %v3677 = vadd.f32 %v3645, %v3032
        %v3678 = vadd.f32 %v3646, %v3032
        %v3679 = vadd.f32 %v3647, %v3032
        %v3680 = vadd.f32 %v3648, %v3032
        %v3681 = vadd.f32 %v3649, %v3032
        %v3682 = vadd.f32 %v3650, %v3032
        %v3683 = vadd.f32 %v3651, %v3032
        %v3684 = vadd.f32 %v3652, %v3032
        %v3685 = vadd.f32 %v3653, %v3032
        %v3686 = vadd.f32 %v3654, %v3032
        %v3687 = vadd.f32 %v3655, %v3032
        %v3688 = vadd.f32 %v3656, %v3032
        %v3689 = vadd.f32 %v3657, %v3032
        %v3690 = vadd.f32 %v3658, %v3032
        %v3691 = vadd.f32 %v3659, %v3032
        %v3692 = vadd.f32 %v3660, %v3032
        %v3693 = vadd.f32 %v3661, %v3032
        %v3694 = vadd.f32 %v3662, %v3032
        %v3695 = vadd.f32 %v3663, %v3032
        %v3696 = vadd.f32 %v3664, %v3032
        %v3697 = vadd.f32 %v3665, %v3032
        %v3698 = vadd.f32 %v3666, %v3032
        %v3699 = vadd.f32 %v3667, %v3032
        %v3700 = vadd.f32 %v3668, %v3032
        %v3701 = vadd.f32 %v3669, %v3032
        %v3702 = vadd.f32 %v3670, %v3032
        %v3703 = vadd.f32 %v3671, %v3032
        %v3704 = vadd.f32 %v3672, %v3032
        %v3705 = vadd.f32 %v3673, %v3032
        %v3706 = vadd.f32 %v3674, %v3032
        %v3707 = vadd.f32 %v3675, %v3032
        %v3708 = vadd.f32 %v3676, %v3032
        %v3709 = vmax.f32 %v3677, 0.0
        %v3710 = vmax.f32 %v3678, 0.0
        %v3711 = vmax.f32 %v3679, 0.0
        %v3712 = vmax.f32 %v3680, 0.0
        %v3713 = vmax.f32 %v3681, 0.0
        %v3714 = vmax.f32 %v3682, 0.0
        %v3715 = vmax.f32 %v3683, 0.0
        %v3716 = vmax.f32 %v3684, 0.0
        %v3717 = vmax.f32 %v3685, 0.0
        %v3718 = vmax.f32 %v3686, 0.0
        %v3719 = vmax.f32 %v3687, 0.0
        %v3720 = vmax.f32 %v3688, 0.0
        %v3721 = vmax.f32 %v3689, 0.0
        %v3722 = vmax.f32 %v3690, 0.0
        %v3723 = vmax.f32 %v3691, 0.0
        %v3724 = vmax.f32 %v3692, 0.0
        %v3725 = vmax.f32 %v3693, 0.0
        %v3726 = vmax.f32 %v3694, 0.0
        %v3727 = vmax.f32 %v3695, 0.0
        %v3728 = vmax.f32 %v3696, 0.0
        %v3729 = vmax.f32 %v3697, 0.0
        %v3730 = vmax.f32 %v3698, 0.0
        %v3731 = vmax.f32 %v3699, 0.0
        %v3732 = vmax.f32 %v3700, 0.0
        %v3733 = vmax.f32 %v3701, 0.0
        %v3734 = vmax.f32 %v3702, 0.0
        %v3735 = vmax.f32 %v3703, 0.0
        %v3736 = vmax.f32 %v3704, 0.0
        %v3737 = vmax.f32 %v3705, 0.0
        %v3738 = vmax.f32 %v3706, 0.0
        %v3739 = vmax.f32 %v3707, 0.0
        %v3740 = vmax.f32 %v3708, 0.0
        %v3741 = vmax.f32 %v3516, %v3709
        %v3742 = vmax.f32 %v3517, %v3710
        %v3743 = vmax.f32 %v3518, %v3711
        %v3744 = vmax.f32 %v3519, %v3712
        %v3745 = vmax.f32 %v3520, %v3713
        %v3746 = vmax.f32 %v3521, %v3714
        %v3747 = vmax.f32 %v3522, %v3715
        %v3748 = vmax.f32 %v3523, %v3716
        %v3749 = vmax.f32 %v3524, %v3717
        %v3750 = vmax.f32 %v3525, %v3718
        %v3751 = vmax.f32 %v3526, %v3719
        %v3752 = vmax.f32 %v3527, %v3720
        %v3753 = vmax.f32 %v3528, %v3721
        %v3754 = vmax.f32 %v3529, %v3722
        %v3755 = vmax.f32 %v3530, %v3723
        %v3756 = vmax.f32 %v3531, %v3724
        %v3757 = vmax.f32 %v3532, %v3725
        %v3758 = vmax.f32 %v3533, %v3726
        %v3759 = vmax.f32 %v3534, %v3727
        %v3760 = vmax.f32 %v3535, %v3728
        %v3761 = vmax.f32 %v3536, %v3729
        %v3762 = vmax.f32 %v3537, %v3730
        %v3763 = vmax.f32 %v3538, %v3731
        %v3764 = vmax.f32 %v3539, %v3732
        %v3765 = vmax.f32 %v3540, %v3733
        %v3766 = vmax.f32 %v3541, %v3734
        %v3767 = vmax.f32 %v3542, %v3735
        %v3768 = vmax.f32 %v3543, %v3736
        %v3769 = vmax.f32 %v3544, %v3737
        %v3770 = vmax.f32 %v3545, %v3738
        %v3771 = vmax.f32 %v3546, %v3739
        %v3772 = vmax.f32 %v3547, %v3740
        %v3773 = vpack.c.bf16 %v3742, %v3741
        %v3774 = vpack.c.bf16 %v3744, %v3743
        %v3775 = vpack.c.bf16 %v3746, %v3745
        %v3776 = vpack.c.bf16 %v3748, %v3747
        %v3777 = vpack.c.bf16 %v3750, %v3749
        %v3778 = vpack.c.bf16 %v3752, %v3751
        %v3779 = vpack.c.bf16 %v3754, %v3753
        %v3780 = vpack.c.bf16 %v3756, %v3755
        %v3781 = vpack.c.bf16 %v3758, %v3757
        %v3782 = vpack.c.bf16 %v3760, %v3759
        %v3783 = vpack.c.bf16 %v3762, %v3761
        %v3784 = vpack.c.bf16 %v3764, %v3763
        %v3785 = vpack.c.bf16 %v3766, %v3765
        %v3786 = vpack.c.bf16 %v3768, %v3767
        %v3787 = vpack.c.bf16 %v3770, %v3769
        %v3788 = vpack.c.bf16 %v3772, %v3771
        %v3805 = vunpack.c.l.b16 %v3773
        %v3806 = vunpack.c.h.b16 %v3773
        %v3807 = vunpack.c.l.b16 %v3774
        %v3808 = vunpack.c.h.b16 %v3774
        %v3809 = vunpack.c.l.b16 %v3775
        %v3810 = vunpack.c.h.b16 %v3775
        %v3811 = vunpack.c.l.b16 %v3776
        %v3812 = vunpack.c.h.b16 %v3776
        %v3813 = vunpack.c.l.b16 %v3777
        %v3814 = vunpack.c.h.b16 %v3777
        %v3815 = vunpack.c.l.b16 %v3778
        %v3816 = vunpack.c.h.b16 %v3778
        %v3817 = vunpack.c.l.b16 %v3779
        %v3818 = vunpack.c.h.b16 %v3779
        %v3819 = vunpack.c.l.b16 %v3780
        %v3820 = vunpack.c.h.b16 %v3780
        %v3821 = vunpack.c.l.b16 %v3781
        %v3822 = vunpack.c.h.b16 %v3781
        %v3823 = vunpack.c.l.b16 %v3782
        %v3824 = vunpack.c.h.b16 %v3782
        %v3825 = vunpack.c.l.b16 %v3783
        %v3826 = vunpack.c.h.b16 %v3783
        %v3827 = vunpack.c.l.b16 %v3784
        %v3828 = vunpack.c.h.b16 %v3784
        %v3829 = vunpack.c.l.b16 %v3785
        %v3830 = vunpack.c.h.b16 %v3785
        %v3831 = vunpack.c.l.b16 %v3786
        %v3832 = vunpack.c.h.b16 %v3786
        %v3833 = vunpack.c.l.b16 %v3787
        %v3834 = vunpack.c.h.b16 %v3787
        %v3835 = vunpack.c.l.b16 %v3788
        %v3836 = vunpack.c.h.b16 %v3788
        %v3837 = vpack.c.b16 %v3805, %v3805
        %v3838 = vpack.c.b16 %v3806, %v3806
        %v3839 = vpack.c.b16 %v3807, %v3807
        %v3840 = vpack.c.b16 %v3808, %v3808
        %v3841 = vpack.c.b16 %v3809, %v3809
        %v3842 = vpack.c.b16 %v3810, %v3810
        %v3843 = vpack.c.b16 %v3811, %v3811
        %v3844 = vpack.c.b16 %v3812, %v3812
        %v3845 = vpack.c.b16 %v3813, %v3813
        %v3846 = vpack.c.b16 %v3814, %v3814
        %v3847 = vpack.c.b16 %v3815, %v3815
        %v3848 = vpack.c.b16 %v3816, %v3816
        %v3849 = vpack.c.b16 %v3817, %v3817
        %v3850 = vpack.c.b16 %v3818, %v3818
        %v3851 = vpack.c.b16 %v3819, %v3819
        %v3852 = vpack.c.b16 %v3820, %v3820
        %v3853 = vpack.c.b16 %v3821, %v3821
        %v3854 = vpack.c.b16 %v3822, %v3822
        %v3855 = vpack.c.b16 %v3823, %v3823
        %v3856 = vpack.c.b16 %v3824, %v3824
        %v3857 = vpack.c.b16 %v3825, %v3825
        %v3858 = vpack.c.b16 %v3826, %v3826
        %v3859 = vpack.c.b16 %v3827, %v3827
        %v3860 = vpack.c.b16 %v3828, %v3828
        %v3861 = vpack.c.b16 %v3829, %v3829
        %v3862 = vpack.c.b16 %v3830, %v3830
        %v3863 = vpack.c.b16 %v3831, %v3831
        %v3864 = vpack.c.b16 %v3832, %v3832
        %v3865 = vpack.c.b16 %v3833, %v3833
        %v3866 = vpack.c.b16 %v3834, %v3834
        %v3867 = vpack.c.b16 %v3835, %v3835
        %v3868 = vpack.c.b16 %v3836, %v3836
        %3901 = vst [vmem:[%s298] sm:$0xf] %v3837
        %3902 = vst [vmem:[%s298 + $0x4] sm:$0xf] %v3838
        %3903 = vst [vmem:[%s298 + $0x8] sm:$0xf] %v3839
        %3904 = vst [vmem:[%s298 + $0xc] sm:$0xf] %v3840
        %3905 = vst [vmem:[%s298 + $0x10] sm:$0xf] %v3841
        %3906 = vst [vmem:[%s298 + $0x14] sm:$0xf] %v3842
        %3907 = vst [vmem:[%s298 + $0x18] sm:$0xf] %v3843
        %3908 = vst [vmem:[%s298 + $0x1c] sm:$0xf] %v3844
        %3909 = vst [vmem:[%s298 + $0x20] sm:$0xf] %v3845
        %3910 = vst [vmem:[%s298 + $0x24] sm:$0xf] %v3846
        %3911 = vst [vmem:[%s298 + $0x28] sm:$0xf] %v3847
        %3912 = vst [vmem:[%s298 + $0x2c] sm:$0xf] %v3848
        %3913 = vst [vmem:[%s298 + $0x30] sm:$0xf] %v3849
        %3914 = vst [vmem:[%s298 + $0x34] sm:$0xf] %v3850
        %3915 = vst [vmem:[%s298 + $0x38] sm:$0xf] %v3851
        %3916 = vst [vmem:[%s298 + $0x3c] sm:$0xf] %v3852
        %3917 = vst [vmem:[%s298 + $0x40] sm:$0xf] %v3853
        %3918 = vst [vmem:[%s298 + $0x44] sm:$0xf] %v3854
        %3919 = vst [vmem:[%s298 + $0x48] sm:$0xf] %v3855
        %3920 = vst [vmem:[%s298 + $0x4c] sm:$0xf] %v3856
        %3921 = vst [vmem:[%s298 + $0x50] sm:$0xf] %v3857
        %3922 = vst [vmem:[%s298 + $0x54] sm:$0xf] %v3858
        %3923 = vst [vmem:[%s298 + $0x58] sm:$0xf] %v3859
        %3924 = vst [vmem:[%s298 + $0x5c] sm:$0xf] %v3860
        %3925 = vst [vmem:[%s298 + $0x60] sm:$0xf] %v3861
        %3926 = vst [vmem:[%s298 + $0x64] sm:$0xf] %v3862
        %3927 = vst [vmem:[%s298 + $0x68] sm:$0xf] %v3863
        %3928 = vst [vmem:[%s298 + $0x6c] sm:$0xf] %v3864
        %3929 = vst [vmem:[%s298 + $0x70] sm:$0xf] %v3865
        %3930 = vst [vmem:[%s298 + $0x74] sm:$0xf] %v3866
        %3931 = vst [vmem:[%s298 + $0x78] sm:$0xf] %v3867
        %3932 = vst [vmem:[%s298 + $0x7c] sm:$0xf] %v3868
      $region52: #{net_aur_hpd_m5_forward.2} parent=39 // pred_fallthru
        _
      %s3933 = smul.u32 %s22, %s21
      %s3934 = smul.u32 %s23, %s21
      %s3935 = smul.u32 32, %s3934
      %p3936 = scmp.lt.s32.totalorder %s3933, 1
      %s3937 = scalar_select %p3936, %s3933, 1
      %p3938 = scmp.lt.s32.totalorder %s3935, 31
      %s3939 = scalar_select %p3938, %s3935, 31
      %s3940 = smul.addr %s3937, 32
      %s3941 = sadd.s32 %s3939, %s3940
      %s3942 = smul.addr %s3941, 4
      %s3943 = scalar_lea.vmem %s5, %s3942
      // Predicated region
      $region53: #{net_aur_hpd_m5_forward.2} parent=39 // pred_check
        %p3944 = pneg %p177
      $region54: #{net_aur_hpd_m5_forward.2} parent=39 // pred_check_branch
        %3946 = sbr.rel (%p3944) target = $region56
      $region55: #{net_aur_hpd_m5_forward.2} parent=39 // pred_region
        %s3947 = smul.u32 %s22, %s21
        %s3948 = smul.u32 %s23, %s21
        %s3949 = smul.u32 32, %s3948
      $region56: #{net_aur_hpd_m5_forward.2} parent=39 // pred_fallthru
        _
    $region40: #{net_aur_hpd_m5_forward.2} parent=5 // pred_fallthru
      _
    %p3950 = scmp.le.s32.totalorder 2, %s11
    // Predicated region
    $region57: #{net_aur_hpd_m5_forward.2} parent=5 // pred_check
      %p3951 = pneg %p3950
    $region58: #{net_aur_hpd_m5_forward.2} parent=5 // pred_check_branch
      %3953 = sbr.rel (%p3951) target = $region60
    $region59: #{net_aur_hpd_m5_forward.2} parent=5 // pred_region
      %s3954 = ssub.s32 %s11, 2
      // Predicated region
      $region61: #{net_aur_hpd_m5_forward.2} parent=59 // pred_check
        %p3955 = pneg %p183
      $region62: #{net_aur_hpd_m5_forward.2} parent=59 // pred_check_branch
        %3957 = sbr.rel (%p3955) target = $region64
      $region63: #{net_aur_hpd_m5_forward.2} parent=59 // pred_region
        %s3958 = smul.u32 %s25, %s24
        %s3959 = smul.u32 %s26, %s24
        %s3960 = smul.u32 32, %s3959
        %p3961 = scmp.lt.s32.totalorder %s3958, 1
        %s3962 = scalar_select %p3961, %s3958, 1
        %p3963 = scmp.lt.s32.totalorder %s3960, 31
        %s3964 = scalar_select %p3963, %s3960, 31
        %s3965 = smul.addr %s3962, 32
        %s3966 = sadd.s32 %s3964, %s3965
        %s3967 = smul.addr %s3966, 4
        %s3968 = scalar_lea.vmem %s5, %s3967
      $region64: #{net_aur_hpd_m5_forward.2} parent=59 // pred_fallthru
        _
    $region60: #{net_aur_hpd_m5_forward.2} parent=5 // pred_fallthru
      _
  $region6: #{net_aur_hpd_m5_forward.2} parent=0 // loop_footer
    %s15 = sadd.s32 1, %s11
  $region7: #{net_aur_hpd_m5_forward.2} parent=0 // loop_footer_branch
    %10 = sbr.rel target = $region3
  $region8: #{net_aur_hpd_m5_forward.2} parent=0 // loop_exit
    _

// kernel: net_aur_hpd_m5_forward.3
$region0: #{net_aur_hpd_m5_forward.3}
  #allocation0 [shape = 'u32[]', space=smem, size = 0x4, offset = 0x4, fixed_abs, tag = 'smem constant byte address 0x4 - core index']
  #allocation1 [shape = 'u32[144,128]{1,0:T(1,128)}', space=vmem, size = 0x12000, scoped, tag = 'internal scratch']
  #allocation2 [shape = 'f32[512,128]{1,0:T(8,128)}', space=vmem, size = 0x40000, scoped, tag = 'scratch operand']
  #allocation3 [shape = 'f32[1,1]{1,0:T(1,128)S(1)}', space=vmem, size = 0x200, scoped, tag = 'scoped memory for net_aur_hpd_m5_forward.3']
  %s0 = inlined_call_operand.vmem [shape: bf16[512,128], index: 0, kind: input, shape index: {}]
  %s1 = inlined_call_operand.vmem [shape: bf16[3,128,128], index: 1, kind: input, shape index: {}]
  %s2 = inlined_call_operand.vmem [shape: f32[3,128], index: 2, kind: input, shape index: {}]
  %s3 = inlined_call_operand.vmem [shape: bf16[3,128,128], index: 3, kind: input, shape index: {}]
  %s4 = inlined_call_operand.vmem [shape: f32[3,128], index: 4, kind: input, shape index: {}]
  %s5 = inlined_call_operand.vmem [shape: bf16[3,128,128], index: 5, kind: input, shape index: {}]
  %s6 = inlined_call_operand.vmem [shape: f32[3,128], index: 6, kind: input, shape index: {}]
  %s7 = inlined_call_operand.vmem [shape: f32[128,1], index: 7, kind: input, shape index: {}]
  %s8 = inlined_call_operand.<no memory space> [shape: f32[1,1], index: 8, kind: input, shape index: {}]
  %s9 = inlined_call_operand.vmem [shape: f32[2,1], index: 9, kind: output, shape index: {}]
  %s10 = sld [smem:[#allocation0]]
  $region46: #{net_aur_hpd_m5_forward.3} parent=0
    _
  %s12 = ssub.s32 1, %s10
  %s13 = scalar_select 0, %s12, %s10
  %v14 = vstv %s8
  %15 = vst [vmem:[#allocation3] sm:$0x1] %v14
  // Predicated region
  $region2: #{net_aur_hpd_m5_forward.3} parent=0 // pred_check
    _
  $region3: #{net_aur_hpd_m5_forward.3} parent=0 // pred_check_branch
    %17 = sbr.rel (0) target = $region5
  $region4: #{net_aur_hpd_m5_forward.3} parent=0 // pred_region
    _
  $region5: #{net_aur_hpd_m5_forward.3} parent=0 // pred_fallthru
    _
  // Predicated region
  $region6: #{net_aur_hpd_m5_forward.3} parent=0 // pred_check
    _
  $region7: #{net_aur_hpd_m5_forward.3} parent=0 // pred_check_branch
    %19 = sbr.rel (0) target = $region9
  $region8: #{net_aur_hpd_m5_forward.3} parent=0 // pred_region
    _
  $region9: #{net_aur_hpd_m5_forward.3} parent=0 // pred_fallthru
    _
  // Predicated region
  $region10: #{net_aur_hpd_m5_forward.3} parent=0 // pred_check
    _
  $region11: #{net_aur_hpd_m5_forward.3} parent=0 // pred_check_branch
    %21 = sbr.rel (0) target = $region13
  $region12: #{net_aur_hpd_m5_forward.3} parent=0 // pred_region
    _
  $region13: #{net_aur_hpd_m5_forward.3} parent=0 // pred_fallthru
    _
  // Predicated region
  $region14: #{net_aur_hpd_m5_forward.3} parent=0 // pred_check
    _
  $region15: #{net_aur_hpd_m5_forward.3} parent=0 // pred_check_branch
    %23 = sbr.rel (0) target = $region17
  $region16: #{net_aur_hpd_m5_forward.3} parent=0 // pred_region
    _
  $region17: #{net_aur_hpd_m5_forward.3} parent=0 // pred_fallthru
    _
  // Predicated region
  $region18: #{net_aur_hpd_m5_forward.3} parent=0 // pred_check
    _
  $region19: #{net_aur_hpd_m5_forward.3} parent=0 // pred_check_branch
    %25 = sbr.rel (0) target = $region21
  $region20: #{net_aur_hpd_m5_forward.3} parent=0 // pred_region
    _
  $region21: #{net_aur_hpd_m5_forward.3} parent=0 // pred_fallthru
    _
  // Predicated region
  $region22: #{net_aur_hpd_m5_forward.3} parent=0 // pred_check
    _
  $region23: #{net_aur_hpd_m5_forward.3} parent=0 // pred_check_branch
    %27 = sbr.rel (0) target = $region25
  $region24: #{net_aur_hpd_m5_forward.3} parent=0 // pred_region
    _
  $region25: #{net_aur_hpd_m5_forward.3} parent=0 // pred_fallthru
    _
  // Predicated region
  $region26: #{net_aur_hpd_m5_forward.3} parent=0 // pred_check
    _
  $region27: #{net_aur_hpd_m5_forward.3} parent=0 // pred_check_branch
    %29 = sbr.rel (0) target = $region29
  $region28: #{net_aur_hpd_m5_forward.3} parent=0 // pred_region
    _
  $region29: #{net_aur_hpd_m5_forward.3} parent=0 // pred_fallthru
    _
  // Predicated region
  $region30: #{net_aur_hpd_m5_forward.3} parent=0 // pred_check
    _
  $region31: #{net_aur_hpd_m5_forward.3} parent=0 // pred_check_branch
    %31 = sbr.rel (0) target = $region33
  $region32: #{net_aur_hpd_m5_forward.3} parent=0 // pred_region
    _
  $region33: #{net_aur_hpd_m5_forward.3} parent=0 // pred_fallthru
    _
  // Predicated region
  $region34: #{net_aur_hpd_m5_forward.3} parent=0 // pred_check
    _
  $region35: #{net_aur_hpd_m5_forward.3} parent=0 // pred_check_branch
    %33 = sbr.rel (0) target = $region37
  $region36: #{net_aur_hpd_m5_forward.3} parent=0 // pred_region
    _
  $region37: #{net_aur_hpd_m5_forward.3} parent=0 // pred_fallthru
    _
  %v35 = vld [vmem:[%s0] sm:$0xf]
  %v36 = vld [vmem:[%s0 + $0x4] sm:$0xf]
  %v37 = vld [vmem:[%s0 + $0x8] sm:$0xf]
  %v38 = vld [vmem:[%s0 + $0xc] sm:$0xf]
  %v39 = vld [vmem:[%s0 + $0x10] sm:$0xf]
  %v40 = vld [vmem:[%s0 + $0x14] sm:$0xf]
  %v41 = vld [vmem:[%s0 + $0x18] sm:$0xf]
  %v42 = vld [vmem:[%s0 + $0x1c] sm:$0xf]
  %v43 = vld [vmem:[%s0 + $0x20] sm:$0xf]
  %v44 = vld [vmem:[%s0 + $0x24] sm:$0xf]
  %v45 = vld [vmem:[%s0 + $0x28] sm:$0xf]
  %v46 = vld [vmem:[%s0 + $0x2c] sm:$0xf]
  %v47 = vld [vmem:[%s0 + $0x30] sm:$0xf]
  %v48 = vld [vmem:[%s0 + $0x34] sm:$0xf]
  %v49 = vld [vmem:[%s0 + $0x38] sm:$0xf]
  %v50 = vld [vmem:[%s0 + $0x3c] sm:$0xf]
  %v51 = vld [vmem:[%s0 + $0x40] sm:$0xf]
  %v52 = vld [vmem:[%s0 + $0x44] sm:$0xf]
  %v53 = vld [vmem:[%s0 + $0x48] sm:$0xf]
  %v54 = vld [vmem:[%s0 + $0x4c] sm:$0xf]
  %v55 = vld [vmem:[%s0 + $0x50] sm:$0xf]
  %v56 = vld [vmem:[%s0 + $0x54] sm:$0xf]
  %v57 = vld [vmem:[%s0 + $0x58] sm:$0xf]
  %v58 = vld [vmem:[%s0 + $0x5c] sm:$0xf]
  %v59 = vld [vmem:[%s0 + $0x60] sm:$0xf]
  %v60 = vld [vmem:[%s0 + $0x64] sm:$0xf]
  %v61 = vld [vmem:[%s0 + $0x68] sm:$0xf]
  %v62 = vld [vmem:[%s0 + $0x6c] sm:$0xf]
  %v63 = vld [vmem:[%s0 + $0x70] sm:$0xf]
  %v64 = vld [vmem:[%s0 + $0x74] sm:$0xf]
  %v65 = vld [vmem:[%s0 + $0x78] sm:$0xf]
  %v66 = vld [vmem:[%s0 + $0x7c] sm:$0xf]
  %v67 = vld [vmem:[%s0 + $0x80] sm:$0xf]
  %v68 = vld [vmem:[%s0 + $0x84] sm:$0xf]
  %v69 = vld [vmem:[%s0 + $0x88] sm:$0xf]
  %v70 = vld [vmem:[%s0 + $0x8c] sm:$0xf]
  %v71 = vld [vmem:[%s0 + $0x90] sm:$0xf]
  %v72 = vld [vmem:[%s0 + $0x94] sm:$0xf]
  %v73 = vld [vmem:[%s0 + $0x98] sm:$0xf]
  %v74 = vld [vmem:[%s0 + $0x9c] sm:$0xf]
  %v75 = vld [vmem:[%s0 + $0xa0] sm:$0xf]
  %v76 = vld [vmem:[%s0 + $0xa4] sm:$0xf]
  %v77 = vld [vmem:[%s0 + $0xa8] sm:$0xf]
  %v78 = vld [vmem:[%s0 + $0xac] sm:$0xf]
  %v79 = vld [vmem:[%s0 + $0xb0] sm:$0xf]
  %v80 = vld [vmem:[%s0 + $0xb4] sm:$0xf]
  %v81 = vld [vmem:[%s0 + $0xb8] sm:$0xf]
  %v82 = vld [vmem:[%s0 + $0xbc] sm:$0xf]
  %v83 = vld [vmem:[%s0 + $0xc0] sm:$0xf]
  %v84 = vld [vmem:[%s0 + $0xc4] sm:$0xf]
  %v85 = vld [vmem:[%s0 + $0xc8] sm:$0xf]
  %v86 = vld [vmem:[%s0 + $0xcc] sm:$0xf]
  %v87 = vld [vmem:[%s0 + $0xd0] sm:$0xf]
  %v88 = vld [vmem:[%s0 + $0xd4] sm:$0xf]
  %v89 = vld [vmem:[%s0 + $0xd8] sm:$0xf]
  %v90 = vld [vmem:[%s0 + $0xdc] sm:$0xf]
  %v91 = vld [vmem:[%s0 + $0xe0] sm:$0xf]
  %v92 = vld [vmem:[%s0 + $0xe4] sm:$0xf]
  %v93 = vld [vmem:[%s0 + $0xe8] sm:$0xf]
  %v94 = vld [vmem:[%s0 + $0xec] sm:$0xf]
  %v95 = vld [vmem:[%s0 + $0xf0] sm:$0xf]
  %v96 = vld [vmem:[%s0 + $0xf4] sm:$0xf]
  %v97 = vld [vmem:[%s0 + $0xf8] sm:$0xf]
  %v98 = vld [vmem:[%s0 + $0xfc] sm:$0xf]
  %v99 = vld [vmem:[%s1] sm:$0xf]
  %v100 = vld [vmem:[%s1 + $0x4] sm:$0xf]
  %v101 = vld [vmem:[%s1 + $0x8] sm:$0xf]
  %v102 = vld [vmem:[%s1 + $0xc] sm:$0xf]
  %v103 = vld [vmem:[%s1 + $0x10] sm:$0xf]
  %v104 = vld [vmem:[%s1 + $0x14] sm:$0xf]
  %v105 = vld [vmem:[%s1 + $0x18] sm:$0xf]
  %v106 = vld [vmem:[%s1 + $0x1c] sm:$0xf]
  %v107 = vld [vmem:[%s1 + $0x20] sm:$0xf]
  %v108 = vld [vmem:[%s1 + $0x24] sm:$0xf]
  %v109 = vld [vmem:[%s1 + $0x28] sm:$0xf]
  %v110 = vld [vmem:[%s1 + $0x2c] sm:$0xf]
  %v111 = vld [vmem:[%s1 + $0x30] sm:$0xf]
  %v112 = vld [vmem:[%s1 + $0x34] sm:$0xf]
  %v113 = vld [vmem:[%s1 + $0x38] sm:$0xf]
  %v114 = vld [vmem:[%s1 + $0x3c] sm:$0xf]
  %s115 = scalar_lea.vmem %s1, 64
  %v116 = vld [vmem:[%s115] sm:$0xf]
  %v117 = vld [vmem:[%s115 + $0x4] sm:$0xf]
  %v118 = vld [vmem:[%s115 + $0x8] sm:$0xf]
  %v119 = vld [vmem:[%s115 + $0xc] sm:$0xf]
  %v120 = vld [vmem:[%s115 + $0x10] sm:$0xf]
  %v121 = vld [vmem:[%s115 + $0x14] sm:$0xf]
  %v122 = vld [vmem:[%s115 + $0x18] sm:$0xf]
  %v123 = vld [vmem:[%s115 + $0x1c] sm:$0xf]
  %v124 = vld [vmem:[%s115 + $0x20] sm:$0xf]
  %v125 = vld [vmem:[%s115 + $0x24] sm:$0xf]
  %v126 = vld [vmem:[%s115 + $0x28] sm:$0xf]
  %v127 = vld [vmem:[%s115 + $0x2c] sm:$0xf]
  %v128 = vld [vmem:[%s115 + $0x30] sm:$0xf]
  %v129 = vld [vmem:[%s115 + $0x34] sm:$0xf]
  %v130 = vld [vmem:[%s115 + $0x38] sm:$0xf]
  %v131 = vld [vmem:[%s115 + $0x3c] sm:$0xf]
  %v196 = vunpack.c.l.b16 %v35
  %v197 = vunpack.c.l.b16 %v36
  %v198 = vunpack.c.l.b16 %v37
  %v199 = vunpack.c.l.b16 %v38
  %v200 = vunpack.c.l.b16 %v39
  %v201 = vunpack.c.l.b16 %v40
  %v202 = vunpack.c.l.b16 %v41
  %v203 = vunpack.c.l.b16 %v42
  %v204 = vunpack.c.l.b16 %v43
  %v205 = vunpack.c.l.b16 %v44
  %v206 = vunpack.c.l.b16 %v45
  %v207 = vunpack.c.l.b16 %v46
  %v208 = vunpack.c.l.b16 %v47
  %v209 = vunpack.c.l.b16 %v48
  %v210 = vunpack.c.l.b16 %v49
  %v211 = vunpack.c.l.b16 %v50
  %v212 = vunpack.c.l.b16 %v51
  %v213 = vunpack.c.l.b16 %v52
  %v214 = vunpack.c.l.b16 %v53
  %v215 = vunpack.c.l.b16 %v54
  %v216 = vunpack.c.l.b16 %v55
  %v217 = vunpack.c.l.b16 %v56
  %v218 = vunpack.c.l.b16 %v57
  %v219 = vunpack.c.l.b16 %v58
  %v220 = vunpack.c.l.b16 %v59
  %v221 = vunpack.c.l.b16 %v60
  %v222 = vunpack.c.l.b16 %v61
  %v223 = vunpack.c.l.b16 %v62
  %v224 = vunpack.c.l.b16 %v63
  %v225 = vunpack.c.l.b16 %v64
  %v226 = vunpack.c.l.b16 %v65
  %v227 = vunpack.c.l.b16 %v66
  %v228 = vunpack.c.l.b16 %v67
  %v229 = vunpack.c.l.b16 %v68
  %v230 = vunpack.c.l.b16 %v69
  %v231 = vunpack.c.l.b16 %v70
  %v232 = vunpack.c.l.b16 %v71
  %v233 = vunpack.c.l.b16 %v72
  %v234 = vunpack.c.l.b16 %v73
  %v235 = vunpack.c.l.b16 %v74
  %v236 = vunpack.c.l.b16 %v75
  %v237 = vunpack.c.l.b16 %v76
  %v238 = vunpack.c.l.b16 %v77
  %v239 = vunpack.c.l.b16 %v78
  %v240 = vunpack.c.l.b16 %v79
  %v241 = vunpack.c.l.b16 %v80
  %v242 = vunpack.c.l.b16 %v81
  %v243 = vunpack.c.l.b16 %v82
  %v244 = vunpack.c.l.b16 %v83
  %v245 = vunpack.c.l.b16 %v84
  %v246 = vunpack.c.l.b16 %v85
  %v247 = vunpack.c.l.b16 %v86
  %v248 = vunpack.c.l.b16 %v87
  %v249 = vunpack.c.l.b16 %v88
  %v250 = vunpack.c.l.b16 %v89
  %v251 = vunpack.c.l.b16 %v90
  %v252 = vunpack.c.l.b16 %v91
  %v253 = vunpack.c.l.b16 %v92
  %v254 = vunpack.c.l.b16 %v93
  %v255 = vunpack.c.l.b16 %v94
  %v256 = vunpack.c.l.b16 %v95
  %v257 = vunpack.c.l.b16 %v96
  %v258 = vunpack.c.l.b16 %v97
  %v259 = vunpack.c.l.b16 %v98
  %v260 = vpack.c.b16 %v197, %v196
  %v261 = vpack.c.b16 %v199, %v198
  %v262 = vpack.c.b16 %v201, %v200
  %v263 = vpack.c.b16 %v203, %v202
  %v264 = vpack.c.b16 %v205, %v204
  %v265 = vpack.c.b16 %v207, %v206
  %v266 = vpack.c.b16 %v209, %v208
  %v267 = vpack.c.b16 %v211, %v210
  %v268 = vpack.c.b16 %v213, %v212
  %v269 = vpack.c.b16 %v215, %v214
  %v270 = vpack.c.b16 %v217, %v216
  %v271 = vpack.c.b16 %v219, %v218
  %v272 = vpack.c.b16 %v221, %v220
  %v273 = vpack.c.b16 %v223, %v222
  %v274 = vpack.c.b16 %v225, %v224
  %v275 = vpack.c.b16 %v227, %v226
  %v276 = vpack.c.b16 %v229, %v228
  %v277 = vpack.c.b16 %v231, %v230
  %v278 = vpack.c.b16 %v233, %v232
  %v279 = vpack.c.b16 %v235, %v234
  %v280 = vpack.c.b16 %v237, %v236
  %v281 = vpack.c.b16 %v239, %v238
  %v282 = vpack.c.b16 %v241, %v240
  %v283 = vpack.c.b16 %v243, %v242
  %v284 = vpack.c.b16 %v245, %v244
  %v285 = vpack.c.b16 %v247, %v246
  %v286 = vpack.c.b16 %v249, %v248
  %v287 = vpack.c.b16 %v251, %v250
  %v288 = vpack.c.b16 %v253, %v252
  %v289 = vpack.c.b16 %v255, %v254
  %v290 = vpack.c.b16 %v257, %v256
  %v291 = vpack.c.b16 %v259, %v258
  %v340 = vunpack.c.l.b16 %v116
  %v341 = vunpack.c.l.b16 %v117
  %v342 = vunpack.c.l.b16 %v118
  %v343 = vunpack.c.l.b16 %v119
  %v344 = vunpack.c.l.b16 %v120
  %v345 = vunpack.c.l.b16 %v121
  %v346 = vunpack.c.l.b16 %v122
  %v347 = vunpack.c.l.b16 %v123
  %v348 = vunpack.c.l.b16 %v124
  %v349 = vunpack.c.l.b16 %v125
  %v350 = vunpack.c.l.b16 %v126
  %v351 = vunpack.c.l.b16 %v127
  %v352 = vunpack.c.l.b16 %v128
  %v353 = vunpack.c.l.b16 %v129
  %v354 = vunpack.c.l.b16 %v130
  %v355 = vunpack.c.l.b16 %v131
  %v356 = vpack.c.b16 %v341, %v340
  %v357 = vpack.c.b16 %v343, %v342
  %v358 = vpack.c.b16 %v345, %v344
  %v359 = vpack.c.b16 %v347, %v346
  %v360 = vpack.c.b16 %v349, %v348
  %v361 = vpack.c.b16 %v351, %v350
  %v362 = vpack.c.b16 %v353, %v352
  %v363 = vpack.c.b16 %v355, %v354
  %372 = vmatprep.subr.bf16.mxu0 0
  %373 = vmatpush1.bf16.msra.mxu0 %v363
  %374 = vmatprep.subr.bf16.mxu0 0
  %375 = vmatpush1.bf16.msra.mxu0 %v362
  %376 = vmatprep.subr.bf16.mxu0 0
  %377 = vmatpush1.bf16.msra.mxu0 %v361
  %378 = vmatprep.subr.bf16.mxu0 0
  %379 = vmatpush1.bf16.msra.mxu0 %v360
  %380 = vmatprep.subr.bf16.mxu0 0
  %381 = vmatpush1.bf16.msra.mxu0 %v359
  %382 = vmatprep.subr.bf16.mxu0 0
  %383 = vmatpush1.bf16.msra.mxu0 %v358
  %384 = vmatprep.subr.bf16.mxu0 0
  %385 = vmatpush1.bf16.msra.mxu0 %v357
  %386 = vmatprep.subr.bf16.mxu0 0
  %387 = vmatpush1.bf16.msra.mxu0 %v356
  %388 = vmatprep.subr.bf16.mxu0 0
  %389 = vmatpush2.bf16.msra.mxu0 0
  %390 = vmatprep.subr.bf16.mxu0 0
  %391 = vmatpush2.bf16.msra.mxu0 0
  %392 = vmatprep.subr.bf16.mxu0 0
  %393 = vmatpush2.bf16.msra.mxu0 0
  %394 = vmatprep.subr.bf16.mxu0 0
  %395 = vmatpush2.bf16.msra.mxu0 0
  %396 = vmatprep.subr.bf16.mxu0 0
  %397 = vmatpush2.bf16.msra.mxu0 0
  %398 = vmatprep.subr.bf16.mxu0 0
  %399 = vmatpush2.bf16.msra.mxu0 0
  %400 = vmatprep.subr.bf16.mxu0 0
  %401 = vmatpush2.bf16.msra.mxu0 0
  %402 = vmatprep.subr.bf16.mxu0 0
  %403 = vmatpush2.bf16.msra.mxu0 0
  %404 = vmatprep.mubr.bf16.mxu0 0
  %405 = vmatmul.mubr.bf16.gmra.mxu0 %v260
  %v406 = vpop.f32.mrf.mxu0
  %v407 = vadd.f32 0.0, %v406
  %v408 = vpop.f32.mrf.mxu0
  %v409 = vpop.f32.mrf.mxu0
  %v410 = vadd.f32 0.0, %v409
  %v411 = vpop.f32.mrf.mxu0
  %412 = vmatprep.mubr.bf16.mxu0 0
  %413 = vmatmul.mubr.bf16.gmra.mxu0 %v261
  %v414 = vpop.f32.mrf.mxu0
  %v415 = vadd.f32 0.0, %v414
  %v416 = vpop.f32.mrf.mxu0
  %v417 = vpop.f32.mrf.mxu0
  %v418 = vadd.f32 0.0, %v417
  %v419 = vpop.f32.mrf.mxu0
  %420 = vmatprep.mubr.bf16.mxu0 0
  %421 = vmatmul.mubr.bf16.gmra.mxu0 %v262
  %v422 = vpop.f32.mrf.mxu0
  %v423 = vadd.f32 0.0, %v422
  %v424 = vpop.f32.mrf.mxu0
  %v425 = vpop.f32.mrf.mxu0
  %v426 = vadd.f32 0.0, %v425
  %v427 = vpop.f32.mrf.mxu0
  %428 = vmatprep.mubr.bf16.mxu0 0
  %429 = vmatmul.mubr.bf16.gmra.mxu0 %v263
  %v430 = vpop.f32.mrf.mxu0
  %v431 = vadd.f32 0.0, %v430
  %v432 = vpop.f32.mrf.mxu0
  %v433 = vpop.f32.mrf.mxu0
  %v434 = vadd.f32 0.0, %v433
  %v435 = vpop.f32.mrf.mxu0
  %436 = vmatprep.mubr.bf16.mxu0 0
  %437 = vmatmul.mubr.bf16.gmra.mxu0 %v264
  %v438 = vpop.f32.mrf.mxu0
  %v439 = vadd.f32 0.0, %v438
  %v440 = vpop.f32.mrf.mxu0
  %v441 = vpop.f32.mrf.mxu0
  %v442 = vadd.f32 0.0, %v441
  %v443 = vpop.f32.mrf.mxu0
  %444 = vmatprep.mubr.bf16.mxu0 0
  %445 = vmatmul.mubr.bf16.gmra.mxu0 %v265
  %v446 = vpop.f32.mrf.mxu0
  %v447 = vadd.f32 0.0, %v446
  %v448 = vpop.f32.mrf.mxu0
  %v449 = vpop.f32.mrf.mxu0
  %v450 = vadd.f32 0.0, %v449
  %v451 = vpop.f32.mrf.mxu0
  %452 = vmatprep.mubr.bf16.mxu0 0
  %453 = vmatmul.mubr.bf16.gmra.mxu0 %v266
  %v454 = vpop.f32.mrf.mxu0
  %v455 = vadd.f32 0.0, %v454
  %v456 = vpop.f32.mrf.mxu0
  %v457 = vpop.f32.mrf.mxu0
  %v458 = vadd.f32 0.0, %v457
  %v459 = vpop.f32.mrf.mxu0
  %460 = vmatprep.mubr.bf16.mxu0 0
  %461 = vmatmul.mubr.bf16.gmra.mxu0 %v267
  %v462 = vpop.f32.mrf.mxu0
  %v463 = vadd.f32 0.0, %v462
  %v464 = vpop.f32.mrf.mxu0
  %v465 = vpop.f32.mrf.mxu0
  %v466 = vadd.f32 0.0, %v465
  %v467 = vpop.f32.mrf.mxu0
  %468 = vmatprep.mubr.bf16.mxu0 0
  %469 = vmatmul.mubr.bf16.gmra.mxu0 %v268
  %v470 = vpop.f32.mrf.mxu0
  %v471 = vadd.f32 0.0, %v470
  %v472 = vpop.f32.mrf.mxu0
  %v473 = vpop.f32.mrf.mxu0
  %v474 = vadd.f32 0.0, %v473
  %v475 = vpop.f32.mrf.mxu0
  %476 = vmatprep.mubr.bf16.mxu0 0
  %477 = vmatmul.mubr.bf16.gmra.mxu0 %v269
  %v478 = vpop.f32.mrf.mxu0
  %v479 = vadd.f32 0.0, %v478
  %v480 = vpop.f32.mrf.mxu0
  %v481 = vpop.f32.mrf.mxu0
  %v482 = vadd.f32 0.0, %v481
  %v483 = vpop.f32.mrf.mxu0
  %484 = vmatprep.mubr.bf16.mxu0 0
  %485 = vmatmul.mubr.bf16.gmra.mxu0 %v270
  %v486 = vpop.f32.mrf.mxu0
  %v487 = vadd.f32 0.0, %v486
  %v488 = vpop.f32.mrf.mxu0
  %v489 = vpop.f32.mrf.mxu0
  %v490 = vadd.f32 0.0, %v489
  %v491 = vpop.f32.mrf.mxu0
  %492 = vmatprep.mubr.bf16.mxu0 0
  %493 = vmatmul.mubr.bf16.gmra.mxu0 %v271
  %v494 = vpop.f32.mrf.mxu0
  %v495 = vadd.f32 0.0, %v494
  %v496 = vpop.f32.mrf.mxu0
  %v497 = vpop.f32.mrf.mxu0
  %v498 = vadd.f32 0.0, %v497
  %v499 = vpop.f32.mrf.mxu0
  %500 = vmatprep.mubr.bf16.mxu0 0
  %501 = vmatmul.mubr.bf16.gmra.mxu0 %v272
  %v502 = vpop.f32.mrf.mxu0
  %v503 = vadd.f32 0.0, %v502
  %v504 = vpop.f32.mrf.mxu0
  %v505 = vpop.f32.mrf.mxu0
  %v506 = vadd.f32 0.0, %v505
  %v507 = vpop.f32.mrf.mxu0
  %508 = vmatprep.mubr.bf16.mxu0 0
  %509 = vmatmul.mubr.bf16.gmra.mxu0 %v273
  %v510 = vpop.f32.mrf.mxu0
  %v511 = vadd.f32 0.0, %v510
  %v512 = vpop.f32.mrf.mxu0
  %v513 = vpop.f32.mrf.mxu0
  %v514 = vadd.f32 0.0, %v513
  %v515 = vpop.f32.mrf.mxu0
  %516 = vmatprep.mubr.bf16.mxu0 0
  %517 = vmatmul.mubr.bf16.gmra.mxu0 %v274
  %v518 = vpop.f32.mrf.mxu0
  %v519 = vadd.f32 0.0, %v518
  %v520 = vpop.f32.mrf.mxu0
  %v521 = vpop.f32.mrf.mxu0
  %v522 = vadd.f32 0.0, %v521
  %v523 = vpop.f32.mrf.mxu0
  %524 = vmatprep.mubr.bf16.mxu0 0
  %525 = vmatmul.mubr.bf16.gmra.mxu0 %v275
  %v526 = vpop.f32.mrf.mxu0
  %v527 = vadd.f32 0.0, %v526
  %v528 = vpop.f32.mrf.mxu0
  %v529 = vpop.f32.mrf.mxu0
  %v530 = vadd.f32 0.0, %v529
  %v531 = vpop.f32.mrf.mxu0
  %532 = vmatprep.mubr.bf16.mxu0 0
  %533 = vmatmul.mubr.bf16.gmra.mxu0 %v276
  %v534 = vpop.f32.mrf.mxu0
  %v535 = vadd.f32 0.0, %v534
  %v536 = vpop.f32.mrf.mxu0
  %v537 = vpop.f32.mrf.mxu0
  %v538 = vadd.f32 0.0, %v537
  %v539 = vpop.f32.mrf.mxu0
  %540 = vmatprep.mubr.bf16.mxu0 0
  %541 = vmatmul.mubr.bf16.gmra.mxu0 %v277
  %v542 = vpop.f32.mrf.mxu0
  %v543 = vadd.f32 0.0, %v542
  %v544 = vpop.f32.mrf.mxu0
  %v545 = vpop.f32.mrf.mxu0
  %v546 = vadd.f32 0.0, %v545
  %v547 = vpop.f32.mrf.mxu0
  %548 = vmatprep.mubr.bf16.mxu0 0
  %549 = vmatmul.mubr.bf16.gmra.mxu0 %v278
  %v550 = vpop.f32.mrf.mxu0
  %v551 = vadd.f32 0.0, %v550
  %v552 = vpop.f32.mrf.mxu0
  %v553 = vpop.f32.mrf.mxu0
  %v554 = vadd.f32 0.0, %v553
  %v555 = vpop.f32.mrf.mxu0
  %556 = vmatprep.mubr.bf16.mxu0 0
  %557 = vmatmul.mubr.bf16.gmra.mxu0 %v279
  %v558 = vpop.f32.mrf.mxu0
  %v559 = vadd.f32 0.0, %v558
  %v560 = vpop.f32.mrf.mxu0
  %v561 = vpop.f32.mrf.mxu0
  %v562 = vadd.f32 0.0, %v561
  %v563 = vpop.f32.mrf.mxu0
  %564 = vmatprep.mubr.bf16.mxu0 0
  %565 = vmatmul.mubr.bf16.gmra.mxu0 %v280
  %v566 = vpop.f32.mrf.mxu0
  %v567 = vadd.f32 0.0, %v566
  %v568 = vpop.f32.mrf.mxu0
  %v569 = vpop.f32.mrf.mxu0
  %v570 = vadd.f32 0.0, %v569
  %v571 = vpop.f32.mrf.mxu0
  %572 = vmatprep.mubr.bf16.mxu0 0
  %573 = vmatmul.mubr.bf16.gmra.mxu0 %v281
  %v574 = vpop.f32.mrf.mxu0
  %v575 = vadd.f32 0.0, %v574
  %v576 = vpop.f32.mrf.mxu0
  %v577 = vpop.f32.mrf.mxu0
  %v578 = vadd.f32 0.0, %v577
  %v579 = vpop.f32.mrf.mxu0
  %580 = vmatprep.mubr.bf16.mxu0 0
  %581 = vmatmul.mubr.bf16.gmra.mxu0 %v282
  %v582 = vpop.f32.mrf.mxu0
  %v583 = vadd.f32 0.0, %v582
  %v584 = vpop.f32.mrf.mxu0
  %v585 = vpop.f32.mrf.mxu0
  %v586 = vadd.f32 0.0, %v585
  %v587 = vpop.f32.mrf.mxu0
  %588 = vmatprep.mubr.bf16.mxu0 0
  %589 = vmatmul.mubr.bf16.gmra.mxu0 %v283
  %v590 = vpop.f32.mrf.mxu0
  %v591 = vadd.f32 0.0, %v590
  %v592 = vpop.f32.mrf.mxu0
  %v593 = vpop.f32.mrf.mxu0
  %v594 = vadd.f32 0.0, %v593
  %v595 = vpop.f32.mrf.mxu0
  %596 = vmatprep.mubr.bf16.mxu0 0
  %597 = vmatmul.mubr.bf16.gmra.mxu0 %v284
  %v598 = vpop.f32.mrf.mxu0
  %v599 = vadd.f32 0.0, %v598
  %v600 = vpop.f32.mrf.mxu0
  %v601 = vpop.f32.mrf.mxu0
  %v602 = vadd.f32 0.0, %v601
  %v603 = vpop.f32.mrf.mxu0
  %604 = vmatprep.mubr.bf16.mxu0 0
  %605 = vmatmul.mubr.bf16.gmra.mxu0 %v285
  %v606 = vpop.f32.mrf.mxu0
  %v607 = vadd.f32 0.0, %v606
  %v608 = vpop.f32.mrf.mxu0
  %v609 = vpop.f32.mrf.mxu0
  %v610 = vadd.f32 0.0, %v609
  %v611 = vpop.f32.mrf.mxu0
  %612 = vmatprep.mubr.bf16.mxu0 0
  %613 = vmatmul.mubr.bf16.gmra.mxu0 %v286
  %v614 = vpop.f32.mrf.mxu0
  %v615 = vadd.f32 0.0, %v614
  %v616 = vpop.f32.mrf.mxu0
  %v617 = vpop.f32.mrf.mxu0
  %v618 = vadd.f32 0.0, %v617
  %v619 = vpop.f32.mrf.mxu0
  %620 = vmatprep.mubr.bf16.mxu0 0
  %621 = vmatmul.mubr.bf16.gmra.mxu0 %v287
  %v622 = vpop.f32.mrf.mxu0
  %v623 = vadd.f32 0.0, %v622
  %v624 = vpop.f32.mrf.mxu0
  %v625 = vpop.f32.mrf.mxu0
  %v626 = vadd.f32 0.0, %v625
  %v627 = vpop.f32.mrf.mxu0
  %628 = vmatprep.mubr.bf16.mxu0 0
  %629 = vmatmul.mubr.bf16.gmra.mxu0 %v288
  %v630 = vpop.f32.mrf.mxu0
  %v631 = vadd.f32 0.0, %v630
  %v632 = vpop.f32.mrf.mxu0
  %v633 = vpop.f32.mrf.mxu0
  %v634 = vadd.f32 0.0, %v633
  %v635 = vpop.f32.mrf.mxu0
  %636 = vmatprep.mubr.bf16.mxu0 0
  %637 = vmatmul.mubr.bf16.gmra.mxu0 %v289
  %v638 = vpop.f32.mrf.mxu0
  %v639 = vadd.f32 0.0, %v638
  %v640 = vpop.f32.mrf.mxu0
  %v641 = vpop.f32.mrf.mxu0
  %v642 = vadd.f32 0.0, %v641
  %v643 = vpop.f32.mrf.mxu0
  %644 = vmatprep.mubr.bf16.mxu0 0
  %645 = vmatmul.mubr.bf16.gmra.mxu0 %v290
  %v646 = vpop.f32.mrf.mxu0
  %v647 = vadd.f32 0.0, %v646
  %v648 = vpop.f32.mrf.mxu0
  %v649 = vpop.f32.mrf.mxu0
  %v650 = vadd.f32 0.0, %v649
  %v651 = vpop.f32.mrf.mxu0
  %652 = vmatprep.mubr.bf16.mxu0 0
  %653 = vmatmul.mubr.bf16.gmra.mxu0 %v291
  %v654 = vpop.f32.mrf.mxu0
  %v655 = vadd.f32 0.0, %v654
  %v656 = vpop.f32.mrf.mxu0
  %v657 = vpop.f32.mrf.mxu0
  %v658 = vadd.f32 0.0, %v657
  %v659 = vpop.f32.mrf.mxu0
  %660 = vdwg.mxu0
  %vm725 = vcmask 1046528
  %v726 = vrot.slane %v407, 1
  %v727 = vrot.slane %v410, 1
  %v728 = vsel %vm725, %v726, %v727
  %v729 = vrot.slane %v415, 1
  %v730 = vsel %vm725, %v727, %v729
  %v731 = vrot.slane %v418, 1
  %v732 = vsel %vm725, %v729, %v731
  %v733 = vrot.slane %v423, 1
  %v734 = vsel %vm725, %v731, %v733
  %v735 = vrot.slane %v426, 1
  %v736 = vsel %vm725, %v733, %v735
  %v737 = vrot.slane %v431, 1
  %v738 = vsel %vm725, %v735, %v737
  %v739 = vrot.slane %v434, 1
  %v740 = vsel %vm725, %v737, %v739
  %v741 = vrot.slane %v439, 1
  %v742 = vsel %vm725, %v739, %v741
  %v743 = vrot.slane %v442, 1
  %v744 = vsel %vm725, %v741, %v743
  %v745 = vrot.slane %v447, 1
  %v746 = vsel %vm725, %v743, %v745
  %v747 = vrot.slane %v450, 1
  %v748 = vsel %vm725, %v745, %v747
  %v749 = vrot.slane %v455, 1
  %v750 = vsel %vm725, %v747, %v749
  %v751 = vrot.slane %v458, 1
  %v752 = vsel %vm725, %v749, %v751
  %v753 = vrot.slane %v463, 1
  %v754 = vsel %vm725, %v751, %v753
  %v755 = vrot.slane %v466, 1
  %v756 = vsel %vm725, %v753, %v755
  %v757 = vrot.slane %v471, 1
  %v758 = vsel %vm725, %v755, %v757
  %v759 = vrot.slane %v474, 1
  %v760 = vsel %vm725, %v757, %v759
  %v761 = vrot.slane %v479, 1
  %v762 = vsel %vm725, %v759, %v761
  %v763 = vrot.slane %v482, 1
  %v764 = vsel %vm725, %v761, %v763
  %v765 = vrot.slane %v487, 1
  %v766 = vsel %vm725, %v763, %v765
  %v767 = vrot.slane %v490, 1
  %v768 = vsel %vm725, %v765, %v767
  %v769 = vrot.slane %v495, 1
  %v770 = vsel %vm725, %v767, %v769
  %v771 = vrot.slane %v498, 1
  %v772 = vsel %vm725, %v769, %v771
  %v773 = vrot.slane %v503, 1
  %v774 = vsel %vm725, %v771, %v773
  %v775 = vrot.slane %v506, 1
  %v776 = vsel %vm725, %v773, %v775
  %v777 = vrot.slane %v511, 1
  %v778 = vsel %vm725, %v775, %v777
  %v779 = vrot.slane %v514, 1
  %v780 = vsel %vm725, %v777, %v779
  %v781 = vrot.slane %v519, 1
  %v782 = vsel %vm725, %v779, %v781
  %v783 = vrot.slane %v522, 1
  %v784 = vsel %vm725, %v781, %v783
  %v785 = vrot.slane %v527, 1
  %v786 = vsel %vm725, %v783, %v785
  %v787 = vrot.slane %v530, 1
  %v788 = vsel %vm725, %v785, %v787
  %v789 = vrot.slane %v535, 1
  %v790 = vsel %vm725, %v787, %v789
  %v791 = vrot.slane %v538, 1
  %v792 = vsel %vm725, %v789, %v791
  %v793 = vrot.slane %v543, 1
  %v794 = vsel %vm725, %v791, %v793
  %v795 = vrot.slane %v546, 1
  %v796 = vsel %vm725, %v793, %v795
  %v797 = vrot.slane %v551, 1
  %v798 = vsel %vm725, %v795, %v797
  %v799 = vrot.slane %v554, 1
  %v800 = vsel %vm725, %v797, %v799
  %v801 = vrot.slane %v559, 1
  %v802 = vsel %vm725, %v799, %v801
  %v803 = vrot.slane %v562, 1
  %v804 = vsel %vm725, %v801, %v803
  %v805 = vrot.slane %v567, 1
  %v806 = vsel %vm725, %v803, %v805
  %v807 = vrot.slane %v570, 1
  %v808 = vsel %vm725, %v805, %v807
  %v809 = vrot.slane %v575, 1
  %v810 = vsel %vm725, %v807, %v809
  %v811 = vrot.slane %v578, 1
  %v812 = vsel %vm725, %v809, %v811
  %v813 = vrot.slane %v583, 1
  %v814 = vsel %vm725, %v811, %v813
  %v815 = vrot.slane %v586, 1
  %v816 = vsel %vm725, %v813, %v815
  %v817 = vrot.slane %v591, 1
  %v818 = vsel %vm725, %v815, %v817
  %v819 = vrot.slane %v594, 1
  %v820 = vsel %vm725, %v817, %v819
  %v821 = vrot.slane %v599, 1
  %v822 = vsel %vm725, %v819, %v821
  %v823 = vrot.slane %v602, 1
  %v824 = vsel %vm725, %v821, %v823
  %v825 = vrot.slane %v607, 1
  %v826 = vsel %vm725, %v823, %v825
  %v827 = vrot.slane %v610, 1
  %v828 = vsel %vm725, %v825, %v827
  %v829 = vrot.slane %v615, 1
  %v830 = vsel %vm725, %v827, %v829
  %v831 = vrot.slane %v618, 1
  %v832 = vsel %vm725, %v829, %v831
  %v833 = vrot.slane %v623, 1
  %v834 = vsel %vm725, %v831, %v833
  %v835 = vrot.slane %v626, 1
  %v836 = vsel %vm725, %v833, %v835
  %v837 = vrot.slane %v631, 1
  %v838 = vsel %vm725, %v835, %v837
  %v839 = vrot.slane %v634, 1
  %v840 = vsel %vm725, %v837, %v839
  %v841 = vrot.slane %v639, 1
  %v842 = vsel %vm725, %v839, %v841
  %v843 = vrot.slane %v642, 1
  %v844 = vsel %vm725, %v841, %v843
  %v845 = vrot.slane %v647, 1
  %v846 = vsel %vm725, %v843, %v845
  %v847 = vrot.slane %v650, 1
  %v848 = vsel %vm725, %v845, %v847
  %v849 = vrot.slane %v655, 1
  %v850 = vsel %vm725, %v847, %v849
  %v851 = vrot.slane %v658, 1
  %v852 = vsel %vm725, %v849, %v851
  %v917 = vsel %vm725, %v851, 0.0
  %v934 = vunpack.c.l.b16 %v99
  %v935 = vunpack.c.l.b16 %v100
  %v936 = vunpack.c.l.b16 %v101
  %v937 = vunpack.c.l.b16 %v102
  %v938 = vunpack.c.l.b16 %v103
  %v939 = vunpack.c.l.b16 %v104
  %v940 = vunpack.c.l.b16 %v105
  %v941 = vunpack.c.l.b16 %v106
  %v942 = vunpack.c.l.b16 %v107
  %v943 = vunpack.c.l.b16 %v108
  %v944 = vunpack.c.l.b16 %v109
  %v945 = vunpack.c.l.b16 %v110
  %v946 = vunpack.c.l.b16 %v111
  %v947 = vunpack.c.l.b16 %v112
  %v948 = vunpack.c.l.b16 %v113
  %v949 = vunpack.c.l.b16 %v114
  %v950 = vpack.c.b16 %v935, %v934
  %v951 = vpack.c.b16 %v937, %v936
  %v952 = vpack.c.b16 %v939, %v938
  %v953 = vpack.c.b16 %v941, %v940
  %v954 = vpack.c.b16 %v943, %v942
  %v955 = vpack.c.b16 %v945, %v944
  %v956 = vpack.c.b16 %v947, %v946
  %v957 = vpack.c.b16 %v949, %v948
  %966 = vmatprep.subr.bf16.mxu0 0
  %967 = vmatpush1.bf16.msra.mxu0 %v957
  %968 = vmatprep.subr.bf16.mxu0 0
  %969 = vmatpush1.bf16.msra.mxu0 %v956
  %970 = vmatprep.subr.bf16.mxu0 0
  %971 = vmatpush1.bf16.msra.mxu0 %v955
  %972 = vmatprep.subr.bf16.mxu0 0
  %973 = vmatpush1.bf16.msra.mxu0 %v954
  %974 = vmatprep.subr.bf16.mxu0 0
  %975 = vmatpush1.bf16.msra.mxu0 %v953
  %976 = vmatprep.subr.bf16.mxu0 0
  %977 = vmatpush1.bf16.msra.mxu0 %v952
  %978 = vmatprep.subr.bf16.mxu0 0
  %979 = vmatpush1.bf16.msra.mxu0 %v951
  %980 = vmatprep.subr.bf16.mxu0 0
  %981 = vmatpush1.bf16.msra.mxu0 %v950
  %982 = vmatprep.subr.bf16.mxu0 0
  %983 = vmatpush2.bf16.msra.mxu0 0
  %984 = vmatprep.subr.bf16.mxu0 0
  %985 = vmatpush2.bf16.msra.mxu0 0
  %986 = vmatprep.subr.bf16.mxu0 0
  %987 = vmatpush2.bf16.msra.mxu0 0
  %988 = vmatprep.subr.bf16.mxu0 0
  %989 = vmatpush2.bf16.msra.mxu0 0
  %990 = vmatprep.subr.bf16.mxu0 0
  %991 = vmatpush2.bf16.msra.mxu0 0
  %992 = vmatprep.subr.bf16.mxu0 0
  %993 = vmatpush2.bf16.msra.mxu0 0
  %994 = vmatprep.subr.bf16.mxu0 0
  %995 = vmatpush2.bf16.msra.mxu0 0
  %996 = vmatprep.subr.bf16.mxu0 0
  %997 = vmatpush2.bf16.msra.mxu0 0
  %998 = vmatprep.mubr.bf16.mxu0 0
  %999 = vmatmul.mubr.bf16.gmra.mxu0 %v260
  %v1000 = vpop.f32.mrf.mxu0
  %v1001 = vadd.f32 %v728, %v1000
  %v1002 = vpop.f32.mrf.mxu0
  %v1003 = vpop.f32.mrf.mxu0
  %v1004 = vadd.f32 %v730, %v1003
  %v1005 = vpop.f32.mrf.mxu0
  %1006 = vmatprep.mubr.bf16.mxu0 0
  %1007 = vmatmul.mubr.bf16.gmra.mxu0 %v261
  %v1008 = vpop.f32.mrf.mxu0
  %v1009 = vadd.f32 %v732, %v1008
  %v1010 = vpop.f32.mrf.mxu0
  %v1011 = vpop.f32.mrf.mxu0
  %v1012 = vadd.f32 %v734, %v1011
  %v1013 = vpop.f32.mrf.mxu0
  %1014 = vmatprep.mubr.bf16.mxu0 0
  %1015 = vmatmul.mubr.bf16.gmra.mxu0 %v262
  %v1016 = vpop.f32.mrf.mxu0
  %v1017 = vadd.f32 %v736, %v1016
  %v1018 = vpop.f32.mrf.mxu0
  %v1019 = vpop.f32.mrf.mxu0
  %v1020 = vadd.f32 %v738, %v1019
  %v1021 = vpop.f32.mrf.mxu0
  %1022 = vmatprep.mubr.bf16.mxu0 0
  %1023 = vmatmul.mubr.bf16.gmra.mxu0 %v263
  %v1024 = vpop.f32.mrf.mxu0
  %v1025 = vadd.f32 %v740, %v1024
  %v1026 = vpop.f32.mrf.mxu0
  %v1027 = vpop.f32.mrf.mxu0
  %v1028 = vadd.f32 %v742, %v1027
  %v1029 = vpop.f32.mrf.mxu0
  %1030 = vmatprep.mubr.bf16.mxu0 0
  %1031 = vmatmul.mubr.bf16.gmra.mxu0 %v264
  %v1032 = vpop.f32.mrf.mxu0
  %v1033 = vadd.f32 %v744, %v1032
  %v1034 = vpop.f32.mrf.mxu0
  %v1035 = vpop.f32.mrf.mxu0
  %v1036 = vadd.f32 %v746, %v1035
  %v1037 = vpop.f32.mrf.mxu0
  %1038 = vmatprep.mubr.bf16.mxu0 0
  %1039 = vmatmul.mubr.bf16.gmra.mxu0 %v265
  %v1040 = vpop.f32.mrf.mxu0
  %v1041 = vadd.f32 %v748, %v1040
  %v1042 = vpop.f32.mrf.mxu0
  %v1043 = vpop.f32.mrf.mxu0
  %v1044 = vadd.f32 %v750, %v1043
  %v1045 = vpop.f32.mrf.mxu0
  %1046 = vmatprep.mubr.bf16.mxu0 0
  %1047 = vmatmul.mubr.bf16.gmra.mxu0 %v266
  %v1048 = vpop.f32.mrf.mxu0
  %v1049 = vadd.f32 %v752, %v1048
  %v1050 = vpop.f32.mrf.mxu0
  %v1051 = vpop.f32.mrf.mxu0
  %v1052 = vadd.f32 %v754, %v1051
  %v1053 = vpop.f32.mrf.mxu0
  %1054 = vmatprep.mubr.bf16.mxu0 0
  %1055 = vmatmul.mubr.bf16.gmra.mxu0 %v267
  %v1056 = vpop.f32.mrf.mxu0
  %v1057 = vadd.f32 %v756, %v1056
  %v1058 = vpop.f32.mrf.mxu0
  %v1059 = vpop.f32.mrf.mxu0
  %v1060 = vadd.f32 %v758, %v1059
  %v1061 = vpop.f32.mrf.mxu0
  %1062 = vmatprep.mubr.bf16.mxu0 0
  %1063 = vmatmul.mubr.bf16.gmra.mxu0 %v268
  %v1064 = vpop.f32.mrf.mxu0
  %v1065 = vadd.f32 %v760, %v1064
  %v1066 = vpop.f32.mrf.mxu0
  %v1067 = vpop.f32.mrf.mxu0
  %v1068 = vadd.f32 %v762, %v1067
  %v1069 = vpop.f32.mrf.mxu0
  %1070 = vmatprep.mubr.bf16.mxu0 0
  %1071 = vmatmul.mubr.bf16.gmra.mxu0 %v269
  %v1072 = vpop.f32.mrf.mxu0
  %v1073 = vadd.f32 %v764, %v1072
  %v1074 = vpop.f32.mrf.mxu0
  %v1075 = vpop.f32.mrf.mxu0
  %v1076 = vadd.f32 %v766, %v1075
  %v1077 = vpop.f32.mrf.mxu0
  %1078 = vmatprep.mubr.bf16.mxu0 0
  %1079 = vmatmul.mubr.bf16.gmra.mxu0 %v270
  %v1080 = vpop.f32.mrf.mxu0
  %v1081 = vadd.f32 %v768, %v1080
  %v1082 = vpop.f32.mrf.mxu0
  %v1083 = vpop.f32.mrf.mxu0
  %v1084 = vadd.f32 %v770, %v1083
  %v1085 = vpop.f32.mrf.mxu0
  %1086 = vmatprep.mubr.bf16.mxu0 0
  %1087 = vmatmul.mubr.bf16.gmra.mxu0 %v271
  %v1088 = vpop.f32.mrf.mxu0
  %v1089 = vadd.f32 %v772, %v1088
  %v1090 = vpop.f32.mrf.mxu0
  %v1091 = vpop.f32.mrf.mxu0
  %v1092 = vadd.f32 %v774, %v1091
  %v1093 = vpop.f32.mrf.mxu0
  %1094 = vmatprep.mubr.bf16.mxu0 0
  %1095 = vmatmul.mubr.bf16.gmra.mxu0 %v272
  %v1096 = vpop.f32.mrf.mxu0
  %v1097 = vadd.f32 %v776, %v1096
  %v1098 = vpop.f32.mrf.mxu0
  %v1099 = vpop.f32.mrf.mxu0
  %v1100 = vadd.f32 %v778, %v1099
  %v1101 = vpop.f32.mrf.mxu0
  %1102 = vmatprep.mubr.bf16.mxu0 0
  %1103 = vmatmul.mubr.bf16.gmra.mxu0 %v273
  %v1104 = vpop.f32.mrf.mxu0
  %v1105 = vadd.f32 %v780, %v1104
  %v1106 = vpop.f32.mrf.mxu0
  %v1107 = vpop.f32.mrf.mxu0
  %v1108 = vadd.f32 %v782, %v1107
  %v1109 = vpop.f32.mrf.mxu0
  %1110 = vmatprep.mubr.bf16.mxu0 0
  %1111 = vmatmul.mubr.bf16.gmra.mxu0 %v274
  %v1112 = vpop.f32.mrf.mxu0
  %v1113 = vadd.f32 %v784, %v1112
  %v1114 = vpop.f32.mrf.mxu0
  %v1115 = vpop.f32.mrf.mxu0
  %v1116 = vadd.f32 %v786, %v1115
  %v1117 = vpop.f32.mrf.mxu0
  %1118 = vmatprep.mubr.bf16.mxu0 0
  %1119 = vmatmul.mubr.bf16.gmra.mxu0 %v275
  %v1120 = vpop.f32.mrf.mxu0
  %v1121 = vadd.f32 %v788, %v1120
  %v1122 = vpop.f32.mrf.mxu0
  %v1123 = vpop.f32.mrf.mxu0
  %v1124 = vadd.f32 %v790, %v1123
  %v1125 = vpop.f32.mrf.mxu0
  %1126 = vmatprep.mubr.bf16.mxu0 0
  %1127 = vmatmul.mubr.bf16.gmra.mxu0 %v276
  %v1128 = vpop.f32.mrf.mxu0
  %v1129 = vadd.f32 %v792, %v1128
  %v1130 = vpop.f32.mrf.mxu0
  %v1131 = vpop.f32.mrf.mxu0
  %v1132 = vadd.f32 %v794, %v1131
  %v1133 = vpop.f32.mrf.mxu0
  %1134 = vmatprep.mubr.bf16.mxu0 0
  %1135 = vmatmul.mubr.bf16.gmra.mxu0 %v277
  %v1136 = vpop.f32.mrf.mxu0
  %v1137 = vadd.f32 %v796, %v1136
  %v1138 = vpop.f32.mrf.mxu0
  %v1139 = vpop.f32.mrf.mxu0
  %v1140 = vadd.f32 %v798, %v1139
  %v1141 = vpop.f32.mrf.mxu0
  %1142 = vmatprep.mubr.bf16.mxu0 0
  %1143 = vmatmul.mubr.bf16.gmra.mxu0 %v278
  %v1144 = vpop.f32.mrf.mxu0
  %v1145 = vadd.f32 %v800, %v1144
  %v1146 = vpop.f32.mrf.mxu0
  %v1147 = vpop.f32.mrf.mxu0
  %v1148 = vadd.f32 %v802, %v1147
  %v1149 = vpop.f32.mrf.mxu0
  %1150 = vmatprep.mubr.bf16.mxu0 0
  %1151 = vmatmul.mubr.bf16.gmra.mxu0 %v279
  %v1152 = vpop.f32.mrf.mxu0
  %v1153 = vadd.f32 %v804, %v1152
  %v1154 = vpop.f32.mrf.mxu0
  %v1155 = vpop.f32.mrf.mxu0
  %v1156 = vadd.f32 %v806, %v1155
  %v1157 = vpop.f32.mrf.mxu0
  %1158 = vmatprep.mubr.bf16.mxu0 0
  %1159 = vmatmul.mubr.bf16.gmra.mxu0 %v280
  %v1160 = vpop.f32.mrf.mxu0
  %v1161 = vadd.f32 %v808, %v1160
  %v1162 = vpop.f32.mrf.mxu0
  %v1163 = vpop.f32.mrf.mxu0
  %v1164 = vadd.f32 %v810, %v1163
  %v1165 = vpop.f32.mrf.mxu0
  %1166 = vmatprep.mubr.bf16.mxu0 0
  %1167 = vmatmul.mubr.bf16.gmra.mxu0 %v281
  %v1168 = vpop.f32.mrf.mxu0
  %v1169 = vadd.f32 %v812, %v1168
  %v1170 = vpop.f32.mrf.mxu0
  %v1171 = vpop.f32.mrf.mxu0
  %v1172 = vadd.f32 %v814, %v1171
  %v1173 = vpop.f32.mrf.mxu0
  %1174 = vmatprep.mubr.bf16.mxu0 0
  %1175 = vmatmul.mubr.bf16.gmra.mxu0 %v282
  %v1176 = vpop.f32.mrf.mxu0
  %v1177 = vadd.f32 %v816, %v1176
  %v1178 = vpop.f32.mrf.mxu0
  %v1179 = vpop.f32.mrf.mxu0
  %v1180 = vadd.f32 %v818, %v1179
  %v1181 = vpop.f32.mrf.mxu0
  %1182 = vmatprep.mubr.bf16.mxu0 0
  %1183 = vmatmul.mubr.bf16.gmra.mxu0 %v283
  %v1184 = vpop.f32.mrf.mxu0
  %v1185 = vadd.f32 %v820, %v1184
  %v1186 = vpop.f32.mrf.mxu0
  %v1187 = vpop.f32.mrf.mxu0
  %v1188 = vadd.f32 %v822, %v1187
  %v1189 = vpop.f32.mrf.mxu0
  %1190 = vmatprep.mubr.bf16.mxu0 0
  %1191 = vmatmul.mubr.bf16.gmra.mxu0 %v284
  %v1192 = vpop.f32.mrf.mxu0
  %v1193 = vadd.f32 %v824, %v1192
  %v1194 = vpop.f32.mrf.mxu0
  %v1195 = vpop.f32.mrf.mxu0
  %v1196 = vadd.f32 %v826, %v1195
  %v1197 = vpop.f32.mrf.mxu0
  %1198 = vmatprep.mubr.bf16.mxu0 0
  %1199 = vmatmul.mubr.bf16.gmra.mxu0 %v285
  %v1200 = vpop.f32.mrf.mxu0
  %v1201 = vadd.f32 %v828, %v1200
  %v1202 = vpop.f32.mrf.mxu0
  %v1203 = vpop.f32.mrf.mxu0
  %v1204 = vadd.f32 %v830, %v1203
  %v1205 = vpop.f32.mrf.mxu0
  %1206 = vmatprep.mubr.bf16.mxu0 0
  %1207 = vmatmul.mubr.bf16.gmra.mxu0 %v286
  %v1208 = vpop.f32.mrf.mxu0
  %v1209 = vadd.f32 %v832, %v1208
  %v1210 = vpop.f32.mrf.mxu0
  %v1211 = vpop.f32.mrf.mxu0
  %v1212 = vadd.f32 %v834, %v1211
  %v1213 = vpop.f32.mrf.mxu0
  %1214 = vmatprep.mubr.bf16.mxu0 0
  %1215 = vmatmul.mubr.bf16.gmra.mxu0 %v287
  %v1216 = vpop.f32.mrf.mxu0
  %v1217 = vadd.f32 %v836, %v1216
  %v1218 = vpop.f32.mrf.mxu0
  %v1219 = vpop.f32.mrf.mxu0
  %v1220 = vadd.f32 %v838, %v1219
  %v1221 = vpop.f32.mrf.mxu0
  %1222 = vmatprep.mubr.bf16.mxu0 0
  %1223 = vmatmul.mubr.bf16.gmra.mxu0 %v288
  %v1224 = vpop.f32.mrf.mxu0
  %v1225 = vadd.f32 %v840, %v1224
  %v1226 = vpop.f32.mrf.mxu0
  %v1227 = vpop.f32.mrf.mxu0
  %v1228 = vadd.f32 %v842, %v1227
  %v1229 = vpop.f32.mrf.mxu0
  %1230 = vmatprep.mubr.bf16.mxu0 0
  %1231 = vmatmul.mubr.bf16.gmra.mxu0 %v289
  %v1232 = vpop.f32.mrf.mxu0
  %v1233 = vadd.f32 %v844, %v1232
  %v1234 = vpop.f32.mrf.mxu0
  %v1235 = vpop.f32.mrf.mxu0
  %v1236 = vadd.f32 %v846, %v1235
  %v1237 = vpop.f32.mrf.mxu0
  %1238 = vmatprep.mubr.bf16.mxu0 0
  %1239 = vmatmul.mubr.bf16.gmra.mxu0 %v290
  %v1240 = vpop.f32.mrf.mxu0
  %v1241 = vadd.f32 %v848, %v1240
  %v1242 = vpop.f32.mrf.mxu0
  %v1243 = vpop.f32.mrf.mxu0
  %v1244 = vadd.f32 %v850, %v1243
  %v1245 = vpop.f32.mrf.mxu0
  %1246 = vmatprep.mubr.bf16.mxu0 0
  %1247 = vmatmul.mubr.bf16.gmra.mxu0 %v291
  %v1248 = vpop.f32.mrf.mxu0
  %v1249 = vadd.f32 %v852, %v1248
  %v1250 = vpop.f32.mrf.mxu0
  %v1251 = vpop.f32.mrf.mxu0
  %v1252 = vadd.f32 %v917, %v1251
  %v1253 = vpop.f32.mrf.mxu0
  %1254 = vdwg.mxu0
  %s1255 = scalar_lea.vmem %s1, 128
  %v1256 = vld [vmem:[%s1255] sm:$0xf]
  %v1257 = vld [vmem:[%s1255 + $0x4] sm:$0xf]
  %v1258 = vld [vmem:[%s1255 + $0x8] sm:$0xf]
  %v1259 = vld [vmem:[%s1255 + $0xc] sm:$0xf]
  %v1260 = vld [vmem:[%s1255 + $0x10] sm:$0xf]
  %v1261 = vld [vmem:[%s1255 + $0x14] sm:$0xf]
  %v1262 = vld [vmem:[%s1255 + $0x18] sm:$0xf]
  %v1263 = vld [vmem:[%s1255 + $0x1c] sm:$0xf]
  %v1264 = vld [vmem:[%s1255 + $0x20] sm:$0xf]
  %v1265 = vld [vmem:[%s1255 + $0x24] sm:$0xf]
  %v1266 = vld [vmem:[%s1255 + $0x28] sm:$0xf]
  %v1267 = vld [vmem:[%s1255 + $0x2c] sm:$0xf]
  %v1268 = vld [vmem:[%s1255 + $0x30] sm:$0xf]
  %v1269 = vld [vmem:[%s1255 + $0x34] sm:$0xf]
  %v1270 = vld [vmem:[%s1255 + $0x38] sm:$0xf]
  %v1271 = vld [vmem:[%s1255 + $0x3c] sm:$0xf]
  %v1288 = vunpack.c.l.b16 %v1256
  %v1289 = vunpack.c.l.b16 %v1257
  %v1290 = vunpack.c.l.b16 %v1258
  %v1291 = vunpack.c.l.b16 %v1259
  %v1292 = vunpack.c.l.b16 %v1260
  %v1293 = vunpack.c.l.b16 %v1261
  %v1294 = vunpack.c.l.b16 %v1262
  %v1295 = vunpack.c.l.b16 %v1263
  %v1296 = vunpack.c.l.b16 %v1264
  %v1297 = vunpack.c.l.b16 %v1265
  %v1298 = vunpack.c.l.b16 %v1266
  %v1299 = vunpack.c.l.b16 %v1267
  %v1300 = vunpack.c.l.b16 %v1268
  %v1301 = vunpack.c.l.b16 %v1269
  %v1302 = vunpack.c.l.b16 %v1270
  %v1303 = vunpack.c.l.b16 %v1271
  %v1304 = vpack.c.b16 %v1289, %v1288
  %v1305 = vpack.c.b16 %v1291, %v1290
  %v1306 = vpack.c.b16 %v1293, %v1292
  %v1307 = vpack.c.b16 %v1295, %v1294
  %v1308 = vpack.c.b16 %v1297, %v1296
  %v1309 = vpack.c.b16 %v1299, %v1298
  %v1310 = vpack.c.b16 %v1301, %v1300
  %v1311 = vpack.c.b16 %v1303, %v1302
  %1320 = vmatprep.subr.bf16.mxu0 0
  %1321 = vmatpush1.bf16.msra.mxu0 %v1311
  %1322 = vmatprep.subr.bf16.mxu0 0
  %1323 = vmatpush1.bf16.msra.mxu0 %v1310
  %1324 = vmatprep.subr.bf16.mxu0 0
  %1325 = vmatpush1.bf16.msra.mxu0 %v1309
  %1326 = vmatprep.subr.bf16.mxu0 0
  %1327 = vmatpush1.bf16.msra.mxu0 %v1308
  %1328 = vmatprep.subr.bf16.mxu0 0
  %1329 = vmatpush1.bf16.msra.mxu0 %v1307
  %1330 = vmatprep.subr.bf16.mxu0 0
  %1331 = vmatpush1.bf16.msra.mxu0 %v1306
  %1332 = vmatprep.subr.bf16.mxu0 0
  %1333 = vmatpush1.bf16.msra.mxu0 %v1305
  %1334 = vmatprep.subr.bf16.mxu0 0
  %1335 = vmatpush1.bf16.msra.mxu0 %v1304
  %1336 = vmatprep.subr.bf16.mxu0 0
  %1337 = vmatpush2.bf16.msra.mxu0 0
  %1338 = vmatprep.subr.bf16.mxu0 0
  %1339 = vmatpush2.bf16.msra.mxu0 0
  %1340 = vmatprep.subr.bf16.mxu0 0
  %1341 = vmatpush2.bf16.msra.mxu0 0
  %1342 = vmatprep.subr.bf16.mxu0 0
  %1343 = vmatpush2.bf16.msra.mxu0 0
  %1344 = vmatprep.subr.bf16.mxu0 0
  %1345 = vmatpush2.bf16.msra.mxu0 0
  %1346 = vmatprep.subr.bf16.mxu0 0
  %1347 = vmatpush2.bf16.msra.mxu0 0
  %1348 = vmatprep.subr.bf16.mxu0 0
  %1349 = vmatpush2.bf16.msra.mxu0 0
  %1350 = vmatprep.subr.bf16.mxu0 0
  %1351 = vmatpush2.bf16.msra.mxu0 0
  %1352 = vmatprep.mubr.bf16.mxu0 0
  %1353 = vmatmul.mubr.bf16.gmra.mxu0 %v260
  %v1354 = vpop.f32.mrf.mxu0
  %v1355 = vadd.f32 0.0, %v1354
  %v1356 = vpop.f32.mrf.mxu0
  %v1357 = vpop.f32.mrf.mxu0
  %v1358 = vadd.f32 0.0, %v1357
  %v1359 = vpop.f32.mrf.mxu0
  %1360 = vmatprep.mubr.bf16.mxu0 0
  %1361 = vmatmul.mubr.bf16.gmra.mxu0 %v261
  %v1362 = vpop.f32.mrf.mxu0
  %v1363 = vadd.f32 0.0, %v1362
  %v1364 = vpop.f32.mrf.mxu0
  %v1365 = vpop.f32.mrf.mxu0
  %v1366 = vadd.f32 0.0, %v1365
  %v1367 = vpop.f32.mrf.mxu0
  %1368 = vmatprep.mubr.bf16.mxu0 0
  %1369 = vmatmul.mubr.bf16.gmra.mxu0 %v262
  %v1370 = vpop.f32.mrf.mxu0
  %v1371 = vadd.f32 0.0, %v1370
  %v1372 = vpop.f32.mrf.mxu0
  %v1373 = vpop.f32.mrf.mxu0
  %v1374 = vadd.f32 0.0, %v1373
  %v1375 = vpop.f32.mrf.mxu0
  %1376 = vmatprep.mubr.bf16.mxu0 0
  %1377 = vmatmul.mubr.bf16.gmra.mxu0 %v263
  %v1378 = vpop.f32.mrf.mxu0
  %v1379 = vadd.f32 0.0, %v1378
  %v1380 = vpop.f32.mrf.mxu0
  %v1381 = vpop.f32.mrf.mxu0
  %v1382 = vadd.f32 0.0, %v1381
  %v1383 = vpop.f32.mrf.mxu0
  %1384 = vmatprep.mubr.bf16.mxu0 0
  %1385 = vmatmul.mubr.bf16.gmra.mxu0 %v264
  %v1386 = vpop.f32.mrf.mxu0
  %v1387 = vadd.f32 0.0, %v1386
  %v1388 = vpop.f32.mrf.mxu0
  %v1389 = vpop.f32.mrf.mxu0
  %v1390 = vadd.f32 0.0, %v1389
  %v1391 = vpop.f32.mrf.mxu0
  %1392 = vmatprep.mubr.bf16.mxu0 0
  %1393 = vmatmul.mubr.bf16.gmra.mxu0 %v265
  %v1394 = vpop.f32.mrf.mxu0
  %v1395 = vadd.f32 0.0, %v1394
  %v1396 = vpop.f32.mrf.mxu0
  %v1397 = vpop.f32.mrf.mxu0
  %v1398 = vadd.f32 0.0, %v1397
  %v1399 = vpop.f32.mrf.mxu0
  %1400 = vmatprep.mubr.bf16.mxu0 0
  %1401 = vmatmul.mubr.bf16.gmra.mxu0 %v266
  %v1402 = vpop.f32.mrf.mxu0
  %v1403 = vadd.f32 0.0, %v1402
  %v1404 = vpop.f32.mrf.mxu0
  %v1405 = vpop.f32.mrf.mxu0
  %v1406 = vadd.f32 0.0, %v1405
  %v1407 = vpop.f32.mrf.mxu0
  %1408 = vmatprep.mubr.bf16.mxu0 0
  %1409 = vmatmul.mubr.bf16.gmra.mxu0 %v267
  %v1410 = vpop.f32.mrf.mxu0
  %v1411 = vadd.f32 0.0, %v1410
  %v1412 = vpop.f32.mrf.mxu0
  %v1413 = vpop.f32.mrf.mxu0
  %v1414 = vadd.f32 0.0, %v1413
  %v1415 = vpop.f32.mrf.mxu0
  %1416 = vmatprep.mubr.bf16.mxu0 0
  %1417 = vmatmul.mubr.bf16.gmra.mxu0 %v268
  %v1418 = vpop.f32.mrf.mxu0
  %v1419 = vadd.f32 0.0, %v1418
  %v1420 = vpop.f32.mrf.mxu0
  %v1421 = vpop.f32.mrf.mxu0
  %v1422 = vadd.f32 0.0, %v1421
  %v1423 = vpop.f32.mrf.mxu0
  %1424 = vmatprep.mubr.bf16.mxu0 0
  %1425 = vmatmul.mubr.bf16.gmra.mxu0 %v269
  %v1426 = vpop.f32.mrf.mxu0
  %v1427 = vadd.f32 0.0, %v1426
  %v1428 = vpop.f32.mrf.mxu0
  %v1429 = vpop.f32.mrf.mxu0
  %v1430 = vadd.f32 0.0, %v1429
  %v1431 = vpop.f32.mrf.mxu0
  %1432 = vmatprep.mubr.bf16.mxu0 0
  %1433 = vmatmul.mubr.bf16.gmra.mxu0 %v270
  %v1434 = vpop.f32.mrf.mxu0
  %v1435 = vadd.f32 0.0, %v1434
  %v1436 = vpop.f32.mrf.mxu0
  %v1437 = vpop.f32.mrf.mxu0
  %v1438 = vadd.f32 0.0, %v1437
  %v1439 = vpop.f32.mrf.mxu0
  %1440 = vmatprep.mubr.bf16.mxu0 0
  %1441 = vmatmul.mubr.bf16.gmra.mxu0 %v271
  %v1442 = vpop.f32.mrf.mxu0
  %v1443 = vadd.f32 0.0, %v1442
  %v1444 = vpop.f32.mrf.mxu0
  %v1445 = vpop.f32.mrf.mxu0
  %v1446 = vadd.f32 0.0, %v1445
  %v1447 = vpop.f32.mrf.mxu0
  %1448 = vmatprep.mubr.bf16.mxu0 0
  %1449 = vmatmul.mubr.bf16.gmra.mxu0 %v272
  %v1450 = vpop.f32.mrf.mxu0
  %v1451 = vadd.f32 0.0, %v1450
  %v1452 = vpop.f32.mrf.mxu0
  %v1453 = vpop.f32.mrf.mxu0
  %v1454 = vadd.f32 0.0, %v1453
  %v1455 = vpop.f32.mrf.mxu0
  %1456 = vmatprep.mubr.bf16.mxu0 0
  %1457 = vmatmul.mubr.bf16.gmra.mxu0 %v273
  %v1458 = vpop.f32.mrf.mxu0
  %v1459 = vadd.f32 0.0, %v1458
  %v1460 = vpop.f32.mrf.mxu0
  %v1461 = vpop.f32.mrf.mxu0
  %v1462 = vadd.f32 0.0, %v1461
  %v1463 = vpop.f32.mrf.mxu0
  %1464 = vmatprep.mubr.bf16.mxu0 0
  %1465 = vmatmul.mubr.bf16.gmra.mxu0 %v274
  %v1466 = vpop.f32.mrf.mxu0
  %v1467 = vadd.f32 0.0, %v1466
  %v1468 = vpop.f32.mrf.mxu0
  %v1469 = vpop.f32.mrf.mxu0
  %v1470 = vadd.f32 0.0, %v1469
  %v1471 = vpop.f32.mrf.mxu0
  %1472 = vmatprep.mubr.bf16.mxu0 0
  %1473 = vmatmul.mubr.bf16.gmra.mxu0 %v275
  %v1474 = vpop.f32.mrf.mxu0
  %v1475 = vadd.f32 0.0, %v1474
  %v1476 = vpop.f32.mrf.mxu0
  %v1477 = vpop.f32.mrf.mxu0
  %v1478 = vadd.f32 0.0, %v1477
  %v1479 = vpop.f32.mrf.mxu0
  %1480 = vmatprep.mubr.bf16.mxu0 0
  %1481 = vmatmul.mubr.bf16.gmra.mxu0 %v276
  %v1482 = vpop.f32.mrf.mxu0
  %v1483 = vadd.f32 0.0, %v1482
  %v1484 = vpop.f32.mrf.mxu0
  %v1485 = vpop.f32.mrf.mxu0
  %v1486 = vadd.f32 0.0, %v1485
  %v1487 = vpop.f32.mrf.mxu0
  %1488 = vmatprep.mubr.bf16.mxu0 0
  %1489 = vmatmul.mubr.bf16.gmra.mxu0 %v277
  %v1490 = vpop.f32.mrf.mxu0
  %v1491 = vadd.f32 0.0, %v1490
  %v1492 = vpop.f32.mrf.mxu0
  %v1493 = vpop.f32.mrf.mxu0
  %v1494 = vadd.f32 0.0, %v1493
  %v1495 = vpop.f32.mrf.mxu0
  %1496 = vmatprep.mubr.bf16.mxu0 0
  %1497 = vmatmul.mubr.bf16.gmra.mxu0 %v278
  %v1498 = vpop.f32.mrf.mxu0
  %v1499 = vadd.f32 0.0, %v1498
  %v1500 = vpop.f32.mrf.mxu0
  %v1501 = vpop.f32.mrf.mxu0
  %v1502 = vadd.f32 0.0, %v1501
  %v1503 = vpop.f32.mrf.mxu0
  %1504 = vmatprep.mubr.bf16.mxu0 0
  %1505 = vmatmul.mubr.bf16.gmra.mxu0 %v279
  %v1506 = vpop.f32.mrf.mxu0
  %v1507 = vadd.f32 0.0, %v1506
  %v1508 = vpop.f32.mrf.mxu0
  %v1509 = vpop.f32.mrf.mxu0
  %v1510 = vadd.f32 0.0, %v1509
  %v1511 = vpop.f32.mrf.mxu0
  %1512 = vmatprep.mubr.bf16.mxu0 0
  %1513 = vmatmul.mubr.bf16.gmra.mxu0 %v280
  %v1514 = vpop.f32.mrf.mxu0
  %v1515 = vadd.f32 0.0, %v1514
  %v1516 = vpop.f32.mrf.mxu0
  %v1517 = vpop.f32.mrf.mxu0
  %v1518 = vadd.f32 0.0, %v1517
  %v1519 = vpop.f32.mrf.mxu0
  %1520 = vmatprep.mubr.bf16.mxu0 0
  %1521 = vmatmul.mubr.bf16.gmra.mxu0 %v281
  %v1522 = vpop.f32.mrf.mxu0
  %v1523 = vadd.f32 0.0, %v1522
  %v1524 = vpop.f32.mrf.mxu0
  %v1525 = vpop.f32.mrf.mxu0
  %v1526 = vadd.f32 0.0, %v1525
  %v1527 = vpop.f32.mrf.mxu0
  %1528 = vmatprep.mubr.bf16.mxu0 0
  %1529 = vmatmul.mubr.bf16.gmra.mxu0 %v282
  %v1530 = vpop.f32.mrf.mxu0
  %v1531 = vadd.f32 0.0, %v1530
  %v1532 = vpop.f32.mrf.mxu0
  %v1533 = vpop.f32.mrf.mxu0
  %v1534 = vadd.f32 0.0, %v1533
  %v1535 = vpop.f32.mrf.mxu0
  %1536 = vmatprep.mubr.bf16.mxu0 0
  %1537 = vmatmul.mubr.bf16.gmra.mxu0 %v283
  %v1538 = vpop.f32.mrf.mxu0
  %v1539 = vadd.f32 0.0, %v1538
  %v1540 = vpop.f32.mrf.mxu0
  %v1541 = vpop.f32.mrf.mxu0
  %v1542 = vadd.f32 0.0, %v1541
  %v1543 = vpop.f32.mrf.mxu0
  %1544 = vmatprep.mubr.bf16.mxu0 0
  %1545 = vmatmul.mubr.bf16.gmra.mxu0 %v284
  %v1546 = vpop.f32.mrf.mxu0
  %v1547 = vadd.f32 0.0, %v1546
  %v1548 = vpop.f32.mrf.mxu0
  %v1549 = vpop.f32.mrf.mxu0
  %v1550 = vadd.f32 0.0, %v1549
  %v1551 = vpop.f32.mrf.mxu0
  %1552 = vmatprep.mubr.bf16.mxu0 0
  %1553 = vmatmul.mubr.bf16.gmra.mxu0 %v285
  %v1554 = vpop.f32.mrf.mxu0
  %v1555 = vadd.f32 0.0, %v1554
  %v1556 = vpop.f32.mrf.mxu0
  %v1557 = vpop.f32.mrf.mxu0
  %v1558 = vadd.f32 0.0, %v1557
  %v1559 = vpop.f32.mrf.mxu0
  %1560 = vmatprep.mubr.bf16.mxu0 0
  %1561 = vmatmul.mubr.bf16.gmra.mxu0 %v286
  %v1562 = vpop.f32.mrf.mxu0
  %v1563 = vadd.f32 0.0, %v1562
  %v1564 = vpop.f32.mrf.mxu0
  %v1565 = vpop.f32.mrf.mxu0
  %v1566 = vadd.f32 0.0, %v1565
  %v1567 = vpop.f32.mrf.mxu0
  %1568 = vmatprep.mubr.bf16.mxu0 0
  %1569 = vmatmul.mubr.bf16.gmra.mxu0 %v287
  %v1570 = vpop.f32.mrf.mxu0
  %v1571 = vadd.f32 0.0, %v1570
  %v1572 = vpop.f32.mrf.mxu0
  %v1573 = vpop.f32.mrf.mxu0
  %v1574 = vadd.f32 0.0, %v1573
  %v1575 = vpop.f32.mrf.mxu0
  %1576 = vmatprep.mubr.bf16.mxu0 0
  %1577 = vmatmul.mubr.bf16.gmra.mxu0 %v288
  %v1578 = vpop.f32.mrf.mxu0
  %v1579 = vadd.f32 0.0, %v1578
  %v1580 = vpop.f32.mrf.mxu0
  %v1581 = vpop.f32.mrf.mxu0
  %v1582 = vadd.f32 0.0, %v1581
  %v1583 = vpop.f32.mrf.mxu0
  %1584 = vmatprep.mubr.bf16.mxu0 0
  %1585 = vmatmul.mubr.bf16.gmra.mxu0 %v289
  %v1586 = vpop.f32.mrf.mxu0
  %v1587 = vadd.f32 0.0, %v1586
  %v1588 = vpop.f32.mrf.mxu0
  %v1589 = vpop.f32.mrf.mxu0
  %v1590 = vadd.f32 0.0, %v1589
  %v1591 = vpop.f32.mrf.mxu0
  %1592 = vmatprep.mubr.bf16.mxu0 0
  %1593 = vmatmul.mubr.bf16.gmra.mxu0 %v290
  %v1594 = vpop.f32.mrf.mxu0
  %v1595 = vadd.f32 0.0, %v1594
  %v1596 = vpop.f32.mrf.mxu0
  %v1597 = vpop.f32.mrf.mxu0
  %v1598 = vadd.f32 0.0, %v1597
  %v1599 = vpop.f32.mrf.mxu0
  %1600 = vmatprep.mubr.bf16.mxu0 0
  %1601 = vmatmul.mubr.bf16.gmra.mxu0 %v291
  %v1602 = vpop.f32.mrf.mxu0
  %v1603 = vadd.f32 0.0, %v1602
  %v1604 = vpop.f32.mrf.mxu0
  %v1605 = vpop.f32.mrf.mxu0
  %v1606 = vadd.f32 0.0, %v1605
  %v1607 = vpop.f32.mrf.mxu0
  %1608 = vdwg.mxu0
  %vm1673 = vcmask 1045504
  %v1674 = vrot.slane %v1355, 2
  %v1675 = vrot.slane %v1358, 2
  %v1676 = vsel %vm1673, %v1674, %v1675
  %v1677 = vrot.slane %v1363, 2
  %v1678 = vsel %vm1673, %v1675, %v1677
  %v1679 = vrot.slane %v1366, 2
  %v1680 = vsel %vm1673, %v1677, %v1679
  %v1681 = vrot.slane %v1371, 2
  %v1682 = vsel %vm1673, %v1679, %v1681
  %v1683 = vrot.slane %v1374, 2
  %v1684 = vsel %vm1673, %v1681, %v1683
  %v1685 = vrot.slane %v1379, 2
  %v1686 = vsel %vm1673, %v1683, %v1685
  %v1687 = vrot.slane %v1382, 2
  %v1688 = vsel %vm1673, %v1685, %v1687
  %v1689 = vrot.slane %v1387, 2
  %v1690 = vsel %vm1673, %v1687, %v1689
  %v1691 = vrot.slane %v1390, 2
  %v1692 = vsel %vm1673, %v1689, %v1691
  %v1693 = vrot.slane %v1395, 2
  %v1694 = vsel %vm1673, %v1691, %v1693
  %v1695 = vrot.slane %v1398, 2
  %v1696 = vsel %vm1673, %v1693, %v1695
  %v1697 = vrot.slane %v1403, 2
  %v1698 = vsel %vm1673, %v1695, %v1697
  %v1699 = vrot.slane %v1406, 2
  %v1700 = vsel %vm1673, %v1697, %v1699
  %v1701 = vrot.slane %v1411, 2
  %v1702 = vsel %vm1673, %v1699, %v1701
  %v1703 = vrot.slane %v1414, 2
  %v1704 = vsel %vm1673, %v1701, %v1703
  %v1705 = vrot.slane %v1419, 2
  %v1706 = vsel %vm1673, %v1703, %v1705
  %v1707 = vrot.slane %v1422, 2
  %v1708 = vsel %vm1673, %v1705, %v1707
  %v1709 = vrot.slane %v1427, 2
  %v1710 = vsel %vm1673, %v1707, %v1709
  %v1711 = vrot.slane %v1430, 2
  %v1712 = vsel %vm1673, %v1709, %v1711
  %v1713 = vrot.slane %v1435, 2
  %v1714 = vsel %vm1673, %v1711, %v1713
  %v1715 = vrot.slane %v1438, 2
  %v1716 = vsel %vm1673, %v1713, %v1715
  %v1717 = vrot.slane %v1443, 2
  %v1718 = vsel %vm1673, %v1715, %v1717
  %v1719 = vrot.slane %v1446, 2
  %v1720 = vsel %vm1673, %v1717, %v1719
  %v1721 = vrot.slane %v1451, 2
  %v1722 = vsel %vm1673, %v1719, %v1721
  %v1723 = vrot.slane %v1454, 2
  %v1724 = vsel %vm1673, %v1721, %v1723
  %v1725 = vrot.slane %v1459, 2
  %v1726 = vsel %vm1673, %v1723, %v1725
  %v1727 = vrot.slane %v1462, 2
  %v1728 = vsel %vm1673, %v1725, %v1727
  %v1729 = vrot.slane %v1467, 2
  %v1730 = vsel %vm1673, %v1727, %v1729
  %v1731 = vrot.slane %v1470, 2
  %v1732 = vsel %vm1673, %v1729, %v1731
  %v1733 = vrot.slane %v1475, 2
  %v1734 = vsel %vm1673, %v1731, %v1733
  %v1735 = vrot.slane %v1478, 2
  %v1736 = vsel %vm1673, %v1733, %v1735
  %v1737 = vrot.slane %v1483, 2
  %v1738 = vsel %vm1673, %v1735, %v1737
  %v1739 = vrot.slane %v1486, 2
  %v1740 = vsel %vm1673, %v1737, %v1739
  %v1741 = vrot.slane %v1491, 2
  %v1742 = vsel %vm1673, %v1739, %v1741
  %v1743 = vrot.slane %v1494, 2
  %v1744 = vsel %vm1673, %v1741, %v1743
  %v1745 = vrot.slane %v1499, 2
  %v1746 = vsel %vm1673, %v1743, %v1745
  %v1747 = vrot.slane %v1502, 2
  %v1748 = vsel %vm1673, %v1745, %v1747
  %v1749 = vrot.slane %v1507, 2
  %v1750 = vsel %vm1673, %v1747, %v1749
  %v1751 = vrot.slane %v1510, 2
  %v1752 = vsel %vm1673, %v1749, %v1751
  %v1753 = vrot.slane %v1515, 2
  %v1754 = vsel %vm1673, %v1751, %v1753
  %v1755 = vrot.slane %v1518, 2
  %v1756 = vsel %vm1673, %v1753, %v1755
  %v1757 = vrot.slane %v1523, 2
  %v1758 = vsel %vm1673, %v1755, %v1757
  %v1759 = vrot.slane %v1526, 2
  %v1760 = vsel %vm1673, %v1757, %v1759
  %v1761 = vrot.slane %v1531, 2
  %v1762 = vsel %vm1673, %v1759, %v1761
  %v1763 = vrot.slane %v1534, 2
  %v1764 = vsel %vm1673, %v1761, %v1763
  %v1765 = vrot.slane %v1539, 2
  %v1766 = vsel %vm1673, %v1763, %v1765
  %v1767 = vrot.slane %v1542, 2
  %v1768 = vsel %vm1673, %v1765, %v1767
  %v1769 = vrot.slane %v1547, 2
  %v1770 = vsel %vm1673, %v1767, %v1769
  %v1771 = vrot.slane %v1550, 2
  %v1772 = vsel %vm1673, %v1769, %v1771
  %v1773 = vrot.slane %v1555, 2
  %v1774 = vsel %vm1673, %v1771, %v1773
  %v1775 = vrot.slane %v1558, 2
  %v1776 = vsel %vm1673, %v1773, %v1775
  %v1777 = vrot.slane %v1563, 2
  %v1778 = vsel %vm1673, %v1775, %v1777
  %v1779 = vrot.slane %v1566, 2
  %v1780 = vsel %vm1673, %v1777, %v1779
  %v1781 = vrot.slane %v1571, 2
  %v1782 = vsel %vm1673, %v1779, %v1781
  %v1783 = vrot.slane %v1574, 2
  %v1784 = vsel %vm1673, %v1781, %v1783
  %v1785 = vrot.slane %v1579, 2
  %v1786 = vsel %vm1673, %v1783, %v1785
  %v1787 = vrot.slane %v1582, 2
  %v1788 = vsel %vm1673, %v1785, %v1787
  %v1789 = vrot.slane %v1587, 2
  %v1790 = vsel %vm1673, %v1787, %v1789
  %v1791 = vrot.slane %v1590, 2
  %v1792 = vsel %vm1673, %v1789, %v1791
  %v1793 = vrot.slane %v1595, 2
  %v1794 = vsel %vm1673, %v1791, %v1793
  %v1795 = vrot.slane %v1598, 2
  %v1796 = vsel %vm1673, %v1793, %v1795
  %v1797 = vrot.slane %v1603, 2
  %v1798 = vsel %vm1673, %v1795, %v1797
  %v1799 = vrot.slane %v1606, 2
  %v1800 = vsel %vm1673, %v1797, %v1799
  %v1865 = vsel %vm1673, %v1799, 0.0
  %v1866 = vadd.f32 %v1001, %v1676
  %v1867 = vadd.f32 %v1004, %v1678
  %v1868 = vadd.f32 %v1009, %v1680
  %v1869 = vadd.f32 %v1012, %v1682
  %v1870 = vadd.f32 %v1017, %v1684
  %v1871 = vadd.f32 %v1020, %v1686
  %v1872 = vadd.f32 %v1025, %v1688
  %v1873 = vadd.f32 %v1028, %v1690
  %v1874 = vadd.f32 %v1033, %v1692
  %v1875 = vadd.f32 %v1036, %v1694
  %v1876 = vadd.f32 %v1041, %v1696
  %v1877 = vadd.f32 %v1044, %v1698
  %v1878 = vadd.f32 %v1049, %v1700
  %v1879 = vadd.f32 %v1052, %v1702
  %v1880 = vadd.f32 %v1057, %v1704
  %v1881 = vadd.f32 %v1060, %v1706
  %v1882 = vadd.f32 %v1065, %v1708
  %v1883 = vadd.f32 %v1068, %v1710
  %v1884 = vadd.f32 %v1073, %v1712
  %v1885 = vadd.f32 %v1076, %v1714
  %v1886 = vadd.f32 %v1081, %v1716
  %v1887 = vadd.f32 %v1084, %v1718
  %v1888 = vadd.f32 %v1089, %v1720
  %v1889 = vadd.f32 %v1092, %v1722
  %v1890 = vadd.f32 %v1097, %v1724
  %v1891 = vadd.f32 %v1100, %v1726
  %v1892 = vadd.f32 %v1105, %v1728
  %v1893 = vadd.f32 %v1108, %v1730
  %v1894 = vadd.f32 %v1113, %v1732
  %v1895 = vadd.f32 %v1116, %v1734
  %v1896 = vadd.f32 %v1121, %v1736
  %v1897 = vadd.f32 %v1124, %v1738
  %v1898 = vadd.f32 %v1129, %v1740
  %v1899 = vadd.f32 %v1132, %v1742
  %v1900 = vadd.f32 %v1137, %v1744
  %v1901 = vadd.f32 %v1140, %v1746
  %v1902 = vadd.f32 %v1145, %v1748
  %v1903 = vadd.f32 %v1148, %v1750
  %v1904 = vadd.f32 %v1153, %v1752
  %v1905 = vadd.f32 %v1156, %v1754
  %v1906 = vadd.f32 %v1161, %v1756
  %v1907 = vadd.f32 %v1164, %v1758
  %v1908 = vadd.f32 %v1169, %v1760
  %v1909 = vadd.f32 %v1172, %v1762
  %v1910 = vadd.f32 %v1177, %v1764
  %v1911 = vadd.f32 %v1180, %v1766
  %v1912 = vadd.f32 %v1185, %v1768
  %v1913 = vadd.f32 %v1188, %v1770
  %v1914 = vadd.f32 %v1193, %v1772
  %v1915 = vadd.f32 %v1196, %v1774
  %v1916 = vadd.f32 %v1201, %v1776
  %v1917 = vadd.f32 %v1204, %v1778
  %v1918 = vadd.f32 %v1209, %v1780
  %v1919 = vadd.f32 %v1212, %v1782
  %v1920 = vadd.f32 %v1217, %v1784
  %v1921 = vadd.f32 %v1220, %v1786
  %v1922 = vadd.f32 %v1225, %v1788
  %v1923 = vadd.f32 %v1228, %v1790
  %v1924 = vadd.f32 %v1233, %v1792
  %v1925 = vadd.f32 %v1236, %v1794
  %v1926 = vadd.f32 %v1241, %v1796
  %v1927 = vadd.f32 %v1244, %v1798
  %v1928 = vadd.f32 %v1249, %v1800
  %v1929 = vadd.f32 %v1252, %v1865
  %v1930 = vld [vmem:[%s2] sm:$0x1]
  %v1931 = vlaneseq
  %v1932 = vshrl.u32 %v1931, 7
  %v1933 = vsub.s32 0, %v1932
  %v1934 = vrot.slane %v1930, %v1933
  %v1935 = vadd.f32 %v1866, %v1934
  %v1936 = vadd.f32 %v1867, %v1934
  %v1937 = vadd.f32 %v1868, %v1934
  %v1938 = vadd.f32 %v1869, %v1934
  %v1939 = vadd.f32 %v1870, %v1934
  %v1940 = vadd.f32 %v1871, %v1934
  %v1941 = vadd.f32 %v1872, %v1934
  %v1942 = vadd.f32 %v1873, %v1934
  %v1943 = vadd.f32 %v1874, %v1934
  %v1944 = vadd.f32 %v1875, %v1934
  %v1945 = vadd.f32 %v1876, %v1934
  %v1946 = vadd.f32 %v1877, %v1934
  %v1947 = vadd.f32 %v1878, %v1934
  %v1948 = vadd.f32 %v1879, %v1934
  %v1949 = vadd.f32 %v1880, %v1934
  %v1950 = vadd.f32 %v1881, %v1934
  %v1951 = vadd.f32 %v1882, %v1934
  %v1952 = vadd.f32 %v1883, %v1934
  %v1953 = vadd.f32 %v1884, %v1934
  %v1954 = vadd.f32 %v1885, %v1934
  %v1955 = vadd.f32 %v1886, %v1934
  %v1956 = vadd.f32 %v1887, %v1934
  %v1957 = vadd.f32 %v1888, %v1934
  %v1958 = vadd.f32 %v1889, %v1934
  %v1959 = vadd.f32 %v1890, %v1934
  %v1960 = vadd.f32 %v1891, %v1934
  %v1961 = vadd.f32 %v1892, %v1934
  %v1962 = vadd.f32 %v1893, %v1934
  %v1963 = vadd.f32 %v1894, %v1934
  %v1964 = vadd.f32 %v1895, %v1934
  %v1965 = vadd.f32 %v1896, %v1934
  %v1966 = vadd.f32 %v1897, %v1934
  %v1967 = vadd.f32 %v1898, %v1934
  %v1968 = vadd.f32 %v1899, %v1934
  %v1969 = vadd.f32 %v1900, %v1934
  %v1970 = vadd.f32 %v1901, %v1934
  %v1971 = vadd.f32 %v1902, %v1934
  %v1972 = vadd.f32 %v1903, %v1934
  %v1973 = vadd.f32 %v1904, %v1934
  %v1974 = vadd.f32 %v1905, %v1934
  %v1975 = vadd.f32 %v1906, %v1934
  %v1976 = vadd.f32 %v1907, %v1934
  %v1977 = vadd.f32 %v1908, %v1934
  %v1978 = vadd.f32 %v1909, %v1934
  %v1979 = vadd.f32 %v1910, %v1934
  %v1980 = vadd.f32 %v1911, %v1934
  %v1981 = vadd.f32 %v1912, %v1934
  %v1982 = vadd.f32 %v1913, %v1934
  %v1983 = vadd.f32 %v1914, %v1934
  %v1984 = vadd.f32 %v1915, %v1934
  %v1985 = vadd.f32 %v1916, %v1934
  %v1986 = vadd.f32 %v1917, %v1934
  %v1987 = vadd.f32 %v1918, %v1934
  %v1988 = vadd.f32 %v1919, %v1934
  %v1989 = vadd.f32 %v1920, %v1934
  %v1990 = vadd.f32 %v1921, %v1934
  %v1991 = vadd.f32 %v1922, %v1934
  %v1992 = vadd.f32 %v1923, %v1934
  %v1993 = vadd.f32 %v1924, %v1934
  %v1994 = vadd.f32 %v1925, %v1934
  %v1995 = vadd.f32 %v1926, %v1934
  %v1996 = vadd.f32 %v1927, %v1934
  %v1997 = vadd.f32 %v1928, %v1934
  %v1998 = vadd.f32 %v1929, %v1934
  %v1999 = vlaneseq
  %v2000 = vshrl.u32 %v1999, 7
  %v2001 = vadd.s32 %v2000, 8
  %v2002 = vadd.s32 %v2000, 16
  %v2003 = vadd.s32 %v2000, 24
  %v2004 = vadd.s32 %v2000, 32
  %v2005 = vadd.s32 %v2000, 40
  %v2006 = vadd.s32 %v2000, 48
  %v2007 = vadd.s32 %v2000, 56
  %v2008 = vadd.s32 %v2000, 64
  %v2009 = vadd.s32 %v2000, 72
  %v2010 = vadd.s32 %v2000, 80
  %v2011 = vadd.s32 %v2000, 88
  %v2012 = vadd.s32 %v2000, 96
  %v2013 = vadd.s32 %v2000, 104
  %v2014 = vadd.s32 %v2000, 112
  %v2015 = vadd.s32 %v2000, 120
  %v2016 = vadd.s32 %v2000, 128
  %v2017 = vadd.s32 %v2000, 136
  %v2018 = vadd.s32 %v2000, 144
  %v2019 = vadd.s32 %v2000, 152
  %v2020 = vadd.s32 %v2000, 160
  %v2021 = vadd.s32 %v2000, 168
  %v2022 = vadd.s32 %v2000, 176
  %v2023 = vadd.s32 %v2000, 184
  %v2024 = vadd.s32 %v2000, 192
  %v2025 = vadd.s32 %v2000, 200
  %v2026 = vadd.s32 %v2000, 208
  %v2027 = vadd.s32 %v2000, 216
  %v2028 = vadd.s32 %v2000, 224
  %v2029 = vadd.s32 %v2000, 232
  %v2030 = vadd.s32 %v2000, 240
  %v2031 = vadd.s32 %v2000, 248
  %v2032 = vadd.s32 %v2000, 256
  %v2033 = vadd.s32 %v2000, 264
  %v2034 = vadd.s32 %v2000, 272
  %v2035 = vadd.s32 %v2000, 280
  %v2036 = vadd.s32 %v2000, 288
  %v2037 = vadd.s32 %v2000, 296
  %v2038 = vadd.s32 %v2000, 304
  %v2039 = vadd.s32 %v2000, 312
  %v2040 = vadd.s32 %v2000, 320
  %v2041 = vadd.s32 %v2000, 328
  %v2042 = vadd.s32 %v2000, 336
  %v2043 = vadd.s32 %v2000, 344
  %v2044 = vadd.s32 %v2000, 352
  %v2045 = vadd.s32 %v2000, 360
  %v2046 = vadd.s32 %v2000, 368
  %v2047 = vadd.s32 %v2000, 376
  %v2048 = vadd.s32 %v2000, 384
  %v2049 = vadd.s32 %v2000, 392
  %v2050 = vadd.s32 %v2000, 400
  %v2051 = vadd.s32 %v2000, 408
  %v2052 = vadd.s32 %v2000, 416
  %v2053 = vadd.s32 %v2000, 424
  %v2054 = vadd.s32 %v2000, 432
  %v2055 = vadd.s32 %v2000, 440
  %v2056 = vadd.s32 %v2000, 448
  %v2057 = vadd.s32 %v2000, 456
  %v2058 = vadd.s32 %v2000, 464
  %v2059 = vadd.s32 %v2000, 472
  %v2060 = vadd.s32 %v2000, 480
  %v2061 = vadd.s32 %v2000, 488
  %v2062 = vadd.s32 %v2000, 496
  %v2063 = vadd.s32 %v2000, 504
  %vm2064 = vcmp.lt.s32.totalorder %v2000, 0
  %v2065 = vsub.s32 0, %v2000
  %v2066 = vsel %vm2064, %v2065, %v2000
  %v2067 = vshrl.u32 %v2066, 8
  %v2068 = vand.u32 %v2066, 255
  %v2069 = vsub.s32 0, %v2068
  %v2070 = vsel %vm2064, %v2069, %v2068
  %vm2071 = vcmp.lt.s32.totalorder %v2001, 0
  %v2072 = vsub.s32 0, %v2001
  %v2073 = vsel %vm2071, %v2072, %v2001
  %v2074 = vshrl.u32 %v2073, 8
  %v2075 = vand.u32 %v2073, 255
  %v2076 = vsub.s32 0, %v2075
  %v2077 = vsel %vm2071, %v2076, %v2075
  %vm2078 = vcmp.lt.s32.totalorder %v2002, 0
  %v2079 = vsub.s32 0, %v2002
  %v2080 = vsel %vm2078, %v2079, %v2002
  %v2081 = vshrl.u32 %v2080, 8
  %v2082 = vand.u32 %v2080, 255
  %v2083 = vsub.s32 0, %v2082
  %v2084 = vsel %vm2078, %v2083, %v2082
  %vm2085 = vcmp.lt.s32.totalorder %v2003, 0
  %v2086 = vsub.s32 0, %v2003
  %v2087 = vsel %vm2085, %v2086, %v2003
  %v2088 = vshrl.u32 %v2087, 8
  %v2089 = vand.u32 %v2087, 255
  %v2090 = vsub.s32 0, %v2089
  %v2091 = vsel %vm2085, %v2090, %v2089
  %vm2092 = vcmp.lt.s32.totalorder %v2004, 0
  %v2093 = vsub.s32 0, %v2004
  %v2094 = vsel %vm2092, %v2093, %v2004
  %v2095 = vshrl.u32 %v2094, 8
  %v2096 = vand.u32 %v2094, 255
  %v2097 = vsub.s32 0, %v2096
  %v2098 = vsel %vm2092, %v2097, %v2096
  %vm2099 = vcmp.lt.s32.totalorder %v2005, 0
  %v2100 = vsub.s32 0, %v2005
  %v2101 = vsel %vm2099, %v2100, %v2005
  %v2102 = vshrl.u32 %v2101, 8
  %v2103 = vand.u32 %v2101, 255
  %v2104 = vsub.s32 0, %v2103
  %v2105 = vsel %vm2099, %v2104, %v2103
  %vm2106 = vcmp.lt.s32.totalorder %v2006, 0
  %v2107 = vsub.s32 0, %v2006
  %v2108 = vsel %vm2106, %v2107, %v2006
  %v2109 = vshrl.u32 %v2108, 8
  %v2110 = vand.u32 %v2108, 255
  %v2111 = vsub.s32 0, %v2110
  %v2112 = vsel %vm2106, %v2111, %v2110
  %vm2113 = vcmp.lt.s32.totalorder %v2007, 0
  %v2114 = vsub.s32 0, %v2007
  %v2115 = vsel %vm2113, %v2114, %v2007
  %v2116 = vshrl.u32 %v2115, 8
  %v2117 = vand.u32 %v2115, 255
  %v2118 = vsub.s32 0, %v2117
  %v2119 = vsel %vm2113, %v2118, %v2117
  %vm2120 = vcmp.lt.s32.totalorder %v2008, 0
  %v2121 = vsub.s32 0, %v2008
  %v2122 = vsel %vm2120, %v2121, %v2008
  %v2123 = vshrl.u32 %v2122, 8
  %v2124 = vand.u32 %v2122, 255
  %v2125 = vsub.s32 0, %v2124
  %v2126 = vsel %vm2120, %v2125, %v2124
  %vm2127 = vcmp.lt.s32.totalorder %v2009, 0
  %v2128 = vsub.s32 0, %v2009
  %v2129 = vsel %vm2127, %v2128, %v2009
  %v2130 = vshrl.u32 %v2129, 8
  %v2131 = vand.u32 %v2129, 255
  %v2132 = vsub.s32 0, %v2131
  %v2133 = vsel %vm2127, %v2132, %v2131
  %vm2134 = vcmp.lt.s32.totalorder %v2010, 0
  %v2135 = vsub.s32 0, %v2010
  %v2136 = vsel %vm2134, %v2135, %v2010
  %v2137 = vshrl.u32 %v2136, 8
  %v2138 = vand.u32 %v2136, 255
  %v2139 = vsub.s32 0, %v2138
  %v2140 = vsel %vm2134, %v2139, %v2138
  %vm2141 = vcmp.lt.s32.totalorder %v2011, 0
  %v2142 = vsub.s32 0, %v2011
  %v2143 = vsel %vm2141, %v2142, %v2011
  %v2144 = vshrl.u32 %v2143, 8
  %v2145 = vand.u32 %v2143, 255
  %v2146 = vsub.s32 0, %v2145
  %v2147 = vsel %vm2141, %v2146, %v2145
  %vm2148 = vcmp.lt.s32.totalorder %v2012, 0
  %v2149 = vsub.s32 0, %v2012
  %v2150 = vsel %vm2148, %v2149, %v2012
  %v2151 = vshrl.u32 %v2150, 8
  %v2152 = vand.u32 %v2150, 255
  %v2153 = vsub.s32 0, %v2152
  %v2154 = vsel %vm2148, %v2153, %v2152
  %vm2155 = vcmp.lt.s32.totalorder %v2013, 0
  %v2156 = vsub.s32 0, %v2013
  %v2157 = vsel %vm2155, %v2156, %v2013
  %v2158 = vshrl.u32 %v2157, 8
  %v2159 = vand.u32 %v2157, 255
  %v2160 = vsub.s32 0, %v2159
  %v2161 = vsel %vm2155, %v2160, %v2159
  %vm2162 = vcmp.lt.s32.totalorder %v2014, 0
  %v2163 = vsub.s32 0, %v2014
  %v2164 = vsel %vm2162, %v2163, %v2014
  %v2165 = vshrl.u32 %v2164, 8
  %v2166 = vand.u32 %v2164, 255
  %v2167 = vsub.s32 0, %v2166
  %v2168 = vsel %vm2162, %v2167, %v2166
  %vm2169 = vcmp.lt.s32.totalorder %v2015, 0
  %v2170 = vsub.s32 0, %v2015
  %v2171 = vsel %vm2169, %v2170, %v2015
  %v2172 = vshrl.u32 %v2171, 8
  %v2173 = vand.u32 %v2171, 255
  %v2174 = vsub.s32 0, %v2173
  %v2175 = vsel %vm2169, %v2174, %v2173
  %vm2176 = vcmp.lt.s32.totalorder %v2016, 0
  %v2177 = vsub.s32 0, %v2016
  %v2178 = vsel %vm2176, %v2177, %v2016
  %v2179 = vshrl.u32 %v2178, 8
  %v2180 = vand.u32 %v2178, 255
  %v2181 = vsub.s32 0, %v2180
  %v2182 = vsel %vm2176, %v2181, %v2180
  %vm2183 = vcmp.lt.s32.totalorder %v2017, 0
  %v2184 = vsub.s32 0, %v2017
  %v2185 = vsel %vm2183, %v2184, %v2017
  %v2186 = vshrl.u32 %v2185, 8
  %v2187 = vand.u32 %v2185, 255
  %v2188 = vsub.s32 0, %v2187
  %v2189 = vsel %vm2183, %v2188, %v2187
  %vm2190 = vcmp.lt.s32.totalorder %v2018, 0
  %v2191 = vsub.s32 0, %v2018
  %v2192 = vsel %vm2190, %v2191, %v2018
  %v2193 = vshrl.u32 %v2192, 8
  %v2194 = vand.u32 %v2192, 255
  %v2195 = vsub.s32 0, %v2194
  %v2196 = vsel %vm2190, %v2195, %v2194
  %vm2197 = vcmp.lt.s32.totalorder %v2019, 0
  %v2198 = vsub.s32 0, %v2019
  %v2199 = vsel %vm2197, %v2198, %v2019
  %v2200 = vshrl.u32 %v2199, 8
  %v2201 = vand.u32 %v2199, 255
  %v2202 = vsub.s32 0, %v2201
  %v2203 = vsel %vm2197, %v2202, %v2201
  %vm2204 = vcmp.lt.s32.totalorder %v2020, 0
  %v2205 = vsub.s32 0, %v2020
  %v2206 = vsel %vm2204, %v2205, %v2020
  %v2207 = vshrl.u32 %v2206, 8
  %v2208 = vand.u32 %v2206, 255
  %v2209 = vsub.s32 0, %v2208
  %v2210 = vsel %vm2204, %v2209, %v2208
  %vm2211 = vcmp.lt.s32.totalorder %v2021, 0
  %v2212 = vsub.s32 0, %v2021
  %v2213 = vsel %vm2211, %v2212, %v2021
  %v2214 = vshrl.u32 %v2213, 8
  %v2215 = vand.u32 %v2213, 255
  %v2216 = vsub.s32 0, %v2215
  %v2217 = vsel %vm2211, %v2216, %v2215
  %vm2218 = vcmp.lt.s32.totalorder %v2022, 0
  %v2219 = vsub.s32 0, %v2022
  %v2220 = vsel %vm2218, %v2219, %v2022
  %v2221 = vshrl.u32 %v2220, 8
  %v2222 = vand.u32 %v2220, 255
  %v2223 = vsub.s32 0, %v2222
  %v2224 = vsel %vm2218, %v2223, %v2222
  %vm2225 = vcmp.lt.s32.totalorder %v2023, 0
  %v2226 = vsub.s32 0, %v2023
  %v2227 = vsel %vm2225, %v2226, %v2023
  %v2228 = vshrl.u32 %v2227, 8
  %v2229 = vand.u32 %v2227, 255
  %v2230 = vsub.s32 0, %v2229
  %v2231 = vsel %vm2225, %v2230, %v2229
  %vm2232 = vcmp.lt.s32.totalorder %v2024, 0
  %v2233 = vsub.s32 0, %v2024
  %v2234 = vsel %vm2232, %v2233, %v2024
  %v2235 = vshrl.u32 %v2234, 8
  %v2236 = vand.u32 %v2234, 255
  %v2237 = vsub.s32 0, %v2236
  %v2238 = vsel %vm2232, %v2237, %v2236
  %vm2239 = vcmp.lt.s32.totalorder %v2025, 0
  %v2240 = vsub.s32 0, %v2025
  %v2241 = vsel %vm2239, %v2240, %v2025
  %v2242 = vshrl.u32 %v2241, 8
  %v2243 = vand.u32 %v2241, 255
  %v2244 = vsub.s32 0, %v2243
  %v2245 = vsel %vm2239, %v2244, %v2243
  %vm2246 = vcmp.lt.s32.totalorder %v2026, 0
  %v2247 = vsub.s32 0, %v2026
  %v2248 = vsel %vm2246, %v2247, %v2026
  %v2249 = vshrl.u32 %v2248, 8
  %v2250 = vand.u32 %v2248, 255
  %v2251 = vsub.s32 0, %v2250
  %v2252 = vsel %vm2246, %v2251, %v2250
  %vm2253 = vcmp.lt.s32.totalorder %v2027, 0
  %v2254 = vsub.s32 0, %v2027
  %v2255 = vsel %vm2253, %v2254, %v2027
  %v2256 = vshrl.u32 %v2255, 8
  %v2257 = vand.u32 %v2255, 255
  %v2258 = vsub.s32 0, %v2257
  %v2259 = vsel %vm2253, %v2258, %v2257
  %vm2260 = vcmp.lt.s32.totalorder %v2028, 0
  %v2261 = vsub.s32 0, %v2028
  %v2262 = vsel %vm2260, %v2261, %v2028
  %v2263 = vshrl.u32 %v2262, 8
  %v2264 = vand.u32 %v2262, 255
  %v2265 = vsub.s32 0, %v2264
  %v2266 = vsel %vm2260, %v2265, %v2264
  %vm2267 = vcmp.lt.s32.totalorder %v2029, 0
  %v2268 = vsub.s32 0, %v2029
  %v2269 = vsel %vm2267, %v2268, %v2029
  %v2270 = vshrl.u32 %v2269, 8
  %v2271 = vand.u32 %v2269, 255
  %v2272 = vsub.s32 0, %v2271
  %v2273 = vsel %vm2267, %v2272, %v2271
  %vm2274 = vcmp.lt.s32.totalorder %v2030, 0
  %v2275 = vsub.s32 0, %v2030
  %v2276 = vsel %vm2274, %v2275, %v2030
  %v2277 = vshrl.u32 %v2276, 8
  %v2278 = vand.u32 %v2276, 255
  %v2279 = vsub.s32 0, %v2278
  %v2280 = vsel %vm2274, %v2279, %v2278
  %vm2281 = vcmp.lt.s32.totalorder %v2031, 0
  %v2282 = vsub.s32 0, %v2031
  %v2283 = vsel %vm2281, %v2282, %v2031
  %v2284 = vshrl.u32 %v2283, 8
  %v2285 = vand.u32 %v2283, 255
  %v2286 = vsub.s32 0, %v2285
  %v2287 = vsel %vm2281, %v2286, %v2285
  %vm2288 = vcmp.lt.s32.totalorder %v2032, 0
  %v2289 = vsub.s32 0, %v2032
  %v2290 = vsel %vm2288, %v2289, %v2032
  %v2291 = vshrl.u32 %v2290, 8
  %v2292 = vand.u32 %v2290, 255
  %v2293 = vsub.s32 0, %v2292
  %v2294 = vsel %vm2288, %v2293, %v2292
  %vm2295 = vcmp.lt.s32.totalorder %v2033, 0
  %v2296 = vsub.s32 0, %v2033
  %v2297 = vsel %vm2295, %v2296, %v2033
  %v2298 = vshrl.u32 %v2297, 8
  %v2299 = vand.u32 %v2297, 255
  %v2300 = vsub.s32 0, %v2299
  %v2301 = vsel %vm2295, %v2300, %v2299
  %vm2302 = vcmp.lt.s32.totalorder %v2034, 0
  %v2303 = vsub.s32 0, %v2034
  %v2304 = vsel %vm2302, %v2303, %v2034
  %v2305 = vshrl.u32 %v2304, 8
  %v2306 = vand.u32 %v2304, 255
  %v2307 = vsub.s32 0, %v2306
  %v2308 = vsel %vm2302, %v2307, %v2306
  %vm2309 = vcmp.lt.s32.totalorder %v2035, 0
  %v2310 = vsub.s32 0, %v2035
  %v2311 = vsel %vm2309, %v2310, %v2035
  %v2312 = vshrl.u32 %v2311, 8
  %v2313 = vand.u32 %v2311, 255
  %v2314 = vsub.s32 0, %v2313
  %v2315 = vsel %vm2309, %v2314, %v2313
  %vm2316 = vcmp.lt.s32.totalorder %v2036, 0
  %v2317 = vsub.s32 0, %v2036
  %v2318 = vsel %vm2316, %v2317, %v2036
  %v2319 = vshrl.u32 %v2318, 8
  %v2320 = vand.u32 %v2318, 255
  %v2321 = vsub.s32 0, %v2320
  %v2322 = vsel %vm2316, %v2321, %v2320
  %vm2323 = vcmp.lt.s32.totalorder %v2037, 0
  %v2324 = vsub.s32 0, %v2037
  %v2325 = vsel %vm2323, %v2324, %v2037
  %v2326 = vshrl.u32 %v2325, 8
  %v2327 = vand.u32 %v2325, 255
  %v2328 = vsub.s32 0, %v2327
  %v2329 = vsel %vm2323, %v2328, %v2327
  %vm2330 = vcmp.lt.s32.totalorder %v2038, 0
  %v2331 = vsub.s32 0, %v2038
  %v2332 = vsel %vm2330, %v2331, %v2038
  %v2333 = vshrl.u32 %v2332, 8
  %v2334 = vand.u32 %v2332, 255
  %v2335 = vsub.s32 0, %v2334
  %v2336 = vsel %vm2330, %v2335, %v2334
  %vm2337 = vcmp.lt.s32.totalorder %v2039, 0
  %v2338 = vsub.s32 0, %v2039
  %v2339 = vsel %vm2337, %v2338, %v2039
  %v2340 = vshrl.u32 %v2339, 8
  %v2341 = vand.u32 %v2339, 255
  %v2342 = vsub.s32 0, %v2341
  %v2343 = vsel %vm2337, %v2342, %v2341
  %vm2344 = vcmp.lt.s32.totalorder %v2040, 0
  %v2345 = vsub.s32 0, %v2040
  %v2346 = vsel %vm2344, %v2345, %v2040
  %v2347 = vshrl.u32 %v2346, 8
  %v2348 = vand.u32 %v2346, 255
  %v2349 = vsub.s32 0, %v2348
  %v2350 = vsel %vm2344, %v2349, %v2348
  %vm2351 = vcmp.lt.s32.totalorder %v2041, 0
  %v2352 = vsub.s32 0, %v2041
  %v2353 = vsel %vm2351, %v2352, %v2041
  %v2354 = vshrl.u32 %v2353, 8
  %v2355 = vand.u32 %v2353, 255
  %v2356 = vsub.s32 0, %v2355
  %v2357 = vsel %vm2351, %v2356, %v2355
  %vm2358 = vcmp.lt.s32.totalorder %v2042, 0
  %v2359 = vsub.s32 0, %v2042
  %v2360 = vsel %vm2358, %v2359, %v2042
  %v2361 = vshrl.u32 %v2360, 8
  %v2362 = vand.u32 %v2360, 255
  %v2363 = vsub.s32 0, %v2362
  %v2364 = vsel %vm2358, %v2363, %v2362
  %vm2365 = vcmp.lt.s32.totalorder %v2043, 0
  %v2366 = vsub.s32 0, %v2043
  %v2367 = vsel %vm2365, %v2366, %v2043
  %v2368 = vshrl.u32 %v2367, 8
  %v2369 = vand.u32 %v2367, 255
  %v2370 = vsub.s32 0, %v2369
  %v2371 = vsel %vm2365, %v2370, %v2369
  %vm2372 = vcmp.lt.s32.totalorder %v2044, 0
  %v2373 = vsub.s32 0, %v2044
  %v2374 = vsel %vm2372, %v2373, %v2044
  %v2375 = vshrl.u32 %v2374, 8
  %v2376 = vand.u32 %v2374, 255
  %v2377 = vsub.s32 0, %v2376
  %v2378 = vsel %vm2372, %v2377, %v2376
  %vm2379 = vcmp.lt.s32.totalorder %v2045, 0
  %v2380 = vsub.s32 0, %v2045
  %v2381 = vsel %vm2379, %v2380, %v2045
  %v2382 = vshrl.u32 %v2381, 8
  %v2383 = vand.u32 %v2381, 255
  %v2384 = vsub.s32 0, %v2383
  %v2385 = vsel %vm2379, %v2384, %v2383
  %vm2386 = vcmp.lt.s32.totalorder %v2046, 0
  %v2387 = vsub.s32 0, %v2046
  %v2388 = vsel %vm2386, %v2387, %v2046
  %v2389 = vshrl.u32 %v2388, 8
  %v2390 = vand.u32 %v2388, 255
  %v2391 = vsub.s32 0, %v2390
  %v2392 = vsel %vm2386, %v2391, %v2390
  %vm2393 = vcmp.lt.s32.totalorder %v2047, 0
  %v2394 = vsub.s32 0, %v2047
  %v2395 = vsel %vm2393, %v2394, %v2047
  %v2396 = vshrl.u32 %v2395, 8
  %v2397 = vand.u32 %v2395, 255
  %v2398 = vsub.s32 0, %v2397
  %v2399 = vsel %vm2393, %v2398, %v2397
  %vm2400 = vcmp.lt.s32.totalorder %v2048, 0
  %v2401 = vsub.s32 0, %v2048
  %v2402 = vsel %vm2400, %v2401, %v2048
  %v2403 = vshrl.u32 %v2402, 8
  %v2404 = vand.u32 %v2402, 255
  %v2405 = vsub.s32 0, %v2404
  %v2406 = vsel %vm2400, %v2405, %v2404
  %vm2407 = vcmp.lt.s32.totalorder %v2049, 0
  %v2408 = vsub.s32 0, %v2049
  %v2409 = vsel %vm2407, %v2408, %v2049
  %v2410 = vshrl.u32 %v2409, 8
  %v2411 = vand.u32 %v2409, 255
  %v2412 = vsub.s32 0, %v2411
  %v2413 = vsel %vm2407, %v2412, %v2411
  %vm2414 = vcmp.lt.s32.totalorder %v2050, 0
  %v2415 = vsub.s32 0, %v2050
  %v2416 = vsel %vm2414, %v2415, %v2050
  %v2417 = vshrl.u32 %v2416, 8
  %v2418 = vand.u32 %v2416, 255
  %v2419 = vsub.s32 0, %v2418
  %v2420 = vsel %vm2414, %v2419, %v2418
  %vm2421 = vcmp.lt.s32.totalorder %v2051, 0
  %v2422 = vsub.s32 0, %v2051
  %v2423 = vsel %vm2421, %v2422, %v2051
  %v2424 = vshrl.u32 %v2423, 8
  %v2425 = vand.u32 %v2423, 255
  %v2426 = vsub.s32 0, %v2425
  %v2427 = vsel %vm2421, %v2426, %v2425
  %vm2428 = vcmp.lt.s32.totalorder %v2052, 0
  %v2429 = vsub.s32 0, %v2052
  %v2430 = vsel %vm2428, %v2429, %v2052
  %v2431 = vshrl.u32 %v2430, 8
  %v2432 = vand.u32 %v2430, 255
  %v2433 = vsub.s32 0, %v2432
  %v2434 = vsel %vm2428, %v2433, %v2432
  %vm2435 = vcmp.lt.s32.totalorder %v2053, 0
  %v2436 = vsub.s32 0, %v2053
  %v2437 = vsel %vm2435, %v2436, %v2053
  %v2438 = vshrl.u32 %v2437, 8
  %v2439 = vand.u32 %v2437, 255
  %v2440 = vsub.s32 0, %v2439
  %v2441 = vsel %vm2435, %v2440, %v2439
  %vm2442 = vcmp.lt.s32.totalorder %v2054, 0
  %v2443 = vsub.s32 0, %v2054
  %v2444 = vsel %vm2442, %v2443, %v2054
  %v2445 = vshrl.u32 %v2444, 8
  %v2446 = vand.u32 %v2444, 255
  %v2447 = vsub.s32 0, %v2446
  %v2448 = vsel %vm2442, %v2447, %v2446
  %vm2449 = vcmp.lt.s32.totalorder %v2055, 0
  %v2450 = vsub.s32 0, %v2055
  %v2451 = vsel %vm2449, %v2450, %v2055
  %v2452 = vshrl.u32 %v2451, 8
  %v2453 = vand.u32 %v2451, 255
  %v2454 = vsub.s32 0, %v2453
  %v2455 = vsel %vm2449, %v2454, %v2453
  %vm2456 = vcmp.lt.s32.totalorder %v2056, 0
  %v2457 = vsub.s32 0, %v2056
  %v2458 = vsel %vm2456, %v2457, %v2056
  %v2459 = vshrl.u32 %v2458, 8
  %v2460 = vand.u32 %v2458, 255
  %v2461 = vsub.s32 0, %v2460
  %v2462 = vsel %vm2456, %v2461, %v2460
  %vm2463 = vcmp.lt.s32.totalorder %v2057, 0
  %v2464 = vsub.s32 0, %v2057
  %v2465 = vsel %vm2463, %v2464, %v2057
  %v2466 = vshrl.u32 %v2465, 8
  %v2467 = vand.u32 %v2465, 255
  %v2468 = vsub.s32 0, %v2467
  %v2469 = vsel %vm2463, %v2468, %v2467
  %vm2470 = vcmp.lt.s32.totalorder %v2058, 0
  %v2471 = vsub.s32 0, %v2058
  %v2472 = vsel %vm2470, %v2471, %v2058
  %v2473 = vshrl.u32 %v2472, 8
  %v2474 = vand.u32 %v2472, 255
  %v2475 = vsub.s32 0, %v2474
  %v2476 = vsel %vm2470, %v2475, %v2474
  %vm2477 = vcmp.lt.s32.totalorder %v2059, 0
  %v2478 = vsub.s32 0, %v2059
  %v2479 = vsel %vm2477, %v2478, %v2059
  %v2480 = vshrl.u32 %v2479, 8
  %v2481 = vand.u32 %v2479, 255
  %v2482 = vsub.s32 0, %v2481
  %v2483 = vsel %vm2477, %v2482, %v2481
  %vm2484 = vcmp.lt.s32.totalorder %v2060, 0
  %v2485 = vsub.s32 0, %v2060
  %v2486 = vsel %vm2484, %v2485, %v2060
  %v2487 = vshrl.u32 %v2486, 8
  %v2488 = vand.u32 %v2486, 255
  %v2489 = vsub.s32 0, %v2488
  %v2490 = vsel %vm2484, %v2489, %v2488
  %vm2491 = vcmp.lt.s32.totalorder %v2061, 0
  %v2492 = vsub.s32 0, %v2061
  %v2493 = vsel %vm2491, %v2492, %v2061
  %v2494 = vshrl.u32 %v2493, 8
  %v2495 = vand.u32 %v2493, 255
  %v2496 = vsub.s32 0, %v2495
  %v2497 = vsel %vm2491, %v2496, %v2495
  %vm2498 = vcmp.lt.s32.totalorder %v2062, 0
  %v2499 = vsub.s32 0, %v2062
  %v2500 = vsel %vm2498, %v2499, %v2062
  %v2501 = vshrl.u32 %v2500, 8
  %v2502 = vand.u32 %v2500, 255
  %v2503 = vsub.s32 0, %v2502
  %v2504 = vsel %vm2498, %v2503, %v2502
  %vm2505 = vcmp.lt.s32.totalorder %v2063, 0
  %v2506 = vsub.s32 0, %v2063
  %v2507 = vsel %vm2505, %v2506, %v2063
  %v2508 = vshrl.u32 %v2507, 8
  %v2509 = vand.u32 %v2507, 255
  %v2510 = vsub.s32 0, %v2509
  %v2511 = vsel %vm2505, %v2510, %v2509
  %vm2512 = vcmp.ne.s32.totalorder %v2070, 0
  %vm2513 = vcmp.ne.s32.totalorder %v2077, 0
  %vm2514 = vcmp.ne.s32.totalorder %v2084, 0
  %vm2515 = vcmp.ne.s32.totalorder %v2091, 0
  %vm2516 = vcmp.ne.s32.totalorder %v2098, 0
  %vm2517 = vcmp.ne.s32.totalorder %v2105, 0
  %vm2518 = vcmp.ne.s32.totalorder %v2112, 0
  %vm2519 = vcmp.ne.s32.totalorder %v2119, 0
  %vm2520 = vcmp.ne.s32.totalorder %v2126, 0
  %vm2521 = vcmp.ne.s32.totalorder %v2133, 0
  %vm2522 = vcmp.ne.s32.totalorder %v2140, 0
  %vm2523 = vcmp.ne.s32.totalorder %v2147, 0
  %vm2524 = vcmp.ne.s32.totalorder %v2154, 0
  %vm2525 = vcmp.ne.s32.totalorder %v2161, 0
  %vm2526 = vcmp.ne.s32.totalorder %v2168, 0
  %vm2527 = vcmp.ne.s32.totalorder %v2175, 0
  %vm2528 = vcmp.ne.s32.totalorder %v2182, 0
  %vm2529 = vcmp.ne.s32.totalorder %v2189, 0
  %vm2530 = vcmp.ne.s32.totalorder %v2196, 0
  %vm2531 = vcmp.ne.s32.totalorder %v2203, 0
  %vm2532 = vcmp.ne.s32.totalorder %v2210, 0
  %vm2533 = vcmp.ne.s32.totalorder %v2217, 0
  %vm2534 = vcmp.ne.s32.totalorder %v2224, 0
  %vm2535 = vcmp.ne.s32.totalorder %v2231, 0
  %vm2536 = vcmp.ne.s32.totalorder %v2238, 0
  %vm2537 = vcmp.ne.s32.totalorder %v2245, 0
  %vm2538 = vcmp.ne.s32.totalorder %v2252, 0
  %vm2539 = vcmp.ne.s32.totalorder %v2259, 0
  %vm2540 = vcmp.ne.s32.totalorder %v2266, 0
  %vm2541 = vcmp.ne.s32.totalorder %v2273, 0
  %vm2542 = vcmp.ne.s32.totalorder %v2280, 0
  %vm2543 = vcmp.ne.s32.totalorder %v2287, 0
  %vm2544 = vcmp.ne.s32.totalorder %v2294, 0
  %vm2545 = vcmp.ne.s32.totalorder %v2301, 0
  %vm2546 = vcmp.ne.s32.totalorder %v2308, 0
  %vm2547 = vcmp.ne.s32.totalorder %v2315, 0
  %vm2548 = vcmp.ne.s32.totalorder %v2322, 0
  %vm2549 = vcmp.ne.s32.totalorder %v2329, 0
  %vm2550 = vcmp.ne.s32.totalorder %v2336, 0
  %vm2551 = vcmp.ne.s32.totalorder %v2343, 0
  %vm2552 = vcmp.ne.s32.totalorder %v2350, 0
  %vm2553 = vcmp.ne.s32.totalorder %v2357, 0
  %vm2554 = vcmp.ne.s32.totalorder %v2364, 0
  %vm2555 = vcmp.ne.s32.totalorder %v2371, 0
  %vm2556 = vcmp.ne.s32.totalorder %v2378, 0
  %vm2557 = vcmp.ne.s32.totalorder %v2385, 0
  %vm2558 = vcmp.ne.s32.totalorder %v2392, 0
  %vm2559 = vcmp.ne.s32.totalorder %v2399, 0
  %vm2560 = vcmp.ne.s32.totalorder %v2406, 0
  %vm2561 = vcmp.ne.s32.totalorder %v2413, 0
  %vm2562 = vcmp.ne.s32.totalorder %v2420, 0
  %vm2563 = vcmp.ne.s32.totalorder %v2427, 0
  %vm2564 = vcmp.ne.s32.totalorder %v2434, 0
  %vm2565 = vcmp.ne.s32.totalorder %v2441, 0
  %vm2566 = vcmp.ne.s32.totalorder %v2448, 0
  %vm2567 = vcmp.ne.s32.totalorder %v2455, 0
  %vm2568 = vcmp.ne.s32.totalorder %v2462, 0
  %vm2569 = vcmp.ne.s32.totalorder %v2469, 0
  %vm2570 = vcmp.ne.s32.totalorder %v2476, 0
  %vm2571 = vcmp.ne.s32.totalorder %v2483, 0
  %vm2572 = vcmp.ne.s32.totalorder %v2490, 0
  %vm2573 = vcmp.ne.s32.totalorder %v2497, 0
  %vm2574 = vcmp.ne.s32.totalorder %v2504, 0
  %vm2575 = vcmp.ne.s32.totalorder %v2511, 0
  %vm2576 = vcmp.lt.s32.totalorder %v2070, 0
  %vm2577 = vcmp.lt.s32.totalorder %v2077, 0
  %vm2578 = vcmp.lt.s32.totalorder %v2084, 0
  %vm2579 = vcmp.lt.s32.totalorder %v2091, 0
  %vm2580 = vcmp.lt.s32.totalorder %v2098, 0
  %vm2581 = vcmp.lt.s32.totalorder %v2105, 0
  %vm2582 = vcmp.lt.s32.totalorder %v2112, 0
  %vm2583 = vcmp.lt.s32.totalorder %v2119, 0
  %vm2584 = vcmp.lt.s32.totalorder %v2126, 0
  %vm2585 = vcmp.lt.s32.totalorder %v2133, 0
  %vm2586 = vcmp.lt.s32.totalorder %v2140, 0
  %vm2587 = vcmp.lt.s32.totalorder %v2147, 0
  %vm2588 = vcmp.lt.s32.totalorder %v2154, 0
  %vm2589 = vcmp.lt.s32.totalorder %v2161, 0
  %vm2590 = vcmp.lt.s32.totalorder %v2168, 0
  %vm2591 = vcmp.lt.s32.totalorder %v2175, 0
  %vm2592 = vcmp.lt.s32.totalorder %v2182, 0
  %vm2593 = vcmp.lt.s32.totalorder %v2189, 0
  %vm2594 = vcmp.lt.s32.totalorder %v2196, 0
  %vm2595 = vcmp.lt.s32.totalorder %v2203, 0
  %vm2596 = vcmp.lt.s32.totalorder %v2210, 0
  %vm2597 = vcmp.lt.s32.totalorder %v2217, 0
  %vm2598 = vcmp.lt.s32.totalorder %v2224, 0
  %vm2599 = vcmp.lt.s32.totalorder %v2231, 0
  %vm2600 = vcmp.lt.s32.totalorder %v2238, 0
  %vm2601 = vcmp.lt.s32.totalorder %v2245, 0
  %vm2602 = vcmp.lt.s32.totalorder %v2252, 0
  %vm2603 = vcmp.lt.s32.totalorder %v2259, 0
  %vm2604 = vcmp.lt.s32.totalorder %v2266, 0
  %vm2605 = vcmp.lt.s32.totalorder %v2273, 0
  %vm2606 = vcmp.lt.s32.totalorder %v2280, 0
  %vm2607 = vcmp.lt.s32.totalorder %v2287, 0
  %vm2608 = vcmp.lt.s32.totalorder %v2294, 0
  %vm2609 = vcmp.lt.s32.totalorder %v2301, 0
  %vm2610 = vcmp.lt.s32.totalorder %v2308, 0
  %vm2611 = vcmp.lt.s32.totalorder %v2315, 0
  %vm2612 = vcmp.lt.s32.totalorder %v2322, 0
  %vm2613 = vcmp.lt.s32.totalorder %v2329, 0
  %vm2614 = vcmp.lt.s32.totalorder %v2336, 0
  %vm2615 = vcmp.lt.s32.totalorder %v2343, 0
  %vm2616 = vcmp.lt.s32.totalorder %v2350, 0
  %vm2617 = vcmp.lt.s32.totalorder %v2357, 0
  %vm2618 = vcmp.lt.s32.totalorder %v2364, 0
  %vm2619 = vcmp.lt.s32.totalorder %v2371, 0
  %vm2620 = vcmp.lt.s32.totalorder %v2378, 0
  %vm2621 = vcmp.lt.s32.totalorder %v2385, 0
  %vm2622 = vcmp.lt.s32.totalorder %v2392, 0
  %vm2623 = vcmp.lt.s32.totalorder %v2399, 0
  %vm2624 = vcmp.lt.s32.totalorder %v2406, 0
  %vm2625 = vcmp.lt.s32.totalorder %v2413, 0
  %vm2626 = vcmp.lt.s32.totalorder %v2420, 0
  %vm2627 = vcmp.lt.s32.totalorder %v2427, 0
  %vm2628 = vcmp.lt.s32.totalorder %v2434, 0
  %vm2629 = vcmp.lt.s32.totalorder %v2441, 0
  %vm2630 = vcmp.lt.s32.totalorder %v2448, 0
  %vm2631 = vcmp.lt.s32.totalorder %v2455, 0
  %vm2632 = vcmp.lt.s32.totalorder %v2462, 0
  %vm2633 = vcmp.lt.s32.totalorder %v2469, 0
  %vm2634 = vcmp.lt.s32.totalorder %v2476, 0
  %vm2635 = vcmp.lt.s32.totalorder %v2483, 0
  %vm2636 = vcmp.lt.s32.totalorder %v2490, 0
  %vm2637 = vcmp.lt.s32.totalorder %v2497, 0
  %vm2638 = vcmp.lt.s32.totalorder %v2504, 0
  %vm2639 = vcmp.lt.s32.totalorder %v2511, 0
  %vm2640 = vmand %vm2576, %vm2512
  %vm2641 = vmand %vm2577, %vm2513
  %vm2642 = vmand %vm2578, %vm2514
  %vm2643 = vmand %vm2579, %vm2515
  %vm2644 = vmand %vm2580, %vm2516
  %vm2645 = vmand %vm2581, %vm2517
  %vm2646 = vmand %vm2582, %vm2518
  %vm2647 = vmand %vm2583, %vm2519
  %vm2648 = vmand %vm2584, %vm2520
  %vm2649 = vmand %vm2585, %vm2521
  %vm2650 = vmand %vm2586, %vm2522
  %vm2651 = vmand %vm2587, %vm2523
  %vm2652 = vmand %vm2588, %vm2524
  %vm2653 = vmand %vm2589, %vm2525
  %vm2654 = vmand %vm2590, %vm2526
  %vm2655 = vmand %vm2591, %vm2527
  %vm2656 = vmand %vm2592, %vm2528
  %vm2657 = vmand %vm2593, %vm2529
  %vm2658 = vmand %vm2594, %vm2530
  %vm2659 = vmand %vm2595, %vm2531
  %vm2660 = vmand %vm2596, %vm2532
  %vm2661 = vmand %vm2597, %vm2533
  %vm2662 = vmand %vm2598, %vm2534
  %vm2663 = vmand %vm2599, %vm2535
  %vm2664 = vmand %vm2600, %vm2536
  %vm2665 = vmand %vm2601, %vm2537
  %vm2666 = vmand %vm2602, %vm2538
  %vm2667 = vmand %vm2603, %vm2539
  %vm2668 = vmand %vm2604, %vm2540
  %vm2669 = vmand %vm2605, %vm2541
  %vm2670 = vmand %vm2606, %vm2542
  %vm2671 = vmand %vm2607, %vm2543
  %vm2672 = vmand %vm2608, %vm2544
  %vm2673 = vmand %vm2609, %vm2545
  %vm2674 = vmand %vm2610, %vm2546
  %vm2675 = vmand %vm2611, %vm2547
  %vm2676 = vmand %vm2612, %vm2548
  %vm2677 = vmand %vm2613, %vm2549
  %vm2678 = vmand %vm2614, %vm2550
  %vm2679 = vmand %vm2615, %vm2551
  %vm2680 = vmand %vm2616, %vm2552
  %vm2681 = vmand %vm2617, %vm2553
  %vm2682 = vmand %vm2618, %vm2554
  %vm2683 = vmand %vm2619, %vm2555
  %vm2684 = vmand %vm2620, %vm2556
  %vm2685 = vmand %vm2621, %vm2557
  %vm2686 = vmand %vm2622, %vm2558
  %vm2687 = vmand %vm2623, %vm2559
  %vm2688 = vmand %vm2624, %vm2560
  %vm2689 = vmand %vm2625, %vm2561
  %vm2690 = vmand %vm2626, %vm2562
  %vm2691 = vmand %vm2627, %vm2563
  %vm2692 = vmand %vm2628, %vm2564
  %vm2693 = vmand %vm2629, %vm2565
  %vm2694 = vmand %vm2630, %vm2566
  %vm2695 = vmand %vm2631, %vm2567
  %vm2696 = vmand %vm2632, %vm2568
  %vm2697 = vmand %vm2633, %vm2569
  %vm2698 = vmand %vm2634, %vm2570
  %vm2699 = vmand %vm2635, %vm2571
  %vm2700 = vmand %vm2636, %vm2572
  %vm2701 = vmand %vm2637, %vm2573
  %vm2702 = vmand %vm2638, %vm2574
  %vm2703 = vmand %vm2639, %vm2575
  %v2704 = vadd.s32 %v2070, 256
  %v2705 = vadd.s32 %v2077, 256
  %v2706 = vadd.s32 %v2084, 256
  %v2707 = vadd.s32 %v2091, 256
  %v2708 = vadd.s32 %v2098, 256
  %v2709 = vadd.s32 %v2105, 256
  %v2710 = vadd.s32 %v2112, 256
  %v2711 = vadd.s32 %v2119, 256
  %v2712 = vadd.s32 %v2126, 256
  %v2713 = vadd.s32 %v2133, 256
  %v2714 = vadd.s32 %v2140, 256
  %v2715 = vadd.s32 %v2147, 256
  %v2716 = vadd.s32 %v2154, 256
  %v2717 = vadd.s32 %v2161, 256
  %v2718 = vadd.s32 %v2168, 256
  %v2719 = vadd.s32 %v2175, 256
  %v2720 = vadd.s32 %v2182, 256
  %v2721 = vadd.s32 %v2189, 256
  %v2722 = vadd.s32 %v2196, 256
  %v2723 = vadd.s32 %v2203, 256
  %v2724 = vadd.s32 %v2210, 256
  %v2725 = vadd.s32 %v2217, 256
  %v2726 = vadd.s32 %v2224, 256
  %v2727 = vadd.s32 %v2231, 256
  %v2728 = vadd.s32 %v2238, 256
  %v2729 = vadd.s32 %v2245, 256
  %v2730 = vadd.s32 %v2252, 256
  %v2731 = vadd.s32 %v2259, 256
  %v2732 = vadd.s32 %v2266, 256
  %v2733 = vadd.s32 %v2273, 256
  %v2734 = vadd.s32 %v2280, 256
  %v2735 = vadd.s32 %v2287, 256
  %v2736 = vadd.s32 %v2294, 256
  %v2737 = vadd.s32 %v2301, 256
  %v2738 = vadd.s32 %v2308, 256
  %v2739 = vadd.s32 %v2315, 256
  %v2740 = vadd.s32 %v2322, 256
  %v2741 = vadd.s32 %v2329, 256
  %v2742 = vadd.s32 %v2336, 256
  %v2743 = vadd.s32 %v2343, 256
  %v2744 = vadd.s32 %v2350, 256
  %v2745 = vadd.s32 %v2357, 256
  %v2746 = vadd.s32 %v2364, 256
  %v2747 = vadd.s32 %v2371, 256
  %v2748 = vadd.s32 %v2378, 256
  %v2749 = vadd.s32 %v2385, 256
  %v2750 = vadd.s32 %v2392, 256
  %v2751 = vadd.s32 %v2399, 256
  %v2752 = vadd.s32 %v2406, 256
  %v2753 = vadd.s32 %v2413, 256
  %v2754 = vadd.s32 %v2420, 256
  %v2755 = vadd.s32 %v2427, 256
  %v2756 = vadd.s32 %v2434, 256
  %v2757 = vadd.s32 %v2441, 256
  %v2758 = vadd.s32 %v2448, 256
  %v2759 = vadd.s32 %v2455, 256
  %v2760 = vadd.s32 %v2462, 256
  %v2761 = vadd.s32 %v2469, 256
  %v2762 = vadd.s32 %v2476, 256
  %v2763 = vadd.s32 %v2483, 256
  %v2764 = vadd.s32 %v2490, 256
  %v2765 = vadd.s32 %v2497, 256
  %v2766 = vadd.s32 %v2504, 256
  %v2767 = vadd.s32 %v2511, 256
  %v2768 = vsel %vm2640, %v2704, %v2070
  %v2769 = vsel %vm2641, %v2705, %v2077
  %v2770 = vsel %vm2642, %v2706, %v2084
  %v2771 = vsel %vm2643, %v2707, %v2091
  %v2772 = vsel %vm2644, %v2708, %v2098
  %v2773 = vsel %vm2645, %v2709, %v2105
  %v2774 = vsel %vm2646, %v2710, %v2112
  %v2775 = vsel %vm2647, %v2711, %v2119
  %v2776 = vsel %vm2648, %v2712, %v2126
  %v2777 = vsel %vm2649, %v2713, %v2133
  %v2778 = vsel %vm2650, %v2714, %v2140
  %v2779 = vsel %vm2651, %v2715, %v2147
  %v2780 = vsel %vm2652, %v2716, %v2154
  %v2781 = vsel %vm2653, %v2717, %v2161
  %v2782 = vsel %vm2654, %v2718, %v2168
  %v2783 = vsel %vm2655, %v2719, %v2175
  %v2784 = vsel %vm2656, %v2720, %v2182
  %v2785 = vsel %vm2657, %v2721, %v2189
  %v2786 = vsel %vm2658, %v2722, %v2196
  %v2787 = vsel %vm2659, %v2723, %v2203
  %v2788 = vsel %vm2660, %v2724, %v2210
  %v2789 = vsel %vm2661, %v2725, %v2217
  %v2790 = vsel %vm2662, %v2726, %v2224
  %v2791 = vsel %vm2663, %v2727, %v2231
  %v2792 = vsel %vm2664, %v2728, %v2238
  %v2793 = vsel %vm2665, %v2729, %v2245
  %v2794 = vsel %vm2666, %v2730, %v2252
  %v2795 = vsel %vm2667, %v2731, %v2259
  %v2796 = vsel %vm2668, %v2732, %v2266
  %v2797 = vsel %vm2669, %v2733, %v2273
  %v2798 = vsel %vm2670, %v2734, %v2280
  %v2799 = vsel %vm2671, %v2735, %v2287
  %v2800 = vsel %vm2672, %v2736, %v2294
  %v2801 = vsel %vm2673, %v2737, %v2301
  %v2802 = vsel %vm2674, %v2738, %v2308
  %v2803 = vsel %vm2675, %v2739, %v2315
  %v2804 = vsel %vm2676, %v2740, %v2322
  %v2805 = vsel %vm2677, %v2741, %v2329
  %v2806 = vsel %vm2678, %v2742, %v2336
  %v2807 = vsel %vm2679, %v2743, %v2343
  %v2808 = vsel %vm2680, %v2744, %v2350
  %v2809 = vsel %vm2681, %v2745, %v2357
  %v2810 = vsel %vm2682, %v2746, %v2364
  %v2811 = vsel %vm2683, %v2747, %v2371
  %v2812 = vsel %vm2684, %v2748, %v2378
  %v2813 = vsel %vm2685, %v2749, %v2385
  %v2814 = vsel %vm2686, %v2750, %v2392
  %v2815 = vsel %vm2687, %v2751, %v2399
  %v2816 = vsel %vm2688, %v2752, %v2406
  %v2817 = vsel %vm2689, %v2753, %v2413
  %v2818 = vsel %vm2690, %v2754, %v2420
  %v2819 = vsel %vm2691, %v2755, %v2427
  %v2820 = vsel %vm2692, %v2756, %v2434
  %v2821 = vsel %vm2693, %v2757, %v2441
  %v2822 = vsel %vm2694, %v2758, %v2448
  %v2823 = vsel %vm2695, %v2759, %v2455
  %v2824 = vsel %vm2696, %v2760, %v2462
  %v2825 = vsel %vm2697, %v2761, %v2469
  %v2826 = vsel %vm2698, %v2762, %v2476
  %v2827 = vsel %vm2699, %v2763, %v2483
  %v2828 = vsel %vm2700, %v2764, %v2490
  %v2829 = vsel %vm2701, %v2765, %v2497
  %v2830 = vsel %vm2702, %v2766, %v2504
  %v2831 = vsel %vm2703, %v2767, %v2511
  %vm2832 = vcmp.lt.s32.totalorder %v2768, 121
  %vm2833 = vcmp.lt.s32.totalorder %v2769, 121
  %vm2834 = vcmp.lt.s32.totalorder %v2770, 121
  %vm2835 = vcmp.lt.s32.totalorder %v2771, 121
  %vm2836 = vcmp.lt.s32.totalorder %v2772, 121
  %vm2837 = vcmp.lt.s32.totalorder %v2773, 121
  %vm2838 = vcmp.lt.s32.totalorder %v2774, 121
  %vm2839 = vcmp.lt.s32.totalorder %v2775, 121
  %vm2840 = vcmp.lt.s32.totalorder %v2776, 121
  %vm2841 = vcmp.lt.s32.totalorder %v2777, 121
  %vm2842 = vcmp.lt.s32.totalorder %v2778, 121
  %vm2843 = vcmp.lt.s32.totalorder %v2779, 121
  %vm2844 = vcmp.lt.s32.totalorder %v2780, 121
  %vm2845 = vcmp.lt.s32.totalorder %v2781, 121
  %vm2846 = vcmp.lt.s32.totalorder %v2782, 121
  %vm2847 = vcmp.lt.s32.totalorder %v2783, 121
  %vm2848 = vcmp.lt.s32.totalorder %v2784, 121
  %vm2849 = vcmp.lt.s32.totalorder %v2785, 121
  %vm2850 = vcmp.lt.s32.totalorder %v2786, 121
  %vm2851 = vcmp.lt.s32.totalorder %v2787, 121
  %vm2852 = vcmp.lt.s32.totalorder %v2788, 121
  %vm2853 = vcmp.lt.s32.totalorder %v2789, 121
  %vm2854 = vcmp.lt.s32.totalorder %v2790, 121
  %vm2855 = vcmp.lt.s32.totalorder %v2791, 121
  %vm2856 = vcmp.lt.s32.totalorder %v2792, 121
  %vm2857 = vcmp.lt.s32.totalorder %v2793, 121
  %vm2858 = vcmp.lt.s32.totalorder %v2794, 121
  %vm2859 = vcmp.lt.s32.totalorder %v2795, 121
  %vm2860 = vcmp.lt.s32.totalorder %v2796, 121
  %vm2861 = vcmp.lt.s32.totalorder %v2797, 121
  %vm2862 = vcmp.lt.s32.totalorder %v2798, 121
  %vm2863 = vcmp.lt.s32.totalorder %v2799, 121
  %vm2864 = vcmp.lt.s32.totalorder %v2800, 121
  %vm2865 = vcmp.lt.s32.totalorder %v2801, 121
  %vm2866 = vcmp.lt.s32.totalorder %v2802, 121
  %vm2867 = vcmp.lt.s32.totalorder %v2803, 121
  %vm2868 = vcmp.lt.s32.totalorder %v2804, 121
  %vm2869 = vcmp.lt.s32.totalorder %v2805, 121
  %vm2870 = vcmp.lt.s32.totalorder %v2806, 121
  %vm2871 = vcmp.lt.s32.totalorder %v2807, 121
  %vm2872 = vcmp.lt.s32.totalorder %v2808, 121
  %vm2873 = vcmp.lt.s32.totalorder %v2809, 121
  %vm2874 = vcmp.lt.s32.totalorder %v2810, 121
  %vm2875 = vcmp.lt.s32.totalorder %v2811, 121
  %vm2876 = vcmp.lt.s32.totalorder %v2812, 121
  %vm2877 = vcmp.lt.s32.totalorder %v2813, 121
  %vm2878 = vcmp.lt.s32.totalorder %v2814, 121
  %vm2879 = vcmp.lt.s32.totalorder %v2815, 121
  %vm2880 = vcmp.lt.s32.totalorder %v2816, 121
  %vm2881 = vcmp.lt.s32.totalorder %v2817, 121
  %vm2882 = vcmp.lt.s32.totalorder %v2818, 121
  %vm2883 = vcmp.lt.s32.totalorder %v2819, 121
  %vm2884 = vcmp.lt.s32.totalorder %v2820, 121
  %vm2885 = vcmp.lt.s32.totalorder %v2821, 121
  %vm2886 = vcmp.lt.s32.totalorder %v2822, 121
  %vm2887 = vcmp.lt.s32.totalorder %v2823, 121
  %vm2888 = vcmp.lt.s32.totalorder %v2824, 121
  %vm2889 = vcmp.lt.s32.totalorder %v2825, 121
  %vm2890 = vcmp.lt.s32.totalorder %v2826, 121
  %vm2891 = vcmp.lt.s32.totalorder %v2827, 121
  %vm2892 = vcmp.lt.s32.totalorder %v2828, 121
  %vm2893 = vcmp.lt.s32.totalorder %v2829, 121
  %vm2894 = vcmp.lt.s32.totalorder %v2830, 121
  %vm2895 = vcmp.lt.s32.totalorder %v2831, 121
  %v2896 = vsel %vm2832, 1, 0
  %v2897 = vsel %vm2833, 1, 0
  %v2898 = vsel %vm2834, 1, 0
  %v2899 = vsel %vm2835, 1, 0
  %v2900 = vsel %vm2836, 1, 0
  %v2901 = vsel %vm2837, 1, 0
  %v2902 = vsel %vm2838, 1, 0
  %v2903 = vsel %vm2839, 1, 0
  %v2904 = vsel %vm2840, 1, 0
  %v2905 = vsel %vm2841, 1, 0
  %v2906 = vsel %vm2842, 1, 0
  %v2907 = vsel %vm2843, 1, 0
  %v2908 = vsel %vm2844, 1, 0
  %v2909 = vsel %vm2845, 1, 0
  %v2910 = vsel %vm2846, 1, 0
  %v2911 = vsel %vm2847, 1, 0
  %v2912 = vsel %vm2848, 1, 0
  %v2913 = vsel %vm2849, 1, 0
  %v2914 = vsel %vm2850, 1, 0
  %v2915 = vsel %vm2851, 1, 0
  %v2916 = vsel %vm2852, 1, 0
  %v2917 = vsel %vm2853, 1, 0
  %v2918 = vsel %vm2854, 1, 0
  %v2919 = vsel %vm2855, 1, 0
  %v2920 = vsel %vm2856, 1, 0
  %v2921 = vsel %vm2857, 1, 0
  %v2922 = vsel %vm2858, 1, 0
  %v2923 = vsel %vm2859, 1, 0
  %v2924 = vsel %vm2860, 1, 0
  %v2925 = vsel %vm2861, 1, 0
  %v2926 = vsel %vm2862, 1, 0
  %v2927 = vsel %vm2863, 1, 0
  %v2928 = vsel %vm2864, 1, 0
  %v2929 = vsel %vm2865, 1, 0
  %v2930 = vsel %vm2866, 1, 0
  %v2931 = vsel %vm2867, 1, 0
  %v2932 = vsel %vm2868, 1, 0
  %v2933 = vsel %vm2869, 1, 0
  %v2934 = vsel %vm2870, 1, 0
  %v2935 = vsel %vm2871, 1, 0
  %v2936 = vsel %vm2872, 1, 0
  %v2937 = vsel %vm2873, 1, 0
  %v2938 = vsel %vm2874, 1, 0
  %v2939 = vsel %vm2875, 1, 0
  %v2940 = vsel %vm2876, 1, 0
  %v2941 = vsel %vm2877, 1, 0
  %v2942 = vsel %vm2878, 1, 0
  %v2943 = vsel %vm2879, 1, 0
  %v2944 = vsel %vm2880, 1, 0
  %v2945 = vsel %vm2881, 1, 0
  %v2946 = vsel %vm2882, 1, 0
  %v2947 = vsel %vm2883, 1, 0
  %v2948 = vsel %vm2884, 1, 0
  %v2949 = vsel %vm2885, 1, 0
  %v2950 = vsel %vm2886, 1, 0
  %v2951 = vsel %vm2887, 1, 0
  %v2952 = vsel %vm2888, 1, 0
  %v2953 = vsel %vm2889, 1, 0
  %v2954 = vsel %vm2890, 1, 0
  %v2955 = vsel %vm2891, 1, 0
  %v2956 = vsel %vm2892, 1, 0
  %v2957 = vsel %vm2893, 1, 0
  %v2958 = vsel %vm2894, 1, 0
  %v2959 = vsel %vm2895, 1, 0
  %vm2960 = vcmp.eq.s32.totalorder %v2896, 1
  %vm2961 = vcmp.eq.s32.totalorder %v2897, 1
  %vm2962 = vcmp.eq.s32.totalorder %v2898, 1
  %vm2963 = vcmp.eq.s32.totalorder %v2899, 1
  %vm2964 = vcmp.eq.s32.totalorder %v2900, 1
  %vm2965 = vcmp.eq.s32.totalorder %v2901, 1
  %vm2966 = vcmp.eq.s32.totalorder %v2902, 1
  %vm2967 = vcmp.eq.s32.totalorder %v2903, 1
  %vm2968 = vcmp.eq.s32.totalorder %v2904, 1
  %vm2969 = vcmp.eq.s32.totalorder %v2905, 1
  %vm2970 = vcmp.eq.s32.totalorder %v2906, 1
  %vm2971 = vcmp.eq.s32.totalorder %v2907, 1
  %vm2972 = vcmp.eq.s32.totalorder %v2908, 1
  %vm2973 = vcmp.eq.s32.totalorder %v2909, 1
  %vm2974 = vcmp.eq.s32.totalorder %v2910, 1
  %vm2975 = vcmp.eq.s32.totalorder %v2911, 1
  %vm2976 = vcmp.eq.s32.totalorder %v2912, 1
  %vm2977 = vcmp.eq.s32.totalorder %v2913, 1
  %vm2978 = vcmp.eq.s32.totalorder %v2914, 1
  %vm2979 = vcmp.eq.s32.totalorder %v2915, 1
  %vm2980 = vcmp.eq.s32.totalorder %v2916, 1
  %vm2981 = vcmp.eq.s32.totalorder %v2917, 1
  %vm2982 = vcmp.eq.s32.totalorder %v2918, 1
  %vm2983 = vcmp.eq.s32.totalorder %v2919, 1
  %vm2984 = vcmp.eq.s32.totalorder %v2920, 1
  %vm2985 = vcmp.eq.s32.totalorder %v2921, 1
  %vm2986 = vcmp.eq.s32.totalorder %v2922, 1
  %vm2987 = vcmp.eq.s32.totalorder %v2923, 1
  %vm2988 = vcmp.eq.s32.totalorder %v2924, 1
  %vm2989 = vcmp.eq.s32.totalorder %v2925, 1
  %vm2990 = vcmp.eq.s32.totalorder %v2926, 1
  %vm2991 = vcmp.eq.s32.totalorder %v2927, 1
  %vm2992 = vcmp.eq.s32.totalorder %v2928, 1
  %vm2993 = vcmp.eq.s32.totalorder %v2929, 1
  %vm2994 = vcmp.eq.s32.totalorder %v2930, 1
  %vm2995 = vcmp.eq.s32.totalorder %v2931, 1
  %vm2996 = vcmp.eq.s32.totalorder %v2932, 1
  %vm2997 = vcmp.eq.s32.totalorder %v2933, 1
  %vm2998 = vcmp.eq.s32.totalorder %v2934, 1
  %vm2999 = vcmp.eq.s32.totalorder %v2935, 1
  %vm3000 = vcmp.eq.s32.totalorder %v2936, 1
  %vm3001 = vcmp.eq.s32.totalorder %v2937, 1
  %vm3002 = vcmp.eq.s32.totalorder %v2938, 1
  %vm3003 = vcmp.eq.s32.totalorder %v2939, 1
  %vm3004 = vcmp.eq.s32.totalorder %v2940, 1
  %vm3005 = vcmp.eq.s32.totalorder %v2941, 1
  %vm3006 = vcmp.eq.s32.totalorder %v2942, 1
  %vm3007 = vcmp.eq.s32.totalorder %v2943, 1
  %vm3008 = vcmp.eq.s32.totalorder %v2944, 1
  %vm3009 = vcmp.eq.s32.totalorder %v2945, 1
  %vm3010 = vcmp.eq.s32.totalorder %v2946, 1
  %vm3011 = vcmp.eq.s32.totalorder %v2947, 1
  %vm3012 = vcmp.eq.s32.totalorder %v2948, 1
  %vm3013 = vcmp.eq.s32.totalorder %v2949, 1
  %vm3014 = vcmp.eq.s32.totalorder %v2950, 1
  %vm3015 = vcmp.eq.s32.totalorder %v2951, 1
  %vm3016 = vcmp.eq.s32.totalorder %v2952, 1
  %vm3017 = vcmp.eq.s32.totalorder %v2953, 1
  %vm3018 = vcmp.eq.s32.totalorder %v2954, 1
  %vm3019 = vcmp.eq.s32.totalorder %v2955, 1
  %vm3020 = vcmp.eq.s32.totalorder %v2956, 1
  %vm3021 = vcmp.eq.s32.totalorder %v2957, 1
  %vm3022 = vcmp.eq.s32.totalorder %v2958, 1
  %vm3023 = vcmp.eq.s32.totalorder %v2959, 1
  %v3024 = vsel %vm2960, %v1935, 0.0
  %v3025 = vsel %vm2961, %v1936, 0.0
  %v3026 = vsel %vm2962, %v1937, 0.0
  %v3027 = vsel %vm2963, %v1938, 0.0
  %v3028 = vsel %vm2964, %v1939, 0.0
  %v3029 = vsel %vm2965, %v1940, 0.0
  %v3030 = vsel %vm2966, %v1941, 0.0
  %v3031 = vsel %vm2967, %v1942, 0.0
  %v3032 = vsel %vm2968, %v1943, 0.0
  %v3033 = vsel %vm2969, %v1944, 0.0
  %v3034 = vsel %vm2970, %v1945, 0.0
  %v3035 = vsel %vm2971, %v1946, 0.0
  %v3036 = vsel %vm2972, %v1947, 0.0
  %v3037 = vsel %vm2973, %v1948, 0.0
  %v3038 = vsel %vm2974, %v1949, 0.0
  %v3039 = vsel %vm2975, %v1950, 0.0
  %v3040 = vsel %vm2976, %v1951, 0.0
  %v3041 = vsel %vm2977, %v1952, 0.0
  %v3042 = vsel %vm2978, %v1953, 0.0
  %v3043 = vsel %vm2979, %v1954, 0.0
  %v3044 = vsel %vm2980, %v1955, 0.0
  %v3045 = vsel %vm2981, %v1956, 0.0
  %v3046 = vsel %vm2982, %v1957, 0.0
  %v3047 = vsel %vm2983, %v1958, 0.0
  %v3048 = vsel %vm2984, %v1959, 0.0
  %v3049 = vsel %vm2985, %v1960, 0.0
  %v3050 = vsel %vm2986, %v1961, 0.0
  %v3051 = vsel %vm2987, %v1962, 0.0
  %v3052 = vsel %vm2988, %v1963, 0.0
  %v3053 = vsel %vm2989, %v1964, 0.0
  %v3054 = vsel %vm2990, %v1965, 0.0
  %v3055 = vsel %vm2991, %v1966, 0.0
  %v3056 = vsel %vm2992, %v1967, 0.0
  %v3057 = vsel %vm2993, %v1968, 0.0
  %v3058 = vsel %vm2994, %v1969, 0.0
  %v3059 = vsel %vm2995, %v1970, 0.0
  %v3060 = vsel %vm2996, %v1971, 0.0
  %v3061 = vsel %vm2997, %v1972, 0.0
  %v3062 = vsel %vm2998, %v1973, 0.0
  %v3063 = vsel %vm2999, %v1974, 0.0
  %v3064 = vsel %vm3000, %v1975, 0.0
  %v3065 = vsel %vm3001, %v1976, 0.0
  %v3066 = vsel %vm3002, %v1977, 0.0
  %v3067 = vsel %vm3003, %v1978, 0.0
  %v3068 = vsel %vm3004, %v1979, 0.0
  %v3069 = vsel %vm3005, %v1980, 0.0
  %v3070 = vsel %vm3006, %v1981, 0.0
  %v3071 = vsel %vm3007, %v1982, 0.0
  %v3072 = vsel %vm3008, %v1983, 0.0
  %v3073 = vsel %vm3009, %v1984, 0.0
  %v3074 = vsel %vm3010, %v1985, 0.0
  %v3075 = vsel %vm3011, %v1986, 0.0
  %v3076 = vsel %vm3012, %v1987, 0.0
  %v3077 = vsel %vm3013, %v1988, 0.0
  %v3078 = vsel %vm3014, %v1989, 0.0
  %v3079 = vsel %vm3015, %v1990, 0.0
  %v3080 = vsel %vm3016, %v1991, 0.0
  %v3081 = vsel %vm3017, %v1992, 0.0
  %v3082 = vsel %vm3018, %v1993, 0.0
  %v3083 = vsel %vm3019, %v1994, 0.0
  %v3084 = vsel %vm3020, %v1995, 0.0
  %v3085 = vsel %vm3021, %v1996, 0.0
  %v3086 = vsel %vm3022, %v1997, 0.0
  %v3087 = vsel %vm3023, %v1998, 0.0
  %v3088 = vadd.f32 %v3024, %v3025
  %v3089 = vadd.f32 %v3088, %v3026
  %v3090 = vadd.f32 %v3089, %v3027
  %v3091 = vadd.f32 %v3090, %v3028
  %v3092 = vadd.f32 %v3091, %v3029
  %v3093 = vadd.f32 %v3092, %v3030
  %v3094 = vadd.f32 %v3093, %v3031
  %v3095 = vadd.f32 %v3094, %v3032
  %v3096 = vadd.f32 %v3095, %v3033
  %v3097 = vadd.f32 %v3096, %v3034
  %v3098 = vadd.f32 %v3097, %v3035
  %v3099 = vadd.f32 %v3098, %v3036
  %v3100 = vadd.f32 %v3099, %v3037
  %v3101 = vadd.f32 %v3100, %v3038
  %v3102 = vadd.f32 %v3101, %v3039
  %v3103 = vadd.f32 %v3102, %v3040
  %v3104 = vadd.f32 %v3103, %v3041
  %v3105 = vadd.f32 %v3104, %v3042
  %v3106 = vadd.f32 %v3105, %v3043
  %v3107 = vadd.f32 %v3106, %v3044
  %v3108 = vadd.f32 %v3107, %v3045
  %v3109 = vadd.f32 %v3108, %v3046
  %v3110 = vadd.f32 %v3109, %v3047
  %v3111 = vadd.f32 %v3110, %v3048
  %v3112 = vadd.f32 %v3111, %v3049
  %v3113 = vadd.f32 %v3112, %v3050
  %v3114 = vadd.f32 %v3113, %v3051
  %v3115 = vadd.f32 %v3114, %v3052
  %v3116 = vadd.f32 %v3115, %v3053
  %v3117 = vadd.f32 %v3116, %v3054
  %v3118 = vadd.f32 %v3117, %v3055
  %v3119 = vadd.f32 %v3118, %v3056
  %v3120 = vadd.f32 %v3119, %v3057
  %v3121 = vadd.f32 %v3120, %v3058
  %v3122 = vadd.f32 %v3121, %v3059
  %v3123 = vadd.f32 %v3122, %v3060
  %v3124 = vadd.f32 %v3123, %v3061
  %v3125 = vadd.f32 %v3124, %v3062
  %v3126 = vadd.f32 %v3125, %v3063
  %v3127 = vadd.f32 %v3126, %v3064
  %v3128 = vadd.f32 %v3127, %v3065
  %v3129 = vadd.f32 %v3128, %v3066
  %v3130 = vadd.f32 %v3129, %v3067
  %v3131 = vadd.f32 %v3130, %v3068
  %v3132 = vadd.f32 %v3131, %v3069
  %v3133 = vadd.f32 %v3132, %v3070
  %v3134 = vadd.f32 %v3133, %v3071
  %v3135 = vadd.f32 %v3134, %v3072
  %v3136 = vadd.f32 %v3135, %v3073
  %v3137 = vadd.f32 %v3136, %v3074
  %v3138 = vadd.f32 %v3137, %v3075
  %v3139 = vadd.f32 %v3138, %v3076
  %v3140 = vadd.f32 %v3139, %v3077
  %v3141 = vadd.f32 %v3140, %v3078
  %v3142 = vadd.f32 %v3141, %v3079
  %v3143 = vadd.f32 %v3142, %v3080
  %v3144 = vadd.f32 %v3143, %v3081
  %v3145 = vadd.f32 %v3144, %v3082
  %v3146 = vadd.f32 %v3145, %v3083
  %v3147 = vadd.f32 %v3146, %v3084
  %v3148 = vadd.f32 %v3147, %v3085
  %v3149 = vadd.f32 %v3148, %v3086
  %v3150 = vadd.f32 %v3149, %v3087
  %v3151 = vrot.slane %v3150, 4
  %v3152 = vadd.f32 %v3150, %v3151
  %v3153 = vrot.slane %v3152, 2
  %v3154 = vadd.f32 %v3152, %v3153
  %v3155 = vrot.slane %v3154, 1
  %v3156 = vadd.f32 %v3154, %v3155
  %v3157 = vmul.f32 %v3156, 0.004132231
  %v3158 = vmul.f32 %v3024, %v3024
  %v3159 = vmul.f32 %v3025, %v3025
  %v3160 = vmul.f32 %v3026, %v3026
  %v3161 = vmul.f32 %v3027, %v3027
  %v3162 = vmul.f32 %v3028, %v3028
  %v3163 = vmul.f32 %v3029, %v3029
  %v3164 = vmul.f32 %v3030, %v3030
  %v3165 = vmul.f32 %v3031, %v3031
  %v3166 = vmul.f32 %v3032, %v3032
  %v3167 = vmul.f32 %v3033, %v3033
  %v3168 = vmul.f32 %v3034, %v3034
  %v3169 = vmul.f32 %v3035, %v3035
  %v3170 = vmul.f32 %v3036, %v3036
  %v3171 = vmul.f32 %v3037, %v3037
  %v3172 = vmul.f32 %v3038, %v3038
  %v3173 = vmul.f32 %v3039, %v3039
  %v3174 = vmul.f32 %v3040, %v3040
  %v3175 = vmul.f32 %v3041, %v3041
  %v3176 = vmul.f32 %v3042, %v3042
  %v3177 = vmul.f32 %v3043, %v3043
  %v3178 = vmul.f32 %v3044, %v3044
  %v3179 = vmul.f32 %v3045, %v3045
  %v3180 = vmul.f32 %v3046, %v3046
  %v3181 = vmul.f32 %v3047, %v3047
  %v3182 = vmul.f32 %v3048, %v3048
  %v3183 = vmul.f32 %v3049, %v3049
  %v3184 = vmul.f32 %v3050, %v3050
  %v3185 = vmul.f32 %v3051, %v3051
  %v3186 = vmul.f32 %v3052, %v3052
  %v3187 = vmul.f32 %v3053, %v3053
  %v3188 = vmul.f32 %v3054, %v3054
  %v3189 = vmul.f32 %v3055, %v3055
  %v3190 = vmul.f32 %v3056, %v3056
  %v3191 = vmul.f32 %v3057, %v3057
  %v3192 = vmul.f32 %v3058, %v3058
  %v3193 = vmul.f32 %v3059, %v3059
  %v3194 = vmul.f32 %v3060, %v3060
  %v3195 = vmul.f32 %v3061, %v3061
  %v3196 = vmul.f32 %v3062, %v3062
  %v3197 = vmul.f32 %v3063, %v3063
  %v3198 = vmul.f32 %v3064, %v3064
  %v3199 = vmul.f32 %v3065, %v3065
  %v3200 = vmul.f32 %v3066, %v3066
  %v3201 = vmul.f32 %v3067, %v3067
  %v3202 = vmul.f32 %v3068, %v3068
  %v3203 = vmul.f32 %v3069, %v3069
  %v3204 = vmul.f32 %v3070, %v3070
  %v3205 = vmul.f32 %v3071, %v3071
  %v3206 = vmul.f32 %v3072, %v3072
  %v3207 = vmul.f32 %v3073, %v3073
  %v3208 = vmul.f32 %v3074, %v3074
  %v3209 = vmul.f32 %v3075, %v3075
  %v3210 = vmul.f32 %v3076, %v3076
  %v3211 = vmul.f32 %v3077, %v3077
  %v3212 = vmul.f32 %v3078, %v3078
  %v3213 = vmul.f32 %v3079, %v3079
  %v3214 = vmul.f32 %v3080, %v3080
  %v3215 = vmul.f32 %v3081, %v3081
  %v3216 = vmul.f32 %v3082, %v3082
  %v3217 = vmul.f32 %v3083, %v3083
  %v3218 = vmul.f32 %v3084, %v3084
  %v3219 = vmul.f32 %v3085, %v3085
  %v3220 = vmul.f32 %v3086, %v3086
  %v3221 = vmul.f32 %v3087, %v3087
  %v3222 = vadd.f32 %v3158, %v3159
  %v3223 = vadd.f32 %v3222, %v3160
  %v3224 = vadd.f32 %v3223, %v3161
  %v3225 = vadd.f32 %v3224, %v3162
  %v3226 = vadd.f32 %v3225, %v3163
  %v3227 = vadd.f32 %v3226, %v3164
  %v3228 = vadd.f32 %v3227, %v3165
  %v3229 = vadd.f32 %v3228, %v3166
  %v3230 = vadd.f32 %v3229, %v3167
  %v3231 = vadd.f32 %v3230, %v3168
  %v3232 = vadd.f32 %v3231, %v3169
  %v3233 = vadd.f32 %v3232, %v3170
  %v3234 = vadd.f32 %v3233, %v3171
  %v3235 = vadd.f32 %v3234, %v3172
  %v3236 = vadd.f32 %v3235, %v3173
  %v3237 = vadd.f32 %v3236, %v3174
  %v3238 = vadd.f32 %v3237, %v3175
  %v3239 = vadd.f32 %v3238, %v3176
  %v3240 = vadd.f32 %v3239, %v3177
  %v3241 = vadd.f32 %v3240, %v3178
  %v3242 = vadd.f32 %v3241, %v3179
  %v3243 = vadd.f32 %v3242, %v3180
  %v3244 = vadd.f32 %v3243, %v3181
  %v3245 = vadd.f32 %v3244, %v3182
  %v3246 = vadd.f32 %v3245, %v3183
  %v3247 = vadd.f32 %v3246, %v3184
  %v3248 = vadd.f32 %v3247, %v3185
  %v3249 = vadd.f32 %v3248, %v3186
  %v3250 = vadd.f32 %v3249, %v3187
  %v3251 = vadd.f32 %v3250, %v3188
  %v3252 = vadd.f32 %v3251, %v3189
  %v3253 = vadd.f32 %v3252, %v3190
  %v3254 = vadd.f32 %v3253, %v3191
  %v3255 = vadd.f32 %v3254, %v3192
  %v3256 = vadd.f32 %v3255, %v3193
  %v3257 = vadd.f32 %v3256, %v3194
  %v3258 = vadd.f32 %v3257, %v3195
  %v3259 = vadd.f32 %v3258, %v3196
  %v3260 = vadd.f32 %v3259, %v3197
  %v3261 = vadd.f32 %v3260, %v3198
  %v3262 = vadd.f32 %v3261, %v3199
  %v3263 = vadd.f32 %v3262, %v3200
  %v3264 = vadd.f32 %v3263, %v3201
  %v3265 = vadd.f32 %v3264, %v3202
  %v3266 = vadd.f32 %v3265, %v3203
  %v3267 = vadd.f32 %v3266, %v3204
  %v3268 = vadd.f32 %v3267, %v3205
  %v3269 = vadd.f32 %v3268, %v3206
  %v3270 = vadd.f32 %v3269, %v3207
  %v3271 = vadd.f32 %v3270, %v3208
  %v3272 = vadd.f32 %v3271, %v3209
  %v3273 = vadd.f32 %v3272, %v3210
  %v3274 = vadd.f32 %v3273, %v3211
  %v3275 = vadd.f32 %v3274, %v3212
  %v3276 = vadd.f32 %v3275, %v3213
  %v3277 = vadd.f32 %v3276, %v3214
  %v3278 = vadd.f32 %v3277, %v3215
  %v3279 = vadd.f32 %v3278, %v3216
  %v3280 = vadd.f32 %v3279, %v3217
  %v3281 = vadd.f32 %v3280, %v3218
  %v3282 = vadd.f32 %v3281, %v3219
  %v3283 = vadd.f32 %v3282, %v3220
  %v3284 = vadd.f32 %v3283, %v3221
  %v3285 = vrot.slane %v3284, 4
  %v3286 = vadd.f32 %v3284, %v3285
  %v3287 = vrot.slane %v3286, 2
  %v3288 = vadd.f32 %v3286, %v3287
  %v3289 = vrot.slane %v3288, 1
  %v3290 = vadd.f32 %v3288, %v3289
  %v3291 = vmul.f32 %v3290, 0.004132231
  %v3292 = vmul.f32 %v3157, %v3157
  %v3293 = vsub.f32 %v3291, %v3292
  %v3294 = vadd.f32 %v3293, 1e-05
  %v3295 = vrsqrt.pop %v3294
  %v3296 = vld [vmem:[%s2 + $0x1] sm:$0x1]
  %v3297 = vmul.f32 %v3295, %v3296
  %v3298 = vsub.f32 %v1935, %v3157
  %v3299 = vsub.f32 %v1936, %v3157
  %v3300 = vsub.f32 %v1937, %v3157
  %v3301 = vsub.f32 %v1938, %v3157
  %v3302 = vsub.f32 %v1939, %v3157
  %v3303 = vsub.f32 %v1940, %v3157
  %v3304 = vsub.f32 %v1941, %v3157
  %v3305 = vsub.f32 %v1942, %v3157
  %v3306 = vsub.f32 %v1943, %v3157
  %v3307 = vsub.f32 %v1944, %v3157
  %v3308 = vsub.f32 %v1945, %v3157
  %v3309 = vsub.f32 %v1946, %v3157
  %v3310 = vsub.f32 %v1947, %v3157
  %v3311 = vsub.f32 %v1948, %v3157
  %v3312 = vsub.f32 %v1949, %v3157
  %v3313 = vsub.f32 %v1950, %v3157
  %v3314 = vsub.f32 %v1951, %v3157
  %v3315 = vsub.f32 %v1952, %v3157
  %v3316 = vsub.f32 %v1953, %v3157
  %v3317 = vsub.f32 %v1954, %v3157
  %v3318 = vsub.f32 %v1955, %v3157
  %v3319 = vsub.f32 %v1956, %v3157
  %v3320 = vsub.f32 %v1957, %v3157
  %v3321 = vsub.f32 %v1958, %v3157
  %v3322 = vsub.f32 %v1959, %v3157
  %v3323 = vsub.f32 %v1960, %v3157
  %v3324 = vsub.f32 %v1961, %v3157
  %v3325 = vsub.f32 %v1962, %v3157
  %v3326 = vsub.f32 %v1963, %v3157
  %v3327 = vsub.f32 %v1964, %v3157
  %v3328 = vsub.f32 %v1965, %v3157
  %v3329 = vsub.f32 %v1966, %v3157
  %v3330 = vsub.f32 %v1967, %v3157
  %v3331 = vsub.f32 %v1968, %v3157
  %v3332 = vsub.f32 %v1969, %v3157
  %v3333 = vsub.f32 %v1970, %v3157
  %v3334 = vsub.f32 %v1971, %v3157
  %v3335 = vsub.f32 %v1972, %v3157
  %v3336 = vsub.f32 %v1973, %v3157
  %v3337 = vsub.f32 %v1974, %v3157
  %v3338 = vsub.f32 %v1975, %v3157
  %v3339 = vsub.f32 %v1976, %v3157
  %v3340 = vsub.f32 %v1977, %v3157
  %v3341 = vsub.f32 %v1978, %v3157
  %v3342 = vsub.f32 %v1979, %v3157
  %v3343 = vsub.f32 %v1980, %v3157
  %v3344 = vsub.f32 %v1981, %v3157
  %v3345 = vsub.f32 %v1982, %v3157
  %v3346 = vsub.f32 %v1983, %v3157
  %v3347 = vsub.f32 %v1984, %v3157
  %v3348 = vsub.f32 %v1985, %v3157
  %v3349 = vsub.f32 %v1986, %v3157
  %v3350 = vsub.f32 %v1987, %v3157
  %v3351 = vsub.f32 %v1988, %v3157
  %v3352 = vsub.f32 %v1989, %v3157
  %v3353 = vsub.f32 %v1990, %v3157
  %v3354 = vsub.f32 %v1991, %v3157
  %v3355 = vsub.f32 %v1992, %v3157
  %v3356 = vsub.f32 %v1993, %v3157
  %v3357 = vsub.f32 %v1994, %v3157
  %v3358 = vsub.f32 %v1995, %v3157
  %v3359 = vsub.f32 %v1996, %v3157
  %v3360 = vsub.f32 %v1997, %v3157
  %v3361 = vsub.f32 %v1998, %v3157
  %v3362 = vlaneseq
  %v3363 = vshrl.u32 %v3362, 7
  %v3364 = vsub.s32 0, %v3363
  %v3365 = vrot.slane %v3297, %v3364
  %v3366 = vmul.f32 %v3298, %v3365
  %v3367 = vmul.f32 %v3299, %v3365
  %v3368 = vmul.f32 %v3300, %v3365
  %v3369 = vmul.f32 %v3301, %v3365
  %v3370 = vmul.f32 %v3302, %v3365
  %v3371 = vmul.f32 %v3303, %v3365
  %v3372 = vmul.f32 %v3304, %v3365
  %v3373 = vmul.f32 %v3305, %v3365
  %v3374 = vmul.f32 %v3306, %v3365
  %v3375 = vmul.f32 %v3307, %v3365
  %v3376 = vmul.f32 %v3308, %v3365
  %v3377 = vmul.f32 %v3309, %v3365
  %v3378 = vmul.f32 %v3310, %v3365
  %v3379 = vmul.f32 %v3311, %v3365
  %v3380 = vmul.f32 %v3312, %v3365
  %v3381 = vmul.f32 %v3313, %v3365
  %v3382 = vmul.f32 %v3314, %v3365
  %v3383 = vmul.f32 %v3315, %v3365
  %v3384 = vmul.f32 %v3316, %v3365
  %v3385 = vmul.f32 %v3317, %v3365
  %v3386 = vmul.f32 %v3318, %v3365
  %v3387 = vmul.f32 %v3319, %v3365
  %v3388 = vmul.f32 %v3320, %v3365
  %v3389 = vmul.f32 %v3321, %v3365
  %v3390 = vmul.f32 %v3322, %v3365
  %v3391 = vmul.f32 %v3323, %v3365
  %v3392 = vmul.f32 %v3324, %v3365
  %v3393 = vmul.f32 %v3325, %v3365
  %v3394 = vmul.f32 %v3326, %v3365
  %v3395 = vmul.f32 %v3327, %v3365
  %v3396 = vmul.f32 %v3328, %v3365
  %v3397 = vmul.f32 %v3329, %v3365
  %v3398 = vmul.f32 %v3330, %v3365
  %v3399 = vmul.f32 %v3331, %v3365
  %v3400 = vmul.f32 %v3332, %v3365
  %v3401 = vmul.f32 %v3333, %v3365
  %v3402 = vmul.f32 %v3334, %v3365
  %v3403 = vmul.f32 %v3335, %v3365
  %v3404 = vmul.f32 %v3336, %v3365
  %v3405 = vmul.f32 %v3337, %v3365
  %v3406 = vmul.f32 %v3338, %v3365
  %v3407 = vmul.f32 %v3339, %v3365
  %v3408 = vmul.f32 %v3340, %v3365
  %v3409 = vmul.f32 %v3341, %v3365
  %v3410 = vmul.f32 %v3342, %v3365
  %v3411 = vmul.f32 %v3343, %v3365
  %v3412 = vmul.f32 %v3344, %v3365
  %v3413 = vmul.f32 %v3345, %v3365
  %v3414 = vmul.f32 %v3346, %v3365
  %v3415 = vmul.f32 %v3347, %v3365
  %v3416 = vmul.f32 %v3348, %v3365
  %v3417 = vmul.f32 %v3349, %v3365
  %v3418 = vmul.f32 %v3350, %v3365
  %v3419 = vmul.f32 %v3351, %v3365
  %v3420 = vmul.f32 %v3352, %v3365
  %v3421 = vmul.f32 %v3353, %v3365
  %v3422 = vmul.f32 %v3354, %v3365
  %v3423 = vmul.f32 %v3355, %v3365
  %v3424 = vmul.f32 %v3356, %v3365
  %v3425 = vmul.f32 %v3357, %v3365
  %v3426 = vmul.f32 %v3358, %v3365
  %v3427 = vmul.f32 %v3359, %v3365
  %v3428 = vmul.f32 %v3360, %v3365
  %v3429 = vmul.f32 %v3361, %v3365
  %v3430 = vld [vmem:[%s2 + $0x2] sm:$0x1]
  %v3431 = vlaneseq
  %v3432 = vshrl.u32 %v3431, 7
  %v3433 = vsub.s32 0, %v3432
  %v3434 = vrot.slane %v3430, %v3433
  %v3435 = vadd.f32 %v3366, %v3434
  %v3436 = vadd.f32 %v3367, %v3434
  %v3437 = vadd.f32 %v3368, %v3434
  %v3438 = vadd.f32 %v3369, %v3434
  %v3439 = vadd.f32 %v3370, %v3434
  %v3440 = vadd.f32 %v3371, %v3434
  %v3441 = vadd.f32 %v3372, %v3434
  %v3442 = vadd.f32 %v3373, %v3434
  %v3443 = vadd.f32 %v3374, %v3434
  %v3444 = vadd.f32 %v3375, %v3434
  %v3445 = vadd.f32 %v3376, %v3434
  %v3446 = vadd.f32 %v3377, %v3434
  %v3447 = vadd.f32 %v3378, %v3434
  %v3448 = vadd.f32 %v3379, %v3434
  %v3449 = vadd.f32 %v3380, %v3434
  %v3450 = vadd.f32 %v3381, %v3434
  %v3451 = vadd.f32 %v3382, %v3434
  %v3452 = vadd.f32 %v3383, %v3434
  %v3453 = vadd.f32 %v3384, %v3434
  %v3454 = vadd.f32 %v3385, %v3434
  %v3455 = vadd.f32 %v3386, %v3434
  %v3456 = vadd.f32 %v3387, %v3434
  %v3457 = vadd.f32 %v3388, %v3434
  %v3458 = vadd.f32 %v3389, %v3434
  %v3459 = vadd.f32 %v3390, %v3434
  %v3460 = vadd.f32 %v3391, %v3434
  %v3461 = vadd.f32 %v3392, %v3434
  %v3462 = vadd.f32 %v3393, %v3434
  %v3463 = vadd.f32 %v3394, %v3434
  %v3464 = vadd.f32 %v3395, %v3434
  %v3465 = vadd.f32 %v3396, %v3434
  %v3466 = vadd.f32 %v3397, %v3434
  %v3467 = vadd.f32 %v3398, %v3434
  %v3468 = vadd.f32 %v3399, %v3434
  %v3469 = vadd.f32 %v3400, %v3434
  %v3470 = vadd.f32 %v3401, %v3434
  %v3471 = vadd.f32 %v3402, %v3434
  %v3472 = vadd.f32 %v3403, %v3434
  %v3473 = vadd.f32 %v3404, %v3434
  %v3474 = vadd.f32 %v3405, %v3434
  %v3475 = vadd.f32 %v3406, %v3434
  %v3476 = vadd.f32 %v3407, %v3434
  %v3477 = vadd.f32 %v3408, %v3434
  %v3478 = vadd.f32 %v3409, %v3434
  %v3479 = vadd.f32 %v3410, %v3434
  %v3480 = vadd.f32 %v3411, %v3434
  %v3481 = vadd.f32 %v3412, %v3434
  %v3482 = vadd.f32 %v3413, %v3434
  %v3483 = vadd.f32 %v3414, %v3434
  %v3484 = vadd.f32 %v3415, %v3434
  %v3485 = vadd.f32 %v3416, %v3434
  %v3486 = vadd.f32 %v3417, %v3434
  %v3487 = vadd.f32 %v3418, %v3434
  %v3488 = vadd.f32 %v3419, %v3434
  %v3489 = vadd.f32 %v3420, %v3434
  %v3490 = vadd.f32 %v3421, %v3434
  %v3491 = vadd.f32 %v3422, %v3434
  %v3492 = vadd.f32 %v3423, %v3434
  %v3493 = vadd.f32 %v3424, %v3434
  %v3494 = vadd.f32 %v3425, %v3434
  %v3495 = vadd.f32 %v3426, %v3434
  %v3496 = vadd.f32 %v3427, %v3434
  %v3497 = vadd.f32 %v3428, %v3434
  %v3498 = vadd.f32 %v3429, %v3434
  %v3499 = vmax.f32 %v3435, 0.0
  %v3500 = vmax.f32 %v3436, 0.0
  %v3501 = vmax.f32 %v3437, 0.0
  %v3502 = vmax.f32 %v3438, 0.0
  %v3503 = vmax.f32 %v3439, 0.0
  %v3504 = vmax.f32 %v3440, 0.0
  %v3505 = vmax.f32 %v3441, 0.0
  %v3506 = vmax.f32 %v3442, 0.0
  %v3507 = vmax.f32 %v3443, 0.0
  %v3508 = vmax.f32 %v3444, 0.0
  %v3509 = vmax.f32 %v3445, 0.0
  %v3510 = vmax.f32 %v3446, 0.0
  %v3511 = vmax.f32 %v3447, 0.0
  %v3512 = vmax.f32 %v3448, 0.0
  %v3513 = vmax.f32 %v3449, 0.0
  %v3514 = vmax.f32 %v3450, 0.0
  %v3515 = vmax.f32 %v3451, 0.0
  %v3516 = vmax.f32 %v3452, 0.0
  %v3517 = vmax.f32 %v3453, 0.0
  %v3518 = vmax.f32 %v3454, 0.0
  %v3519 = vmax.f32 %v3455, 0.0
  %v3520 = vmax.f32 %v3456, 0.0
  %v3521 = vmax.f32 %v3457, 0.0
  %v3522 = vmax.f32 %v3458, 0.0
  %v3523 = vmax.f32 %v3459, 0.0
  %v3524 = vmax.f32 %v3460, 0.0
  %v3525 = vmax.f32 %v3461, 0.0
  %v3526 = vmax.f32 %v3462, 0.0
  %v3527 = vmax.f32 %v3463, 0.0
  %v3528 = vmax.f32 %v3464, 0.0
  %v3529 = vmax.f32 %v3465, 0.0
  %v3530 = vmax.f32 %v3466, 0.0
  %v3531 = vmax.f32 %v3467, 0.0
  %v3532 = vmax.f32 %v3468, 0.0
  %v3533 = vmax.f32 %v3469, 0.0
  %v3534 = vmax.f32 %v3470, 0.0
  %v3535 = vmax.f32 %v3471, 0.0
  %v3536 = vmax.f32 %v3472, 0.0
  %v3537 = vmax.f32 %v3473, 0.0
  %v3538 = vmax.f32 %v3474, 0.0
  %v3539 = vmax.f32 %v3475, 0.0
  %v3540 = vmax.f32 %v3476, 0.0
  %v3541 = vmax.f32 %v3477, 0.0
  %v3542 = vmax.f32 %v3478, 0.0
  %v3543 = vmax.f32 %v3479, 0.0
  %v3544 = vmax.f32 %v3480, 0.0
  %v3545 = vmax.f32 %v3481, 0.0
  %v3546 = vmax.f32 %v3482, 0.0
  %v3547 = vmax.f32 %v3483, 0.0
  %v3548 = vmax.f32 %v3484, 0.0
  %v3549 = vmax.f32 %v3485, 0.0
  %v3550 = vmax.f32 %v3486, 0.0
  %v3551 = vmax.f32 %v3487, 0.0
  %v3552 = vmax.f32 %v3488, 0.0
  %v3553 = vmax.f32 %v3489, 0.0
  %v3554 = vmax.f32 %v3490, 0.0
  %v3555 = vmax.f32 %v3491, 0.0
  %v3556 = vmax.f32 %v3492, 0.0
  %v3557 = vmax.f32 %v3493, 0.0
  %v3558 = vmax.f32 %v3494, 0.0
  %v3559 = vmax.f32 %v3495, 0.0
  %v3560 = vmax.f32 %v3496, 0.0
  %v3561 = vmax.f32 %v3497, 0.0
  %v3562 = vmax.f32 %v3498, 0.0
  %3563 = vst [vmem:[#allocation2] sm:$0xff] %v3499
  %3564 = vst [vmem:[#allocation2 + $0x8] sm:$0xff] %v3500
  %3565 = vst [vmem:[#allocation2 + $0x10] sm:$0xff] %v3501
  %3566 = vst [vmem:[#allocation2 + $0x18] sm:$0xff] %v3502
  %3567 = vst [vmem:[#allocation2 + $0x20] sm:$0xff] %v3503
  %3568 = vst [vmem:[#allocation2 + $0x28] sm:$0xff] %v3504
  %3569 = vst [vmem:[#allocation2 + $0x30] sm:$0xff] %v3505
  %3570 = vst [vmem:[#allocation2 + $0x38] sm:$0xff] %v3506
  %3571 = vst [vmem:[#allocation2 + $0x40] sm:$0xff] %v3507
  %3572 = vst [vmem:[#allocation2 + $0x48] sm:$0xff] %v3508
  %3573 = vst [vmem:[#allocation2 + $0x50] sm:$0xff] %v3509
  %3574 = vst [vmem:[#allocation2 + $0x58] sm:$0xff] %v3510
  %3575 = vst [vmem:[#allocation2 + $0x60] sm:$0xff] %v3511
  %3576 = vst [vmem:[#allocation2 + $0x68] sm:$0xff] %v3512
  %3577 = vst [vmem:[#allocation2 + $0x70] sm:$0xff] %v3513
  %3578 = vst [vmem:[#allocation2 + $0x78] sm:$0xff] %v3514
  %3579 = vst [vmem:[#allocation2 + $0x80] sm:$0xff] %v3515
  %3580 = vst [vmem:[#allocation2 + $0x88] sm:$0xff] %v3516
  %3581 = vst [vmem:[#allocation2 + $0x90] sm:$0xff] %v3517
  %3582 = vst [vmem:[#allocation2 + $0x98] sm:$0xff] %v3518
  %3583 = vst [vmem:[#allocation2 + $0xa0] sm:$0xff] %v3519
  %3584 = vst [vmem:[#allocation2 + $0xa8] sm:$0xff] %v3520
  %3585 = vst [vmem:[#allocation2 + $0xb0] sm:$0xff] %v3521
  %3586 = vst [vmem:[#allocation2 + $0xb8] sm:$0xff] %v3522
  %3587 = vst [vmem:[#allocation2 + $0xc0] sm:$0xff] %v3523
  %3588 = vst [vmem:[#allocation2 + $0xc8] sm:$0xff] %v3524
  %3589 = vst [vmem:[#allocation2 + $0xd0] sm:$0xff] %v3525
  %3590 = vst [vmem:[#allocation2 + $0xd8] sm:$0xff] %v3526
  %3591 = vst [vmem:[#allocation2 + $0xe0] sm:$0xff] %v3527
  %3592 = vst [vmem:[#allocation2 + $0xe8] sm:$0xff] %v3528
  %3593 = vst [vmem:[#allocation2 + $0xf0] sm:$0xff] %v3529
  %3594 = vst [vmem:[#allocation2 + $0xf8] sm:$0xff] %v3530
  %3595 = vst [vmem:[#allocation2 + $0x100] sm:$0xff] %v3531
  %3596 = vst [vmem:[#allocation2 + $0x108] sm:$0xff] %v3532
  %3597 = vst [vmem:[#allocation2 + $0x110] sm:$0xff] %v3533
  %3598 = vst [vmem:[#allocation2 + $0x118] sm:$0xff] %v3534
  %3599 = vst [vmem:[#allocation2 + $0x120] sm:$0xff] %v3535
  %3600 = vst [vmem:[#allocation2 + $0x128] sm:$0xff] %v3536
  %3601 = vst [vmem:[#allocation2 + $0x130] sm:$0xff] %v3537
  %3602 = vst [vmem:[#allocation2 + $0x138] sm:$0xff] %v3538
  %3603 = vst [vmem:[#allocation2 + $0x140] sm:$0xff] %v3539
  %3604 = vst [vmem:[#allocation2 + $0x148] sm:$0xff] %v3540
  %3605 = vst [vmem:[#allocation2 + $0x150] sm:$0xff] %v3541
  %3606 = vst [vmem:[#allocation2 + $0x158] sm:$0xff] %v3542
  %3607 = vst [vmem:[#allocation2 + $0x160] sm:$0xff] %v3543
  %3608 = vst [vmem:[#allocation2 + $0x168] sm:$0xff] %v3544
  %3609 = vst [vmem:[#allocation2 + $0x170] sm:$0xff] %v3545
  %3610 = vst [vmem:[#allocation2 + $0x178] sm:$0xff] %v3546
  %3611 = vst [vmem:[#allocation2 + $0x180] sm:$0xff] %v3547
  %3612 = vst [vmem:[#allocation2 + $0x188] sm:$0xff] %v3548
  %3613 = vst [vmem:[#allocation2 + $0x190] sm:$0xff] %v3549
  %3614 = vst [vmem:[#allocation2 + $0x198] sm:$0xff] %v3550
  %3615 = vst [vmem:[#allocation2 + $0x1a0] sm:$0xff] %v3551
  %3616 = vst [vmem:[#allocation2 + $0x1a8] sm:$0xff] %v3552
  %3617 = vst [vmem:[#allocation2 + $0x1b0] sm:$0xff] %v3553
  %3618 = vst [vmem:[#allocation2 + $0x1b8] sm:$0xff] %v3554
  %3619 = vst [vmem:[#allocation2 + $0x1c0] sm:$0xff] %v3555
  %3620 = vst [vmem:[#allocation2 + $0x1c8] sm:$0xff] %v3556
  %3621 = vst [vmem:[#allocation2 + $0x1d0] sm:$0xff] %v3557
  %3622 = vst [vmem:[#allocation2 + $0x1d8] sm:$0xff] %v3558
  %3623 = vst [vmem:[#allocation2 + $0x1e0] sm:$0xff] %v3559
  %3624 = vst [vmem:[#allocation2 + $0x1e8] sm:$0xff] %v3560
  %3625 = vst [vmem:[#allocation2 + $0x1f0] sm:$0xff] %v3561
  %3626 = vst [vmem:[#allocation2 + $0x1f8] sm:$0xff] %v3562
  %v3627 = vld [vmem:[#allocation2] ss:$4 sm:$0xff]
  %s3628 = scalar_lea.vmem [#allocation2], 32
  %v3629 = vld [vmem:[%s3628] ss:$4 sm:$0xff]
  %s3630 = scalar_lea.vmem [#allocation2], 64
  %v3631 = vld [vmem:[%s3630] ss:$4 sm:$0xff]
  %s3632 = scalar_lea.vmem [#allocation2], 96
  %v3633 = vld [vmem:[%s3632] ss:$4 sm:$0xff]
  %s3634 = scalar_lea.vmem [#allocation2], 128
  %v3635 = vld [vmem:[%s3634] ss:$4 sm:$0xff]
  %s3636 = scalar_lea.vmem [#allocation2], 160
  %v3637 = vld [vmem:[%s3636] ss:$4 sm:$0xff]
  %s3638 = scalar_lea.vmem [#allocation2], 192
  %v3639 = vld [vmem:[%s3638] ss:$4 sm:$0xff]
  %s3640 = scalar_lea.vmem [#allocation2], 224
  %v3641 = vld [vmem:[%s3640] ss:$4 sm:$0xff]
  %s3642 = scalar_lea.vmem [#allocation2], 256
  %v3643 = vld [vmem:[%s3642] ss:$4 sm:$0xff]
  %s3644 = scalar_lea.vmem [#allocation2], 288
  %v3645 = vld [vmem:[%s3644] ss:$4 sm:$0xff]
  %s3646 = scalar_lea.vmem [#allocation2], 320
  %v3647 = vld [vmem:[%s3646] ss:$4 sm:$0xff]
  %s3648 = scalar_lea.vmem [#allocation2], 352
  %v3649 = vld [vmem:[%s3648] ss:$4 sm:$0xff]
  %s3650 = scalar_lea.vmem [#allocation2], 384
  %v3651 = vld [vmem:[%s3650] ss:$4 sm:$0xff]
  %s3652 = scalar_lea.vmem [#allocation2], 416
  %v3653 = vld [vmem:[%s3652] ss:$4 sm:$0xff]
  %s3654 = scalar_lea.vmem [#allocation2], 448
  %v3655 = vld [vmem:[%s3654] ss:$4 sm:$0xff]
  %s3656 = scalar_lea.vmem [#allocation2], 480
  %v3657 = vld [vmem:[%s3656] ss:$4 sm:$0xff]
  %s3658 = scalar_lea.vmem [#allocation2], 1
  %v3659 = vld [vmem:[%s3658] ss:$4 sm:$0xff]
  %s3660 = scalar_lea.vmem [#allocation2], 33
  %v3661 = vld [vmem:[%s3660] ss:$4 sm:$0xff]
  %s3662 = scalar_lea.vmem [#allocation2], 65
  %v3663 = vld [vmem:[%s3662] ss:$4 sm:$0xff]
  %s3664 = scalar_lea.vmem [#allocation2], 97
  %v3665 = vld [vmem:[%s3664] ss:$4 sm:$0xff]
  %s3666 = scalar_lea.vmem [#allocation2], 129
  %v3667 = vld [vmem:[%s3666] ss:$4 sm:$0xff]
  %s3668 = scalar_lea.vmem [#allocation2], 161
  %v3669 = vld [vmem:[%s3668] ss:$4 sm:$0xff]
  %s3670 = scalar_lea.vmem [#allocation2], 193
  %v3671 = vld [vmem:[%s3670] ss:$4 sm:$0xff]
  %s3672 = scalar_lea.vmem [#allocation2], 225
  %v3673 = vld [vmem:[%s3672] ss:$4 sm:$0xff]
  %s3674 = scalar_lea.vmem [#allocation2], 257
  %v3675 = vld [vmem:[%s3674] ss:$4 sm:$0xff]
  %s3676 = scalar_lea.vmem [#allocation2], 289
  %v3677 = vld [vmem:[%s3676] ss:$4 sm:$0xff]
  %s3678 = scalar_lea.vmem [#allocation2], 321
  %v3679 = vld [vmem:[%s3678] ss:$4 sm:$0xff]
  %s3680 = scalar_lea.vmem [#allocation2], 353
  %v3681 = vld [vmem:[%s3680] ss:$4 sm:$0xff]
  %s3682 = scalar_lea.vmem [#allocation2], 385
  %v3683 = vld [vmem:[%s3682] ss:$4 sm:$0xff]
  %s3684 = scalar_lea.vmem [#allocation2], 417
  %v3685 = vld [vmem:[%s3684] ss:$4 sm:$0xff]
  %s3686 = scalar_lea.vmem [#allocation2], 449
  %v3687 = vld [vmem:[%s3686] ss:$4 sm:$0xff]
  %s3688 = scalar_lea.vmem [#allocation2], 481
  %v3689 = vld [vmem:[%s3688] ss:$4 sm:$0xff]
  %v3690 = vmax.f32 %v3627, %v3659
  %v3691 = vmax.f32 %v3629, %v3661
  %v3692 = vmax.f32 %v3631, %v3663
  %v3693 = vmax.f32 %v3633, %v3665
  %v3694 = vmax.f32 %v3635, %v3667
  %v3695 = vmax.f32 %v3637, %v3669
  %v3696 = vmax.f32 %v3639, %v3671
  %v3697 = vmax.f32 %v3641, %v3673
  %v3698 = vmax.f32 %v3643, %v3675
  %v3699 = vmax.f32 %v3645, %v3677
  %v3700 = vmax.f32 %v3647, %v3679
  %v3701 = vmax.f32 %v3649, %v3681
  %v3702 = vmax.f32 %v3651, %v3683
  %v3703 = vmax.f32 %v3653, %v3685
  %v3704 = vmax.f32 %v3655, %v3687
  %v3705 = vmax.f32 %v3657, %v3689
  %s3706 = scalar_lea.vmem [#allocation2], 2
  %v3707 = vld [vmem:[%s3706] ss:$4 sm:$0xff]
  %s3708 = scalar_lea.vmem [#allocation2], 34
  %v3709 = vld [vmem:[%s3708] ss:$4 sm:$0xff]
  %s3710 = scalar_lea.vmem [#allocation2], 66
  %v3711 = vld [vmem:[%s3710] ss:$4 sm:$0xff]
  %s3712 = scalar_lea.vmem [#allocation2], 98
  %v3713 = vld [vmem:[%s3712] ss:$4 sm:$0xff]
  %s3714 = scalar_lea.vmem [#allocation2], 130
  %v3715 = vld [vmem:[%s3714] ss:$4 sm:$0xff]
  %s3716 = scalar_lea.vmem [#allocation2], 162
  %v3717 = vld [vmem:[%s3716] ss:$4 sm:$0xff]
  %s3718 = scalar_lea.vmem [#allocation2], 194
  %v3719 = vld [vmem:[%s3718] ss:$4 sm:$0xff]
  %s3720 = scalar_lea.vmem [#allocation2], 226
  %v3721 = vld [vmem:[%s3720] ss:$4 sm:$0xff]
  %s3722 = scalar_lea.vmem [#allocation2], 258
  %v3723 = vld [vmem:[%s3722] ss:$4 sm:$0xff]
  %s3724 = scalar_lea.vmem [#allocation2], 290
  %v3725 = vld [vmem:[%s3724] ss:$4 sm:$0xff]
  %s3726 = scalar_lea.vmem [#allocation2], 322
  %v3727 = vld [vmem:[%s3726] ss:$4 sm:$0xff]
  %s3728 = scalar_lea.vmem [#allocation2], 354
  %v3729 = vld [vmem:[%s3728] ss:$4 sm:$0xff]
  %s3730 = scalar_lea.vmem [#allocation2], 386
  %v3731 = vld [vmem:[%s3730] ss:$4 sm:$0xff]
  %s3732 = scalar_lea.vmem [#allocation2], 418
  %v3733 = vld [vmem:[%s3732] ss:$4 sm:$0xff]
  %s3734 = scalar_lea.vmem [#allocation2], 450
  %v3735 = vld [vmem:[%s3734] ss:$4 sm:$0xff]
  %s3736 = scalar_lea.vmem [#allocation2], 482
  %v3737 = vld [vmem:[%s3736] ss:$4 sm:$0xff]
  %v3738 = vmax.f32 %v3690, %v3707
  %v3739 = vmax.f32 %v3691, %v3709
  %v3740 = vmax.f32 %v3692, %v3711
  %v3741 = vmax.f32 %v3693, %v3713
  %v3742 = vmax.f32 %v3694, %v3715
  %v3743 = vmax.f32 %v3695, %v3717
  %v3744 = vmax.f32 %v3696, %v3719
  %v3745 = vmax.f32 %v3697, %v3721
  %v3746 = vmax.f32 %v3698, %v3723
  %v3747 = vmax.f32 %v3699, %v3725
  %v3748 = vmax.f32 %v3700, %v3727
  %v3749 = vmax.f32 %v3701, %v3729
  %v3750 = vmax.f32 %v3702, %v3731
  %v3751 = vmax.f32 %v3703, %v3733
  %v3752 = vmax.f32 %v3704, %v3735
  %v3753 = vmax.f32 %v3705, %v3737
  %s3754 = scalar_lea.vmem [#allocation2], 3
  %v3755 = vld [vmem:[%s3754] ss:$4 sm:$0xff]
  %s3756 = scalar_lea.vmem [#allocation2], 35
  %v3757 = vld [vmem:[%s3756] ss:$4 sm:$0xff]
  %s3758 = scalar_lea.vmem [#allocation2], 67
  %v3759 = vld [vmem:[%s3758] ss:$4 sm:$0xff]
  %s3760 = scalar_lea.vmem [#allocation2], 99
  %v3761 = vld [vmem:[%s3760] ss:$4 sm:$0xff]
  %s3762 = scalar_lea.vmem [#allocation2], 131
  %v3763 = vld [vmem:[%s3762] ss:$4 sm:$0xff]
  %s3764 = scalar_lea.vmem [#allocation2], 163
  %v3765 = vld [vmem:[%s3764] ss:$4 sm:$0xff]
  %s3766 = scalar_lea.vmem [#allocation2], 195
  %v3767 = vld [vmem:[%s3766] ss:$4 sm:$0xff]
  %s3768 = scalar_lea.vmem [#allocation2], 227
  %v3769 = vld [vmem:[%s3768] ss:$4 sm:$0xff]
  %s3770 = scalar_lea.vmem [#allocation2], 259
  %v3771 = vld [vmem:[%s3770] ss:$4 sm:$0xff]
  %s3772 = scalar_lea.vmem [#allocation2], 291
  %v3773 = vld [vmem:[%s3772] ss:$4 sm:$0xff]
  %s3774 = scalar_lea.vmem [#allocation2], 323
  %v3775 = vld [vmem:[%s3774] ss:$4 sm:$0xff]
  %s3776 = scalar_lea.vmem [#allocation2], 355
  %v3777 = vld [vmem:[%s3776] ss:$4 sm:$0xff]
  %s3778 = scalar_lea.vmem [#allocation2], 387
  %v3779 = vld [vmem:[%s3778] ss:$4 sm:$0xff]
  %s3780 = scalar_lea.vmem [#allocation2], 419
  %v3781 = vld [vmem:[%s3780] ss:$4 sm:$0xff]
  %s3782 = scalar_lea.vmem [#allocation2], 451
  %v3783 = vld [vmem:[%s3782] ss:$4 sm:$0xff]
  %s3784 = scalar_lea.vmem [#allocation2], 483
  %v3785 = vld [vmem:[%s3784] ss:$4 sm:$0xff]
  %v3786 = vmax.f32 %v3738, %v3755
  %v3787 = vmax.f32 %v3739, %v3757
  %v3788 = vmax.f32 %v3740, %v3759
  %v3789 = vmax.f32 %v3741, %v3761
  %v3790 = vmax.f32 %v3742, %v3763
  %v3791 = vmax.f32 %v3743, %v3765
  %v3792 = vmax.f32 %v3744, %v3767
  %v3793 = vmax.f32 %v3745, %v3769
  %v3794 = vmax.f32 %v3746, %v3771
  %v3795 = vmax.f32 %v3747, %v3773
  %v3796 = vmax.f32 %v3748, %v3775
  %v3797 = vmax.f32 %v3749, %v3777
  %v3798 = vmax.f32 %v3750, %v3779
  %v3799 = vmax.f32 %v3751, %v3781
  %v3800 = vmax.f32 %v3752, %v3783
  %v3801 = vmax.f32 %v3753, %v3785
  %v3802 = vpack.c.bf16 %v3787, %v3786
  %v3803 = vpack.c.bf16 %v3789, %v3788
  %v3804 = vpack.c.bf16 %v3791, %v3790
  %v3805 = vpack.c.bf16 %v3793, %v3792
  %v3806 = vpack.c.bf16 %v3795, %v3794
  %v3807 = vpack.c.bf16 %v3797, %v3796
  %v3808 = vpack.c.bf16 %v3799, %v3798
  %v3809 = vpack.c.bf16 %v3801, %v3800
  %v3810 = vld [vmem:[%s3] sm:$0xf]
  %v3811 = vld [vmem:[%s3 + $0x4] sm:$0xf]
  %v3812 = vld [vmem:[%s3 + $0x8] sm:$0xf]
  %v3813 = vld [vmem:[%s3 + $0xc] sm:$0xf]
  %v3814 = vld [vmem:[%s3 + $0x10] sm:$0xf]
  %v3815 = vld [vmem:[%s3 + $0x14] sm:$0xf]
  %v3816 = vld [vmem:[%s3 + $0x18] sm:$0xf]
  %v3817 = vld [vmem:[%s3 + $0x1c] sm:$0xf]
  %v3818 = vld [vmem:[%s3 + $0x20] sm:$0xf]
  %v3819 = vld [vmem:[%s3 + $0x24] sm:$0xf]
  %v3820 = vld [vmem:[%s3 + $0x28] sm:$0xf]
  %v3821 = vld [vmem:[%s3 + $0x2c] sm:$0xf]
  %v3822 = vld [vmem:[%s3 + $0x30] sm:$0xf]
  %v3823 = vld [vmem:[%s3 + $0x34] sm:$0xf]
  %v3824 = vld [vmem:[%s3 + $0x38] sm:$0xf]
  %v3825 = vld [vmem:[%s3 + $0x3c] sm:$0xf]
  %s3826 = scalar_lea.vmem %s3, 64
  %v3827 = vld [vmem:[%s3826] sm:$0xf]
  %v3828 = vld [vmem:[%s3826 + $0x4] sm:$0xf]
  %v3829 = vld [vmem:[%s3826 + $0x8] sm:$0xf]
  %v3830 = vld [vmem:[%s3826 + $0xc] sm:$0xf]
  %v3831 = vld [vmem:[%s3826 + $0x10] sm:$0xf]
  %v3832 = vld [vmem:[%s3826 + $0x14] sm:$0xf]
  %v3833 = vld [vmem:[%s3826 + $0x18] sm:$0xf]
  %v3834 = vld [vmem:[%s3826 + $0x1c] sm:$0xf]
  %v3835 = vld [vmem:[%s3826 + $0x20] sm:$0xf]
  %v3836 = vld [vmem:[%s3826 + $0x24] sm:$0xf]
  %v3837 = vld [vmem:[%s3826 + $0x28] sm:$0xf]
  %v3838 = vld [vmem:[%s3826 + $0x2c] sm:$0xf]
  %v3839 = vld [vmem:[%s3826 + $0x30] sm:$0xf]
  %v3840 = vld [vmem:[%s3826 + $0x34] sm:$0xf]
  %v3841 = vld [vmem:[%s3826 + $0x38] sm:$0xf]
  %v3842 = vld [vmem:[%s3826 + $0x3c] sm:$0xf]
  %v3859 = vunpack.c.l.b16 %v3827
  %v3860 = vunpack.c.l.b16 %v3828
  %v3861 = vunpack.c.l.b16 %v3829
  %v3862 = vunpack.c.l.b16 %v3830
  %v3863 = vunpack.c.l.b16 %v3831
  %v3864 = vunpack.c.l.b16 %v3832
  %v3865 = vunpack.c.l.b16 %v3833
  %v3866 = vunpack.c.l.b16 %v3834
  %v3867 = vunpack.c.l.b16 %v3835
  %v3868 = vunpack.c.l.b16 %v3836
  %v3869 = vunpack.c.l.b16 %v3837
  %v3870 = vunpack.c.l.b16 %v3838
  %v3871 = vunpack.c.l.b16 %v3839
  %v3872 = vunpack.c.l.b16 %v3840
  %v3873 = vunpack.c.l.b16 %v3841
  %v3874 = vunpack.c.l.b16 %v3842
  %v3875 = vpack.c.b16 %v3860, %v3859
  %v3876 = vpack.c.b16 %v3862, %v3861
  %v3877 = vpack.c.b16 %v3864, %v3863
  %v3878 = vpack.c.b16 %v3866, %v3865
  %v3879 = vpack.c.b16 %v3868, %v3867
  %v3880 = vpack.c.b16 %v3870, %v3869
  %v3881 = vpack.c.b16 %v3872, %v3871
  %v3882 = vpack.c.b16 %v3874, %v3873
  %3891 = vmatprep.subr.bf16.mxu0 0
  %3892 = vmatpush1.bf16.msra.mxu0 %v3882
  %3893 = vmatprep.subr.bf16.mxu0 0
  %3894 = vmatpush1.bf16.msra.mxu0 %v3881
  %3895 = vmatprep.subr.bf16.mxu0 0
  %3896 = vmatpush1.bf16.msra.mxu0 %v3880
  %3897 = vmatprep.subr.bf16.mxu0 0
  %3898 = vmatpush1.bf16.msra.mxu0 %v3879
  %3899 = vmatprep.subr.bf16.mxu0 0
  %3900 = vmatpush1.bf16.msra.mxu0 %v3878
  %3901 = vmatprep.subr.bf16.mxu0 0
  %3902 = vmatpush1.bf16.msra.mxu0 %v3877
  %3903 = vmatprep.subr.bf16.mxu0 0
  %3904 = vmatpush1.bf16.msra.mxu0 %v3876
  %3905 = vmatprep.subr.bf16.mxu0 0
  %3906 = vmatpush1.bf16.msra.mxu0 %v3875
  %3907 = vmatprep.subr.bf16.mxu0 0
  %3908 = vmatpush2.bf16.msra.mxu0 0
  %3909 = vmatprep.subr.bf16.mxu0 0
  %3910 = vmatpush2.bf16.msra.mxu0 0
  %3911 = vmatprep.subr.bf16.mxu0 0
  %3912 = vmatpush2.bf16.msra.mxu0 0
  %3913 = vmatprep.subr.bf16.mxu0 0
  %3914 = vmatpush2.bf16.msra.mxu0 0
  %3915 = vmatprep.subr.bf16.mxu0 0
  %3916 = vmatpush2.bf16.msra.mxu0 0
  %3917 = vmatprep.subr.bf16.mxu0 0
  %3918 = vmatpush2.bf16.msra.mxu0 0
  %3919 = vmatprep.subr.bf16.mxu0 0
  %3920 = vmatpush2.bf16.msra.mxu0 0
  %3921 = vmatprep.subr.bf16.mxu0 0
  %3922 = vmatpush2.bf16.msra.mxu0 0
  %3923 = vmatprep.mubr.bf16.mxu0 0
  %3924 = vmatmul.mubr.bf16.gmra.mxu0 %v3802
  %v3925 = vpop.f32.mrf.mxu0
  %v3926 = vadd.f32 0.0, %v3925
  %v3927 = vpop.f32.mrf.mxu0
  %v3928 = vpop.f32.mrf.mxu0
  %v3929 = vadd.f32 0.0, %v3928
  %v3930 = vpop.f32.mrf.mxu0
  %3931 = vmatprep.mubr.bf16.mxu0 0
  %3932 = vmatmul.mubr.bf16.gmra.mxu0 %v3803
  %v3933 = vpop.f32.mrf.mxu0
  %v3934 = vadd.f32 0.0, %v3933
  %v3935 = vpop.f32.mrf.mxu0
  %v3936 = vpop.f32.mrf.mxu0
  %v3937 = vadd.f32 0.0, %v3936
  %v3938 = vpop.f32.mrf.mxu0
  %3939 = vmatprep.mubr.bf16.mxu0 0
  %3940 = vmatmul.mubr.bf16.gmra.mxu0 %v3804
  %v3941 = vpop.f32.mrf.mxu0
  %v3942 = vadd.f32 0.0, %v3941
  %v3943 = vpop.f32.mrf.mxu0
  %v3944 = vpop.f32.mrf.mxu0
  %v3945 = vadd.f32 0.0, %v3944
  %v3946 = vpop.f32.mrf.mxu0
  %3947 = vmatprep.mubr.bf16.mxu0 0
  %3948 = vmatmul.mubr.bf16.gmra.mxu0 %v3805
  %v3949 = vpop.f32.mrf.mxu0
  %v3950 = vadd.f32 0.0, %v3949
  %v3951 = vpop.f32.mrf.mxu0
  %v3952 = vpop.f32.mrf.mxu0
  %v3953 = vadd.f32 0.0, %v3952
  %v3954 = vpop.f32.mrf.mxu0
  %3955 = vmatprep.mubr.bf16.mxu0 0
  %3956 = vmatmul.mubr.bf16.gmra.mxu0 %v3806
  %v3957 = vpop.f32.mrf.mxu0
  %v3958 = vadd.f32 0.0, %v3957
  %v3959 = vpop.f32.mrf.mxu0
  %v3960 = vpop.f32.mrf.mxu0
  %v3961 = vadd.f32 0.0, %v3960
  %v3962 = vpop.f32.mrf.mxu0
  %3963 = vmatprep.mubr.bf16.mxu0 0
  %3964 = vmatmul.mubr.bf16.gmra.mxu0 %v3807
  %v3965 = vpop.f32.mrf.mxu0
  %v3966 = vadd.f32 0.0, %v3965
  %v3967 = vpop.f32.mrf.mxu0
  %v3968 = vpop.f32.mrf.mxu0
  %v3969 = vadd.f32 0.0, %v3968
  %v3970 = vpop.f32.mrf.mxu0
  %3971 = vmatprep.mubr.bf16.mxu0 0
  %3972 = vmatmul.mubr.bf16.gmra.mxu0 %v3808
  %v3973 = vpop.f32.mrf.mxu0
  %v3974 = vadd.f32 0.0, %v3973
  %v3975 = vpop.f32.mrf.mxu0
  %v3976 = vpop.f32.mrf.mxu0
  %v3977 = vadd.f32 0.0, %v3976
  %v3978 = vpop.f32.mrf.mxu0
  %3979 = vmatprep.mubr.bf16.mxu0 0
  %3980 = vmatmul.mubr.bf16.gmra.mxu0 %v3809
  %v3981 = vpop.f32.mrf.mxu0
  %v3982 = vadd.f32 0.0, %v3981
  %v3983 = vpop.f32.mrf.mxu0
  %v3984 = vpop.f32.mrf.mxu0
  %v3985 = vadd.f32 0.0, %v3984
  %v3986 = vpop.f32.mrf.mxu0
  %3987 = vdwg.mxu0
  %v4004 = vrot.slane %v3926, 1
  %v4005 = vrot.slane %v3929, 1
  %v4006 = vsel %vm725, %v4004, %v4005
  %v4007 = vrot.slane %v3934, 1
  %v4008 = vsel %vm725, %v4005, %v4007
  %v4009 = vrot.slane %v3937, 1
  %v4010 = vsel %vm725, %v4007, %v4009
  %v4011 = vrot.slane %v3942, 1
  %v4012 = vsel %vm725, %v4009, %v4011
  %v4013 = vrot.slane %v3945, 1
  %v4014 = vsel %vm725, %v4011, %v4013
  %v4015 = vrot.slane %v3950, 1
  %v4016 = vsel %vm725, %v4013, %v4015
  %v4017 = vrot.slane %v3953, 1
  %v4018 = vsel %vm725, %v4015, %v4017
  %v4019 = vrot.slane %v3958, 1
  %v4020 = vsel %vm725, %v4017, %v4019
  %v4021 = vrot.slane %v3961, 1
  %v4022 = vsel %vm725, %v4019, %v4021
  %v4023 = vrot.slane %v3966, 1
  %v4024 = vsel %vm725, %v4021, %v4023
  %v4025 = vrot.slane %v3969, 1
  %v4026 = vsel %vm725, %v4023, %v4025
  %v4027 = vrot.slane %v3974, 1
  %v4028 = vsel %vm725, %v4025, %v4027
  %v4029 = vrot.slane %v3977, 1
  %v4030 = vsel %vm725, %v4027, %v4029
  %v4031 = vrot.slane %v3982, 1
  %v4032 = vsel %vm725, %v4029, %v4031
  %v4033 = vrot.slane %v3985, 1
  %v4034 = vsel %vm725, %v4031, %v4033
  %v4051 = vsel %vm725, %v4033, 0.0
  %v4068 = vunpack.c.l.b16 %v3810
  %v4069 = vunpack.c.l.b16 %v3811
  %v4070 = vunpack.c.l.b16 %v3812
  %v4071 = vunpack.c.l.b16 %v3813
  %v4072 = vunpack.c.l.b16 %v3814
  %v4073 = vunpack.c.l.b16 %v3815
  %v4074 = vunpack.c.l.b16 %v3816
  %v4075 = vunpack.c.l.b16 %v3817
  %v4076 = vunpack.c.l.b16 %v3818
  %v4077 = vunpack.c.l.b16 %v3819
  %v4078 = vunpack.c.l.b16 %v3820
  %v4079 = vunpack.c.l.b16 %v3821
  %v4080 = vunpack.c.l.b16 %v3822
  %v4081 = vunpack.c.l.b16 %v3823
  %v4082 = vunpack.c.l.b16 %v3824
  %v4083 = vunpack.c.l.b16 %v3825
  %v4084 = vpack.c.b16 %v4069, %v4068
  %v4085 = vpack.c.b16 %v4071, %v4070
  %v4086 = vpack.c.b16 %v4073, %v4072
  %v4087 = vpack.c.b16 %v4075, %v4074
  %v4088 = vpack.c.b16 %v4077, %v4076
  %v4089 = vpack.c.b16 %v4079, %v4078
  %v4090 = vpack.c.b16 %v4081, %v4080
  %v4091 = vpack.c.b16 %v4083, %v4082
  %4100 = vmatprep.subr.bf16.mxu0 0
  %4101 = vmatpush1.bf16.msra.mxu0 %v4091
  %4102 = vmatprep.subr.bf16.mxu0 0
  %4103 = vmatpush1.bf16.msra.mxu0 %v4090
  %4104 = vmatprep.subr.bf16.mxu0 0
  %4105 = vmatpush1.bf16.msra.mxu0 %v4089
  %4106 = vmatprep.subr.bf16.mxu0 0
  %4107 = vmatpush1.bf16.msra.mxu0 %v4088
  %4108 = vmatprep.subr.bf16.mxu0 0
  %4109 = vmatpush1.bf16.msra.mxu0 %v4087
  %4110 = vmatprep.subr.bf16.mxu0 0
  %4111 = vmatpush1.bf16.msra.mxu0 %v4086
  %4112 = vmatprep.subr.bf16.mxu0 0
  %4113 = vmatpush1.bf16.msra.mxu0 %v4085
  %4114 = vmatprep.subr.bf16.mxu0 0
  %4115 = vmatpush1.bf16.msra.mxu0 %v4084
  %4116 = vmatprep.subr.bf16.mxu0 0
  %4117 = vmatpush2.bf16.msra.mxu0 0
  %4118 = vmatprep.subr.bf16.mxu0 0
  %4119 = vmatpush2.bf16.msra.mxu0 0
  %4120 = vmatprep.subr.bf16.mxu0 0
  %4121 = vmatpush2.bf16.msra.mxu0 0
  %4122 = vmatprep.subr.bf16.mxu0 0
  %4123 = vmatpush2.bf16.msra.mxu0 0
  %4124 = vmatprep.subr.bf16.mxu0 0
  %4125 = vmatpush2.bf16.msra.mxu0 0
  %4126 = vmatprep.subr.bf16.mxu0 0
  %4127 = vmatpush2.bf16.msra.mxu0 0
  %4128 = vmatprep.subr.bf16.mxu0 0
  %4129 = vmatpush2.bf16.msra.mxu0 0
  %4130 = vmatprep.subr.bf16.mxu0 0
  %4131 = vmatpush2.bf16.msra.mxu0 0
  %4132 = vmatprep.mubr.bf16.mxu0 0
  %4133 = vmatmul.mubr.bf16.gmra.mxu0 %v3802
  %v4134 = vpop.f32.mrf.mxu0
  %v4135 = vadd.f32 %v4006, %v4134
  %v4136 = vpop.f32.mrf.mxu0
  %v4137 = vpop.f32.mrf.mxu0
  %v4138 = vadd.f32 %v4008, %v4137
  %v4139 = vpop.f32.mrf.mxu0
  %4140 = vmatprep.mubr.bf16.mxu0 0
  %4141 = vmatmul.mubr.bf16.gmra.mxu0 %v3803
  %v4142 = vpop.f32.mrf.mxu0
  %v4143 = vadd.f32 %v4010, %v4142
  %v4144 = vpop.f32.mrf.mxu0
  %v4145 = vpop.f32.mrf.mxu0
  %v4146 = vadd.f32 %v4012, %v4145
  %v4147 = vpop.f32.mrf.mxu0
  %4148 = vmatprep.mubr.bf16.mxu0 0
  %4149 = vmatmul.mubr.bf16.gmra.mxu0 %v3804
  %v4150 = vpop.f32.mrf.mxu0
  %v4151 = vadd.f32 %v4014, %v4150
  %v4152 = vpop.f32.mrf.mxu0
  %v4153 = vpop.f32.mrf.mxu0
  %v4154 = vadd.f32 %v4016, %v4153
  %v4155 = vpop.f32.mrf.mxu0
  %4156 = vmatprep.mubr.bf16.mxu0 0
  %4157 = vmatmul.mubr.bf16.gmra.mxu0 %v3805
  %v4158 = vpop.f32.mrf.mxu0
  %v4159 = vadd.f32 %v4018, %v4158
  %v4160 = vpop.f32.mrf.mxu0
  %v4161 = vpop.f32.mrf.mxu0
  %v4162 = vadd.f32 %v4020, %v4161
  %v4163 = vpop.f32.mrf.mxu0
  %4164 = vmatprep.mubr.bf16.mxu0 0
  %4165 = vmatmul.mubr.bf16.gmra.mxu0 %v3806
  %v4166 = vpop.f32.mrf.mxu0
  %v4167 = vadd.f32 %v4022, %v4166
  %v4168 = vpop.f32.mrf.mxu0
  %v4169 = vpop.f32.mrf.mxu0
  %v4170 = vadd.f32 %v4024, %v4169
  %v4171 = vpop.f32.mrf.mxu0
  %4172 = vmatprep.mubr.bf16.mxu0 0
  %4173 = vmatmul.mubr.bf16.gmra.mxu0 %v3807
  %v4174 = vpop.f32.mrf.mxu0
  %v4175 = vadd.f32 %v4026, %v4174
  %v4176 = vpop.f32.mrf.mxu0
  %v4177 = vpop.f32.mrf.mxu0
  %v4178 = vadd.f32 %v4028, %v4177
  %v4179 = vpop.f32.mrf.mxu0
  %4180 = vmatprep.mubr.bf16.mxu0 0
  %4181 = vmatmul.mubr.bf16.gmra.mxu0 %v3808
  %v4182 = vpop.f32.mrf.mxu0
  %v4183 = vadd.f32 %v4030, %v4182
  %v4184 = vpop.f32.mrf.mxu0
  %v4185 = vpop.f32.mrf.mxu0
  %v4186 = vadd.f32 %v4032, %v4185
  %v4187 = vpop.f32.mrf.mxu0
  %4188 = vmatprep.mubr.bf16.mxu0 0
  %4189 = vmatmul.mubr.bf16.gmra.mxu0 %v3809
  %v4190 = vpop.f32.mrf.mxu0
  %v4191 = vadd.f32 %v4034, %v4190
  %v4192 = vpop.f32.mrf.mxu0
  %v4193 = vpop.f32.mrf.mxu0
  %v4194 = vadd.f32 %v4051, %v4193
  %v4195 = vpop.f32.mrf.mxu0
  %4196 = vdwg.mxu0
  %s4197 = scalar_lea.vmem %s3, 128
  %v4198 = vld [vmem:[%s4197] sm:$0xf]
  %v4199 = vld [vmem:[%s4197 + $0x4] sm:$0xf]
  %v4200 = vld [vmem:[%s4197 + $0x8] sm:$0xf]
  %v4201 = vld [vmem:[%s4197 + $0xc] sm:$0xf]
  %v4202 = vld [vmem:[%s4197 + $0x10] sm:$0xf]
  %v4203 = vld [vmem:[%s4197 + $0x14] sm:$0xf]
  %v4204 = vld [vmem:[%s4197 + $0x18] sm:$0xf]
  %v4205 = vld [vmem:[%s4197 + $0x1c] sm:$0xf]
  %v4206 = vld [vmem:[%s4197 + $0x20] sm:$0xf]
  %v4207 = vld [vmem:[%s4197 + $0x24] sm:$0xf]
  %v4208 = vld [vmem:[%s4197 + $0x28] sm:$0xf]
  %v4209 = vld [vmem:[%s4197 + $0x2c] sm:$0xf]
  %v4210 = vld [vmem:[%s4197 + $0x30] sm:$0xf]
  %v4211 = vld [vmem:[%s4197 + $0x34] sm:$0xf]
  %v4212 = vld [vmem:[%s4197 + $0x38] sm:$0xf]
  %v4213 = vld [vmem:[%s4197 + $0x3c] sm:$0xf]
  %v4230 = vunpack.c.l.b16 %v4198
  %v4231 = vunpack.c.l.b16 %v4199
  %v4232 = vunpack.c.l.b16 %v4200
  %v4233 = vunpack.c.l.b16 %v4201
  %v4234 = vunpack.c.l.b16 %v4202
  %v4235 = vunpack.c.l.b16 %v4203
  %v4236 = vunpack.c.l.b16 %v4204
  %v4237 = vunpack.c.l.b16 %v4205
  %v4238 = vunpack.c.l.b16 %v4206
  %v4239 = vunpack.c.l.b16 %v4207
  %v4240 = vunpack.c.l.b16 %v4208
  %v4241 = vunpack.c.l.b16 %v4209
  %v4242 = vunpack.c.l.b16 %v4210
  %v4243 = vunpack.c.l.b16 %v4211
  %v4244 = vunpack.c.l.b16 %v4212
  %v4245 = vunpack.c.l.b16 %v4213
  %v4246 = vpack.c.b16 %v4231, %v4230
  %v4247 = vpack.c.b16 %v4233, %v4232
  %v4248 = vpack.c.b16 %v4235, %v4234
  %v4249 = vpack.c.b16 %v4237, %v4236
  %v4250 = vpack.c.b16 %v4239, %v4238
  %v4251 = vpack.c.b16 %v4241, %v4240
  %v4252 = vpack.c.b16 %v4243, %v4242
  %v4253 = vpack.c.b16 %v4245, %v4244
  %4262 = vmatprep.subr.bf16.mxu0 0
  %4263 = vmatpush1.bf16.msra.mxu0 %v4253
  %4264 = vmatprep.subr.bf16.mxu0 0
  %4265 = vmatpush1.bf16.msra.mxu0 %v4252
  %4266 = vmatprep.subr.bf16.mxu0 0
  %4267 = vmatpush1.bf16.msra.mxu0 %v4251
  %4268 = vmatprep.subr.bf16.mxu0 0
  %4269 = vmatpush1.bf16.msra.mxu0 %v4250
  %4270 = vmatprep.subr.bf16.mxu0 0
  %4271 = vmatpush1.bf16.msra.mxu0 %v4249
  %4272 = vmatprep.subr.bf16.mxu0 0
  %4273 = vmatpush1.bf16.msra.mxu0 %v4248
  %4274 = vmatprep.subr.bf16.mxu0 0
  %4275 = vmatpush1.bf16.msra.mxu0 %v4247
  %4276 = vmatprep.subr.bf16.mxu0 0
  %4277 = vmatpush1.bf16.msra.mxu0 %v4246
  %4278 = vmatprep.subr.bf16.mxu0 0
  %4279 = vmatpush2.bf16.msra.mxu0 0
  %4280 = vmatprep.subr.bf16.mxu0 0
  %4281 = vmatpush2.bf16.msra.mxu0 0
  %4282 = vmatprep.subr.bf16.mxu0 0
  %4283 = vmatpush2.bf16.msra.mxu0 0
  %4284 = vmatprep.subr.bf16.mxu0 0
  %4285 = vmatpush2.bf16.msra.mxu0 0
  %4286 = vmatprep.subr.bf16.mxu0 0
  %4287 = vmatpush2.bf16.msra.mxu0 0
  %4288 = vmatprep.subr.bf16.mxu0 0
  %4289 = vmatpush2.bf16.msra.mxu0 0
  %4290 = vmatprep.subr.bf16.mxu0 0
  %4291 = vmatpush2.bf16.msra.mxu0 0
  %4292 = vmatprep.subr.bf16.mxu0 0
  %4293 = vmatpush2.bf16.msra.mxu0 0
  %4294 = vmatprep.mubr.bf16.mxu0 0
  %4295 = vmatmul.mubr.bf16.gmra.mxu0 %v3802
  %v4296 = vpop.f32.mrf.mxu0
  %v4297 = vadd.f32 0.0, %v4296
  %v4298 = vpop.f32.mrf.mxu0
  %v4299 = vpop.f32.mrf.mxu0
  %v4300 = vadd.f32 0.0, %v4299
  %v4301 = vpop.f32.mrf.mxu0
  %4302 = vmatprep.mubr.bf16.mxu0 0
  %4303 = vmatmul.mubr.bf16.gmra.mxu0 %v3803
  %v4304 = vpop.f32.mrf.mxu0
  %v4305 = vadd.f32 0.0, %v4304
  %v4306 = vpop.f32.mrf.mxu0
  %v4307 = vpop.f32.mrf.mxu0
  %v4308 = vadd.f32 0.0, %v4307
  %v4309 = vpop.f32.mrf.mxu0
  %4310 = vmatprep.mubr.bf16.mxu0 0
  %4311 = vmatmul.mubr.bf16.gmra.mxu0 %v3804
  %v4312 = vpop.f32.mrf.mxu0
  %v4313 = vadd.f32 0.0, %v4312
  %v4314 = vpop.f32.mrf.mxu0
  %v4315 = vpop.f32.mrf.mxu0
  %v4316 = vadd.f32 0.0, %v4315
  %v4317 = vpop.f32.mrf.mxu0
  %4318 = vmatprep.mubr.bf16.mxu0 0
  %4319 = vmatmul.mubr.bf16.gmra.mxu0 %v3805
  %v4320 = vpop.f32.mrf.mxu0
  %v4321 = vadd.f32 0.0, %v4320
  %v4322 = vpop.f32.mrf.mxu0
  %v4323 = vpop.f32.mrf.mxu0
  %v4324 = vadd.f32 0.0, %v4323
  %v4325 = vpop.f32.mrf.mxu0
  %4326 = vmatprep.mubr.bf16.mxu0 0
  %4327 = vmatmul.mubr.bf16.gmra.mxu0 %v3806
  %v4328 = vpop.f32.mrf.mxu0
  %v4329 = vadd.f32 0.0, %v4328
  %v4330 = vpop.f32.mrf.mxu0
  %v4331 = vpop.f32.mrf.mxu0
  %v4332 = vadd.f32 0.0, %v4331
  %v4333 = vpop.f32.mrf.mxu0
  %4334 = vmatprep.mubr.bf16.mxu0 0
  %4335 = vmatmul.mubr.bf16.gmra.mxu0 %v3807
  %v4336 = vpop.f32.mrf.mxu0
  %v4337 = vadd.f32 0.0, %v4336
  %v4338 = vpop.f32.mrf.mxu0
  %v4339 = vpop.f32.mrf.mxu0
  %v4340 = vadd.f32 0.0, %v4339
  %v4341 = vpop.f32.mrf.mxu0
  %4342 = vmatprep.mubr.bf16.mxu0 0
  %4343 = vmatmul.mubr.bf16.gmra.mxu0 %v3808
  %v4344 = vpop.f32.mrf.mxu0
  %v4345 = vadd.f32 0.0, %v4344
  %v4346 = vpop.f32.mrf.mxu0
  %v4347 = vpop.f32.mrf.mxu0
  %v4348 = vadd.f32 0.0, %v4347
  %v4349 = vpop.f32.mrf.mxu0
  %4350 = vmatprep.mubr.bf16.mxu0 0
  %4351 = vmatmul.mubr.bf16.gmra.mxu0 %v3809
  %v4352 = vpop.f32.mrf.mxu0
  %v4353 = vadd.f32 0.0, %v4352
  %v4354 = vpop.f32.mrf.mxu0
  %v4355 = vpop.f32.mrf.mxu0
  %v4356 = vadd.f32 0.0, %v4355
  %v4357 = vpop.f32.mrf.mxu0
  %4358 = vdwg.mxu0
  %v4375 = vrot.slane %v4297, 2
  %v4376 = vrot.slane %v4300, 2
  %v4377 = vsel %vm1673, %v4375, %v4376
  %v4378 = vrot.slane %v4305, 2
  %v4379 = vsel %vm1673, %v4376, %v4378
  %v4380 = vrot.slane %v4308, 2
  %v4381 = vsel %vm1673, %v4378, %v4380
  %v4382 = vrot.slane %v4313, 2
  %v4383 = vsel %vm1673, %v4380, %v4382
  %v4384 = vrot.slane %v4316, 2
  %v4385 = vsel %vm1673, %v4382, %v4384
  %v4386 = vrot.slane %v4321, 2
  %v4387 = vsel %vm1673, %v4384, %v4386
  %v4388 = vrot.slane %v4324, 2
  %v4389 = vsel %vm1673, %v4386, %v4388
  %v4390 = vrot.slane %v4329, 2
  %v4391 = vsel %vm1673, %v4388, %v4390
  %v4392 = vrot.slane %v4332, 2
  %v4393 = vsel %vm1673, %v4390, %v4392
  %v4394 = vrot.slane %v4337, 2
  %v4395 = vsel %vm1673, %v4392, %v4394
  %v4396 = vrot.slane %v4340, 2
  %v4397 = vsel %vm1673, %v4394, %v4396
  %v4398 = vrot.slane %v4345, 2
  %v4399 = vsel %vm1673, %v4396, %v4398
  %v4400 = vrot.slane %v4348, 2
  %v4401 = vsel %vm1673, %v4398, %v4400
  %v4402 = vrot.slane %v4353, 2
  %v4403 = vsel %vm1673, %v4400, %v4402
  %v4404 = vrot.slane %v4356, 2
  %v4405 = vsel %vm1673, %v4402, %v4404
  %v4422 = vsel %vm1673, %v4404, 0.0
  %v4423 = vadd.f32 %v4135, %v4377
  %v4424 = vadd.f32 %v4138, %v4379
  %v4425 = vadd.f32 %v4143, %v4381
  %v4426 = vadd.f32 %v4146, %v4383
  %v4427 = vadd.f32 %v4151, %v4385
  %v4428 = vadd.f32 %v4154, %v4387
  %v4429 = vadd.f32 %v4159, %v4389
  %v4430 = vadd.f32 %v4162, %v4391
  %v4431 = vadd.f32 %v4167, %v4393
  %v4432 = vadd.f32 %v4170, %v4395
  %v4433 = vadd.f32 %v4175, %v4397
  %v4434 = vadd.f32 %v4178, %v4399
  %v4435 = vadd.f32 %v4183, %v4401
  %v4436 = vadd.f32 %v4186, %v4403
  %v4437 = vadd.f32 %v4191, %v4405
  %v4438 = vadd.f32 %v4194, %v4422
  %v4439 = vld [vmem:[%s4] sm:$0x1]
  %v4440 = vlaneseq
  %v4441 = vshrl.u32 %v4440, 7
  %v4442 = vsub.s32 0, %v4441
  %v4443 = vrot.slane %v4439, %v4442
  %v4444 = vadd.f32 %v4423, %v4443
  %v4445 = vadd.f32 %v4424, %v4443
  %v4446 = vadd.f32 %v4425, %v4443
  %v4447 = vadd.f32 %v4426, %v4443
  %v4448 = vadd.f32 %v4427, %v4443
  %v4449 = vadd.f32 %v4428, %v4443
  %v4450 = vadd.f32 %v4429, %v4443
  %v4451 = vadd.f32 %v4430, %v4443
  %v4452 = vadd.f32 %v4431, %v4443
  %v4453 = vadd.f32 %v4432, %v4443
  %v4454 = vadd.f32 %v4433, %v4443
  %v4455 = vadd.f32 %v4434, %v4443
  %v4456 = vadd.f32 %v4435, %v4443
  %v4457 = vadd.f32 %v4436, %v4443
  %v4458 = vadd.f32 %v4437, %v4443
  %v4459 = vadd.f32 %v4438, %v4443
  %vm4460 = vcmp.lt.s32.totalorder %v2000, 0
  %v4461 = vsub.s32 0, %v2000
  %v4462 = vsel %vm4460, %v4461, %v2000
  %v4463 = vshrl.u32 %v4462, 6
  %v4464 = vand.u32 %v4462, 63
  %v4465 = vsub.s32 0, %v4464
  %v4466 = vsel %vm4460, %v4465, %v4464
  %vm4467 = vcmp.lt.s32.totalorder %v2001, 0
  %v4468 = vsub.s32 0, %v2001
  %v4469 = vsel %vm4467, %v4468, %v2001
  %v4470 = vshrl.u32 %v4469, 6
  %v4471 = vand.u32 %v4469, 63
  %v4472 = vsub.s32 0, %v4471
  %v4473 = vsel %vm4467, %v4472, %v4471
  %vm4474 = vcmp.lt.s32.totalorder %v2002, 0
  %v4475 = vsub.s32 0, %v2002
  %v4476 = vsel %vm4474, %v4475, %v2002
  %v4477 = vshrl.u32 %v4476, 6
  %v4478 = vand.u32 %v4476, 63
  %v4479 = vsub.s32 0, %v4478
  %v4480 = vsel %vm4474, %v4479, %v4478
  %vm4481 = vcmp.lt.s32.totalorder %v2003, 0
  %v4482 = vsub.s32 0, %v2003
  %v4483 = vsel %vm4481, %v4482, %v2003
  %v4484 = vshrl.u32 %v4483, 6
  %v4485 = vand.u32 %v4483, 63
  %v4486 = vsub.s32 0, %v4485
  %v4487 = vsel %vm4481, %v4486, %v4485
  %vm4488 = vcmp.lt.s32.totalorder %v2004, 0
  %v4489 = vsub.s32 0, %v2004
  %v4490 = vsel %vm4488, %v4489, %v2004
  %v4491 = vshrl.u32 %v4490, 6
  %v4492 = vand.u32 %v4490, 63
  %v4493 = vsub.s32 0, %v4492
  %v4494 = vsel %vm4488, %v4493, %v4492
  %vm4495 = vcmp.lt.s32.totalorder %v2005, 0
  %v4496 = vsub.s32 0, %v2005
  %v4497 = vsel %vm4495, %v4496, %v2005
  %v4498 = vshrl.u32 %v4497, 6
  %v4499 = vand.u32 %v4497, 63
  %v4500 = vsub.s32 0, %v4499
  %v4501 = vsel %vm4495, %v4500, %v4499
  %vm4502 = vcmp.lt.s32.totalorder %v2006, 0
  %v4503 = vsub.s32 0, %v2006
  %v4504 = vsel %vm4502, %v4503, %v2006
  %v4505 = vshrl.u32 %v4504, 6
  %v4506 = vand.u32 %v4504, 63
  %v4507 = vsub.s32 0, %v4506
  %v4508 = vsel %vm4502, %v4507, %v4506
  %vm4509 = vcmp.lt.s32.totalorder %v2007, 0
  %v4510 = vsub.s32 0, %v2007
  %v4511 = vsel %vm4509, %v4510, %v2007
  %v4512 = vshrl.u32 %v4511, 6
  %v4513 = vand.u32 %v4511, 63
  %v4514 = vsub.s32 0, %v4513
  %v4515 = vsel %vm4509, %v4514, %v4513
  %vm4516 = vcmp.lt.s32.totalorder %v2008, 0
  %v4517 = vsub.s32 0, %v2008
  %v4518 = vsel %vm4516, %v4517, %v2008
  %v4519 = vshrl.u32 %v4518, 6
  %v4520 = vand.u32 %v4518, 63
  %v4521 = vsub.s32 0, %v4520
  %v4522 = vsel %vm4516, %v4521, %v4520
  %vm4523 = vcmp.lt.s32.totalorder %v2009, 0
  %v4524 = vsub.s32 0, %v2009
  %v4525 = vsel %vm4523, %v4524, %v2009
  %v4526 = vshrl.u32 %v4525, 6
  %v4527 = vand.u32 %v4525, 63
  %v4528 = vsub.s32 0, %v4527
  %v4529 = vsel %vm4523, %v4528, %v4527
  %vm4530 = vcmp.lt.s32.totalorder %v2010, 0
  %v4531 = vsub.s32 0, %v2010
  %v4532 = vsel %vm4530, %v4531, %v2010
  %v4533 = vshrl.u32 %v4532, 6
  %v4534 = vand.u32 %v4532, 63
  %v4535 = vsub.s32 0, %v4534
  %v4536 = vsel %vm4530, %v4535, %v4534
  %vm4537 = vcmp.lt.s32.totalorder %v2011, 0
  %v4538 = vsub.s32 0, %v2011
  %v4539 = vsel %vm4537, %v4538, %v2011
  %v4540 = vshrl.u32 %v4539, 6
  %v4541 = vand.u32 %v4539, 63
  %v4542 = vsub.s32 0, %v4541
  %v4543 = vsel %vm4537, %v4542, %v4541
  %vm4544 = vcmp.lt.s32.totalorder %v2012, 0
  %v4545 = vsub.s32 0, %v2012
  %v4546 = vsel %vm4544, %v4545, %v2012
  %v4547 = vshrl.u32 %v4546, 6
  %v4548 = vand.u32 %v4546, 63
  %v4549 = vsub.s32 0, %v4548
  %v4550 = vsel %vm4544, %v4549, %v4548
  %vm4551 = vcmp.lt.s32.totalorder %v2013, 0
  %v4552 = vsub.s32 0, %v2013
  %v4553 = vsel %vm4551, %v4552, %v2013
  %v4554 = vshrl.u32 %v4553, 6
  %v4555 = vand.u32 %v4553, 63
  %v4556 = vsub.s32 0, %v4555
  %v4557 = vsel %vm4551, %v4556, %v4555
  %vm4558 = vcmp.lt.s32.totalorder %v2014, 0
  %v4559 = vsub.s32 0, %v2014
  %v4560 = vsel %vm4558, %v4559, %v2014
  %v4561 = vshrl.u32 %v4560, 6
  %v4562 = vand.u32 %v4560, 63
  %v4563 = vsub.s32 0, %v4562
  %v4564 = vsel %vm4558, %v4563, %v4562
  %vm4565 = vcmp.lt.s32.totalorder %v2015, 0
  %v4566 = vsub.s32 0, %v2015
  %v4567 = vsel %vm4565, %v4566, %v2015
  %v4568 = vshrl.u32 %v4567, 6
  %v4569 = vand.u32 %v4567, 63
  %v4570 = vsub.s32 0, %v4569
  %v4571 = vsel %vm4565, %v4570, %v4569
  %vm4572 = vcmp.ne.s32.totalorder %v4466, 0
  %vm4573 = vcmp.ne.s32.totalorder %v4473, 0
  %vm4574 = vcmp.ne.s32.totalorder %v4480, 0
  %vm4575 = vcmp.ne.s32.totalorder %v4487, 0
  %vm4576 = vcmp.ne.s32.totalorder %v4494, 0
  %vm4577 = vcmp.ne.s32.totalorder %v4501, 0
  %vm4578 = vcmp.ne.s32.totalorder %v4508, 0
  %vm4579 = vcmp.ne.s32.totalorder %v4515, 0
  %vm4580 = vcmp.ne.s32.totalorder %v4522, 0
  %vm4581 = vcmp.ne.s32.totalorder %v4529, 0
  %vm4582 = vcmp.ne.s32.totalorder %v4536, 0
  %vm4583 = vcmp.ne.s32.totalorder %v4543, 0
  %vm4584 = vcmp.ne.s32.totalorder %v4550, 0
  %vm4585 = vcmp.ne.s32.totalorder %v4557, 0
  %vm4586 = vcmp.ne.s32.totalorder %v4564, 0
  %vm4587 = vcmp.ne.s32.totalorder %v4571, 0
  %vm4588 = vcmp.lt.s32.totalorder %v4466, 0
  %vm4589 = vcmp.lt.s32.totalorder %v4473, 0
  %vm4590 = vcmp.lt.s32.totalorder %v4480, 0
  %vm4591 = vcmp.lt.s32.totalorder %v4487, 0
  %vm4592 = vcmp.lt.s32.totalorder %v4494, 0
  %vm4593 = vcmp.lt.s32.totalorder %v4501, 0
  %vm4594 = vcmp.lt.s32.totalorder %v4508, 0
  %vm4595 = vcmp.lt.s32.totalorder %v4515, 0
  %vm4596 = vcmp.lt.s32.totalorder %v4522, 0
  %vm4597 = vcmp.lt.s32.totalorder %v4529, 0
  %vm4598 = vcmp.lt.s32.totalorder %v4536, 0
  %vm4599 = vcmp.lt.s32.totalorder %v4543, 0
  %vm4600 = vcmp.lt.s32.totalorder %v4550, 0
  %vm4601 = vcmp.lt.s32.totalorder %v4557, 0
  %vm4602 = vcmp.lt.s32.totalorder %v4564, 0
  %vm4603 = vcmp.lt.s32.totalorder %v4571, 0
  %vm4604 = vmand %vm4588, %vm4572
  %vm4605 = vmand %vm4589, %vm4573
  %vm4606 = vmand %vm4590, %vm4574
  %vm4607 = vmand %vm4591, %vm4575
  %vm4608 = vmand %vm4592, %vm4576
  %vm4609 = vmand %vm4593, %vm4577
  %vm4610 = vmand %vm4594, %vm4578
  %vm4611 = vmand %vm4595, %vm4579
  %vm4612 = vmand %vm4596, %vm4580
  %vm4613 = vmand %vm4597, %vm4581
  %vm4614 = vmand %vm4598, %vm4582
  %vm4615 = vmand %vm4599, %vm4583
  %vm4616 = vmand %vm4600, %vm4584
  %vm4617 = vmand %vm4601, %vm4585
  %vm4618 = vmand %vm4602, %vm4586
  %vm4619 = vmand %vm4603, %vm4587
  %v4620 = vadd.s32 %v4466, 64
  %v4621 = vadd.s32 %v4473, 64
  %v4622 = vadd.s32 %v4480, 64
  %v4623 = vadd.s32 %v4487, 64
  %v4624 = vadd.s32 %v4494, 64
  %v4625 = vadd.s32 %v4501, 64
  %v4626 = vadd.s32 %v4508, 64
  %v4627 = vadd.s32 %v4515, 64
  %v4628 = vadd.s32 %v4522, 64
  %v4629 = vadd.s32 %v4529, 64
  %v4630 = vadd.s32 %v4536, 64
  %v4631 = vadd.s32 %v4543, 64
  %v4632 = vadd.s32 %v4550, 64
  %v4633 = vadd.s32 %v4557, 64
  %v4634 = vadd.s32 %v4564, 64
  %v4635 = vadd.s32 %v4571, 64
  %v4636 = vsel %vm4604, %v4620, %v4466
  %v4637 = vsel %vm4605, %v4621, %v4473
  %v4638 = vsel %vm4606, %v4622, %v4480
  %v4639 = vsel %vm4607, %v4623, %v4487
  %v4640 = vsel %vm4608, %v4624, %v4494
  %v4641 = vsel %vm4609, %v4625, %v4501
  %v4642 = vsel %vm4610, %v4626, %v4508
  %v4643 = vsel %vm4611, %v4627, %v4515
  %v4644 = vsel %vm4612, %v4628, %v4522
  %v4645 = vsel %vm4613, %v4629, %v4529
  %v4646 = vsel %vm4614, %v4630, %v4536
  %v4647 = vsel %vm4615, %v4631, %v4543
  %v4648 = vsel %vm4616, %v4632, %v4550
  %v4649 = vsel %vm4617, %v4633, %v4557
  %v4650 = vsel %vm4618, %v4634, %v4564
  %v4651 = vsel %vm4619, %v4635, %v4571
  %vm4652 = vcmp.lt.s32.totalorder %v4636, 28
  %vm4653 = vcmp.lt.s32.totalorder %v4637, 28
  %vm4654 = vcmp.lt.s32.totalorder %v4638, 28
  %vm4655 = vcmp.lt.s32.totalorder %v4639, 28
  %vm4656 = vcmp.lt.s32.totalorder %v4640, 28
  %vm4657 = vcmp.lt.s32.totalorder %v4641, 28
  %vm4658 = vcmp.lt.s32.totalorder %v4642, 28
  %vm4659 = vcmp.lt.s32.totalorder %v4643, 28
  %vm4660 = vcmp.lt.s32.totalorder %v4644, 28
  %vm4661 = vcmp.lt.s32.totalorder %v4645, 28
  %vm4662 = vcmp.lt.s32.totalorder %v4646, 28
  %vm4663 = vcmp.lt.s32.totalorder %v4647, 28
  %vm4664 = vcmp.lt.s32.totalorder %v4648, 28
  %vm4665 = vcmp.lt.s32.totalorder %v4649, 28
  %vm4666 = vcmp.lt.s32.totalorder %v4650, 28
  %vm4667 = vcmp.lt.s32.totalorder %v4651, 28
  %v4668 = vsel %vm4652, 1, 0
  %v4669 = vsel %vm4653, 1, 0
  %v4670 = vsel %vm4654, 1, 0
  %v4671 = vsel %vm4655, 1, 0
  %v4672 = vsel %vm4656, 1, 0
  %v4673 = vsel %vm4657, 1, 0
  %v4674 = vsel %vm4658, 1, 0
  %v4675 = vsel %vm4659, 1, 0
  %v4676 = vsel %vm4660, 1, 0
  %v4677 = vsel %vm4661, 1, 0
  %v4678 = vsel %vm4662, 1, 0
  %v4679 = vsel %vm4663, 1, 0
  %v4680 = vsel %vm4664, 1, 0
  %v4681 = vsel %vm4665, 1, 0
  %v4682 = vsel %vm4666, 1, 0
  %v4683 = vsel %vm4667, 1, 0
  %vm4684 = vcmp.eq.s32.totalorder %v4668, 1
  %vm4685 = vcmp.eq.s32.totalorder %v4669, 1
  %vm4686 = vcmp.eq.s32.totalorder %v4670, 1
  %vm4687 = vcmp.eq.s32.totalorder %v4671, 1
  %vm4688 = vcmp.eq.s32.totalorder %v4672, 1
  %vm4689 = vcmp.eq.s32.totalorder %v4673, 1
  %vm4690 = vcmp.eq.s32.totalorder %v4674, 1
  %vm4691 = vcmp.eq.s32.totalorder %v4675, 1
  %vm4692 = vcmp.eq.s32.totalorder %v4676, 1
  %vm4693 = vcmp.eq.s32.totalorder %v4677, 1
  %vm4694 = vcmp.eq.s32.totalorder %v4678, 1
  %vm4695 = vcmp.eq.s32.totalorder %v4679, 1
  %vm4696 = vcmp.eq.s32.totalorder %v4680, 1
  %vm4697 = vcmp.eq.s32.totalorder %v4681, 1
  %vm4698 = vcmp.eq.s32.totalorder %v4682, 1
  %vm4699 = vcmp.eq.s32.totalorder %v4683, 1
  %v4700 = vsel %vm4684, %v4444, 0.0
  %v4701 = vsel %vm4685, %v4445, 0.0
  %v4702 = vsel %vm4686, %v4446, 0.0
  %v4703 = vsel %vm4687, %v4447, 0.0
  %v4704 = vsel %vm4688, %v4448, 0.0
  %v4705 = vsel %vm4689, %v4449, 0.0
  %v4706 = vsel %vm4690, %v4450, 0.0
  %v4707 = vsel %vm4691, %v4451, 0.0
  %v4708 = vsel %vm4692, %v4452, 0.0
  %v4709 = vsel %vm4693, %v4453, 0.0
  %v4710 = vsel %vm4694, %v4454, 0.0
  %v4711 = vsel %vm4695, %v4455, 0.0
  %v4712 = vsel %vm4696, %v4456, 0.0
  %v4713 = vsel %vm4697, %v4457, 0.0
  %v4714 = vsel %vm4698, %v4458, 0.0
  %v4715 = vsel %vm4699, %v4459, 0.0
  %v4716 = vadd.f32 %v4700, %v4701
  %v4717 = vadd.f32 %v4716, %v4702
  %v4718 = vadd.f32 %v4717, %v4703
  %v4719 = vadd.f32 %v4718, %v4704
  %v4720 = vadd.f32 %v4719, %v4705
  %v4721 = vadd.f32 %v4720, %v4706
  %v4722 = vadd.f32 %v4721, %v4707
  %v4723 = vadd.f32 %v4722, %v4708
  %v4724 = vadd.f32 %v4723, %v4709
  %v4725 = vadd.f32 %v4724, %v4710
  %v4726 = vadd.f32 %v4725, %v4711
  %v4727 = vadd.f32 %v4726, %v4712
  %v4728 = vadd.f32 %v4727, %v4713
  %v4729 = vadd.f32 %v4728, %v4714
  %v4730 = vadd.f32 %v4729, %v4715
  %v4731 = vrot.slane %v4730, 4
  %v4732 = vadd.f32 %v4730, %v4731
  %v4733 = vrot.slane %v4732, 2
  %v4734 = vadd.f32 %v4732, %v4733
  %v4735 = vrot.slane %v4734, 1
  %v4736 = vadd.f32 %v4734, %v4735
  %v4737 = vmul.f32 %v4736, 0.017857144
  %v4738 = vmul.f32 %v4700, %v4700
  %v4739 = vmul.f32 %v4701, %v4701
  %v4740 = vmul.f32 %v4702, %v4702
  %v4741 = vmul.f32 %v4703, %v4703
  %v4742 = vmul.f32 %v4704, %v4704
  %v4743 = vmul.f32 %v4705, %v4705
  %v4744 = vmul.f32 %v4706, %v4706
  %v4745 = vmul.f32 %v4707, %v4707
  %v4746 = vmul.f32 %v4708, %v4708
  %v4747 = vmul.f32 %v4709, %v4709
  %v4748 = vmul.f32 %v4710, %v4710
  %v4749 = vmul.f32 %v4711, %v4711
  %v4750 = vmul.f32 %v4712, %v4712
  %v4751 = vmul.f32 %v4713, %v4713
  %v4752 = vmul.f32 %v4714, %v4714
  %v4753 = vmul.f32 %v4715, %v4715
  %v4754 = vadd.f32 %v4738, %v4739
  %v4755 = vadd.f32 %v4754, %v4740
  %v4756 = vadd.f32 %v4755, %v4741
  %v4757 = vadd.f32 %v4756, %v4742
  %v4758 = vadd.f32 %v4757, %v4743
  %v4759 = vadd.f32 %v4758, %v4744
  %v4760 = vadd.f32 %v4759, %v4745
  %v4761 = vadd.f32 %v4760, %v4746
  %v4762 = vadd.f32 %v4761, %v4747
  %v4763 = vadd.f32 %v4762, %v4748
  %v4764 = vadd.f32 %v4763, %v4749
  %v4765 = vadd.f32 %v4764, %v4750
  %v4766 = vadd.f32 %v4765, %v4751
  %v4767 = vadd.f32 %v4766, %v4752
  %v4768 = vadd.f32 %v4767, %v4753
  %v4769 = vrot.slane %v4768, 4
  %v4770 = vadd.f32 %v4768, %v4769
  %v4771 = vrot.slane %v4770, 2
  %v4772 = vadd.f32 %v4770, %v4771
  %v4773 = vrot.slane %v4772, 1
  %v4774 = vadd.f32 %v4772, %v4773
  %v4775 = vmul.f32 %v4774, 0.017857144
  %v4776 = vmul.f32 %v4737, %v4737
  %v4777 = vsub.f32 %v4775, %v4776
  %v4778 = vadd.f32 %v4777, 1e-05
  %v4779 = vrsqrt.pop %v4778
  %v4780 = vld [vmem:[%s4 + $0x1] sm:$0x1]
  %v4781 = vmul.f32 %v4779, %v4780
  %v4782 = vsub.f32 %v4444, %v4737
  %v4783 = vsub.f32 %v4445, %v4737
  %v4784 = vsub.f32 %v4446, %v4737
  %v4785 = vsub.f32 %v4447, %v4737
  %v4786 = vsub.f32 %v4448, %v4737
  %v4787 = vsub.f32 %v4449, %v4737
  %v4788 = vsub.f32 %v4450, %v4737
  %v4789 = vsub.f32 %v4451, %v4737
  %v4790 = vsub.f32 %v4452, %v4737
  %v4791 = vsub.f32 %v4453, %v4737
  %v4792 = vsub.f32 %v4454, %v4737
  %v4793 = vsub.f32 %v4455, %v4737
  %v4794 = vsub.f32 %v4456, %v4737
  %v4795 = vsub.f32 %v4457, %v4737
  %v4796 = vsub.f32 %v4458, %v4737
  %v4797 = vsub.f32 %v4459, %v4737
  %v4798 = vlaneseq
  %v4799 = vshrl.u32 %v4798, 7
  %v4800 = vsub.s32 0, %v4799
  %v4801 = vrot.slane %v4781, %v4800
  %v4802 = vmul.f32 %v4782, %v4801
  %v4803 = vmul.f32 %v4783, %v4801
  %v4804 = vmul.f32 %v4784, %v4801
  %v4805 = vmul.f32 %v4785, %v4801
  %v4806 = vmul.f32 %v4786, %v4801
  %v4807 = vmul.f32 %v4787, %v4801
  %v4808 = vmul.f32 %v4788, %v4801
  %v4809 = vmul.f32 %v4789, %v4801
  %v4810 = vmul.f32 %v4790, %v4801
  %v4811 = vmul.f32 %v4791, %v4801
  %v4812 = vmul.f32 %v4792, %v4801
  %v4813 = vmul.f32 %v4793, %v4801
  %v4814 = vmul.f32 %v4794, %v4801
  %v4815 = vmul.f32 %v4795, %v4801
  %v4816 = vmul.f32 %v4796, %v4801
  %v4817 = vmul.f32 %v4797, %v4801
  %v4818 = vld [vmem:[%s4 + $0x2] sm:$0x1]
  %v4819 = vlaneseq
  %v4820 = vshrl.u32 %v4819, 7
  %v4821 = vsub.s32 0, %v4820
  %v4822 = vrot.slane %v4818, %v4821
  %v4823 = vadd.f32 %v4802, %v4822
  %v4824 = vadd.f32 %v4803, %v4822
  %v4825 = vadd.f32 %v4804, %v4822
  %v4826 = vadd.f32 %v4805, %v4822
  %v4827 = vadd.f32 %v4806, %v4822
  %v4828 = vadd.f32 %v4807, %v4822
  %v4829 = vadd.f32 %v4808, %v4822
  %v4830 = vadd.f32 %v4809, %v4822
  %v4831 = vadd.f32 %v4810, %v4822
  %v4832 = vadd.f32 %v4811, %v4822
  %v4833 = vadd.f32 %v4812, %v4822
  %v4834 = vadd.f32 %v4813, %v4822
  %v4835 = vadd.f32 %v4814, %v4822
  %v4836 = vadd.f32 %v4815, %v4822
  %v4837 = vadd.f32 %v4816, %v4822
  %v4838 = vadd.f32 %v4817, %v4822
  %v4839 = vmax.f32 %v4823, 0.0
  %v4840 = vmax.f32 %v4824, 0.0
  %v4841 = vmax.f32 %v4825, 0.0
  %v4842 = vmax.f32 %v4826, 0.0
  %v4843 = vmax.f32 %v4827, 0.0
  %v4844 = vmax.f32 %v4828, 0.0
  %v4845 = vmax.f32 %v4829, 0.0
  %v4846 = vmax.f32 %v4830, 0.0
  %v4847 = vmax.f32 %v4831, 0.0
  %v4848 = vmax.f32 %v4832, 0.0
  %v4849 = vmax.f32 %v4833, 0.0
  %v4850 = vmax.f32 %v4834, 0.0
  %v4851 = vmax.f32 %v4835, 0.0
  %v4852 = vmax.f32 %v4836, 0.0
  %v4853 = vmax.f32 %v4837, 0.0
  %v4854 = vmax.f32 %v4838, 0.0
  %4855 = vst [vmem:[#allocation2] sm:$0xff] %v4839
  %4856 = vst [vmem:[#allocation2 + $0x8] sm:$0xff] %v4840
  %4857 = vst [vmem:[#allocation2 + $0x10] sm:$0xff] %v4841
  %4858 = vst [vmem:[#allocation2 + $0x18] sm:$0xff] %v4842
  %4859 = vst [vmem:[#allocation2 + $0x20] sm:$0xff] %v4843
  %4860 = vst [vmem:[#allocation2 + $0x28] sm:$0xff] %v4844
  %4861 = vst [vmem:[#allocation2 + $0x30] sm:$0xff] %v4845
  %4862 = vst [vmem:[#allocation2 + $0x38] sm:$0xff] %v4846
  %4863 = vst [vmem:[#allocation2 + $0x40] sm:$0xff] %v4847
  %4864 = vst [vmem:[#allocation2 + $0x48] sm:$0xff] %v4848
  %4865 = vst [vmem:[#allocation2 + $0x50] sm:$0xff] %v4849
  %4866 = vst [vmem:[#allocation2 + $0x58] sm:$0xff] %v4850
  %4867 = vst [vmem:[#allocation2 + $0x60] sm:$0xff] %v4851
  %4868 = vst [vmem:[#allocation2 + $0x68] sm:$0xff] %v4852
  %4869 = vst [vmem:[#allocation2 + $0x70] sm:$0xff] %v4853
  %4870 = vst [vmem:[#allocation2 + $0x78] sm:$0xff] %v4854
  %v4871 = vld [vmem:[#allocation2] ss:$4 sm:$0xff]
  %s4872 = scalar_lea.vmem [#allocation2], 32
  %v4873 = vld [vmem:[%s4872] ss:$4 sm:$0xff]
  %s4874 = scalar_lea.vmem [#allocation2], 64
  %v4875 = vld [vmem:[%s4874] ss:$4 sm:$0xff]
  %s4876 = scalar_lea.vmem [#allocation2], 96
  %v4877 = vld [vmem:[%s4876] ss:$4 sm:$0xff]
  %v4878 = vld [vmem:[%s3658] ss:$4 sm:$0xff]
  %v4879 = vld [vmem:[%s3660] ss:$4 sm:$0xff]
  %v4880 = vld [vmem:[%s3662] ss:$4 sm:$0xff]
  %v4881 = vld [vmem:[%s3664] ss:$4 sm:$0xff]
  %v4882 = vmax.f32 %v4871, %v4878
  %v4883 = vmax.f32 %v4873, %v4879
  %v4884 = vmax.f32 %v4875, %v4880
  %v4885 = vmax.f32 %v4877, %v4881
  %v4886 = vld [vmem:[%s3706] ss:$4 sm:$0xff]
  %v4887 = vld [vmem:[%s3708] ss:$4 sm:$0xff]
  %v4888 = vld [vmem:[%s3710] ss:$4 sm:$0xff]
  %v4889 = vld [vmem:[%s3712] ss:$4 sm:$0xff]
  %v4890 = vmax.f32 %v4882, %v4886
  %v4891 = vmax.f32 %v4883, %v4887
  %v4892 = vmax.f32 %v4884, %v4888
  %v4893 = vmax.f32 %v4885, %v4889
  %v4894 = vld [vmem:[%s3754] ss:$4 sm:$0xff]
  %v4895 = vld [vmem:[%s3756] ss:$4 sm:$0xff]
  %v4896 = vld [vmem:[%s3758] ss:$4 sm:$0xff]
  %v4897 = vld [vmem:[%s3760] ss:$4 sm:$0xff]
  %v4898 = vmax.f32 %v4890, %v4894
  %v4899 = vmax.f32 %v4891, %v4895
  %v4900 = vmax.f32 %v4892, %v4896
  %v4901 = vmax.f32 %v4893, %v4897
  %v4902 = vpack.c.bf16 %v4899, %v4898
  %v4903 = vpack.c.bf16 %v4901, %v4900
  %v4904 = vld [vmem:[%s5] sm:$0xf]
  %v4905 = vld [vmem:[%s5 + $0x4] sm:$0xf]
  %v4906 = vld [vmem:[%s5 + $0x8] sm:$0xf]
  %v4907 = vld [vmem:[%s5 + $0xc] sm:$0xf]
  %v4908 = vld [vmem:[%s5 + $0x10] sm:$0xf]
  %v4909 = vld [vmem:[%s5 + $0x14] sm:$0xf]
  %v4910 = vld [vmem:[%s5 + $0x18] sm:$0xf]
  %v4911 = vld [vmem:[%s5 + $0x1c] sm:$0xf]
  %v4912 = vld [vmem:[%s5 + $0x20] sm:$0xf]
  %v4913 = vld [vmem:[%s5 + $0x24] sm:$0xf]
  %v4914 = vld [vmem:[%s5 + $0x28] sm:$0xf]
  %v4915 = vld [vmem:[%s5 + $0x2c] sm:$0xf]
  %v4916 = vld [vmem:[%s5 + $0x30] sm:$0xf]
  %v4917 = vld [vmem:[%s5 + $0x34] sm:$0xf]
  %v4918 = vld [vmem:[%s5 + $0x38] sm:$0xf]
  %v4919 = vld [vmem:[%s5 + $0x3c] sm:$0xf]
  %s4920 = scalar_lea.vmem %s5, 64
  %v4921 = vld [vmem:[%s4920] sm:$0xf]
  %v4922 = vld [vmem:[%s4920 + $0x4] sm:$0xf]
  %v4923 = vld [vmem:[%s4920 + $0x8] sm:$0xf]
  %v4924 = vld [vmem:[%s4920 + $0xc] sm:$0xf]
  %v4925 = vld [vmem:[%s4920 + $0x10] sm:$0xf]
  %v4926 = vld [vmem:[%s4920 + $0x14] sm:$0xf]
  %v4927 = vld [vmem:[%s4920 + $0x18] sm:$0xf]
  %v4928 = vld [vmem:[%s4920 + $0x1c] sm:$0xf]
  %v4929 = vld [vmem:[%s4920 + $0x20] sm:$0xf]
  %v4930 = vld [vmem:[%s4920 + $0x24] sm:$0xf]
  %v4931 = vld [vmem:[%s4920 + $0x28] sm:$0xf]
  %v4932 = vld [vmem:[%s4920 + $0x2c] sm:$0xf]
  %v4933 = vld [vmem:[%s4920 + $0x30] sm:$0xf]
  %v4934 = vld [vmem:[%s4920 + $0x34] sm:$0xf]
  %v4935 = vld [vmem:[%s4920 + $0x38] sm:$0xf]
  %v4936 = vld [vmem:[%s4920 + $0x3c] sm:$0xf]
  %v4953 = vunpack.c.l.b16 %v4921
  %v4954 = vunpack.c.l.b16 %v4922
  %v4955 = vunpack.c.l.b16 %v4923
  %v4956 = vunpack.c.l.b16 %v4924
  %v4957 = vunpack.c.l.b16 %v4925
  %v4958 = vunpack.c.l.b16 %v4926
  %v4959 = vunpack.c.l.b16 %v4927
  %v4960 = vunpack.c.l.b16 %v4928
  %v4961 = vunpack.c.l.b16 %v4929
  %v4962 = vunpack.c.l.b16 %v4930
  %v4963 = vunpack.c.l.b16 %v4931
  %v4964 = vunpack.c.l.b16 %v4932
  %v4965 = vunpack.c.l.b16 %v4933
  %v4966 = vunpack.c.l.b16 %v4934
  %v4967 = vunpack.c.l.b16 %v4935
  %v4968 = vunpack.c.l.b16 %v4936
  %v4969 = vpack.c.b16 %v4954, %v4953
  %v4970 = vpack.c.b16 %v4956, %v4955
  %v4971 = vpack.c.b16 %v4958, %v4957
  %v4972 = vpack.c.b16 %v4960, %v4959
  %v4973 = vpack.c.b16 %v4962, %v4961
  %v4974 = vpack.c.b16 %v4964, %v4963
  %v4975 = vpack.c.b16 %v4966, %v4965
  %v4976 = vpack.c.b16 %v4968, %v4967
  %4985 = vmatprep.subr.bf16.mxu0 0
  %4986 = vmatpush1.bf16.msra.mxu0 %v4976
  %4987 = vmatprep.subr.bf16.mxu0 0
  %4988 = vmatpush1.bf16.msra.mxu0 %v4975
  %4989 = vmatprep.subr.bf16.mxu0 0
  %4990 = vmatpush1.bf16.msra.mxu0 %v4974
  %4991 = vmatprep.subr.bf16.mxu0 0
  %4992 = vmatpush1.bf16.msra.mxu0 %v4973
  %4993 = vmatprep.subr.bf16.mxu0 0
  %4994 = vmatpush1.bf16.msra.mxu0 %v4972
  %4995 = vmatprep.subr.bf16.mxu0 0
  %4996 = vmatpush1.bf16.msra.mxu0 %v4971
  %4997 = vmatprep.subr.bf16.mxu0 0
  %4998 = vmatpush1.bf16.msra.mxu0 %v4970
  %4999 = vmatprep.subr.bf16.mxu0 0
  %5000 = vmatpush1.bf16.msra.mxu0 %v4969
  %5001 = vmatprep.subr.bf16.mxu0 0
  %5002 = vmatpush2.bf16.msra.mxu0 0
  %5003 = vmatprep.subr.bf16.mxu0 0
  %5004 = vmatpush2.bf16.msra.mxu0 0
  %5005 = vmatprep.subr.bf16.mxu0 0
  %5006 = vmatpush2.bf16.msra.mxu0 0
  %5007 = vmatprep.subr.bf16.mxu0 0
  %5008 = vmatpush2.bf16.msra.mxu0 0
  %5009 = vmatprep.subr.bf16.mxu0 0
  %5010 = vmatpush2.bf16.msra.mxu0 0
  %5011 = vmatprep.subr.bf16.mxu0 0
  %5012 = vmatpush2.bf16.msra.mxu0 0
  %5013 = vmatprep.subr.bf16.mxu0 0
  %5014 = vmatpush2.bf16.msra.mxu0 0
  %5015 = vmatprep.subr.bf16.mxu0 0
  %5016 = vmatpush2.bf16.msra.mxu0 0
  %5017 = vmatprep.mubr.bf16.mxu0 0
  %5018 = vmatmul.mubr.bf16.gmra.mxu0 %v4902
  %v5019 = vpop.f32.mrf.mxu0
  %v5020 = vadd.f32 0.0, %v5019
  %v5021 = vpop.f32.mrf.mxu0
  %v5022 = vpop.f32.mrf.mxu0
  %v5023 = vadd.f32 0.0, %v5022
  %v5024 = vpop.f32.mrf.mxu0
  %5025 = vmatprep.mubr.bf16.mxu0 0
  %5026 = vmatmul.mubr.bf16.gmra.mxu0 %v4903
  %v5027 = vpop.f32.mrf.mxu0
  %v5028 = vadd.f32 0.0, %v5027
  %v5029 = vpop.f32.mrf.mxu0
  %v5030 = vpop.f32.mrf.mxu0
  %v5031 = vadd.f32 0.0, %v5030
  %v5032 = vpop.f32.mrf.mxu0
  %5033 = vdwg.mxu0
  %v5038 = vrot.slane %v5020, 1
  %v5039 = vrot.slane %v5023, 1
  %v5040 = vsel %vm725, %v5038, %v5039
  %v5041 = vrot.slane %v5028, 1
  %v5042 = vsel %vm725, %v5039, %v5041
  %v5043 = vrot.slane %v5031, 1
  %v5044 = vsel %vm725, %v5041, %v5043
  %v5049 = vsel %vm725, %v5043, 0.0
  %v5066 = vunpack.c.l.b16 %v4904
  %v5067 = vunpack.c.l.b16 %v4905
  %v5068 = vunpack.c.l.b16 %v4906
  %v5069 = vunpack.c.l.b16 %v4907
  %v5070 = vunpack.c.l.b16 %v4908
  %v5071 = vunpack.c.l.b16 %v4909
  %v5072 = vunpack.c.l.b16 %v4910
  %v5073 = vunpack.c.l.b16 %v4911
  %v5074 = vunpack.c.l.b16 %v4912
  %v5075 = vunpack.c.l.b16 %v4913
  %v5076 = vunpack.c.l.b16 %v4914
  %v5077 = vunpack.c.l.b16 %v4915
  %v5078 = vunpack.c.l.b16 %v4916
  %v5079 = vunpack.c.l.b16 %v4917
  %v5080 = vunpack.c.l.b16 %v4918
  %v5081 = vunpack.c.l.b16 %v4919
  %v5082 = vpack.c.b16 %v5067, %v5066
  %v5083 = vpack.c.b16 %v5069, %v5068
  %v5084 = vpack.c.b16 %v5071, %v5070
  %v5085 = vpack.c.b16 %v5073, %v5072
  %v5086 = vpack.c.b16 %v5075, %v5074
  %v5087 = vpack.c.b16 %v5077, %v5076
  %v5088 = vpack.c.b16 %v5079, %v5078
  %v5089 = vpack.c.b16 %v5081, %v5080
  %5098 = vmatprep.subr.bf16.mxu0 0
  %5099 = vmatpush1.bf16.msra.mxu0 %v5089
  %5100 = vmatprep.subr.bf16.mxu0 0
  %5101 = vmatpush1.bf16.msra.mxu0 %v5088
  %5102 = vmatprep.subr.bf16.mxu0 0
  %5103 = vmatpush1.bf16.msra.mxu0 %v5087
  %5104 = vmatprep.subr.bf16.mxu0 0
  %5105 = vmatpush1.bf16.msra.mxu0 %v5086
  %5106 = vmatprep.subr.bf16.mxu0 0
  %5107 = vmatpush1.bf16.msra.mxu0 %v5085
  %5108 = vmatprep.subr.bf16.mxu0 0
  %5109 = vmatpush1.bf16.msra.mxu0 %v5084
  %5110 = vmatprep.subr.bf16.mxu0 0
  %5111 = vmatpush1.bf16.msra.mxu0 %v5083
  %5112 = vmatprep.subr.bf16.mxu0 0
  %5113 = vmatpush1.bf16.msra.mxu0 %v5082
  %5114 = vmatprep.subr.bf16.mxu0 0
  %5115 = vmatpush2.bf16.msra.mxu0 0
  %5116 = vmatprep.subr.bf16.mxu0 0
  %5117 = vmatpush2.bf16.msra.mxu0 0
  %5118 = vmatprep.subr.bf16.mxu0 0
  %5119 = vmatpush2.bf16.msra.mxu0 0
  %5120 = vmatprep.subr.bf16.mxu0 0
  %5121 = vmatpush2.bf16.msra.mxu0 0
  %5122 = vmatprep.subr.bf16.mxu0 0
  %5123 = vmatpush2.bf16.msra.mxu0 0
  %5124 = vmatprep.subr.bf16.mxu0 0
  %5125 = vmatpush2.bf16.msra.mxu0 0
  %5126 = vmatprep.subr.bf16.mxu0 0
  %5127 = vmatpush2.bf16.msra.mxu0 0
  %5128 = vmatprep.subr.bf16.mxu0 0
  %5129 = vmatpush2.bf16.msra.mxu0 0
  %5130 = vmatprep.mubr.bf16.mxu0 0
  %5131 = vmatmul.mubr.bf16.gmra.mxu0 %v4902
  %v5132 = vpop.f32.mrf.mxu0
  %v5133 = vadd.f32 %v5040, %v5132
  %v5134 = vpop.f32.mrf.mxu0
  %v5135 = vpop.f32.mrf.mxu0
  %v5136 = vadd.f32 %v5042, %v5135
  %v5137 = vpop.f32.mrf.mxu0
  %5138 = vmatprep.mubr.bf16.mxu0 0
  %5139 = vmatmul.mubr.bf16.gmra.mxu0 %v4903
  %v5140 = vpop.f32.mrf.mxu0
  %v5141 = vadd.f32 %v5044, %v5140
  %v5142 = vpop.f32.mrf.mxu0
  %v5143 = vpop.f32.mrf.mxu0
  %v5144 = vadd.f32 %v5049, %v5143
  %v5145 = vpop.f32.mrf.mxu0
  %5146 = vdwg.mxu0
  %s5147 = scalar_lea.vmem %s5, 128
  %v5148 = vld [vmem:[%s5147] sm:$0xf]
  %v5149 = vld [vmem:[%s5147 + $0x4] sm:$0xf]
  %v5150 = vld [vmem:[%s5147 + $0x8] sm:$0xf]
  %v5151 = vld [vmem:[%s5147 + $0xc] sm:$0xf]
  %v5152 = vld [vmem:[%s5147 + $0x10] sm:$0xf]
  %v5153 = vld [vmem:[%s5147 + $0x14] sm:$0xf]
  %v5154 = vld [vmem:[%s5147 + $0x18] sm:$0xf]
  %v5155 = vld [vmem:[%s5147 + $0x1c] sm:$0xf]
  %v5156 = vld [vmem:[%s5147 + $0x20] sm:$0xf]
  %v5157 = vld [vmem:[%s5147 + $0x24] sm:$0xf]
  %v5158 = vld [vmem:[%s5147 + $0x28] sm:$0xf]
  %v5159 = vld [vmem:[%s5147 + $0x2c] sm:$0xf]
  %v5160 = vld [vmem:[%s5147 + $0x30] sm:$0xf]
  %v5161 = vld [vmem:[%s5147 + $0x34] sm:$0xf]
  %v5162 = vld [vmem:[%s5147 + $0x38] sm:$0xf]
  %v5163 = vld [vmem:[%s5147 + $0x3c] sm:$0xf]
  %v5180 = vunpack.c.l.b16 %v5148
  %v5181 = vunpack.c.l.b16 %v5149
  %v5182 = vunpack.c.l.b16 %v5150
  %v5183 = vunpack.c.l.b16 %v5151
  %v5184 = vunpack.c.l.b16 %v5152
  %v5185 = vunpack.c.l.b16 %v5153
  %v5186 = vunpack.c.l.b16 %v5154
  %v5187 = vunpack.c.l.b16 %v5155
  %v5188 = vunpack.c.l.b16 %v5156
  %v5189 = vunpack.c.l.b16 %v5157
  %v5190 = vunpack.c.l.b16 %v5158
  %v5191 = vunpack.c.l.b16 %v5159
  %v5192 = vunpack.c.l.b16 %v5160
  %v5193 = vunpack.c.l.b16 %v5161
  %v5194 = vunpack.c.l.b16 %v5162
  %v5195 = vunpack.c.l.b16 %v5163
  %v5196 = vpack.c.b16 %v5181, %v5180
  %v5197 = vpack.c.b16 %v5183, %v5182
  %v5198 = vpack.c.b16 %v5185, %v5184
  %v5199 = vpack.c.b16 %v5187, %v5186
  %v5200 = vpack.c.b16 %v5189, %v5188
  %v5201 = vpack.c.b16 %v5191, %v5190
  %v5202 = vpack.c.b16 %v5193, %v5192
  %v5203 = vpack.c.b16 %v5195, %v5194
  %5212 = vmatprep.subr.bf16.mxu0 0
  %5213 = vmatpush1.bf16.msra.mxu0 %v5203
  %5214 = vmatprep.subr.bf16.mxu0 0
  %5215 = vmatpush1.bf16.msra.mxu0 %v5202
  %5216 = vmatprep.subr.bf16.mxu0 0
  %5217 = vmatpush1.bf16.msra.mxu0 %v5201
  %5218 = vmatprep.subr.bf16.mxu0 0
  %5219 = vmatpush1.bf16.msra.mxu0 %v5200
  %5220 = vmatprep.subr.bf16.mxu0 0
  %5221 = vmatpush1.bf16.msra.mxu0 %v5199
  %5222 = vmatprep.subr.bf16.mxu0 0
  %5223 = vmatpush1.bf16.msra.mxu0 %v5198
  %5224 = vmatprep.subr.bf16.mxu0 0
  %5225 = vmatpush1.bf16.msra.mxu0 %v5197
  %5226 = vmatprep.subr.bf16.mxu0 0
  %5227 = vmatpush1.bf16.msra.mxu0 %v5196
  %5228 = vmatprep.subr.bf16.mxu0 0
  %5229 = vmatpush2.bf16.msra.mxu0 0
  %5230 = vmatprep.subr.bf16.mxu0 0
  %5231 = vmatpush2.bf16.msra.mxu0 0
  %5232 = vmatprep.subr.bf16.mxu0 0
  %5233 = vmatpush2.bf16.msra.mxu0 0
  %5234 = vmatprep.subr.bf16.mxu0 0
  %5235 = vmatpush2.bf16.msra.mxu0 0
  %5236 = vmatprep.subr.bf16.mxu0 0
  %5237 = vmatpush2.bf16.msra.mxu0 0
  %5238 = vmatprep.subr.bf16.mxu0 0
  %5239 = vmatpush2.bf16.msra.mxu0 0
  %5240 = vmatprep.subr.bf16.mxu0 0
  %5241 = vmatpush2.bf16.msra.mxu0 0
  %5242 = vmatprep.subr.bf16.mxu0 0
  %5243 = vmatpush2.bf16.msra.mxu0 0
  %5244 = vmatprep.mubr.bf16.mxu0 0
  %5245 = vmatmul.mubr.bf16.gmra.mxu0 %v4902
  %v5246 = vpop.f32.mrf.mxu0
  %v5247 = vadd.f32 0.0, %v5246
  %v5248 = vpop.f32.mrf.mxu0
  %v5249 = vpop.f32.mrf.mxu0
  %v5250 = vadd.f32 0.0, %v5249
  %v5251 = vpop.f32.mrf.mxu0
  %5252 = vmatprep.mubr.bf16.mxu0 0
  %5253 = vmatmul.mubr.bf16.gmra.mxu0 %v4903
  %v5254 = vpop.f32.mrf.mxu0
  %v5255 = vadd.f32 0.0, %v5254
  %v5256 = vpop.f32.mrf.mxu0
  %v5257 = vpop.f32.mrf.mxu0
  %v5258 = vadd.f32 0.0, %v5257
  %v5259 = vpop.f32.mrf.mxu0
  %5260 = vdwg.mxu0
  %v5265 = vrot.slane %v5247, 2
  %v5266 = vrot.slane %v5250, 2
  %v5267 = vsel %vm1673, %v5265, %v5266
  %v5268 = vrot.slane %v5255, 2
  %v5269 = vsel %vm1673, %v5266, %v5268
  %v5270 = vrot.slane %v5258, 2
  %v5271 = vsel %vm1673, %v5268, %v5270
  %v5276 = vsel %vm1673, %v5270, 0.0
  %v5277 = vadd.f32 %v5133, %v5267
  %v5278 = vadd.f32 %v5136, %v5269
  %v5279 = vadd.f32 %v5141, %v5271
  %v5280 = vadd.f32 %v5144, %v5276
  %v5281 = vld [vmem:[%s6] sm:$0x1]
  %v5282 = vlaneseq
  %v5283 = vshrl.u32 %v5282, 7
  %v5284 = vsub.s32 0, %v5283
  %v5285 = vrot.slane %v5281, %v5284
  %v5286 = vadd.f32 %v5277, %v5285
  %v5287 = vadd.f32 %v5278, %v5285
  %v5288 = vadd.f32 %v5279, %v5285
  %v5289 = vadd.f32 %v5280, %v5285
  %vm5290 = vcmp.lt.s32.totalorder %v2000, 0
  %v5291 = vsub.s32 0, %v2000
  %v5292 = vsel %vm5290, %v5291, %v2000
  %v5293 = vshrl.u32 %v5292, 4
  %v5294 = vand.u32 %v5292, 15
  %v5295 = vsub.s32 0, %v5294
  %v5296 = vsel %vm5290, %v5295, %v5294
  %vm5297 = vcmp.lt.s32.totalorder %v2001, 0
  %v5298 = vsub.s32 0, %v2001
  %v5299 = vsel %vm5297, %v5298, %v2001
  %v5300 = vshrl.u32 %v5299, 4
  %v5301 = vand.u32 %v5299, 15
  %v5302 = vsub.s32 0, %v5301
  %v5303 = vsel %vm5297, %v5302, %v5301
  %vm5304 = vcmp.lt.s32.totalorder %v2002, 0
  %v5305 = vsub.s32 0, %v2002
  %v5306 = vsel %vm5304, %v5305, %v2002
  %v5307 = vshrl.u32 %v5306, 4
  %v5308 = vand.u32 %v5306, 15
  %v5309 = vsub.s32 0, %v5308
  %v5310 = vsel %vm5304, %v5309, %v5308
  %vm5311 = vcmp.lt.s32.totalorder %v2003, 0
  %v5312 = vsub.s32 0, %v2003
  %v5313 = vsel %vm5311, %v5312, %v2003
  %v5314 = vshrl.u32 %v5313, 4
  %v5315 = vand.u32 %v5313, 15
  %v5316 = vsub.s32 0, %v5315
  %v5317 = vsel %vm5311, %v5316, %v5315
  %vm5318 = vcmp.ne.s32.totalorder %v5296, 0
  %vm5319 = vcmp.ne.s32.totalorder %v5303, 0
  %vm5320 = vcmp.ne.s32.totalorder %v5310, 0
  %vm5321 = vcmp.ne.s32.totalorder %v5317, 0
  %vm5322 = vcmp.lt.s32.totalorder %v5296, 0
  %vm5323 = vcmp.lt.s32.totalorder %v5303, 0
  %vm5324 = vcmp.lt.s32.totalorder %v5310, 0
  %vm5325 = vcmp.lt.s32.totalorder %v5317, 0
  %vm5326 = vmand %vm5322, %vm5318
  %vm5327 = vmand %vm5323, %vm5319
  %vm5328 = vmand %vm5324, %vm5320
  %vm5329 = vmand %vm5325, %vm5321
  %v5330 = vadd.s32 %v5296, 16
  %v5331 = vadd.s32 %v5303, 16
  %v5332 = vadd.s32 %v5310, 16
  %v5333 = vadd.s32 %v5317, 16
  %v5334 = vsel %vm5326, %v5330, %v5296
  %v5335 = vsel %vm5327, %v5331, %v5303
  %v5336 = vsel %vm5328, %v5332, %v5310
  %v5337 = vsel %vm5329, %v5333, %v5317
  %vm5338 = vcmp.lt.s32.totalorder %v5334, 5
  %vm5339 = vcmp.lt.s32.totalorder %v5335, 5
  %vm5340 = vcmp.lt.s32.totalorder %v5336, 5
  %vm5341 = vcmp.lt.s32.totalorder %v5337, 5
  %v5342 = vsel %vm5338, 1, 0
  %v5343 = vsel %vm5339, 1, 0
  %v5344 = vsel %vm5340, 1, 0
  %v5345 = vsel %vm5341, 1, 0
  %vm5346 = vcmp.eq.s32.totalorder %v5342, 1
  %vm5347 = vcmp.eq.s32.totalorder %v5343, 1
  %vm5348 = vcmp.eq.s32.totalorder %v5344, 1
  %vm5349 = vcmp.eq.s32.totalorder %v5345, 1
  %v5350 = vsel %vm5346, %v5286, 0.0
  %v5351 = vsel %vm5347, %v5287, 0.0
  %v5352 = vsel %vm5348, %v5288, 0.0
  %v5353 = vsel %vm5349, %v5289, 0.0
  %v5354 = vadd.f32 %v5350, %v5351
  %v5355 = vadd.f32 %v5354, %v5352
  %v5356 = vadd.f32 %v5355, %v5353
  %v5357 = vrot.slane %v5356, 4
  %v5358 = vadd.f32 %v5356, %v5357
  %v5359 = vrot.slane %v5358, 2
  %v5360 = vadd.f32 %v5358, %v5359
  %v5361 = vrot.slane %v5360, 1
  %v5362 = vadd.f32 %v5360, %v5361
  %v5363 = vmul.f32 %v5362, 0.1
  %v5364 = vmul.f32 %v5350, %v5350
  %v5365 = vmul.f32 %v5351, %v5351
  %v5366 = vmul.f32 %v5352, %v5352
  %v5367 = vmul.f32 %v5353, %v5353
  %v5368 = vadd.f32 %v5364, %v5365
  %v5369 = vadd.f32 %v5368, %v5366
  %v5370 = vadd.f32 %v5369, %v5367
  %v5371 = vrot.slane %v5370, 4
  %v5372 = vadd.f32 %v5370, %v5371
  %v5373 = vrot.slane %v5372, 2
  %v5374 = vadd.f32 %v5372, %v5373
  %v5375 = vrot.slane %v5374, 1
  %v5376 = vadd.f32 %v5374, %v5375
  %v5377 = vmul.f32 %v5376, 0.1
  %v5378 = vmul.f32 %v5363, %v5363
  %v5379 = vsub.f32 %v5377, %v5378
  %v5380 = vadd.f32 %v5379, 1e-05
  %v5381 = vrsqrt.pop %v5380
  %v5382 = vld [vmem:[%s6 + $0x1] sm:$0x1]
  %v5383 = vmul.f32 %v5381, %v5382
  %v5384 = vsub.f32 %v5286, %v5363
  %v5385 = vsub.f32 %v5287, %v5363
  %v5386 = vsub.f32 %v5288, %v5363
  %v5387 = vsub.f32 %v5289, %v5363
  %v5388 = vlaneseq
  %v5389 = vshrl.u32 %v5388, 7
  %v5390 = vsub.s32 0, %v5389
  %v5391 = vrot.slane %v5383, %v5390
  %v5392 = vmul.f32 %v5384, %v5391
  %v5393 = vmul.f32 %v5385, %v5391
  %v5394 = vmul.f32 %v5386, %v5391
  %v5395 = vmul.f32 %v5387, %v5391
  %v5396 = vld [vmem:[%s6 + $0x2] sm:$0x1]
  %v5397 = vlaneseq
  %v5398 = vshrl.u32 %v5397, 7
  %v5399 = vsub.s32 0, %v5398
  %v5400 = vrot.slane %v5396, %v5399
  %v5401 = vadd.f32 %v5392, %v5400
  %v5402 = vadd.f32 %v5393, %v5400
  %v5403 = vadd.f32 %v5394, %v5400
  %v5404 = vadd.f32 %v5395, %v5400
  %v5405 = vmax.f32 %v5401, 0.0
  %v5406 = vmax.f32 %v5402, 0.0
  %v5407 = vmax.f32 %v5403, 0.0
  %v5408 = vmax.f32 %v5404, 0.0
  %5409 = vst [vmem:[#allocation2] sm:$0xff] %v5405
  %5410 = vst [vmem:[#allocation2 + $0x8] sm:$0xff] %v5406
  %5411 = vst [vmem:[#allocation2 + $0x10] sm:$0xff] %v5407
  %5412 = vst [vmem:[#allocation2 + $0x18] sm:$0xff] %v5408
  %v5413 = vld [vmem:[#allocation2] ss:$4 sm:$0xff]
  %v5414 = vld [vmem:[%s3658] ss:$4 sm:$0xff]
  %v5415 = vmax.f32 %v5413, %v5414
  %v5416 = vld [vmem:[%s3706] ss:$4 sm:$0xff]
  %v5417 = vmax.f32 %v5415, %v5416
  %v5418 = vld [vmem:[%s3754] ss:$4 sm:$0xff]
  %v5419 = vmax.f32 %v5417, %v5418
  %vm5420 = vcmp.lt.s32.totalorder %v2000, 0
  %v5421 = vsub.s32 0, %v2000
  %v5422 = vsel %vm5420, %v5421, %v2000
  %v5423 = vshrl.u32 %v5422, 2
  %v5424 = vand.u32 %v5422, 3
  %v5425 = vsub.s32 0, %v5424
  %v5426 = vsel %vm5420, %v5425, %v5424
  %vm5427 = vcmp.ne.s32.totalorder %v5426, 0
  %vm5428 = vcmp.lt.s32.totalorder %v5426, 0
  %vm5429 = vmand %vm5428, %vm5427
  %v5430 = vadd.s32 %v5426, 4
  %v5431 = vsel %vm5429, %v5430, %v5426
  %vm5432 = vcmp.lt.s32.totalorder %v5431, 1
  %v5433 = vsel %vm5432, 1, 0
  %vm5434 = vcmp.eq.s32.totalorder %v5433, 1
  %v5435 = vsel %vm5434, %v5419, 0.0
  %v5436 = vld [vmem:[%s7] sm:$0xff]
  %v5437 = vld [vmem:[%s7 + $0x8] sm:$0xff]
  %v5438 = vld [vmem:[%s7 + $0x10] sm:$0xff]
  %v5439 = vld [vmem:[%s7 + $0x18] sm:$0xff]
  %v5440 = vld [vmem:[%s7 + $0x20] sm:$0xff]
  %v5441 = vld [vmem:[%s7 + $0x28] sm:$0xff]
  %v5442 = vld [vmem:[%s7 + $0x30] sm:$0xff]
  %v5443 = vld [vmem:[%s7 + $0x38] sm:$0xff]
  %v5444 = vld [vmem:[%s7 + $0x40] sm:$0xff]
  %v5445 = vld [vmem:[%s7 + $0x48] sm:$0xff]
  %v5446 = vld [vmem:[%s7 + $0x50] sm:$0xff]
  %v5447 = vld [vmem:[%s7 + $0x58] sm:$0xff]
  %v5448 = vld [vmem:[%s7 + $0x60] sm:$0xff]
  %v5449 = vld [vmem:[%s7 + $0x68] sm:$0xff]
  %v5450 = vld [vmem:[%s7 + $0x70] sm:$0xff]
  %v5451 = vld [vmem:[%s7 + $0x78] sm:$0xff]
  %v5452 = vld [vmem:[#allocation3] sm:$0x1]
  %vm5453 = vcmask 1043456
  %v5454 = vsel %vm5453, %v5435, 0.0
  %v5455 = vrot.slane %v5454, 4
  %v5456 = vadd.f32 %v5454, %v5455
  %v5457 = vrot.slane %v5456, 2
  %v5458 = vadd.f32 %v5456, %v5457
  %v5459 = vrot.slane %v5458, 1
  %v5460 = vadd.f32 %v5458, %v5459
  %5461 = vmatprep.subr.mxu0 0.0
  %5462 = vmatpush1.msra.mxu0 %v5451
  %5463 = vmatprep.subr.mxu0 0.0
  %5464 = vmatpush1.msra.mxu0 %v5450
  %5465 = vmatprep.subr.mxu0 0.0
  %5466 = vmatpush1.msra.mxu0 %v5449
  %5467 = vmatprep.subr.mxu0 0.0
  %5468 = vmatpush1.msra.mxu0 %v5448
  %5469 = vmatprep.subr.mxu0 0.0
  %5470 = vmatpush1.msra.mxu0 %v5447
  %5471 = vmatprep.subr.mxu0 0.0
  %5472 = vmatpush1.msra.mxu0 %v5446
  %5473 = vmatprep.subr.mxu0 0.0
  %5474 = vmatpush1.msra.mxu0 %v5445
  %5475 = vmatprep.subr.mxu0 0.0
  %5476 = vmatpush1.msra.mxu0 %v5444
  %5477 = vmatprep.subr.mxu0 0.0
  %5478 = vmatpush1.msra.mxu0 %v5443
  %5479 = vmatprep.subr.mxu0 0.0
  %5480 = vmatpush1.msra.mxu0 %v5442
  %5481 = vmatprep.subr.mxu0 0.0
  %5482 = vmatpush1.msra.mxu0 %v5441
  %5483 = vmatprep.subr.mxu0 0.0
  %5484 = vmatpush1.msra.mxu0 %v5440
  %5485 = vmatprep.subr.mxu0 0.0
  %5486 = vmatpush1.msra.mxu0 %v5439
  %5487 = vmatprep.subr.mxu0 0.0
  %5488 = vmatpush1.msra.mxu0 %v5438
  %5489 = vmatprep.subr.mxu0 0.0
  %5490 = vmatpush1.msra.mxu0 %v5437
  %5491 = vmatprep.subr.mxu0 0.0
  %5492 = vmatpush1.msra.mxu0 %v5436
  %5493 = vmatprep.subr.mxu0 0.0
  %5494 = vmatpush2.msra.mxu0 0.0
  %5495 = vmatprep.subr.mxu0 0.0
  %5496 = vmatpush2.msra.mxu0 0.0
  %5497 = vmatprep.subr.mxu0 0.0
  %5498 = vmatpush2.msra.mxu0 0.0
  %5499 = vmatprep.subr.mxu0 0.0
  %5500 = vmatpush2.msra.mxu0 0.0
  %5501 = vmatprep.subr.mxu0 0.0
  %5502 = vmatpush2.msra.mxu0 0.0
  %5503 = vmatprep.subr.mxu0 0.0
  %5504 = vmatpush2.msra.mxu0 0.0
  %5505 = vmatprep.subr.mxu0 0.0
  %5506 = vmatpush2.msra.mxu0 0.0
  %5507 = vmatprep.subr.mxu0 0.0
  %5508 = vmatpush2.msra.mxu0 0.0
  %5509 = vmatprep.subr.mxu0 0.0
  %5510 = vmatpush2.msra.mxu0 0.0
  %5511 = vmatprep.subr.mxu0 0.0
  %5512 = vmatpush2.msra.mxu0 0.0
  %5513 = vmatprep.subr.mxu0 0.0
  %5514 = vmatpush2.msra.mxu0 0.0
  %5515 = vmatprep.subr.mxu0 0.0
  %5516 = vmatpush2.msra.mxu0 0.0
  %5517 = vmatprep.subr.mxu0 0.0
  %5518 = vmatpush2.msra.mxu0 0.0
  %5519 = vmatprep.subr.mxu0 0.0
  %5520 = vmatpush2.msra.mxu0 0.0
  %5521 = vmatprep.subr.mxu0 0.0
  %5522 = vmatpush2.msra.mxu0 0.0
  %5523 = vmatprep.subr.mxu0 0.0
  %5524 = vmatpush2.msra.mxu0 0.0
  %5525 = vmatprep.mubr.f32.mxu0 0.0
  %5526 = vmatmul.mubr.f32.gmra.mxu0 %v5460
  %v5527 = vpop.f32.mrf.mxu0
  %v5528 = vadd.f32 %v5452, %v5527
  %v5529 = vpop.f32.mrf.mxu0
  %5530 = vdwg.mxu0
  %v5532 = vrot.slane %v5435, 4
  %v5534 = vsel %vm5453, %v5532, 0.0
  %v5535 = vrot.slane %v5534, 4
  %v5536 = vadd.f32 %v5534, %v5535
  %v5537 = vrot.slane %v5536, 2
  %v5538 = vadd.f32 %v5536, %v5537
  %v5539 = vrot.slane %v5538, 1
  %v5540 = vadd.f32 %v5538, %v5539
  %5541 = vmatprep.subr.mxu0 0.0
  %5542 = vmatpush1.msra.mxu0 %v5451
  %5543 = vmatprep.subr.mxu0 0.0
  %5544 = vmatpush1.msra.mxu0 %v5450
  %5545 = vmatprep.subr.mxu0 0.0
  %5546 = vmatpush1.msra.mxu0 %v5449
  %5547 = vmatprep.subr.mxu0 0.0
  %5548 = vmatpush1.msra.mxu0 %v5448
  %5549 = vmatprep.subr.mxu0 0.0
  %5550 = vmatpush1.msra.mxu0 %v5447
  %5551 = vmatprep.subr.mxu0 0.0
  %5552 = vmatpush1.msra.mxu0 %v5446
  %5553 = vmatprep.subr.mxu0 0.0
  %5554 = vmatpush1.msra.mxu0 %v5445
  %5555 = vmatprep.subr.mxu0 0.0
  %5556 = vmatpush1.msra.mxu0 %v5444
  %5557 = vmatprep.subr.mxu0 0.0
  %5558 = vmatpush1.msra.mxu0 %v5443
  %5559 = vmatprep.subr.mxu0 0.0
  %5560 = vmatpush1.msra.mxu0 %v5442
  %5561 = vmatprep.subr.mxu0 0.0
  %5562 = vmatpush1.msra.mxu0 %v5441
  %5563 = vmatprep.subr.mxu0 0.0
  %5564 = vmatpush1.msra.mxu0 %v5440
  %5565 = vmatprep.subr.mxu0 0.0
  %5566 = vmatpush1.msra.mxu0 %v5439
  %5567 = vmatprep.subr.mxu0 0.0
  %5568 = vmatpush1.msra.mxu0 %v5438
  %5569 = vmatprep.subr.mxu0 0.0
  %5570 = vmatpush1.msra.mxu0 %v5437
  %5571 = vmatprep.subr.mxu0 0.0
  %5572 = vmatpush1.msra.mxu0 %v5436
  %5573 = vmatprep.subr.mxu0 0.0
  %5574 = vmatpush2.msra.mxu0 0.0
  %5575 = vmatprep.subr.mxu0 0.0
  %5576 = vmatpush2.msra.mxu0 0.0
  %5577 = vmatprep.subr.mxu0 0.0
  %5578 = vmatpush2.msra.mxu0 0.0
  %5579 = vmatprep.subr.mxu0 0.0
  %5580 = vmatpush2.msra.mxu0 0.0
  %5581 = vmatprep.subr.mxu0 0.0
  %5582 = vmatpush2.msra.mxu0 0.0
  %5583 = vmatprep.subr.mxu0 0.0
  %5584 = vmatpush2.msra.mxu0 0.0
  %5585 = vmatprep.subr.mxu0 0.0
  %5586 = vmatpush2.msra.mxu0 0.0
  %5587 = vmatprep.subr.mxu0 0.0
  %5588 = vmatpush2.msra.mxu0 0.0
  %5589 = vmatprep.subr.mxu0 0.0
  %5590 = vmatpush2.msra.mxu0 0.0
  %5591 = vmatprep.subr.mxu0 0.0
  %5592 = vmatpush2.msra.mxu0 0.0
  %5593 = vmatprep.subr.mxu0 0.0
  %5594 = vmatpush2.msra.mxu0 0.0
  %5595 = vmatprep.subr.mxu0 0.0
  %5596 = vmatpush2.msra.mxu0 0.0
  %5597 = vmatprep.subr.mxu0 0.0
  %5598 = vmatpush2.msra.mxu0 0.0
  %5599 = vmatprep.subr.mxu0 0.0
  %5600 = vmatpush2.msra.mxu0 0.0
  %5601 = vmatprep.subr.mxu0 0.0
  %5602 = vmatpush2.msra.mxu0 0.0
  %5603 = vmatprep.subr.mxu0 0.0
  %5604 = vmatpush2.msra.mxu0 0.0
  %5605 = vmatprep.mubr.f32.mxu0 0.0
  %5606 = vmatmul.mubr.f32.gmra.mxu0 %v5540
  %v5607 = vpop.f32.mrf.mxu0
  %v5608 = vadd.f32 %v5452, %v5607
  %v5609 = vpop.f32.mrf.mxu0
  %5610 = vdwg.mxu0
  %v5612 = vrot.slane %v5608, 7
  %vm5614 = vcmask 1040384
  %v5615 = vsel %vm5614, %v5528, %v5612
  %v5616 = vsub.f32 0.0, %v5615
  %v5617 = vmul.f32 %v5616, 1.442695
  %v5618 = vpow.pop %v5617
  %v5619 = vadd.f32 %v5618, 1.0
  %v5620 = vrcp.pop %v5619
  %v5621 = vmul.f32 1.0, %v5620
  %vm5622 = vcmask 1024
  %5623 = vst.msk [vmem:[%s9] sm:$0x3] %vm5622, %v5621
  // Predicated region
  $region38: #{net_aur_hpd_m5_forward.3} parent=0 // pred_check
    _
  $region39: #{net_aur_hpd_m5_forward.3} parent=0 // pred_check_branch
    %5625 = sbr.rel (0) target = $region41
  $region40: #{net_aur_hpd_m5_forward.3} parent=0 // pred_region
    _
  $region41: #{net_aur_hpd_m5_forward.3} parent=0 // pred_fallthru
    _
  // Predicated region
  $region42: #{net_aur_hpd_m5_forward.3} parent=0 // pred_check
    _
  $region43: #{net_aur_hpd_m5_forward.3} parent=0 // pred_check_branch
    %5627 = sbr.rel (0) target = $region45
  $region44: #{net_aur_hpd_m5_forward.3} parent=0 // pred_region
    _
  $region45: #{net_aur_hpd_m5_forward.3} parent=0 // pred_fallthru
    _

</llo_original>
